<compile_context>
chip_gen: v7x
topology: tpu7x:2x2x1
jax: 0.10.0
libtpu: 0.0.40
codegen_flags: <defaults>
</compile_context>

<pallas_src>
import functools

import jax
import jax.numpy as jnp
from jax.experimental import pallas as pl
from jax.experimental.pallas import tpu as pltpu

IN_FEATURES = 784   # 28 * 28
HIDDEN = 128
LATENT = 32

# Deliberate precision choice: full-f32 MXU passes so the kernel matches the
# f32 PyTorch/XLA reference to ~1e-6. The kernel is HBM-bound on v6e/v7x so
# the extra MXU passes are hidden; on v5e (197 TF/s, 820 GB/s) this can be
# relaxed to DEFAULT / bf16 inputs if ~1e-2 tolerance is acceptable.
_MM_PRECISION = jax.lax.Precision.HIGHEST


def autoencoder_kernel(x_ref, w1_ref, b1_ref, w23_ref, b23_ref,
                       w4_ref, b4_ref, out_ref):
    """One batch tile of the fused autoencoder forward pass.

    x_ref:   (tb, 784)
    w1_ref:  (784, 128), b1_ref:  (1, 128)
    w23_ref: (128, 128), b23_ref: (1, 128)   # fused Linear(128,32)->Linear(32,128)
    w4_ref:  (128, 784), b4_ref:  (1, 784)
    out_ref: (tb, 784)
    """
    x = x_ref[...]

    # Encoder: Linear(784, 128) + ReLU
    h1 = jnp.dot(x, w1_ref[...], precision=_MM_PRECISION,
                 preferred_element_type=jnp.float32) + b1_ref[...]
    h1 = jnp.maximum(h1, 0.0)

    # Fused bottleneck (no nonlinearity between Linear(128,32) and Linear(32,128)):
    #   relu((h1 @ w2 + b2) @ w3 + b3) == relu(h1 @ (w2 @ w3) + (b2 @ w3 + b3))
    h2 = jnp.dot(h1, w23_ref[...], precision=_MM_PRECISION,
                 preferred_element_type=jnp.float32) + b23_ref[...]
    h2 = jnp.maximum(h2, 0.0)

    # Decoder: Linear(128, 784) + Sigmoid, written directly at 784 lanes
    # (6 full vregs + 1 masked vreg per row-group of stores).
    y = jnp.dot(h2, w4_ref[...], precision=_MM_PRECISION,
                preferred_element_type=jnp.float32) + b4_ref[...]
    out_ref[...] = jax.nn.sigmoid(y).astype(out_ref.dtype)


def prepare_kernel_params(params):
    """Fuse the activation-free bottleneck; keep natural (un-padded) widths."""
    w1, b1, w2, b2, w3, b3, w4, b4 = params
    w23 = jnp.dot(w2, w3, precision=_MM_PRECISION)            # (128, 128)
    b23 = jnp.dot(b2, w3, precision=_MM_PRECISION) + b3       # (1, 128)
    # TODO(synk): optionally cast x / weights to bfloat16 (keep f32 accumulate
    # + f32 epilogue) to halve HBM traffic on v6e/v7x if ~1e-2 tolerance is
    # acceptable; kept f32 here to match the f32 PyTorch reference tightly.
    return w1, b1, w23, b23, w4, b4


def _round_up(x, m):
    return ((x + m - 1) // m) * m


def _choose_tile(batch, tile_b):
    """Pick a sublane-aligned batch tile; prefer >=2 grid steps (v7x megacore)."""
    tb = max(8, min(_round_up(tile_b, 8), _round_up(batch, 8)))
    if batch >= 16 and pl.cdiv(batch, tb) < 2:
        tb = _round_up(pl.cdiv(batch, 2), 8)
    return tb


@functools.partial(jax.jit, static_argnames=("tile_b",))
def autoencoder_forward(x_nchw, params, tile_b=1024):
    """x_nchw: (B, 1, 28, 28) float32 -> (B, 1, 28, 28) float32."""
    B = x_nchw.shape[0]
    x = x_nchw.reshape(B, IN_FEATURES).astype(jnp.float32)

    w1, b1, w23, b23, w4, b4 = prepare_kernel_params(params)

    # Batch tiling: tb rows per grid step (multiple of 8 sublanes). No batch
    # padding — the grid uses pl.cdiv and Pallas masks the ragged last block
    # (out-of-bounds output rows are discarded).
    tb = _choose_tile(B, tile_b)
    grid = (pl.cdiv(B, tb),)

    out = pl.pallas_call(
        autoencoder_kernel,
        out_shape=jax.ShapeDtypeStruct((B, IN_FEATURES), jnp.float32),
        grid_spec=pltpu.PrefetchScalarGridSpec(
            num_scalar_prefetch=0,
            grid=grid,
            in_specs=[
                pl.BlockSpec((tb, IN_FEATURES), lambda i: (i, 0)),       # x tile
                pl.BlockSpec((IN_FEATURES, HIDDEN), lambda i: (0, 0)),   # w1 (VMEM-resident)
                pl.BlockSpec((1, HIDDEN), lambda i: (0, 0)),             # b1
                pl.BlockSpec((HIDDEN, HIDDEN), lambda i: (0, 0)),        # w23 (fused bottleneck)
                pl.BlockSpec((1, HIDDEN), lambda i: (0, 0)),             # b23
                pl.BlockSpec((HIDDEN, IN_FEATURES), lambda i: (0, 0)),   # w4
                pl.BlockSpec((1, IN_FEATURES), lambda i: (0, 0)),        # b4
            ],
            out_specs=pl.BlockSpec((tb, IN_FEATURES), lambda i: (i, 0)),
        ),
        compiler_params=pltpu.CompilerParams(
            dimension_semantics=("parallel",),        # megacore sharding on v7x
            vmem_limit_bytes=48 * 1024 * 1024,        # safe on v7x's 64 MiB/TC
        ),
    )(x, w1, b1, w23, b23, w4, b4)

    return out.reshape(B, 1, 28, 28)


def init_params(key):
    """Deterministic PyTorch-style init: U(-1/sqrt(fan_in), 1/sqrt(fan_in))."""
    def linear(key, fan_in, fan_out):
        kw, kb = jax.random.split(key)
        bound = 1.0 / jnp.sqrt(fan_in)
        w = jax.random.uniform(kw, (fan_in, fan_out), jnp.float32, -bound, bound)
        b = jax.random.uniform(kb, (1, fan_out), jnp.float32, -bound, bound)
        return w, b

    k1, k2, k3, k4 = jax.random.split(key, 4)
    w1, b1 = linear(k1, IN_FEATURES, HIDDEN)
    w2, b2 = linear(k2, HIDDEN, LATENT)
    w3, b3 = linear(k3, LATENT, HIDDEN)
    w4, b4 = linear(k4, HIDDEN, IN_FEATURES)
    return (w1, b1, w2, b2, w3, b3, w4, b4)


def reference_forward(x_nchw, params):
    """Unfused pure-JAX reference matching the PyTorch module."""
    (w1, b1, w2, b2, w3, b3, w4, b4) = params
    hp = _MM_PRECISION
    x = x_nchw.reshape(x_nchw.shape[0], IN_FEATURES)
    h1 = jnp.maximum(jnp.dot(x, w1, precision=hp) + b1, 0.0)
    z = jnp.dot(h1, w2, precision=hp) + b2
    h2 = jnp.maximum(jnp.dot(z, w3, precision=hp) + b3, 0.0)
    y = jax.nn.sigmoid(jnp.dot(h2, w4, precision=hp) + b4)
    return y.reshape(-1, 1, 28, 28)


if __name__ == "__main__":
    key = jax.random.PRNGKey(0)
    kp, kx = jax.random.split(key)
    params = init_params(kp)

    # Small primary test: B = 8 (one grid step).
    B = 8
    x = jax.random.normal(kx, (B, 1, 28, 28), jnp.float32)
    out = jax.block_until_ready(autoencoder_forward(x, params))
    ref = reference_forward(x, params)
    assert out.shape == (B, 1, 28, 28)
    max_err = float(jnp.max(jnp.abs(out - ref)))
    assert jnp.allclose(out, ref, atol=1e-4, rtol=1e-4), max_err

    # Second test: B = 16 forces a 2-step grid (weights stay VMEM-resident
    # across steps; megacore-eligible batch split).
    B2 = 16
    x2 = jax.random.normal(jax.random.PRNGKey(1), (B2, 1, 28, 28), jnp.float32)
    out2 = jax.block_until_ready(autoencoder_forward(x2, params))
    ref2 = reference_forward(x2, params)
    max_err2 = float(jnp.max(jnp.abs(out2 - ref2)))
    assert jnp.allclose(out2, ref2, atol=1e-4, rtol=1e-4), max_err2

    print("KERNEL_OK")
</pallas_src>

<mosaic_0001>
module attributes {stable_mosaic.version = 11 : i64} {
  func.func @autoencoder_kernel(%arg0: i32, %arg1: memref<8x784xf32, #tpu.memory_space<vmem>>, %arg2: memref<784x128xf32, #tpu.memory_space<vmem>>, %arg3: memref<1x128xf32, #tpu.memory_space<vmem>>, %arg4: memref<128x128xf32, #tpu.memory_space<vmem>>, %arg5: memref<1x128xf32, #tpu.memory_space<vmem>>, %arg6: memref<128x784xf32, #tpu.memory_space<vmem>>, %arg7: memref<1x784xf32, #tpu.memory_space<vmem>>, %arg8: memref<8x784xf32, #tpu.memory_space<vmem>>) attributes {dimension_semantics = [#tpu.dimension_semantics<parallel>], iteration_bounds = array<i64: 1>, scalar_prefetch = 0 : i64, scratch_operands = 0 : i64, tpu.core_type = #tpu.core_type<tc>, window_params = [{transform_indices = @transform_0, window_bounds = array<i64: 8, 784>}, {pipeline_mode = #tpu.pipeline_mode<synchronous>, transform_indices = @transform_1, window_bounds = array<i64: 784, 128>}, {pipeline_mode = #tpu.pipeline_mode<synchronous>, transform_indices = @transform_2, window_bounds = array<i64: 1, 128>}, {pipeline_mode = #tpu.pipeline_mode<synchronous>, transform_indices = @transform_3, window_bounds = array<i64: 128, 128>}, {pipeline_mode = #tpu.pipeline_mode<synchronous>, transform_indices = @transform_4, window_bounds = array<i64: 1, 128>}, {pipeline_mode = #tpu.pipeline_mode<synchronous>, transform_indices = @transform_5, window_bounds = array<i64: 128, 784>}, {pipeline_mode = #tpu.pipeline_mode<synchronous>, transform_indices = @transform_6, window_bounds = array<i64: 1, 784>}, {transform_indices = @transform_7, window_bounds = array<i64: 8, 784>}]} {
    %c0 = arith.constant 0 : index
    %c0_0 = arith.constant 0 : index
    %0 = vector.load %arg1[%c0, %c0_0] : memref<8x784xf32, #tpu.memory_space<vmem>>, vector<8x784xf32>
    %c0_1 = arith.constant 0 : index
    %c0_2 = arith.constant 0 : index
    %1 = vector.load %arg2[%c0_1, %c0_2] : memref<784x128xf32, #tpu.memory_space<vmem>>, vector<784x128xf32>
    %cst = arith.constant dense<0.000000e+00> : vector<8x128xf32>
    %2 = tpu.matmul %0, %1, %cst {dimension_numbers = #tpu.dot_dimension_numbers<[1], [0], [0], [1], [0, 0, 1, 1], [], []>, precision = #tpu.contract_precision<fp32>} : vector<8x784xf32>, vector<784x128xf32>, vector<8x128xf32> -> vector<8x128xf32>
    %c0_3 = arith.constant 0 : index
    %c0_4 = arith.constant 0 : index
    %3 = vector.load %arg3[%c0_3, %c0_4] : memref<1x128xf32, #tpu.memory_space<vmem>>, vector<1x128xf32>
    %4 = vector.broadcast %3 : vector<1x128xf32> to vector<8x128xf32>
    %5 = arith.addf %2, %4 : vector<8x128xf32>
    %cst_5 = arith.constant 0.000000e+00 : f32
    %6 = vector.broadcast %cst_5 : f32 to vector<8x128xf32>
    %7 = arith.maximumf %5, %6 : vector<8x128xf32>
    %c0_6 = arith.constant 0 : index
    %c0_7 = arith.constant 0 : index
    %8 = vector.load %arg4[%c0_6, %c0_7] : memref<128x128xf32, #tpu.memory_space<vmem>>, vector<128x128xf32>
    %cst_8 = arith.constant dense<0.000000e+00> : vector<8x128xf32>
    %9 = tpu.matmul %7, %8, %cst_8 {dimension_numbers = #tpu.dot_dimension_numbers<[1], [0], [0], [1], [0, 0, 1, 1], [], []>, precision = #tpu.contract_precision<fp32>} : vector<8x128xf32>, vector<128x128xf32>, vector<8x128xf32> -> vector<8x128xf32>
    %c0_9 = arith.constant 0 : index
    %c0_10 = arith.constant 0 : index
    %10 = vector.load %arg5[%c0_9, %c0_10] : memref<1x128xf32, #tpu.memory_space<vmem>>, vector<1x128xf32>
    %11 = vector.broadcast %10 : vector<1x128xf32> to vector<8x128xf32>
    %12 = arith.addf %9, %11 : vector<8x128xf32>
    %cst_11 = arith.constant 0.000000e+00 : f32
    %13 = vector.broadcast %cst_11 : f32 to vector<8x128xf32>
    %14 = arith.maximumf %12, %13 : vector<8x128xf32>
    %c0_12 = arith.constant 0 : index
    %c0_13 = arith.constant 0 : index
    %15 = vector.load %arg6[%c0_12, %c0_13] : memref<128x784xf32, #tpu.memory_space<vmem>>, vector<128x784xf32>
    %cst_14 = arith.constant dense<0.000000e+00> : vector<8x784xf32>
    %16 = tpu.matmul %14, %15, %cst_14 {dimension_numbers = #tpu.dot_dimension_numbers<[1], [0], [0], [1], [0, 0, 1, 1], [], []>, precision = #tpu.contract_precision<fp32>} : vector<8x128xf32>, vector<128x784xf32>, vector<8x784xf32> -> vector<8x784xf32>
    %c0_15 = arith.constant 0 : index
    %c0_16 = arith.constant 0 : index
    %17 = vector.load %arg7[%c0_15, %c0_16] : memref<1x784xf32, #tpu.memory_space<vmem>>, vector<1x784xf32>
    %18 = vector.broadcast %17 : vector<1x784xf32> to vector<8x784xf32>
    %19 = arith.addf %16, %18 : vector<8x784xf32>
    %20 = arith.negf %19 : vector<8x784xf32>
    %21 = math.exp %20 : vector<8x784xf32>
    %cst_17 = arith.constant 1.000000e+00 : f32
    %22 = vector.broadcast %cst_17 : f32 to vector<8x784xf32>
    %23 = arith.addf %22, %21 : vector<8x784xf32>
    %24 = arith.divf %22, %23 : vector<8x784xf32>
    %c0_18 = arith.constant 0 : index
    %c0_19 = arith.constant 0 : index
    %25 = vector.load %arg8[%c0_18, %c0_19] : memref<8x784xf32, #tpu.memory_space<vmem>>, vector<8x784xf32>
    tpu.vector_store %arg8[%c0_18, %c0_19], %24 {strides = array<i32>} : memref<8x784xf32, #tpu.memory_space<vmem>>, vector<8x784xf32>,
    return
  }
  func.func @transform_0(%arg0: i32) -> (i32, i32) {
    %c0_i32 = arith.constant 0 : i32
    %c0_i32_0 = arith.constant 0 : i32
    return %arg0, %c0_i32 : i32, i32
  }
  func.func @transform_1(%arg0: i32) -> (i32, i32) {
    %c0_i32 = arith.constant 0 : i32
    %c0_i32_0 = arith.constant 0 : i32
    %c0_i32_1 = arith.constant 0 : i32
    return %c0_i32, %c0_i32_0 : i32, i32
  }
  func.func @transform_2(%arg0: i32) -> (i32, i32) {
    %c0_i32 = arith.constant 0 : i32
    %c0_i32_0 = arith.constant 0 : i32
    %c0_i32_1 = arith.constant 0 : i32
    return %c0_i32, %c0_i32_0 : i32, i32
  }
  func.func @transform_3(%arg0: i32) -> (i32, i32) {
    %c0_i32 = arith.constant 0 : i32
    %c0_i32_0 = arith.constant 0 : i32
    %c0_i32_1 = arith.constant 0 : i32
    return %c0_i32, %c0_i32_0 : i32, i32
  }
  func.func @transform_4(%arg0: i32) -> (i32, i32) {
    %c0_i32 = arith.constant 0 : i32
    %c0_i32_0 = arith.constant 0 : i32
    %c0_i32_1 = arith.constant 0 : i32
    return %c0_i32, %c0_i32_0 : i32, i32
  }
  func.func @transform_5(%arg0: i32) -> (i32, i32) {
    %c0_i32 = arith.constant 0 : i32
    %c0_i32_0 = arith.constant 0 : i32
    %c0_i32_1 = arith.constant 0 : i32
    return %c0_i32, %c0_i32_0 : i32, i32
  }
  func.func @transform_6(%arg0: i32) -> (i32, i32) {
    %c0_i32 = arith.constant 0 : i32
    %c0_i32_0 = arith.constant 0 : i32
    %c0_i32_1 = arith.constant 0 : i32
    return %c0_i32, %c0_i32_0 : i32, i32
  }
  func.func @transform_7(%arg0: i32) -> (i32, i32) {
    %c0_i32 = arith.constant 0 : i32
    %c0_i32_0 = arith.constant 0 : i32
    return %arg0, %c0_i32 : i32, i32
  }
}

</mosaic_0001>

<llo_original>
// kernel: autoencoder_forward.1
$region0: #{autoencoder_forward.1}
  #allocation0 [shape = 'u32[]', space=smem, size = 0x4, offset = 0x4, fixed_abs, tag = 'smem constant byte address 0x4 - core index']
  #allocation1 [shape = 'u32[144,128]{1,0:T(1,128)}', space=vmem, size = 0x12000, scoped, tag = 'internal scratch']
  %s0 = inlined_call_operand.vmem [shape: f32[8,784], index: 0, kind: input, shape index: {}]
  %s1 = inlined_call_operand.vmem [shape: f32[784,128], index: 1, kind: input, shape index: {}]
  %s2 = inlined_call_operand.vmem [shape: f32[1,128], index: 2, kind: input, shape index: {}]
  %s3 = inlined_call_operand.vmem [shape: f32[128,128], index: 3, kind: input, shape index: {}]
  %s4 = inlined_call_operand.vmem [shape: f32[1,128], index: 4, kind: input, shape index: {}]
  %s5 = inlined_call_operand.vmem [shape: f32[128,784], index: 5, kind: input, shape index: {}]
  %s6 = inlined_call_operand.vmem [shape: f32[1,784], index: 6, kind: input, shape index: {}]
  %s7 = inlined_call_operand.vmem [shape: f32[8,784], index: 7, kind: output, shape index: {}]
  %s8 = sld [smem:[#allocation0]]
  $region38: #{autoencoder_forward.1} parent=0
    _
  %s10 = ssub.s32 1, %s8
  %s11 = scalar_select 0, %s10, %s8
  // Predicated region
  $region2: #{autoencoder_forward.1} parent=0 // pred_check
    _
  $region3: #{autoencoder_forward.1} parent=0 // pred_check_branch
    %13 = sbr.rel (0) target = $region5
  $region4: #{autoencoder_forward.1} parent=0 // pred_region
    _
  $region5: #{autoencoder_forward.1} parent=0 // pred_fallthru
    _
  // Predicated region
  $region6: #{autoencoder_forward.1} parent=0 // pred_check
    _
  $region7: #{autoencoder_forward.1} parent=0 // pred_check_branch
    %15 = sbr.rel (0) target = $region9
  $region8: #{autoencoder_forward.1} parent=0 // pred_region
    _
  $region9: #{autoencoder_forward.1} parent=0 // pred_fallthru
    _
  // Predicated region
  $region10: #{autoencoder_forward.1} parent=0 // pred_check
    _
  $region11: #{autoencoder_forward.1} parent=0 // pred_check_branch
    %17 = sbr.rel (0) target = $region13
  $region12: #{autoencoder_forward.1} parent=0 // pred_region
    _
  $region13: #{autoencoder_forward.1} parent=0 // pred_fallthru
    _
  // Predicated region
  $region14: #{autoencoder_forward.1} parent=0 // pred_check
    _
  $region15: #{autoencoder_forward.1} parent=0 // pred_check_branch
    %19 = sbr.rel (0) target = $region17
  $region16: #{autoencoder_forward.1} parent=0 // pred_region
    _
  $region17: #{autoencoder_forward.1} parent=0 // pred_fallthru
    _
  // Predicated region
  $region18: #{autoencoder_forward.1} parent=0 // pred_check
    _
  $region19: #{autoencoder_forward.1} parent=0 // pred_check_branch
    %21 = sbr.rel (0) target = $region21
  $region20: #{autoencoder_forward.1} parent=0 // pred_region
    _
  $region21: #{autoencoder_forward.1} parent=0 // pred_fallthru
    _
  // Predicated region
  $region22: #{autoencoder_forward.1} parent=0 // pred_check
    _
  $region23: #{autoencoder_forward.1} parent=0 // pred_check_branch
    %23 = sbr.rel (0) target = $region25
  $region24: #{autoencoder_forward.1} parent=0 // pred_region
    _
  $region25: #{autoencoder_forward.1} parent=0 // pred_fallthru
    _
  // Predicated region
  $region26: #{autoencoder_forward.1} parent=0 // pred_check
    _
  $region27: #{autoencoder_forward.1} parent=0 // pred_check_branch
    %25 = sbr.rel (0) target = $region29
  $region28: #{autoencoder_forward.1} parent=0 // pred_region
    _
  $region29: #{autoencoder_forward.1} parent=0 // pred_fallthru
    _
  %v26 = vld [vmem:[%s0] sm:$0xff]
  %v27 = vld [vmem:[%s0 + $0x8] sm:$0xff]
  %v28 = vld [vmem:[%s0 + $0x10] sm:$0xff]
  %v29 = vld [vmem:[%s0 + $0x18] sm:$0xff]
  %v30 = vld [vmem:[%s0 + $0x20] sm:$0xff]
  %v31 = vld [vmem:[%s0 + $0x28] sm:$0xff]
  %v32 = vld [vmem:[%s0 + $0x30] sm:$0xff]
  %v33 = vld [vmem:[%s1] sm:$0xff]
  %v34 = vld [vmem:[%s1 + $0x8] sm:$0xff]
  %v35 = vld [vmem:[%s1 + $0x10] sm:$0xff]
  %v36 = vld [vmem:[%s1 + $0x18] sm:$0xff]
  %v37 = vld [vmem:[%s1 + $0x20] sm:$0xff]
  %v38 = vld [vmem:[%s1 + $0x28] sm:$0xff]
  %v39 = vld [vmem:[%s1 + $0x30] sm:$0xff]
  %v40 = vld [vmem:[%s1 + $0x38] sm:$0xff]
  %v41 = vld [vmem:[%s1 + $0x40] sm:$0xff]
  %v42 = vld [vmem:[%s1 + $0x48] sm:$0xff]
  %v43 = vld [vmem:[%s1 + $0x50] sm:$0xff]
  %v44 = vld [vmem:[%s1 + $0x58] sm:$0xff]
  %v45 = vld [vmem:[%s1 + $0x60] sm:$0xff]
  %v46 = vld [vmem:[%s1 + $0x68] sm:$0xff]
  %v47 = vld [vmem:[%s1 + $0x70] sm:$0xff]
  %v48 = vld [vmem:[%s1 + $0x78] sm:$0xff]
  %v49 = vld [vmem:[%s1 + $0x80] sm:$0xff]
  %v50 = vld [vmem:[%s1 + $0x88] sm:$0xff]
  %v51 = vld [vmem:[%s1 + $0x90] sm:$0xff]
  %v52 = vld [vmem:[%s1 + $0x98] sm:$0xff]
  %v53 = vld [vmem:[%s1 + $0xa0] sm:$0xff]
  %v54 = vld [vmem:[%s1 + $0xa8] sm:$0xff]
  %v55 = vld [vmem:[%s1 + $0xb0] sm:$0xff]
  %v56 = vld [vmem:[%s1 + $0xb8] sm:$0xff]
  %v57 = vld [vmem:[%s1 + $0xc0] sm:$0xff]
  %v58 = vld [vmem:[%s1 + $0xc8] sm:$0xff]
  %v59 = vld [vmem:[%s1 + $0xd0] sm:$0xff]
  %v60 = vld [vmem:[%s1 + $0xd8] sm:$0xff]
  %v61 = vld [vmem:[%s1 + $0xe0] sm:$0xff]
  %v62 = vld [vmem:[%s1 + $0xe8] sm:$0xff]
  %v63 = vld [vmem:[%s1 + $0xf0] sm:$0xff]
  %v64 = vld [vmem:[%s1 + $0xf8] sm:$0xff]
  %v65 = vld [vmem:[%s1 + $0x100] sm:$0xff]
  %v66 = vld [vmem:[%s1 + $0x108] sm:$0xff]
  %v67 = vld [vmem:[%s1 + $0x110] sm:$0xff]
  %v68 = vld [vmem:[%s1 + $0x118] sm:$0xff]
  %v69 = vld [vmem:[%s1 + $0x120] sm:$0xff]
  %v70 = vld [vmem:[%s1 + $0x128] sm:$0xff]
  %v71 = vld [vmem:[%s1 + $0x130] sm:$0xff]
  %v72 = vld [vmem:[%s1 + $0x138] sm:$0xff]
  %v73 = vld [vmem:[%s1 + $0x140] sm:$0xff]
  %v74 = vld [vmem:[%s1 + $0x148] sm:$0xff]
  %v75 = vld [vmem:[%s1 + $0x150] sm:$0xff]
  %v76 = vld [vmem:[%s1 + $0x158] sm:$0xff]
  %v77 = vld [vmem:[%s1 + $0x160] sm:$0xff]
  %v78 = vld [vmem:[%s1 + $0x168] sm:$0xff]
  %v79 = vld [vmem:[%s1 + $0x170] sm:$0xff]
  %v80 = vld [vmem:[%s1 + $0x178] sm:$0xff]
  %v81 = vld [vmem:[%s1 + $0x180] sm:$0xff]
  %v82 = vld [vmem:[%s1 + $0x188] sm:$0xff]
  %v83 = vld [vmem:[%s1 + $0x190] sm:$0xff]
  %v84 = vld [vmem:[%s1 + $0x198] sm:$0xff]
  %v85 = vld [vmem:[%s1 + $0x1a0] sm:$0xff]
  %v86 = vld [vmem:[%s1 + $0x1a8] sm:$0xff]
  %v87 = vld [vmem:[%s1 + $0x1b0] sm:$0xff]
  %v88 = vld [vmem:[%s1 + $0x1b8] sm:$0xff]
  %v89 = vld [vmem:[%s1 + $0x1c0] sm:$0xff]
  %v90 = vld [vmem:[%s1 + $0x1c8] sm:$0xff]
  %v91 = vld [vmem:[%s1 + $0x1d0] sm:$0xff]
  %v92 = vld [vmem:[%s1 + $0x1d8] sm:$0xff]
  %v93 = vld [vmem:[%s1 + $0x1e0] sm:$0xff]
  %v94 = vld [vmem:[%s1 + $0x1e8] sm:$0xff]
  %v95 = vld [vmem:[%s1 + $0x1f0] sm:$0xff]
  %v96 = vld [vmem:[%s1 + $0x1f8] sm:$0xff]
  %v97 = vld [vmem:[%s1 + $0x200] sm:$0xff]
  %v98 = vld [vmem:[%s1 + $0x208] sm:$0xff]
  %v99 = vld [vmem:[%s1 + $0x210] sm:$0xff]
  %v100 = vld [vmem:[%s1 + $0x218] sm:$0xff]
  %v101 = vld [vmem:[%s1 + $0x220] sm:$0xff]
  %v102 = vld [vmem:[%s1 + $0x228] sm:$0xff]
  %v103 = vld [vmem:[%s1 + $0x230] sm:$0xff]
  %v104 = vld [vmem:[%s1 + $0x238] sm:$0xff]
  %v105 = vld [vmem:[%s1 + $0x240] sm:$0xff]
  %v106 = vld [vmem:[%s1 + $0x248] sm:$0xff]
  %v107 = vld [vmem:[%s1 + $0x250] sm:$0xff]
  %v108 = vld [vmem:[%s1 + $0x258] sm:$0xff]
  %v109 = vld [vmem:[%s1 + $0x260] sm:$0xff]
  %v110 = vld [vmem:[%s1 + $0x268] sm:$0xff]
  %v111 = vld [vmem:[%s1 + $0x270] sm:$0xff]
  %v112 = vld [vmem:[%s1 + $0x278] sm:$0xff]
  %v113 = vld [vmem:[%s1 + $0x280] sm:$0xff]
  %v114 = vld [vmem:[%s1 + $0x288] sm:$0xff]
  %v115 = vld [vmem:[%s1 + $0x290] sm:$0xff]
  %v116 = vld [vmem:[%s1 + $0x298] sm:$0xff]
  %v117 = vld [vmem:[%s1 + $0x2a0] sm:$0xff]
  %v118 = vld [vmem:[%s1 + $0x2a8] sm:$0xff]
  %v119 = vld [vmem:[%s1 + $0x2b0] sm:$0xff]
  %v120 = vld [vmem:[%s1 + $0x2b8] sm:$0xff]
  %v121 = vld [vmem:[%s1 + $0x2c0] sm:$0xff]
  %v122 = vld [vmem:[%s1 + $0x2c8] sm:$0xff]
  %v123 = vld [vmem:[%s1 + $0x2d0] sm:$0xff]
  %v124 = vld [vmem:[%s1 + $0x2d8] sm:$0xff]
  %v125 = vld [vmem:[%s1 + $0x2e0] sm:$0xff]
  %v126 = vld [vmem:[%s1 + $0x2e8] sm:$0xff]
  %v127 = vld [vmem:[%s1 + $0x2f0] sm:$0xff]
  %v128 = vld [vmem:[%s1 + $0x2f8] sm:$0xff]
  %v129 = vld [vmem:[%s1 + $0x300] sm:$0xff]
  %v130 = vld [vmem:[%s1 + $0x308] sm:$0xff]
  %v131 = vld [vmem:[%s2] sm:$0x1]
  %v133 = vlaneseq
  %v134 = vshrl.u32 %v133, 7
  %v135 = vsub.s32 0, %v134
  %v136 = vrot.slane %v131, %v135
  %vm138 = vcmask 130048
  %v140 = vsel %vm138, %v32, 0
  %142 = vmatprep.subr.mxu0 0.0
  %v143 = vand.u32 %v33, 4294901760
  %144 = vmatpush1.msra.mxu0 %v143
  %145 = vmatprep.subr.mxu0 0.0
  %v146 = vand.u32 %v34, 4294901760
  %147 = vmatpush1.msra.mxu0 %v146
  %148 = vmatprep.subr.mxu0 0.0
  %v149 = vand.u32 %v35, 4294901760
  %150 = vmatpush1.msra.mxu0 %v149
  %151 = vmatprep.subr.mxu0 0.0
  %v152 = vand.u32 %v36, 4294901760
  %153 = vmatpush1.msra.mxu0 %v152
  %154 = vmatprep.subr.mxu0 0.0
  %v155 = vand.u32 %v37, 4294901760
  %156 = vmatpush1.msra.mxu0 %v155
  %157 = vmatprep.subr.mxu0 0.0
  %v158 = vand.u32 %v38, 4294901760
  %159 = vmatpush1.msra.mxu0 %v158
  %160 = vmatprep.subr.mxu0 0.0
  %v161 = vand.u32 %v39, 4294901760
  %162 = vmatpush1.msra.mxu0 %v161
  %163 = vmatprep.subr.mxu0 0.0
  %v164 = vand.u32 %v40, 4294901760
  %165 = vmatpush1.msra.mxu0 %v164
  %166 = vmatprep.subr.mxu0 0.0
  %v167 = vand.u32 %v41, 4294901760
  %168 = vmatpush1.msra.mxu0 %v167
  %169 = vmatprep.subr.mxu0 0.0
  %v170 = vand.u32 %v42, 4294901760
  %171 = vmatpush1.msra.mxu0 %v170
  %172 = vmatprep.subr.mxu0 0.0
  %v173 = vand.u32 %v43, 4294901760
  %174 = vmatpush1.msra.mxu0 %v173
  %175 = vmatprep.subr.mxu0 0.0
  %v176 = vand.u32 %v44, 4294901760
  %177 = vmatpush1.msra.mxu0 %v176
  %178 = vmatprep.subr.mxu0 0.0
  %v179 = vand.u32 %v45, 4294901760
  %180 = vmatpush1.msra.mxu0 %v179
  %181 = vmatprep.subr.mxu0 0.0
  %v182 = vand.u32 %v46, 4294901760
  %183 = vmatpush1.msra.mxu0 %v182
  %184 = vmatprep.subr.mxu0 0.0
  %v185 = vand.u32 %v47, 4294901760
  %186 = vmatpush1.msra.mxu0 %v185
  %187 = vmatprep.subr.mxu0 0.0
  %v188 = vand.u32 %v48, 4294901760
  %189 = vmatpush1.msra.mxu0 %v188
  %190 = vmatprep.subr.mxu0 0.0
  %v191 = vand.u32 %v49, 4294901760
  %192 = vmatpush1.msra.mxu0 %v191
  %193 = vmatprep.subr.mxu0 0.0
  %v194 = vand.u32 %v50, 4294901760
  %195 = vmatpush1.msra.mxu0 %v194
  %196 = vmatprep.subr.mxu0 0.0
  %v197 = vand.u32 %v51, 4294901760
  %198 = vmatpush1.msra.mxu0 %v197
  %199 = vmatprep.subr.mxu0 0.0
  %v200 = vand.u32 %v52, 4294901760
  %201 = vmatpush1.msra.mxu0 %v200
  %202 = vmatprep.subr.mxu0 0.0
  %v203 = vand.u32 %v53, 4294901760
  %204 = vmatpush1.msra.mxu0 %v203
  %205 = vmatprep.subr.mxu0 0.0
  %v206 = vand.u32 %v54, 4294901760
  %207 = vmatpush1.msra.mxu0 %v206
  %208 = vmatprep.subr.mxu0 0.0
  %v209 = vand.u32 %v55, 4294901760
  %210 = vmatpush1.msra.mxu0 %v209
  %211 = vmatprep.subr.mxu0 0.0
  %v212 = vand.u32 %v56, 4294901760
  %213 = vmatpush1.msra.mxu0 %v212
  %214 = vmatprep.subr.mxu0 0.0
  %v215 = vand.u32 %v57, 4294901760
  %216 = vmatpush1.msra.mxu0 %v215
  %217 = vmatprep.subr.mxu0 0.0
  %v218 = vand.u32 %v58, 4294901760
  %219 = vmatpush1.msra.mxu0 %v218
  %220 = vmatprep.subr.mxu0 0.0
  %v221 = vand.u32 %v59, 4294901760
  %222 = vmatpush1.msra.mxu0 %v221
  %223 = vmatprep.subr.mxu0 0.0
  %v224 = vand.u32 %v60, 4294901760
  %225 = vmatpush1.msra.mxu0 %v224
  %226 = vmatprep.subr.mxu0 0.0
  %v227 = vand.u32 %v61, 4294901760
  %228 = vmatpush1.msra.mxu0 %v227
  %229 = vmatprep.subr.mxu0 0.0
  %v230 = vand.u32 %v62, 4294901760
  %231 = vmatpush1.msra.mxu0 %v230
  %232 = vmatprep.subr.mxu0 0.0
  %v233 = vand.u32 %v63, 4294901760
  %234 = vmatpush1.msra.mxu0 %v233
  %235 = vmatprep.subr.mxu0 0.0
  %v236 = vand.u32 %v64, 4294901760
  %237 = vmatpush1.msra.mxu0 %v236
  %v238 = vand.u32 %v27, 4294901760
  %v239 = vsub.f32 %v27, %v238
  %v240 = vand.u32 %v239, 4294901760
  %v241 = vsub.f32 %v239, %v240
  %v242 = vand.u32 %v241, 4294901760
  %243 = vmatprep.mubr.f32.mxu0 %v242
  %v244 = vand.u32 %v26, 4294901760
  %v245 = vsub.f32 %v26, %v244
  %v246 = vand.u32 %v245, 4294901760
  %v247 = vsub.f32 %v245, %v246
  %v248 = vand.u32 %v247, 4294901760
  %249 = vmatmul.mubr.f32.gmra.mrb[0].mxu0 %v248
  %v250 = vpop.f32.mrb[0].mxu0
  %v251 = vadd.f32 %v136, %v250
  %v252 = vpop.f32.mrb[0].mxu0
  %253 = vdwg.mxu0
  %254 = vmatprep.subr.mxu0 0.0
  %v255 = vand.u32 %v33, 4294901760
  %v256 = vsub.f32 %v33, %v255
  %v257 = vand.u32 %v256, 4294901760
  %v258 = vsub.f32 %v256, %v257
  %v259 = vand.u32 %v258, 4294901760
  %260 = vmatpush1.msra.mxu0 %v259
  %261 = vmatprep.subr.mxu0 0.0
  %v262 = vand.u32 %v34, 4294901760
  %v263 = vsub.f32 %v34, %v262
  %v264 = vand.u32 %v263, 4294901760
  %v265 = vsub.f32 %v263, %v264
  %v266 = vand.u32 %v265, 4294901760
  %267 = vmatpush1.msra.mxu0 %v266
  %268 = vmatprep.subr.mxu0 0.0
  %v269 = vand.u32 %v35, 4294901760
  %v270 = vsub.f32 %v35, %v269
  %v271 = vand.u32 %v270, 4294901760
  %v272 = vsub.f32 %v270, %v271
  %v273 = vand.u32 %v272, 4294901760
  %274 = vmatpush1.msra.mxu0 %v273
  %275 = vmatprep.subr.mxu0 0.0
  %v276 = vand.u32 %v36, 4294901760
  %v277 = vsub.f32 %v36, %v276
  %v278 = vand.u32 %v277, 4294901760
  %v279 = vsub.f32 %v277, %v278
  %v280 = vand.u32 %v279, 4294901760
  %281 = vmatpush1.msra.mxu0 %v280
  %282 = vmatprep.subr.mxu0 0.0
  %v283 = vand.u32 %v37, 4294901760
  %v284 = vsub.f32 %v37, %v283
  %v285 = vand.u32 %v284, 4294901760
  %v286 = vsub.f32 %v284, %v285
  %v287 = vand.u32 %v286, 4294901760
  %288 = vmatpush1.msra.mxu0 %v287
  %289 = vmatprep.subr.mxu0 0.0
  %v290 = vand.u32 %v38, 4294901760
  %v291 = vsub.f32 %v38, %v290
  %v292 = vand.u32 %v291, 4294901760
  %v293 = vsub.f32 %v291, %v292
  %v294 = vand.u32 %v293, 4294901760
  %295 = vmatpush1.msra.mxu0 %v294
  %296 = vmatprep.subr.mxu0 0.0
  %v297 = vand.u32 %v39, 4294901760
  %v298 = vsub.f32 %v39, %v297
  %v299 = vand.u32 %v298, 4294901760
  %v300 = vsub.f32 %v298, %v299
  %v301 = vand.u32 %v300, 4294901760
  %302 = vmatpush1.msra.mxu0 %v301
  %303 = vmatprep.subr.mxu0 0.0
  %v304 = vand.u32 %v40, 4294901760
  %v305 = vsub.f32 %v40, %v304
  %v306 = vand.u32 %v305, 4294901760
  %v307 = vsub.f32 %v305, %v306
  %v308 = vand.u32 %v307, 4294901760
  %309 = vmatpush1.msra.mxu0 %v308
  %310 = vmatprep.subr.mxu0 0.0
  %v311 = vand.u32 %v41, 4294901760
  %v312 = vsub.f32 %v41, %v311
  %v313 = vand.u32 %v312, 4294901760
  %v314 = vsub.f32 %v312, %v313
  %v315 = vand.u32 %v314, 4294901760
  %316 = vmatpush1.msra.mxu0 %v315
  %317 = vmatprep.subr.mxu0 0.0
  %v318 = vand.u32 %v42, 4294901760
  %v319 = vsub.f32 %v42, %v318
  %v320 = vand.u32 %v319, 4294901760
  %v321 = vsub.f32 %v319, %v320
  %v322 = vand.u32 %v321, 4294901760
  %323 = vmatpush1.msra.mxu0 %v322
  %324 = vmatprep.subr.mxu0 0.0
  %v325 = vand.u32 %v43, 4294901760
  %v326 = vsub.f32 %v43, %v325
  %v327 = vand.u32 %v326, 4294901760
  %v328 = vsub.f32 %v326, %v327
  %v329 = vand.u32 %v328, 4294901760
  %330 = vmatpush1.msra.mxu0 %v329
  %331 = vmatprep.subr.mxu0 0.0
  %v332 = vand.u32 %v44, 4294901760
  %v333 = vsub.f32 %v44, %v332
  %v334 = vand.u32 %v333, 4294901760
  %v335 = vsub.f32 %v333, %v334
  %v336 = vand.u32 %v335, 4294901760
  %337 = vmatpush1.msra.mxu0 %v336
  %338 = vmatprep.subr.mxu0 0.0
  %v339 = vand.u32 %v45, 4294901760
  %v340 = vsub.f32 %v45, %v339
  %v341 = vand.u32 %v340, 4294901760
  %v342 = vsub.f32 %v340, %v341
  %v343 = vand.u32 %v342, 4294901760
  %344 = vmatpush1.msra.mxu0 %v343
  %345 = vmatprep.subr.mxu0 0.0
  %v346 = vand.u32 %v46, 4294901760
  %v347 = vsub.f32 %v46, %v346
  %v348 = vand.u32 %v347, 4294901760
  %v349 = vsub.f32 %v347, %v348
  %v350 = vand.u32 %v349, 4294901760
  %351 = vmatpush1.msra.mxu0 %v350
  %352 = vmatprep.subr.mxu0 0.0
  %v353 = vand.u32 %v47, 4294901760
  %v354 = vsub.f32 %v47, %v353
  %v355 = vand.u32 %v354, 4294901760
  %v356 = vsub.f32 %v354, %v355
  %v357 = vand.u32 %v356, 4294901760
  %358 = vmatpush1.msra.mxu0 %v357
  %359 = vmatprep.subr.mxu0 0.0
  %v360 = vand.u32 %v48, 4294901760
  %v361 = vsub.f32 %v48, %v360
  %v362 = vand.u32 %v361, 4294901760
  %v363 = vsub.f32 %v361, %v362
  %v364 = vand.u32 %v363, 4294901760
  %365 = vmatpush1.msra.mxu0 %v364
  %366 = vmatprep.subr.mxu0 0.0
  %v367 = vand.u32 %v49, 4294901760
  %v368 = vsub.f32 %v49, %v367
  %v369 = vand.u32 %v368, 4294901760
  %v370 = vsub.f32 %v368, %v369
  %v371 = vand.u32 %v370, 4294901760
  %372 = vmatpush1.msra.mxu0 %v371
  %373 = vmatprep.subr.mxu0 0.0
  %v374 = vand.u32 %v50, 4294901760
  %v375 = vsub.f32 %v50, %v374
  %v376 = vand.u32 %v375, 4294901760
  %v377 = vsub.f32 %v375, %v376
  %v378 = vand.u32 %v377, 4294901760
  %379 = vmatpush1.msra.mxu0 %v378
  %380 = vmatprep.subr.mxu0 0.0
  %v381 = vand.u32 %v51, 4294901760
  %v382 = vsub.f32 %v51, %v381
  %v383 = vand.u32 %v382, 4294901760
  %v384 = vsub.f32 %v382, %v383
  %v385 = vand.u32 %v384, 4294901760
  %386 = vmatpush1.msra.mxu0 %v385
  %387 = vmatprep.subr.mxu0 0.0
  %v388 = vand.u32 %v52, 4294901760
  %v389 = vsub.f32 %v52, %v388
  %v390 = vand.u32 %v389, 4294901760
  %v391 = vsub.f32 %v389, %v390
  %v392 = vand.u32 %v391, 4294901760
  %393 = vmatpush1.msra.mxu0 %v392
  %394 = vmatprep.subr.mxu0 0.0
  %v395 = vand.u32 %v53, 4294901760
  %v396 = vsub.f32 %v53, %v395
  %v397 = vand.u32 %v396, 4294901760
  %v398 = vsub.f32 %v396, %v397
  %v399 = vand.u32 %v398, 4294901760
  %400 = vmatpush1.msra.mxu0 %v399
  %401 = vmatprep.subr.mxu0 0.0
  %v402 = vand.u32 %v54, 4294901760
  %v403 = vsub.f32 %v54, %v402
  %v404 = vand.u32 %v403, 4294901760
  %v405 = vsub.f32 %v403, %v404
  %v406 = vand.u32 %v405, 4294901760
  %407 = vmatpush1.msra.mxu0 %v406
  %408 = vmatprep.subr.mxu0 0.0
  %v409 = vand.u32 %v55, 4294901760
  %v410 = vsub.f32 %v55, %v409
  %v411 = vand.u32 %v410, 4294901760
  %v412 = vsub.f32 %v410, %v411
  %v413 = vand.u32 %v412, 4294901760
  %414 = vmatpush1.msra.mxu0 %v413
  %415 = vmatprep.subr.mxu0 0.0
  %v416 = vand.u32 %v56, 4294901760
  %v417 = vsub.f32 %v56, %v416
  %v418 = vand.u32 %v417, 4294901760
  %v419 = vsub.f32 %v417, %v418
  %v420 = vand.u32 %v419, 4294901760
  %421 = vmatpush1.msra.mxu0 %v420
  %422 = vmatprep.subr.mxu0 0.0
  %v423 = vand.u32 %v57, 4294901760
  %v424 = vsub.f32 %v57, %v423
  %v425 = vand.u32 %v424, 4294901760
  %v426 = vsub.f32 %v424, %v425
  %v427 = vand.u32 %v426, 4294901760
  %428 = vmatpush1.msra.mxu0 %v427
  %429 = vmatprep.subr.mxu0 0.0
  %v430 = vand.u32 %v58, 4294901760
  %v431 = vsub.f32 %v58, %v430
  %v432 = vand.u32 %v431, 4294901760
  %v433 = vsub.f32 %v431, %v432
  %v434 = vand.u32 %v433, 4294901760
  %435 = vmatpush1.msra.mxu0 %v434
  %436 = vmatprep.subr.mxu0 0.0
  %v437 = vand.u32 %v59, 4294901760
  %v438 = vsub.f32 %v59, %v437
  %v439 = vand.u32 %v438, 4294901760
  %v440 = vsub.f32 %v438, %v439
  %v441 = vand.u32 %v440, 4294901760
  %442 = vmatpush1.msra.mxu0 %v441
  %443 = vmatprep.subr.mxu0 0.0
  %v444 = vand.u32 %v60, 4294901760
  %v445 = vsub.f32 %v60, %v444
  %v446 = vand.u32 %v445, 4294901760
  %v447 = vsub.f32 %v445, %v446
  %v448 = vand.u32 %v447, 4294901760
  %449 = vmatpush1.msra.mxu0 %v448
  %450 = vmatprep.subr.mxu0 0.0
  %v451 = vand.u32 %v61, 4294901760
  %v452 = vsub.f32 %v61, %v451
  %v453 = vand.u32 %v452, 4294901760
  %v454 = vsub.f32 %v452, %v453
  %v455 = vand.u32 %v454, 4294901760
  %456 = vmatpush1.msra.mxu0 %v455
  %457 = vmatprep.subr.mxu0 0.0
  %v458 = vand.u32 %v62, 4294901760
  %v459 = vsub.f32 %v62, %v458
  %v460 = vand.u32 %v459, 4294901760
  %v461 = vsub.f32 %v459, %v460
  %v462 = vand.u32 %v461, 4294901760
  %463 = vmatpush1.msra.mxu0 %v462
  %464 = vmatprep.subr.mxu0 0.0
  %v465 = vand.u32 %v63, 4294901760
  %v466 = vsub.f32 %v63, %v465
  %v467 = vand.u32 %v466, 4294901760
  %v468 = vsub.f32 %v466, %v467
  %v469 = vand.u32 %v468, 4294901760
  %470 = vmatpush1.msra.mxu0 %v469
  %471 = vmatprep.subr.mxu0 0.0
  %v472 = vand.u32 %v64, 4294901760
  %v473 = vsub.f32 %v64, %v472
  %v474 = vand.u32 %v473, 4294901760
  %v475 = vsub.f32 %v473, %v474
  %v476 = vand.u32 %v475, 4294901760
  %477 = vmatpush1.msra.mxu0 %v476
  %v478 = vand.u32 %v27, 4294901760
  %479 = vmatprep.mubr.f32.mxu0 %v478
  %v480 = vand.u32 %v26, 4294901760
  %481 = vmatmul.mubr.f32.gmra.mrb[0].mxu0 %v480
  %v482 = vpop.f32.mrb[0].mxu0
  %v483 = vadd.f32 %v251, %v482
  %v484 = vpop.f32.mrb[0].mxu0
  %485 = vdwg.mxu0
  %486 = vmatprep.subr.mxu0 0.0
  %v487 = vand.u32 %v33, 4294901760
  %v488 = vsub.f32 %v33, %v487
  %489 = vmatpush1.msra.mxu0 %v488
  %490 = vmatprep.subr.mxu0 0.0
  %v491 = vand.u32 %v34, 4294901760
  %v492 = vsub.f32 %v34, %v491
  %493 = vmatpush1.msra.mxu0 %v492
  %494 = vmatprep.subr.mxu0 0.0
  %v495 = vand.u32 %v35, 4294901760
  %v496 = vsub.f32 %v35, %v495
  %497 = vmatpush1.msra.mxu0 %v496
  %498 = vmatprep.subr.mxu0 0.0
  %v499 = vand.u32 %v36, 4294901760
  %v500 = vsub.f32 %v36, %v499
  %501 = vmatpush1.msra.mxu0 %v500
  %502 = vmatprep.subr.mxu0 0.0
  %v503 = vand.u32 %v37, 4294901760
  %v504 = vsub.f32 %v37, %v503
  %505 = vmatpush1.msra.mxu0 %v504
  %506 = vmatprep.subr.mxu0 0.0
  %v507 = vand.u32 %v38, 4294901760
  %v508 = vsub.f32 %v38, %v507
  %509 = vmatpush1.msra.mxu0 %v508
  %510 = vmatprep.subr.mxu0 0.0
  %v511 = vand.u32 %v39, 4294901760
  %v512 = vsub.f32 %v39, %v511
  %513 = vmatpush1.msra.mxu0 %v512
  %514 = vmatprep.subr.mxu0 0.0
  %v515 = vand.u32 %v40, 4294901760
  %v516 = vsub.f32 %v40, %v515
  %517 = vmatpush1.msra.mxu0 %v516
  %518 = vmatprep.subr.mxu0 0.0
  %v519 = vand.u32 %v41, 4294901760
  %v520 = vsub.f32 %v41, %v519
  %521 = vmatpush1.msra.mxu0 %v520
  %522 = vmatprep.subr.mxu0 0.0
  %v523 = vand.u32 %v42, 4294901760
  %v524 = vsub.f32 %v42, %v523
  %525 = vmatpush1.msra.mxu0 %v524
  %526 = vmatprep.subr.mxu0 0.0
  %v527 = vand.u32 %v43, 4294901760
  %v528 = vsub.f32 %v43, %v527
  %529 = vmatpush1.msra.mxu0 %v528
  %530 = vmatprep.subr.mxu0 0.0
  %v531 = vand.u32 %v44, 4294901760
  %v532 = vsub.f32 %v44, %v531
  %533 = vmatpush1.msra.mxu0 %v532
  %534 = vmatprep.subr.mxu0 0.0
  %v535 = vand.u32 %v45, 4294901760
  %v536 = vsub.f32 %v45, %v535
  %537 = vmatpush1.msra.mxu0 %v536
  %538 = vmatprep.subr.mxu0 0.0
  %v539 = vand.u32 %v46, 4294901760
  %v540 = vsub.f32 %v46, %v539
  %541 = vmatpush1.msra.mxu0 %v540
  %542 = vmatprep.subr.mxu0 0.0
  %v543 = vand.u32 %v47, 4294901760
  %v544 = vsub.f32 %v47, %v543
  %545 = vmatpush1.msra.mxu0 %v544
  %546 = vmatprep.subr.mxu0 0.0
  %v547 = vand.u32 %v48, 4294901760
  %v548 = vsub.f32 %v48, %v547
  %549 = vmatpush1.msra.mxu0 %v548
  %550 = vmatprep.subr.mxu0 0.0
  %v551 = vand.u32 %v49, 4294901760
  %v552 = vsub.f32 %v49, %v551
  %553 = vmatpush1.msra.mxu0 %v552
  %554 = vmatprep.subr.mxu0 0.0
  %v555 = vand.u32 %v50, 4294901760
  %v556 = vsub.f32 %v50, %v555
  %557 = vmatpush1.msra.mxu0 %v556
  %558 = vmatprep.subr.mxu0 0.0
  %v559 = vand.u32 %v51, 4294901760
  %v560 = vsub.f32 %v51, %v559
  %561 = vmatpush1.msra.mxu0 %v560
  %562 = vmatprep.subr.mxu0 0.0
  %v563 = vand.u32 %v52, 4294901760
  %v564 = vsub.f32 %v52, %v563
  %565 = vmatpush1.msra.mxu0 %v564
  %566 = vmatprep.subr.mxu0 0.0
  %v567 = vand.u32 %v53, 4294901760
  %v568 = vsub.f32 %v53, %v567
  %569 = vmatpush1.msra.mxu0 %v568
  %570 = vmatprep.subr.mxu0 0.0
  %v571 = vand.u32 %v54, 4294901760
  %v572 = vsub.f32 %v54, %v571
  %573 = vmatpush1.msra.mxu0 %v572
  %574 = vmatprep.subr.mxu0 0.0
  %v575 = vand.u32 %v55, 4294901760
  %v576 = vsub.f32 %v55, %v575
  %577 = vmatpush1.msra.mxu0 %v576
  %578 = vmatprep.subr.mxu0 0.0
  %v579 = vand.u32 %v56, 4294901760
  %v580 = vsub.f32 %v56, %v579
  %581 = vmatpush1.msra.mxu0 %v580
  %582 = vmatprep.subr.mxu0 0.0
  %v583 = vand.u32 %v57, 4294901760
  %v584 = vsub.f32 %v57, %v583
  %585 = vmatpush1.msra.mxu0 %v584
  %586 = vmatprep.subr.mxu0 0.0
  %v587 = vand.u32 %v58, 4294901760
  %v588 = vsub.f32 %v58, %v587
  %589 = vmatpush1.msra.mxu0 %v588
  %590 = vmatprep.subr.mxu0 0.0
  %v591 = vand.u32 %v59, 4294901760
  %v592 = vsub.f32 %v59, %v591
  %593 = vmatpush1.msra.mxu0 %v592
  %594 = vmatprep.subr.mxu0 0.0
  %v595 = vand.u32 %v60, 4294901760
  %v596 = vsub.f32 %v60, %v595
  %597 = vmatpush1.msra.mxu0 %v596
  %598 = vmatprep.subr.mxu0 0.0
  %v599 = vand.u32 %v61, 4294901760
  %v600 = vsub.f32 %v61, %v599
  %601 = vmatpush1.msra.mxu0 %v600
  %602 = vmatprep.subr.mxu0 0.0
  %v603 = vand.u32 %v62, 4294901760
  %v604 = vsub.f32 %v62, %v603
  %605 = vmatpush1.msra.mxu0 %v604
  %606 = vmatprep.subr.mxu0 0.0
  %v607 = vand.u32 %v63, 4294901760
  %v608 = vsub.f32 %v63, %v607
  %609 = vmatpush1.msra.mxu0 %v608
  %610 = vmatprep.subr.mxu0 0.0
  %v611 = vand.u32 %v64, 4294901760
  %v612 = vsub.f32 %v64, %v611
  %613 = vmatpush1.msra.mxu0 %v612
  %v614 = vand.u32 %v27, 4294901760
  %v615 = vsub.f32 %v27, %v614
  %616 = vmatprep.mubr.f32.mxu0 %v615
  %v617 = vand.u32 %v26, 4294901760
  %v618 = vsub.f32 %v26, %v617
  %619 = vmatmul.mubr.f32.gmra.mrb[0].mxu0 %v618
  %v620 = vpop.f32.mrb[0].mxu0
  %v621 = vadd.f32 %v483, %v620
  %v622 = vpop.f32.mrb[0].mxu0
  %623 = vdwg.mxu0
  %624 = vmatprep.subr.mxu0 0.0
  %v625 = vand.u32 %v33, 4294901760
  %626 = vmatpush1.msra.mxu0 %v625
  %627 = vmatprep.subr.mxu0 0.0
  %v628 = vand.u32 %v34, 4294901760
  %629 = vmatpush1.msra.mxu0 %v628
  %630 = vmatprep.subr.mxu0 0.0
  %v631 = vand.u32 %v35, 4294901760
  %632 = vmatpush1.msra.mxu0 %v631
  %633 = vmatprep.subr.mxu0 0.0
  %v634 = vand.u32 %v36, 4294901760
  %635 = vmatpush1.msra.mxu0 %v634
  %636 = vmatprep.subr.mxu0 0.0
  %v637 = vand.u32 %v37, 4294901760
  %638 = vmatpush1.msra.mxu0 %v637
  %639 = vmatprep.subr.mxu0 0.0
  %v640 = vand.u32 %v38, 4294901760
  %641 = vmatpush1.msra.mxu0 %v640
  %642 = vmatprep.subr.mxu0 0.0
  %v643 = vand.u32 %v39, 4294901760
  %644 = vmatpush1.msra.mxu0 %v643
  %645 = vmatprep.subr.mxu0 0.0
  %v646 = vand.u32 %v40, 4294901760
  %647 = vmatpush1.msra.mxu0 %v646
  %648 = vmatprep.subr.mxu0 0.0
  %v649 = vand.u32 %v41, 4294901760
  %650 = vmatpush1.msra.mxu0 %v649
  %651 = vmatprep.subr.mxu0 0.0
  %v652 = vand.u32 %v42, 4294901760
  %653 = vmatpush1.msra.mxu0 %v652
  %654 = vmatprep.subr.mxu0 0.0
  %v655 = vand.u32 %v43, 4294901760
  %656 = vmatpush1.msra.mxu0 %v655
  %657 = vmatprep.subr.mxu0 0.0
  %v658 = vand.u32 %v44, 4294901760
  %659 = vmatpush1.msra.mxu0 %v658
  %660 = vmatprep.subr.mxu0 0.0
  %v661 = vand.u32 %v45, 4294901760
  %662 = vmatpush1.msra.mxu0 %v661
  %663 = vmatprep.subr.mxu0 0.0
  %v664 = vand.u32 %v46, 4294901760
  %665 = vmatpush1.msra.mxu0 %v664
  %666 = vmatprep.subr.mxu0 0.0
  %v667 = vand.u32 %v47, 4294901760
  %668 = vmatpush1.msra.mxu0 %v667
  %669 = vmatprep.subr.mxu0 0.0
  %v670 = vand.u32 %v48, 4294901760
  %671 = vmatpush1.msra.mxu0 %v670
  %672 = vmatprep.subr.mxu0 0.0
  %v673 = vand.u32 %v49, 4294901760
  %674 = vmatpush1.msra.mxu0 %v673
  %675 = vmatprep.subr.mxu0 0.0
  %v676 = vand.u32 %v50, 4294901760
  %677 = vmatpush1.msra.mxu0 %v676
  %678 = vmatprep.subr.mxu0 0.0
  %v679 = vand.u32 %v51, 4294901760
  %680 = vmatpush1.msra.mxu0 %v679
  %681 = vmatprep.subr.mxu0 0.0
  %v682 = vand.u32 %v52, 4294901760
  %683 = vmatpush1.msra.mxu0 %v682
  %684 = vmatprep.subr.mxu0 0.0
  %v685 = vand.u32 %v53, 4294901760
  %686 = vmatpush1.msra.mxu0 %v685
  %687 = vmatprep.subr.mxu0 0.0
  %v688 = vand.u32 %v54, 4294901760
  %689 = vmatpush1.msra.mxu0 %v688
  %690 = vmatprep.subr.mxu0 0.0
  %v691 = vand.u32 %v55, 4294901760
  %692 = vmatpush1.msra.mxu0 %v691
  %693 = vmatprep.subr.mxu0 0.0
  %v694 = vand.u32 %v56, 4294901760
  %695 = vmatpush1.msra.mxu0 %v694
  %696 = vmatprep.subr.mxu0 0.0
  %v697 = vand.u32 %v57, 4294901760
  %698 = vmatpush1.msra.mxu0 %v697
  %699 = vmatprep.subr.mxu0 0.0
  %v700 = vand.u32 %v58, 4294901760
  %701 = vmatpush1.msra.mxu0 %v700
  %702 = vmatprep.subr.mxu0 0.0
  %v703 = vand.u32 %v59, 4294901760
  %704 = vmatpush1.msra.mxu0 %v703
  %705 = vmatprep.subr.mxu0 0.0
  %v706 = vand.u32 %v60, 4294901760
  %707 = vmatpush1.msra.mxu0 %v706
  %708 = vmatprep.subr.mxu0 0.0
  %v709 = vand.u32 %v61, 4294901760
  %710 = vmatpush1.msra.mxu0 %v709
  %711 = vmatprep.subr.mxu0 0.0
  %v712 = vand.u32 %v62, 4294901760
  %713 = vmatpush1.msra.mxu0 %v712
  %714 = vmatprep.subr.mxu0 0.0
  %v715 = vand.u32 %v63, 4294901760
  %716 = vmatpush1.msra.mxu0 %v715
  %717 = vmatprep.subr.mxu0 0.0
  %v718 = vand.u32 %v64, 4294901760
  %719 = vmatpush1.msra.mxu0 %v718
  %v720 = vand.u32 %v27, 4294901760
  %v721 = vsub.f32 %v27, %v720
  %v722 = vand.u32 %v721, 4294901760
  %723 = vmatprep.mubr.f32.mxu0 %v722
  %v724 = vand.u32 %v26, 4294901760
  %v725 = vsub.f32 %v26, %v724
  %v726 = vand.u32 %v725, 4294901760
  %727 = vmatmul.mubr.f32.gmra.mrb[0].mxu0 %v726
  %v728 = vpop.f32.mrb[0].mxu0
  %v729 = vadd.f32 %v621, %v728
  %v730 = vpop.f32.mrb[0].mxu0
  %731 = vdwg.mxu0
  %732 = vmatprep.subr.mxu0 0.0
  %v733 = vand.u32 %v33, 4294901760
  %v734 = vsub.f32 %v33, %v733
  %v735 = vand.u32 %v734, 4294901760
  %736 = vmatpush1.msra.mxu0 %v735
  %737 = vmatprep.subr.mxu0 0.0
  %v738 = vand.u32 %v34, 4294901760
  %v739 = vsub.f32 %v34, %v738
  %v740 = vand.u32 %v739, 4294901760
  %741 = vmatpush1.msra.mxu0 %v740
  %742 = vmatprep.subr.mxu0 0.0
  %v743 = vand.u32 %v35, 4294901760
  %v744 = vsub.f32 %v35, %v743
  %v745 = vand.u32 %v744, 4294901760
  %746 = vmatpush1.msra.mxu0 %v745
  %747 = vmatprep.subr.mxu0 0.0
  %v748 = vand.u32 %v36, 4294901760
  %v749 = vsub.f32 %v36, %v748
  %v750 = vand.u32 %v749, 4294901760
  %751 = vmatpush1.msra.mxu0 %v750
  %752 = vmatprep.subr.mxu0 0.0
  %v753 = vand.u32 %v37, 4294901760
  %v754 = vsub.f32 %v37, %v753
  %v755 = vand.u32 %v754, 4294901760
  %756 = vmatpush1.msra.mxu0 %v755
  %757 = vmatprep.subr.mxu0 0.0
  %v758 = vand.u32 %v38, 4294901760
  %v759 = vsub.f32 %v38, %v758
  %v760 = vand.u32 %v759, 4294901760
  %761 = vmatpush1.msra.mxu0 %v760
  %762 = vmatprep.subr.mxu0 0.0
  %v763 = vand.u32 %v39, 4294901760
  %v764 = vsub.f32 %v39, %v763
  %v765 = vand.u32 %v764, 4294901760
  %766 = vmatpush1.msra.mxu0 %v765
  %767 = vmatprep.subr.mxu0 0.0
  %v768 = vand.u32 %v40, 4294901760
  %v769 = vsub.f32 %v40, %v768
  %v770 = vand.u32 %v769, 4294901760
  %771 = vmatpush1.msra.mxu0 %v770
  %772 = vmatprep.subr.mxu0 0.0
  %v773 = vand.u32 %v41, 4294901760
  %v774 = vsub.f32 %v41, %v773
  %v775 = vand.u32 %v774, 4294901760
  %776 = vmatpush1.msra.mxu0 %v775
  %777 = vmatprep.subr.mxu0 0.0
  %v778 = vand.u32 %v42, 4294901760
  %v779 = vsub.f32 %v42, %v778
  %v780 = vand.u32 %v779, 4294901760
  %781 = vmatpush1.msra.mxu0 %v780
  %782 = vmatprep.subr.mxu0 0.0
  %v783 = vand.u32 %v43, 4294901760
  %v784 = vsub.f32 %v43, %v783
  %v785 = vand.u32 %v784, 4294901760
  %786 = vmatpush1.msra.mxu0 %v785
  %787 = vmatprep.subr.mxu0 0.0
  %v788 = vand.u32 %v44, 4294901760
  %v789 = vsub.f32 %v44, %v788
  %v790 = vand.u32 %v789, 4294901760
  %791 = vmatpush1.msra.mxu0 %v790
  %792 = vmatprep.subr.mxu0 0.0
  %v793 = vand.u32 %v45, 4294901760
  %v794 = vsub.f32 %v45, %v793
  %v795 = vand.u32 %v794, 4294901760
  %796 = vmatpush1.msra.mxu0 %v795
  %797 = vmatprep.subr.mxu0 0.0
  %v798 = vand.u32 %v46, 4294901760
  %v799 = vsub.f32 %v46, %v798
  %v800 = vand.u32 %v799, 4294901760
  %801 = vmatpush1.msra.mxu0 %v800
  %802 = vmatprep.subr.mxu0 0.0
  %v803 = vand.u32 %v47, 4294901760
  %v804 = vsub.f32 %v47, %v803
  %v805 = vand.u32 %v804, 4294901760
  %806 = vmatpush1.msra.mxu0 %v805
  %807 = vmatprep.subr.mxu0 0.0
  %v808 = vand.u32 %v48, 4294901760
  %v809 = vsub.f32 %v48, %v808
  %v810 = vand.u32 %v809, 4294901760
  %811 = vmatpush1.msra.mxu0 %v810
  %812 = vmatprep.subr.mxu0 0.0
  %v813 = vand.u32 %v49, 4294901760
  %v814 = vsub.f32 %v49, %v813
  %v815 = vand.u32 %v814, 4294901760
  %816 = vmatpush1.msra.mxu0 %v815
  %817 = vmatprep.subr.mxu0 0.0
  %v818 = vand.u32 %v50, 4294901760
  %v819 = vsub.f32 %v50, %v818
  %v820 = vand.u32 %v819, 4294901760
  %821 = vmatpush1.msra.mxu0 %v820
  %822 = vmatprep.subr.mxu0 0.0
  %v823 = vand.u32 %v51, 4294901760
  %v824 = vsub.f32 %v51, %v823
  %v825 = vand.u32 %v824, 4294901760
  %826 = vmatpush1.msra.mxu0 %v825
  %827 = vmatprep.subr.mxu0 0.0
  %v828 = vand.u32 %v52, 4294901760
  %v829 = vsub.f32 %v52, %v828
  %v830 = vand.u32 %v829, 4294901760
  %831 = vmatpush1.msra.mxu0 %v830
  %832 = vmatprep.subr.mxu0 0.0
  %v833 = vand.u32 %v53, 4294901760
  %v834 = vsub.f32 %v53, %v833
  %v835 = vand.u32 %v834, 4294901760
  %836 = vmatpush1.msra.mxu0 %v835
  %837 = vmatprep.subr.mxu0 0.0
  %v838 = vand.u32 %v54, 4294901760
  %v839 = vsub.f32 %v54, %v838
  %v840 = vand.u32 %v839, 4294901760
  %841 = vmatpush1.msra.mxu0 %v840
  %842 = vmatprep.subr.mxu0 0.0
  %v843 = vand.u32 %v55, 4294901760
  %v844 = vsub.f32 %v55, %v843
  %v845 = vand.u32 %v844, 4294901760
  %846 = vmatpush1.msra.mxu0 %v845
  %847 = vmatprep.subr.mxu0 0.0
  %v848 = vand.u32 %v56, 4294901760
  %v849 = vsub.f32 %v56, %v848
  %v850 = vand.u32 %v849, 4294901760
  %851 = vmatpush1.msra.mxu0 %v850
  %852 = vmatprep.subr.mxu0 0.0
  %v853 = vand.u32 %v57, 4294901760
  %v854 = vsub.f32 %v57, %v853
  %v855 = vand.u32 %v854, 4294901760
  %856 = vmatpush1.msra.mxu0 %v855
  %857 = vmatprep.subr.mxu0 0.0
  %v858 = vand.u32 %v58, 4294901760
  %v859 = vsub.f32 %v58, %v858
  %v860 = vand.u32 %v859, 4294901760
  %861 = vmatpush1.msra.mxu0 %v860
  %862 = vmatprep.subr.mxu0 0.0
  %v863 = vand.u32 %v59, 4294901760
  %v864 = vsub.f32 %v59, %v863
  %v865 = vand.u32 %v864, 4294901760
  %866 = vmatpush1.msra.mxu0 %v865
  %867 = vmatprep.subr.mxu0 0.0
  %v868 = vand.u32 %v60, 4294901760
  %v869 = vsub.f32 %v60, %v868
  %v870 = vand.u32 %v869, 4294901760
  %871 = vmatpush1.msra.mxu0 %v870
  %872 = vmatprep.subr.mxu0 0.0
  %v873 = vand.u32 %v61, 4294901760
  %v874 = vsub.f32 %v61, %v873
  %v875 = vand.u32 %v874, 4294901760
  %876 = vmatpush1.msra.mxu0 %v875
  %877 = vmatprep.subr.mxu0 0.0
  %v878 = vand.u32 %v62, 4294901760
  %v879 = vsub.f32 %v62, %v878
  %v880 = vand.u32 %v879, 4294901760
  %881 = vmatpush1.msra.mxu0 %v880
  %882 = vmatprep.subr.mxu0 0.0
  %v883 = vand.u32 %v63, 4294901760
  %v884 = vsub.f32 %v63, %v883
  %v885 = vand.u32 %v884, 4294901760
  %886 = vmatpush1.msra.mxu0 %v885
  %887 = vmatprep.subr.mxu0 0.0
  %v888 = vand.u32 %v64, 4294901760
  %v889 = vsub.f32 %v64, %v888
  %v890 = vand.u32 %v889, 4294901760
  %891 = vmatpush1.msra.mxu0 %v890
  %v892 = vand.u32 %v27, 4294901760
  %893 = vmatprep.mubr.f32.mxu0 %v892
  %v894 = vand.u32 %v26, 4294901760
  %895 = vmatmul.mubr.f32.gmra.mrb[0].mxu0 %v894
  %v896 = vpop.f32.mrb[0].mxu0
  %v897 = vadd.f32 %v729, %v896
  %v898 = vpop.f32.mrb[0].mxu0
  %899 = vdwg.mxu0
  %900 = vmatprep.subr.mxu0 0.0
  %v901 = vand.u32 %v33, 4294901760
  %902 = vmatpush1.msra.mxu0 %v901
  %903 = vmatprep.subr.mxu0 0.0
  %v904 = vand.u32 %v34, 4294901760
  %905 = vmatpush1.msra.mxu0 %v904
  %906 = vmatprep.subr.mxu0 0.0
  %v907 = vand.u32 %v35, 4294901760
  %908 = vmatpush1.msra.mxu0 %v907
  %909 = vmatprep.subr.mxu0 0.0
  %v910 = vand.u32 %v36, 4294901760
  %911 = vmatpush1.msra.mxu0 %v910
  %912 = vmatprep.subr.mxu0 0.0
  %v913 = vand.u32 %v37, 4294901760
  %914 = vmatpush1.msra.mxu0 %v913
  %915 = vmatprep.subr.mxu0 0.0
  %v916 = vand.u32 %v38, 4294901760
  %917 = vmatpush1.msra.mxu0 %v916
  %918 = vmatprep.subr.mxu0 0.0
  %v919 = vand.u32 %v39, 4294901760
  %920 = vmatpush1.msra.mxu0 %v919
  %921 = vmatprep.subr.mxu0 0.0
  %v922 = vand.u32 %v40, 4294901760
  %923 = vmatpush1.msra.mxu0 %v922
  %924 = vmatprep.subr.mxu0 0.0
  %v925 = vand.u32 %v41, 4294901760
  %926 = vmatpush1.msra.mxu0 %v925
  %927 = vmatprep.subr.mxu0 0.0
  %v928 = vand.u32 %v42, 4294901760
  %929 = vmatpush1.msra.mxu0 %v928
  %930 = vmatprep.subr.mxu0 0.0
  %v931 = vand.u32 %v43, 4294901760
  %932 = vmatpush1.msra.mxu0 %v931
  %933 = vmatprep.subr.mxu0 0.0
  %v934 = vand.u32 %v44, 4294901760
  %935 = vmatpush1.msra.mxu0 %v934
  %936 = vmatprep.subr.mxu0 0.0
  %v937 = vand.u32 %v45, 4294901760
  %938 = vmatpush1.msra.mxu0 %v937
  %939 = vmatprep.subr.mxu0 0.0
  %v940 = vand.u32 %v46, 4294901760
  %941 = vmatpush1.msra.mxu0 %v940
  %942 = vmatprep.subr.mxu0 0.0
  %v943 = vand.u32 %v47, 4294901760
  %944 = vmatpush1.msra.mxu0 %v943
  %945 = vmatprep.subr.mxu0 0.0
  %v946 = vand.u32 %v48, 4294901760
  %947 = vmatpush1.msra.mxu0 %v946
  %948 = vmatprep.subr.mxu0 0.0
  %v949 = vand.u32 %v49, 4294901760
  %950 = vmatpush1.msra.mxu0 %v949
  %951 = vmatprep.subr.mxu0 0.0
  %v952 = vand.u32 %v50, 4294901760
  %953 = vmatpush1.msra.mxu0 %v952
  %954 = vmatprep.subr.mxu0 0.0
  %v955 = vand.u32 %v51, 4294901760
  %956 = vmatpush1.msra.mxu0 %v955
  %957 = vmatprep.subr.mxu0 0.0
  %v958 = vand.u32 %v52, 4294901760
  %959 = vmatpush1.msra.mxu0 %v958
  %960 = vmatprep.subr.mxu0 0.0
  %v961 = vand.u32 %v53, 4294901760
  %962 = vmatpush1.msra.mxu0 %v961
  %963 = vmatprep.subr.mxu0 0.0
  %v964 = vand.u32 %v54, 4294901760
  %965 = vmatpush1.msra.mxu0 %v964
  %966 = vmatprep.subr.mxu0 0.0
  %v967 = vand.u32 %v55, 4294901760
  %968 = vmatpush1.msra.mxu0 %v967
  %969 = vmatprep.subr.mxu0 0.0
  %v970 = vand.u32 %v56, 4294901760
  %971 = vmatpush1.msra.mxu0 %v970
  %972 = vmatprep.subr.mxu0 0.0
  %v973 = vand.u32 %v57, 4294901760
  %974 = vmatpush1.msra.mxu0 %v973
  %975 = vmatprep.subr.mxu0 0.0
  %v976 = vand.u32 %v58, 4294901760
  %977 = vmatpush1.msra.mxu0 %v976
  %978 = vmatprep.subr.mxu0 0.0
  %v979 = vand.u32 %v59, 4294901760
  %980 = vmatpush1.msra.mxu0 %v979
  %981 = vmatprep.subr.mxu0 0.0
  %v982 = vand.u32 %v60, 4294901760
  %983 = vmatpush1.msra.mxu0 %v982
  %984 = vmatprep.subr.mxu0 0.0
  %v985 = vand.u32 %v61, 4294901760
  %986 = vmatpush1.msra.mxu0 %v985
  %987 = vmatprep.subr.mxu0 0.0
  %v988 = vand.u32 %v62, 4294901760
  %989 = vmatpush1.msra.mxu0 %v988
  %990 = vmatprep.subr.mxu0 0.0
  %v991 = vand.u32 %v63, 4294901760
  %992 = vmatpush1.msra.mxu0 %v991
  %993 = vmatprep.subr.mxu0 0.0
  %v994 = vand.u32 %v64, 4294901760
  %995 = vmatpush1.msra.mxu0 %v994
  %v996 = vand.u32 %v27, 4294901760
  %997 = vmatprep.mubr.f32.mxu0 %v996
  %v998 = vand.u32 %v26, 4294901760
  %999 = vmatmul.mubr.f32.gmra.mrb[0].mxu0 %v998
  %v1000 = vpop.f32.mrb[0].mxu0
  %v1001 = vadd.f32 %v897, %v1000
  %v1002 = vpop.f32.mrb[0].mxu0
  %1003 = vdwg.mxu0
  %1004 = vmatprep.subr.mxu0 0.0
  %v1005 = vand.u32 %v65, 4294901760
  %1006 = vmatpush1.msra.mxu0 %v1005
  %1007 = vmatprep.subr.mxu0 0.0
  %v1008 = vand.u32 %v66, 4294901760
  %1009 = vmatpush1.msra.mxu0 %v1008
  %1010 = vmatprep.subr.mxu0 0.0
  %v1011 = vand.u32 %v67, 4294901760
  %1012 = vmatpush1.msra.mxu0 %v1011
  %1013 = vmatprep.subr.mxu0 0.0
  %v1014 = vand.u32 %v68, 4294901760
  %1015 = vmatpush1.msra.mxu0 %v1014
  %1016 = vmatprep.subr.mxu0 0.0
  %v1017 = vand.u32 %v69, 4294901760
  %1018 = vmatpush1.msra.mxu0 %v1017
  %1019 = vmatprep.subr.mxu0 0.0
  %v1020 = vand.u32 %v70, 4294901760
  %1021 = vmatpush1.msra.mxu0 %v1020
  %1022 = vmatprep.subr.mxu0 0.0
  %v1023 = vand.u32 %v71, 4294901760
  %1024 = vmatpush1.msra.mxu0 %v1023
  %1025 = vmatprep.subr.mxu0 0.0
  %v1026 = vand.u32 %v72, 4294901760
  %1027 = vmatpush1.msra.mxu0 %v1026
  %1028 = vmatprep.subr.mxu0 0.0
  %v1029 = vand.u32 %v73, 4294901760
  %1030 = vmatpush1.msra.mxu0 %v1029
  %1031 = vmatprep.subr.mxu0 0.0
  %v1032 = vand.u32 %v74, 4294901760
  %1033 = vmatpush1.msra.mxu0 %v1032
  %1034 = vmatprep.subr.mxu0 0.0
  %v1035 = vand.u32 %v75, 4294901760
  %1036 = vmatpush1.msra.mxu0 %v1035
  %1037 = vmatprep.subr.mxu0 0.0
  %v1038 = vand.u32 %v76, 4294901760
  %1039 = vmatpush1.msra.mxu0 %v1038
  %1040 = vmatprep.subr.mxu0 0.0
  %v1041 = vand.u32 %v77, 4294901760
  %1042 = vmatpush1.msra.mxu0 %v1041
  %1043 = vmatprep.subr.mxu0 0.0
  %v1044 = vand.u32 %v78, 4294901760
  %1045 = vmatpush1.msra.mxu0 %v1044
  %1046 = vmatprep.subr.mxu0 0.0
  %v1047 = vand.u32 %v79, 4294901760
  %1048 = vmatpush1.msra.mxu0 %v1047
  %1049 = vmatprep.subr.mxu0 0.0
  %v1050 = vand.u32 %v80, 4294901760
  %1051 = vmatpush1.msra.mxu0 %v1050
  %1052 = vmatprep.subr.mxu0 0.0
  %v1053 = vand.u32 %v81, 4294901760
  %1054 = vmatpush1.msra.mxu0 %v1053
  %1055 = vmatprep.subr.mxu0 0.0
  %v1056 = vand.u32 %v82, 4294901760
  %1057 = vmatpush1.msra.mxu0 %v1056
  %1058 = vmatprep.subr.mxu0 0.0
  %v1059 = vand.u32 %v83, 4294901760
  %1060 = vmatpush1.msra.mxu0 %v1059
  %1061 = vmatprep.subr.mxu0 0.0
  %v1062 = vand.u32 %v84, 4294901760
  %1063 = vmatpush1.msra.mxu0 %v1062
  %1064 = vmatprep.subr.mxu0 0.0
  %v1065 = vand.u32 %v85, 4294901760
  %1066 = vmatpush1.msra.mxu0 %v1065
  %1067 = vmatprep.subr.mxu0 0.0
  %v1068 = vand.u32 %v86, 4294901760
  %1069 = vmatpush1.msra.mxu0 %v1068
  %1070 = vmatprep.subr.mxu0 0.0
  %v1071 = vand.u32 %v87, 4294901760
  %1072 = vmatpush1.msra.mxu0 %v1071
  %1073 = vmatprep.subr.mxu0 0.0
  %v1074 = vand.u32 %v88, 4294901760
  %1075 = vmatpush1.msra.mxu0 %v1074
  %1076 = vmatprep.subr.mxu0 0.0
  %v1077 = vand.u32 %v89, 4294901760
  %1078 = vmatpush1.msra.mxu0 %v1077
  %1079 = vmatprep.subr.mxu0 0.0
  %v1080 = vand.u32 %v90, 4294901760
  %1081 = vmatpush1.msra.mxu0 %v1080
  %1082 = vmatprep.subr.mxu0 0.0
  %v1083 = vand.u32 %v91, 4294901760
  %1084 = vmatpush1.msra.mxu0 %v1083
  %1085 = vmatprep.subr.mxu0 0.0
  %v1086 = vand.u32 %v92, 4294901760
  %1087 = vmatpush1.msra.mxu0 %v1086
  %1088 = vmatprep.subr.mxu0 0.0
  %v1089 = vand.u32 %v93, 4294901760
  %1090 = vmatpush1.msra.mxu0 %v1089
  %1091 = vmatprep.subr.mxu0 0.0
  %v1092 = vand.u32 %v94, 4294901760
  %1093 = vmatpush1.msra.mxu0 %v1092
  %1094 = vmatprep.subr.mxu0 0.0
  %v1095 = vand.u32 %v95, 4294901760
  %1096 = vmatpush1.msra.mxu0 %v1095
  %1097 = vmatprep.subr.mxu0 0.0
  %v1098 = vand.u32 %v96, 4294901760
  %1099 = vmatpush1.msra.mxu0 %v1098
  %v1100 = vand.u32 %v29, 4294901760
  %v1101 = vsub.f32 %v29, %v1100
  %v1102 = vand.u32 %v1101, 4294901760
  %v1103 = vsub.f32 %v1101, %v1102
  %v1104 = vand.u32 %v1103, 4294901760
  %1105 = vmatprep.mubr.f32.mxu0 %v1104
  %v1106 = vand.u32 %v28, 4294901760
  %v1107 = vsub.f32 %v28, %v1106
  %v1108 = vand.u32 %v1107, 4294901760
  %v1109 = vsub.f32 %v1107, %v1108
  %v1110 = vand.u32 %v1109, 4294901760
  %1111 = vmatmul.mubr.f32.gmra.mrb[0].mxu0 %v1110
  %v1112 = vpop.f32.mrb[0].mxu0
  %v1113 = vadd.f32 %v1001, %v1112
  %v1114 = vpop.f32.mrb[0].mxu0
  %1115 = vdwg.mxu0
  %1116 = vmatprep.subr.mxu0 0.0
  %v1117 = vand.u32 %v65, 4294901760
  %v1118 = vsub.f32 %v65, %v1117
  %v1119 = vand.u32 %v1118, 4294901760
  %v1120 = vsub.f32 %v1118, %v1119
  %v1121 = vand.u32 %v1120, 4294901760
  %1122 = vmatpush1.msra.mxu0 %v1121
  %1123 = vmatprep.subr.mxu0 0.0
  %v1124 = vand.u32 %v66, 4294901760
  %v1125 = vsub.f32 %v66, %v1124
  %v1126 = vand.u32 %v1125, 4294901760
  %v1127 = vsub.f32 %v1125, %v1126
  %v1128 = vand.u32 %v1127, 4294901760
  %1129 = vmatpush1.msra.mxu0 %v1128
  %1130 = vmatprep.subr.mxu0 0.0
  %v1131 = vand.u32 %v67, 4294901760
  %v1132 = vsub.f32 %v67, %v1131
  %v1133 = vand.u32 %v1132, 4294901760
  %v1134 = vsub.f32 %v1132, %v1133
  %v1135 = vand.u32 %v1134, 4294901760
  %1136 = vmatpush1.msra.mxu0 %v1135
  %1137 = vmatprep.subr.mxu0 0.0
  %v1138 = vand.u32 %v68, 4294901760
  %v1139 = vsub.f32 %v68, %v1138
  %v1140 = vand.u32 %v1139, 4294901760
  %v1141 = vsub.f32 %v1139, %v1140
  %v1142 = vand.u32 %v1141, 4294901760
  %1143 = vmatpush1.msra.mxu0 %v1142
  %1144 = vmatprep.subr.mxu0 0.0
  %v1145 = vand.u32 %v69, 4294901760
  %v1146 = vsub.f32 %v69, %v1145
  %v1147 = vand.u32 %v1146, 4294901760
  %v1148 = vsub.f32 %v1146, %v1147
  %v1149 = vand.u32 %v1148, 4294901760
  %1150 = vmatpush1.msra.mxu0 %v1149
  %1151 = vmatprep.subr.mxu0 0.0
  %v1152 = vand.u32 %v70, 4294901760
  %v1153 = vsub.f32 %v70, %v1152
  %v1154 = vand.u32 %v1153, 4294901760
  %v1155 = vsub.f32 %v1153, %v1154
  %v1156 = vand.u32 %v1155, 4294901760
  %1157 = vmatpush1.msra.mxu0 %v1156
  %1158 = vmatprep.subr.mxu0 0.0
  %v1159 = vand.u32 %v71, 4294901760
  %v1160 = vsub.f32 %v71, %v1159
  %v1161 = vand.u32 %v1160, 4294901760
  %v1162 = vsub.f32 %v1160, %v1161
  %v1163 = vand.u32 %v1162, 4294901760
  %1164 = vmatpush1.msra.mxu0 %v1163
  %1165 = vmatprep.subr.mxu0 0.0
  %v1166 = vand.u32 %v72, 4294901760
  %v1167 = vsub.f32 %v72, %v1166
  %v1168 = vand.u32 %v1167, 4294901760
  %v1169 = vsub.f32 %v1167, %v1168
  %v1170 = vand.u32 %v1169, 4294901760
  %1171 = vmatpush1.msra.mxu0 %v1170
  %1172 = vmatprep.subr.mxu0 0.0
  %v1173 = vand.u32 %v73, 4294901760
  %v1174 = vsub.f32 %v73, %v1173
  %v1175 = vand.u32 %v1174, 4294901760
  %v1176 = vsub.f32 %v1174, %v1175
  %v1177 = vand.u32 %v1176, 4294901760
  %1178 = vmatpush1.msra.mxu0 %v1177
  %1179 = vmatprep.subr.mxu0 0.0
  %v1180 = vand.u32 %v74, 4294901760
  %v1181 = vsub.f32 %v74, %v1180
  %v1182 = vand.u32 %v1181, 4294901760
  %v1183 = vsub.f32 %v1181, %v1182
  %v1184 = vand.u32 %v1183, 4294901760
  %1185 = vmatpush1.msra.mxu0 %v1184
  %1186 = vmatprep.subr.mxu0 0.0
  %v1187 = vand.u32 %v75, 4294901760
  %v1188 = vsub.f32 %v75, %v1187
  %v1189 = vand.u32 %v1188, 4294901760
  %v1190 = vsub.f32 %v1188, %v1189
  %v1191 = vand.u32 %v1190, 4294901760
  %1192 = vmatpush1.msra.mxu0 %v1191
  %1193 = vmatprep.subr.mxu0 0.0
  %v1194 = vand.u32 %v76, 4294901760
  %v1195 = vsub.f32 %v76, %v1194
  %v1196 = vand.u32 %v1195, 4294901760
  %v1197 = vsub.f32 %v1195, %v1196
  %v1198 = vand.u32 %v1197, 4294901760
  %1199 = vmatpush1.msra.mxu0 %v1198
  %1200 = vmatprep.subr.mxu0 0.0
  %v1201 = vand.u32 %v77, 4294901760
  %v1202 = vsub.f32 %v77, %v1201
  %v1203 = vand.u32 %v1202, 4294901760
  %v1204 = vsub.f32 %v1202, %v1203
  %v1205 = vand.u32 %v1204, 4294901760
  %1206 = vmatpush1.msra.mxu0 %v1205
  %1207 = vmatprep.subr.mxu0 0.0
  %v1208 = vand.u32 %v78, 4294901760
  %v1209 = vsub.f32 %v78, %v1208
  %v1210 = vand.u32 %v1209, 4294901760
  %v1211 = vsub.f32 %v1209, %v1210
  %v1212 = vand.u32 %v1211, 4294901760
  %1213 = vmatpush1.msra.mxu0 %v1212
  %1214 = vmatprep.subr.mxu0 0.0
  %v1215 = vand.u32 %v79, 4294901760
  %v1216 = vsub.f32 %v79, %v1215
  %v1217 = vand.u32 %v1216, 4294901760
  %v1218 = vsub.f32 %v1216, %v1217
  %v1219 = vand.u32 %v1218, 4294901760
  %1220 = vmatpush1.msra.mxu0 %v1219
  %1221 = vmatprep.subr.mxu0 0.0
  %v1222 = vand.u32 %v80, 4294901760
  %v1223 = vsub.f32 %v80, %v1222
  %v1224 = vand.u32 %v1223, 4294901760
  %v1225 = vsub.f32 %v1223, %v1224
  %v1226 = vand.u32 %v1225, 4294901760
  %1227 = vmatpush1.msra.mxu0 %v1226
  %1228 = vmatprep.subr.mxu0 0.0
  %v1229 = vand.u32 %v81, 4294901760
  %v1230 = vsub.f32 %v81, %v1229
  %v1231 = vand.u32 %v1230, 4294901760
  %v1232 = vsub.f32 %v1230, %v1231
  %v1233 = vand.u32 %v1232, 4294901760
  %1234 = vmatpush1.msra.mxu0 %v1233
  %1235 = vmatprep.subr.mxu0 0.0
  %v1236 = vand.u32 %v82, 4294901760
  %v1237 = vsub.f32 %v82, %v1236
  %v1238 = vand.u32 %v1237, 4294901760
  %v1239 = vsub.f32 %v1237, %v1238
  %v1240 = vand.u32 %v1239, 4294901760
  %1241 = vmatpush1.msra.mxu0 %v1240
  %1242 = vmatprep.subr.mxu0 0.0
  %v1243 = vand.u32 %v83, 4294901760
  %v1244 = vsub.f32 %v83, %v1243
  %v1245 = vand.u32 %v1244, 4294901760
  %v1246 = vsub.f32 %v1244, %v1245
  %v1247 = vand.u32 %v1246, 4294901760
  %1248 = vmatpush1.msra.mxu0 %v1247
  %1249 = vmatprep.subr.mxu0 0.0
  %v1250 = vand.u32 %v84, 4294901760
  %v1251 = vsub.f32 %v84, %v1250
  %v1252 = vand.u32 %v1251, 4294901760
  %v1253 = vsub.f32 %v1251, %v1252
  %v1254 = vand.u32 %v1253, 4294901760
  %1255 = vmatpush1.msra.mxu0 %v1254
  %1256 = vmatprep.subr.mxu0 0.0
  %v1257 = vand.u32 %v85, 4294901760
  %v1258 = vsub.f32 %v85, %v1257
  %v1259 = vand.u32 %v1258, 4294901760
  %v1260 = vsub.f32 %v1258, %v1259
  %v1261 = vand.u32 %v1260, 4294901760
  %1262 = vmatpush1.msra.mxu0 %v1261
  %1263 = vmatprep.subr.mxu0 0.0
  %v1264 = vand.u32 %v86, 4294901760
  %v1265 = vsub.f32 %v86, %v1264
  %v1266 = vand.u32 %v1265, 4294901760
  %v1267 = vsub.f32 %v1265, %v1266
  %v1268 = vand.u32 %v1267, 4294901760
  %1269 = vmatpush1.msra.mxu0 %v1268
  %1270 = vmatprep.subr.mxu0 0.0
  %v1271 = vand.u32 %v87, 4294901760
  %v1272 = vsub.f32 %v87, %v1271
  %v1273 = vand.u32 %v1272, 4294901760
  %v1274 = vsub.f32 %v1272, %v1273
  %v1275 = vand.u32 %v1274, 4294901760
  %1276 = vmatpush1.msra.mxu0 %v1275
  %1277 = vmatprep.subr.mxu0 0.0
  %v1278 = vand.u32 %v88, 4294901760
  %v1279 = vsub.f32 %v88, %v1278
  %v1280 = vand.u32 %v1279, 4294901760
  %v1281 = vsub.f32 %v1279, %v1280
  %v1282 = vand.u32 %v1281, 4294901760
  %1283 = vmatpush1.msra.mxu0 %v1282
  %1284 = vmatprep.subr.mxu0 0.0
  %v1285 = vand.u32 %v89, 4294901760
  %v1286 = vsub.f32 %v89, %v1285
  %v1287 = vand.u32 %v1286, 4294901760
  %v1288 = vsub.f32 %v1286, %v1287
  %v1289 = vand.u32 %v1288, 4294901760
  %1290 = vmatpush1.msra.mxu0 %v1289
  %1291 = vmatprep.subr.mxu0 0.0
  %v1292 = vand.u32 %v90, 4294901760
  %v1293 = vsub.f32 %v90, %v1292
  %v1294 = vand.u32 %v1293, 4294901760
  %v1295 = vsub.f32 %v1293, %v1294
  %v1296 = vand.u32 %v1295, 4294901760
  %1297 = vmatpush1.msra.mxu0 %v1296
  %1298 = vmatprep.subr.mxu0 0.0
  %v1299 = vand.u32 %v91, 4294901760
  %v1300 = vsub.f32 %v91, %v1299
  %v1301 = vand.u32 %v1300, 4294901760
  %v1302 = vsub.f32 %v1300, %v1301
  %v1303 = vand.u32 %v1302, 4294901760
  %1304 = vmatpush1.msra.mxu0 %v1303
  %1305 = vmatprep.subr.mxu0 0.0
  %v1306 = vand.u32 %v92, 4294901760
  %v1307 = vsub.f32 %v92, %v1306
  %v1308 = vand.u32 %v1307, 4294901760
  %v1309 = vsub.f32 %v1307, %v1308
  %v1310 = vand.u32 %v1309, 4294901760
  %1311 = vmatpush1.msra.mxu0 %v1310
  %1312 = vmatprep.subr.mxu0 0.0
  %v1313 = vand.u32 %v93, 4294901760
  %v1314 = vsub.f32 %v93, %v1313
  %v1315 = vand.u32 %v1314, 4294901760
  %v1316 = vsub.f32 %v1314, %v1315
  %v1317 = vand.u32 %v1316, 4294901760
  %1318 = vmatpush1.msra.mxu0 %v1317
  %1319 = vmatprep.subr.mxu0 0.0
  %v1320 = vand.u32 %v94, 4294901760
  %v1321 = vsub.f32 %v94, %v1320
  %v1322 = vand.u32 %v1321, 4294901760
  %v1323 = vsub.f32 %v1321, %v1322
  %v1324 = vand.u32 %v1323, 4294901760
  %1325 = vmatpush1.msra.mxu0 %v1324
  %1326 = vmatprep.subr.mxu0 0.0
  %v1327 = vand.u32 %v95, 4294901760
  %v1328 = vsub.f32 %v95, %v1327
  %v1329 = vand.u32 %v1328, 4294901760
  %v1330 = vsub.f32 %v1328, %v1329
  %v1331 = vand.u32 %v1330, 4294901760
  %1332 = vmatpush1.msra.mxu0 %v1331
  %1333 = vmatprep.subr.mxu0 0.0
  %v1334 = vand.u32 %v96, 4294901760
  %v1335 = vsub.f32 %v96, %v1334
  %v1336 = vand.u32 %v1335, 4294901760
  %v1337 = vsub.f32 %v1335, %v1336
  %v1338 = vand.u32 %v1337, 4294901760
  %1339 = vmatpush1.msra.mxu0 %v1338
  %v1340 = vand.u32 %v29, 4294901760
  %1341 = vmatprep.mubr.f32.mxu0 %v1340
  %v1342 = vand.u32 %v28, 4294901760
  %1343 = vmatmul.mubr.f32.gmra.mrb[0].mxu0 %v1342
  %v1344 = vpop.f32.mrb[0].mxu0
  %v1345 = vadd.f32 %v1113, %v1344
  %v1346 = vpop.f32.mrb[0].mxu0
  %1347 = vdwg.mxu0
  %1348 = vmatprep.subr.mxu0 0.0
  %v1349 = vand.u32 %v65, 4294901760
  %v1350 = vsub.f32 %v65, %v1349
  %1351 = vmatpush1.msra.mxu0 %v1350
  %1352 = vmatprep.subr.mxu0 0.0
  %v1353 = vand.u32 %v66, 4294901760
  %v1354 = vsub.f32 %v66, %v1353
  %1355 = vmatpush1.msra.mxu0 %v1354
  %1356 = vmatprep.subr.mxu0 0.0
  %v1357 = vand.u32 %v67, 4294901760
  %v1358 = vsub.f32 %v67, %v1357
  %1359 = vmatpush1.msra.mxu0 %v1358
  %1360 = vmatprep.subr.mxu0 0.0
  %v1361 = vand.u32 %v68, 4294901760
  %v1362 = vsub.f32 %v68, %v1361
  %1363 = vmatpush1.msra.mxu0 %v1362
  %1364 = vmatprep.subr.mxu0 0.0
  %v1365 = vand.u32 %v69, 4294901760
  %v1366 = vsub.f32 %v69, %v1365
  %1367 = vmatpush1.msra.mxu0 %v1366
  %1368 = vmatprep.subr.mxu0 0.0
  %v1369 = vand.u32 %v70, 4294901760
  %v1370 = vsub.f32 %v70, %v1369
  %1371 = vmatpush1.msra.mxu0 %v1370
  %1372 = vmatprep.subr.mxu0 0.0
  %v1373 = vand.u32 %v71, 4294901760
  %v1374 = vsub.f32 %v71, %v1373
  %1375 = vmatpush1.msra.mxu0 %v1374
  %1376 = vmatprep.subr.mxu0 0.0
  %v1377 = vand.u32 %v72, 4294901760
  %v1378 = vsub.f32 %v72, %v1377
  %1379 = vmatpush1.msra.mxu0 %v1378
  %1380 = vmatprep.subr.mxu0 0.0
  %v1381 = vand.u32 %v73, 4294901760
  %v1382 = vsub.f32 %v73, %v1381
  %1383 = vmatpush1.msra.mxu0 %v1382
  %1384 = vmatprep.subr.mxu0 0.0
  %v1385 = vand.u32 %v74, 4294901760
  %v1386 = vsub.f32 %v74, %v1385
  %1387 = vmatpush1.msra.mxu0 %v1386
  %1388 = vmatprep.subr.mxu0 0.0
  %v1389 = vand.u32 %v75, 4294901760
  %v1390 = vsub.f32 %v75, %v1389
  %1391 = vmatpush1.msra.mxu0 %v1390
  %1392 = vmatprep.subr.mxu0 0.0
  %v1393 = vand.u32 %v76, 4294901760
  %v1394 = vsub.f32 %v76, %v1393
  %1395 = vmatpush1.msra.mxu0 %v1394
  %1396 = vmatprep.subr.mxu0 0.0
  %v1397 = vand.u32 %v77, 4294901760
  %v1398 = vsub.f32 %v77, %v1397
  %1399 = vmatpush1.msra.mxu0 %v1398
  %1400 = vmatprep.subr.mxu0 0.0
  %v1401 = vand.u32 %v78, 4294901760
  %v1402 = vsub.f32 %v78, %v1401
  %1403 = vmatpush1.msra.mxu0 %v1402
  %1404 = vmatprep.subr.mxu0 0.0
  %v1405 = vand.u32 %v79, 4294901760
  %v1406 = vsub.f32 %v79, %v1405
  %1407 = vmatpush1.msra.mxu0 %v1406
  %1408 = vmatprep.subr.mxu0 0.0
  %v1409 = vand.u32 %v80, 4294901760
  %v1410 = vsub.f32 %v80, %v1409
  %1411 = vmatpush1.msra.mxu0 %v1410
  %1412 = vmatprep.subr.mxu0 0.0
  %v1413 = vand.u32 %v81, 4294901760
  %v1414 = vsub.f32 %v81, %v1413
  %1415 = vmatpush1.msra.mxu0 %v1414
  %1416 = vmatprep.subr.mxu0 0.0
  %v1417 = vand.u32 %v82, 4294901760
  %v1418 = vsub.f32 %v82, %v1417
  %1419 = vmatpush1.msra.mxu0 %v1418
  %1420 = vmatprep.subr.mxu0 0.0
  %v1421 = vand.u32 %v83, 4294901760
  %v1422 = vsub.f32 %v83, %v1421
  %1423 = vmatpush1.msra.mxu0 %v1422
  %1424 = vmatprep.subr.mxu0 0.0
  %v1425 = vand.u32 %v84, 4294901760
  %v1426 = vsub.f32 %v84, %v1425
  %1427 = vmatpush1.msra.mxu0 %v1426
  %1428 = vmatprep.subr.mxu0 0.0
  %v1429 = vand.u32 %v85, 4294901760
  %v1430 = vsub.f32 %v85, %v1429
  %1431 = vmatpush1.msra.mxu0 %v1430
  %1432 = vmatprep.subr.mxu0 0.0
  %v1433 = vand.u32 %v86, 4294901760
  %v1434 = vsub.f32 %v86, %v1433
  %1435 = vmatpush1.msra.mxu0 %v1434
  %1436 = vmatprep.subr.mxu0 0.0
  %v1437 = vand.u32 %v87, 4294901760
  %v1438 = vsub.f32 %v87, %v1437
  %1439 = vmatpush1.msra.mxu0 %v1438
  %1440 = vmatprep.subr.mxu0 0.0
  %v1441 = vand.u32 %v88, 4294901760
  %v1442 = vsub.f32 %v88, %v1441
  %1443 = vmatpush1.msra.mxu0 %v1442
  %1444 = vmatprep.subr.mxu0 0.0
  %v1445 = vand.u32 %v89, 4294901760
  %v1446 = vsub.f32 %v89, %v1445
  %1447 = vmatpush1.msra.mxu0 %v1446
  %1448 = vmatprep.subr.mxu0 0.0
  %v1449 = vand.u32 %v90, 4294901760
  %v1450 = vsub.f32 %v90, %v1449
  %1451 = vmatpush1.msra.mxu0 %v1450
  %1452 = vmatprep.subr.mxu0 0.0
  %v1453 = vand.u32 %v91, 4294901760
  %v1454 = vsub.f32 %v91, %v1453
  %1455 = vmatpush1.msra.mxu0 %v1454
  %1456 = vmatprep.subr.mxu0 0.0
  %v1457 = vand.u32 %v92, 4294901760
  %v1458 = vsub.f32 %v92, %v1457
  %1459 = vmatpush1.msra.mxu0 %v1458
  %1460 = vmatprep.subr.mxu0 0.0
  %v1461 = vand.u32 %v93, 4294901760
  %v1462 = vsub.f32 %v93, %v1461
  %1463 = vmatpush1.msra.mxu0 %v1462
  %1464 = vmatprep.subr.mxu0 0.0
  %v1465 = vand.u32 %v94, 4294901760
  %v1466 = vsub.f32 %v94, %v1465
  %1467 = vmatpush1.msra.mxu0 %v1466
  %1468 = vmatprep.subr.mxu0 0.0
  %v1469 = vand.u32 %v95, 4294901760
  %v1470 = vsub.f32 %v95, %v1469
  %1471 = vmatpush1.msra.mxu0 %v1470
  %1472 = vmatprep.subr.mxu0 0.0
  %v1473 = vand.u32 %v96, 4294901760
  %v1474 = vsub.f32 %v96, %v1473
  %1475 = vmatpush1.msra.mxu0 %v1474
  %v1476 = vand.u32 %v29, 4294901760
  %v1477 = vsub.f32 %v29, %v1476
  %1478 = vmatprep.mubr.f32.mxu0 %v1477
  %v1479 = vand.u32 %v28, 4294901760
  %v1480 = vsub.f32 %v28, %v1479
  %1481 = vmatmul.mubr.f32.gmra.mrb[0].mxu0 %v1480
  %v1482 = vpop.f32.mrb[0].mxu0
  %v1483 = vadd.f32 %v1345, %v1482
  %v1484 = vpop.f32.mrb[0].mxu0
  %1485 = vdwg.mxu0
  %1486 = vmatprep.subr.mxu0 0.0
  %v1487 = vand.u32 %v65, 4294901760
  %1488 = vmatpush1.msra.mxu0 %v1487
  %1489 = vmatprep.subr.mxu0 0.0
  %v1490 = vand.u32 %v66, 4294901760
  %1491 = vmatpush1.msra.mxu0 %v1490
  %1492 = vmatprep.subr.mxu0 0.0
  %v1493 = vand.u32 %v67, 4294901760
  %1494 = vmatpush1.msra.mxu0 %v1493
  %1495 = vmatprep.subr.mxu0 0.0
  %v1496 = vand.u32 %v68, 4294901760
  %1497 = vmatpush1.msra.mxu0 %v1496
  %1498 = vmatprep.subr.mxu0 0.0
  %v1499 = vand.u32 %v69, 4294901760
  %1500 = vmatpush1.msra.mxu0 %v1499
  %1501 = vmatprep.subr.mxu0 0.0
  %v1502 = vand.u32 %v70, 4294901760
  %1503 = vmatpush1.msra.mxu0 %v1502
  %1504 = vmatprep.subr.mxu0 0.0
  %v1505 = vand.u32 %v71, 4294901760
  %1506 = vmatpush1.msra.mxu0 %v1505
  %1507 = vmatprep.subr.mxu0 0.0
  %v1508 = vand.u32 %v72, 4294901760
  %1509 = vmatpush1.msra.mxu0 %v1508
  %1510 = vmatprep.subr.mxu0 0.0
  %v1511 = vand.u32 %v73, 4294901760
  %1512 = vmatpush1.msra.mxu0 %v1511
  %1513 = vmatprep.subr.mxu0 0.0
  %v1514 = vand.u32 %v74, 4294901760
  %1515 = vmatpush1.msra.mxu0 %v1514
  %1516 = vmatprep.subr.mxu0 0.0
  %v1517 = vand.u32 %v75, 4294901760
  %1518 = vmatpush1.msra.mxu0 %v1517
  %1519 = vmatprep.subr.mxu0 0.0
  %v1520 = vand.u32 %v76, 4294901760
  %1521 = vmatpush1.msra.mxu0 %v1520
  %1522 = vmatprep.subr.mxu0 0.0
  %v1523 = vand.u32 %v77, 4294901760
  %1524 = vmatpush1.msra.mxu0 %v1523
  %1525 = vmatprep.subr.mxu0 0.0
  %v1526 = vand.u32 %v78, 4294901760
  %1527 = vmatpush1.msra.mxu0 %v1526
  %1528 = vmatprep.subr.mxu0 0.0
  %v1529 = vand.u32 %v79, 4294901760
  %1530 = vmatpush1.msra.mxu0 %v1529
  %1531 = vmatprep.subr.mxu0 0.0
  %v1532 = vand.u32 %v80, 4294901760
  %1533 = vmatpush1.msra.mxu0 %v1532
  %1534 = vmatprep.subr.mxu0 0.0
  %v1535 = vand.u32 %v81, 4294901760
  %1536 = vmatpush1.msra.mxu0 %v1535
  %1537 = vmatprep.subr.mxu0 0.0
  %v1538 = vand.u32 %v82, 4294901760
  %1539 = vmatpush1.msra.mxu0 %v1538
  %1540 = vmatprep.subr.mxu0 0.0
  %v1541 = vand.u32 %v83, 4294901760
  %1542 = vmatpush1.msra.mxu0 %v1541
  %1543 = vmatprep.subr.mxu0 0.0
  %v1544 = vand.u32 %v84, 4294901760
  %1545 = vmatpush1.msra.mxu0 %v1544
  %1546 = vmatprep.subr.mxu0 0.0
  %v1547 = vand.u32 %v85, 4294901760
  %1548 = vmatpush1.msra.mxu0 %v1547
  %1549 = vmatprep.subr.mxu0 0.0
  %v1550 = vand.u32 %v86, 4294901760
  %1551 = vmatpush1.msra.mxu0 %v1550
  %1552 = vmatprep.subr.mxu0 0.0
  %v1553 = vand.u32 %v87, 4294901760
  %1554 = vmatpush1.msra.mxu0 %v1553
  %1555 = vmatprep.subr.mxu0 0.0
  %v1556 = vand.u32 %v88, 4294901760
  %1557 = vmatpush1.msra.mxu0 %v1556
  %1558 = vmatprep.subr.mxu0 0.0
  %v1559 = vand.u32 %v89, 4294901760
  %1560 = vmatpush1.msra.mxu0 %v1559
  %1561 = vmatprep.subr.mxu0 0.0
  %v1562 = vand.u32 %v90, 4294901760
  %1563 = vmatpush1.msra.mxu0 %v1562
  %1564 = vmatprep.subr.mxu0 0.0
  %v1565 = vand.u32 %v91, 4294901760
  %1566 = vmatpush1.msra.mxu0 %v1565
  %1567 = vmatprep.subr.mxu0 0.0
  %v1568 = vand.u32 %v92, 4294901760
  %1569 = vmatpush1.msra.mxu0 %v1568
  %1570 = vmatprep.subr.mxu0 0.0
  %v1571 = vand.u32 %v93, 4294901760
  %1572 = vmatpush1.msra.mxu0 %v1571
  %1573 = vmatprep.subr.mxu0 0.0
  %v1574 = vand.u32 %v94, 4294901760
  %1575 = vmatpush1.msra.mxu0 %v1574
  %1576 = vmatprep.subr.mxu0 0.0
  %v1577 = vand.u32 %v95, 4294901760
  %1578 = vmatpush1.msra.mxu0 %v1577
  %1579 = vmatprep.subr.mxu0 0.0
  %v1580 = vand.u32 %v96, 4294901760
  %1581 = vmatpush1.msra.mxu0 %v1580
  %v1582 = vand.u32 %v29, 4294901760
  %v1583 = vsub.f32 %v29, %v1582
  %v1584 = vand.u32 %v1583, 4294901760
  %1585 = vmatprep.mubr.f32.mxu0 %v1584
  %v1586 = vand.u32 %v28, 4294901760
  %v1587 = vsub.f32 %v28, %v1586
  %v1588 = vand.u32 %v1587, 4294901760
  %1589 = vmatmul.mubr.f32.gmra.mrb[0].mxu0 %v1588
  %v1590 = vpop.f32.mrb[0].mxu0
  %v1591 = vadd.f32 %v1483, %v1590
  %v1592 = vpop.f32.mrb[0].mxu0
  %1593 = vdwg.mxu0
  %1594 = vmatprep.subr.mxu0 0.0
  %v1595 = vand.u32 %v65, 4294901760
  %v1596 = vsub.f32 %v65, %v1595
  %v1597 = vand.u32 %v1596, 4294901760
  %1598 = vmatpush1.msra.mxu0 %v1597
  %1599 = vmatprep.subr.mxu0 0.0
  %v1600 = vand.u32 %v66, 4294901760
  %v1601 = vsub.f32 %v66, %v1600
  %v1602 = vand.u32 %v1601, 4294901760
  %1603 = vmatpush1.msra.mxu0 %v1602
  %1604 = vmatprep.subr.mxu0 0.0
  %v1605 = vand.u32 %v67, 4294901760
  %v1606 = vsub.f32 %v67, %v1605
  %v1607 = vand.u32 %v1606, 4294901760
  %1608 = vmatpush1.msra.mxu0 %v1607
  %1609 = vmatprep.subr.mxu0 0.0
  %v1610 = vand.u32 %v68, 4294901760
  %v1611 = vsub.f32 %v68, %v1610
  %v1612 = vand.u32 %v1611, 4294901760
  %1613 = vmatpush1.msra.mxu0 %v1612
  %1614 = vmatprep.subr.mxu0 0.0
  %v1615 = vand.u32 %v69, 4294901760
  %v1616 = vsub.f32 %v69, %v1615
  %v1617 = vand.u32 %v1616, 4294901760
  %1618 = vmatpush1.msra.mxu0 %v1617
  %1619 = vmatprep.subr.mxu0 0.0
  %v1620 = vand.u32 %v70, 4294901760
  %v1621 = vsub.f32 %v70, %v1620
  %v1622 = vand.u32 %v1621, 4294901760
  %1623 = vmatpush1.msra.mxu0 %v1622
  %1624 = vmatprep.subr.mxu0 0.0
  %v1625 = vand.u32 %v71, 4294901760
  %v1626 = vsub.f32 %v71, %v1625
  %v1627 = vand.u32 %v1626, 4294901760
  %1628 = vmatpush1.msra.mxu0 %v1627
  %1629 = vmatprep.subr.mxu0 0.0
  %v1630 = vand.u32 %v72, 4294901760
  %v1631 = vsub.f32 %v72, %v1630
  %v1632 = vand.u32 %v1631, 4294901760
  %1633 = vmatpush1.msra.mxu0 %v1632
  %1634 = vmatprep.subr.mxu0 0.0
  %v1635 = vand.u32 %v73, 4294901760
  %v1636 = vsub.f32 %v73, %v1635
  %v1637 = vand.u32 %v1636, 4294901760
  %1638 = vmatpush1.msra.mxu0 %v1637
  %1639 = vmatprep.subr.mxu0 0.0
  %v1640 = vand.u32 %v74, 4294901760
  %v1641 = vsub.f32 %v74, %v1640
  %v1642 = vand.u32 %v1641, 4294901760
  %1643 = vmatpush1.msra.mxu0 %v1642
  %1644 = vmatprep.subr.mxu0 0.0
  %v1645 = vand.u32 %v75, 4294901760
  %v1646 = vsub.f32 %v75, %v1645
  %v1647 = vand.u32 %v1646, 4294901760
  %1648 = vmatpush1.msra.mxu0 %v1647
  %1649 = vmatprep.subr.mxu0 0.0
  %v1650 = vand.u32 %v76, 4294901760
  %v1651 = vsub.f32 %v76, %v1650
  %v1652 = vand.u32 %v1651, 4294901760
  %1653 = vmatpush1.msra.mxu0 %v1652
  %1654 = vmatprep.subr.mxu0 0.0
  %v1655 = vand.u32 %v77, 4294901760
  %v1656 = vsub.f32 %v77, %v1655
  %v1657 = vand.u32 %v1656, 4294901760
  %1658 = vmatpush1.msra.mxu0 %v1657
  %1659 = vmatprep.subr.mxu0 0.0
  %v1660 = vand.u32 %v78, 4294901760
  %v1661 = vsub.f32 %v78, %v1660
  %v1662 = vand.u32 %v1661, 4294901760
  %1663 = vmatpush1.msra.mxu0 %v1662
  %1664 = vmatprep.subr.mxu0 0.0
  %v1665 = vand.u32 %v79, 4294901760
  %v1666 = vsub.f32 %v79, %v1665
  %v1667 = vand.u32 %v1666, 4294901760
  %1668 = vmatpush1.msra.mxu0 %v1667
  %1669 = vmatprep.subr.mxu0 0.0
  %v1670 = vand.u32 %v80, 4294901760
  %v1671 = vsub.f32 %v80, %v1670
  %v1672 = vand.u32 %v1671, 4294901760
  %1673 = vmatpush1.msra.mxu0 %v1672
  %1674 = vmatprep.subr.mxu0 0.0
  %v1675 = vand.u32 %v81, 4294901760
  %v1676 = vsub.f32 %v81, %v1675
  %v1677 = vand.u32 %v1676, 4294901760
  %1678 = vmatpush1.msra.mxu0 %v1677
  %1679 = vmatprep.subr.mxu0 0.0
  %v1680 = vand.u32 %v82, 4294901760
  %v1681 = vsub.f32 %v82, %v1680
  %v1682 = vand.u32 %v1681, 4294901760
  %1683 = vmatpush1.msra.mxu0 %v1682
  %1684 = vmatprep.subr.mxu0 0.0
  %v1685 = vand.u32 %v83, 4294901760
  %v1686 = vsub.f32 %v83, %v1685
  %v1687 = vand.u32 %v1686, 4294901760
  %1688 = vmatpush1.msra.mxu0 %v1687
  %1689 = vmatprep.subr.mxu0 0.0
  %v1690 = vand.u32 %v84, 4294901760
  %v1691 = vsub.f32 %v84, %v1690
  %v1692 = vand.u32 %v1691, 4294901760
  %1693 = vmatpush1.msra.mxu0 %v1692
  %1694 = vmatprep.subr.mxu0 0.0
  %v1695 = vand.u32 %v85, 4294901760
  %v1696 = vsub.f32 %v85, %v1695
  %v1697 = vand.u32 %v1696, 4294901760
  %1698 = vmatpush1.msra.mxu0 %v1697
  %1699 = vmatprep.subr.mxu0 0.0
  %v1700 = vand.u32 %v86, 4294901760
  %v1701 = vsub.f32 %v86, %v1700
  %v1702 = vand.u32 %v1701, 4294901760
  %1703 = vmatpush1.msra.mxu0 %v1702
  %1704 = vmatprep.subr.mxu0 0.0
  %v1705 = vand.u32 %v87, 4294901760
  %v1706 = vsub.f32 %v87, %v1705
  %v1707 = vand.u32 %v1706, 4294901760
  %1708 = vmatpush1.msra.mxu0 %v1707
  %1709 = vmatprep.subr.mxu0 0.0
  %v1710 = vand.u32 %v88, 4294901760
  %v1711 = vsub.f32 %v88, %v1710
  %v1712 = vand.u32 %v1711, 4294901760
  %1713 = vmatpush1.msra.mxu0 %v1712
  %1714 = vmatprep.subr.mxu0 0.0
  %v1715 = vand.u32 %v89, 4294901760
  %v1716 = vsub.f32 %v89, %v1715
  %v1717 = vand.u32 %v1716, 4294901760
  %1718 = vmatpush1.msra.mxu0 %v1717
  %1719 = vmatprep.subr.mxu0 0.0
  %v1720 = vand.u32 %v90, 4294901760
  %v1721 = vsub.f32 %v90, %v1720
  %v1722 = vand.u32 %v1721, 4294901760
  %1723 = vmatpush1.msra.mxu0 %v1722
  %1724 = vmatprep.subr.mxu0 0.0
  %v1725 = vand.u32 %v91, 4294901760
  %v1726 = vsub.f32 %v91, %v1725
  %v1727 = vand.u32 %v1726, 4294901760
  %1728 = vmatpush1.msra.mxu0 %v1727
  %1729 = vmatprep.subr.mxu0 0.0
  %v1730 = vand.u32 %v92, 4294901760
  %v1731 = vsub.f32 %v92, %v1730
  %v1732 = vand.u32 %v1731, 4294901760
  %1733 = vmatpush1.msra.mxu0 %v1732
  %1734 = vmatprep.subr.mxu0 0.0
  %v1735 = vand.u32 %v93, 4294901760
  %v1736 = vsub.f32 %v93, %v1735
  %v1737 = vand.u32 %v1736, 4294901760
  %1738 = vmatpush1.msra.mxu0 %v1737
  %1739 = vmatprep.subr.mxu0 0.0
  %v1740 = vand.u32 %v94, 4294901760
  %v1741 = vsub.f32 %v94, %v1740
  %v1742 = vand.u32 %v1741, 4294901760
  %1743 = vmatpush1.msra.mxu0 %v1742
  %1744 = vmatprep.subr.mxu0 0.0
  %v1745 = vand.u32 %v95, 4294901760
  %v1746 = vsub.f32 %v95, %v1745
  %v1747 = vand.u32 %v1746, 4294901760
  %1748 = vmatpush1.msra.mxu0 %v1747
  %1749 = vmatprep.subr.mxu0 0.0
  %v1750 = vand.u32 %v96, 4294901760
  %v1751 = vsub.f32 %v96, %v1750
  %v1752 = vand.u32 %v1751, 4294901760
  %1753 = vmatpush1.msra.mxu0 %v1752
  %v1754 = vand.u32 %v29, 4294901760
  %1755 = vmatprep.mubr.f32.mxu0 %v1754
  %v1756 = vand.u32 %v28, 4294901760
  %1757 = vmatmul.mubr.f32.gmra.mrb[0].mxu0 %v1756
  %v1758 = vpop.f32.mrb[0].mxu0
  %v1759 = vadd.f32 %v1591, %v1758
  %v1760 = vpop.f32.mrb[0].mxu0
  %1761 = vdwg.mxu0
  %1762 = vmatprep.subr.mxu0 0.0
  %v1763 = vand.u32 %v65, 4294901760
  %1764 = vmatpush1.msra.mxu0 %v1763
  %1765 = vmatprep.subr.mxu0 0.0
  %v1766 = vand.u32 %v66, 4294901760
  %1767 = vmatpush1.msra.mxu0 %v1766
  %1768 = vmatprep.subr.mxu0 0.0
  %v1769 = vand.u32 %v67, 4294901760
  %1770 = vmatpush1.msra.mxu0 %v1769
  %1771 = vmatprep.subr.mxu0 0.0
  %v1772 = vand.u32 %v68, 4294901760
  %1773 = vmatpush1.msra.mxu0 %v1772
  %1774 = vmatprep.subr.mxu0 0.0
  %v1775 = vand.u32 %v69, 4294901760
  %1776 = vmatpush1.msra.mxu0 %v1775
  %1777 = vmatprep.subr.mxu0 0.0
  %v1778 = vand.u32 %v70, 4294901760
  %1779 = vmatpush1.msra.mxu0 %v1778
  %1780 = vmatprep.subr.mxu0 0.0
  %v1781 = vand.u32 %v71, 4294901760
  %1782 = vmatpush1.msra.mxu0 %v1781
  %1783 = vmatprep.subr.mxu0 0.0
  %v1784 = vand.u32 %v72, 4294901760
  %1785 = vmatpush1.msra.mxu0 %v1784
  %1786 = vmatprep.subr.mxu0 0.0
  %v1787 = vand.u32 %v73, 4294901760
  %1788 = vmatpush1.msra.mxu0 %v1787
  %1789 = vmatprep.subr.mxu0 0.0
  %v1790 = vand.u32 %v74, 4294901760
  %1791 = vmatpush1.msra.mxu0 %v1790
  %1792 = vmatprep.subr.mxu0 0.0
  %v1793 = vand.u32 %v75, 4294901760
  %1794 = vmatpush1.msra.mxu0 %v1793
  %1795 = vmatprep.subr.mxu0 0.0
  %v1796 = vand.u32 %v76, 4294901760
  %1797 = vmatpush1.msra.mxu0 %v1796
  %1798 = vmatprep.subr.mxu0 0.0
  %v1799 = vand.u32 %v77, 4294901760
  %1800 = vmatpush1.msra.mxu0 %v1799
  %1801 = vmatprep.subr.mxu0 0.0
  %v1802 = vand.u32 %v78, 4294901760
  %1803 = vmatpush1.msra.mxu0 %v1802
  %1804 = vmatprep.subr.mxu0 0.0
  %v1805 = vand.u32 %v79, 4294901760
  %1806 = vmatpush1.msra.mxu0 %v1805
  %1807 = vmatprep.subr.mxu0 0.0
  %v1808 = vand.u32 %v80, 4294901760
  %1809 = vmatpush1.msra.mxu0 %v1808
  %1810 = vmatprep.subr.mxu0 0.0
  %v1811 = vand.u32 %v81, 4294901760
  %1812 = vmatpush1.msra.mxu0 %v1811
  %1813 = vmatprep.subr.mxu0 0.0
  %v1814 = vand.u32 %v82, 4294901760
  %1815 = vmatpush1.msra.mxu0 %v1814
  %1816 = vmatprep.subr.mxu0 0.0
  %v1817 = vand.u32 %v83, 4294901760
  %1818 = vmatpush1.msra.mxu0 %v1817
  %1819 = vmatprep.subr.mxu0 0.0
  %v1820 = vand.u32 %v84, 4294901760
  %1821 = vmatpush1.msra.mxu0 %v1820
  %1822 = vmatprep.subr.mxu0 0.0
  %v1823 = vand.u32 %v85, 4294901760
  %1824 = vmatpush1.msra.mxu0 %v1823
  %1825 = vmatprep.subr.mxu0 0.0
  %v1826 = vand.u32 %v86, 4294901760
  %1827 = vmatpush1.msra.mxu0 %v1826
  %1828 = vmatprep.subr.mxu0 0.0
  %v1829 = vand.u32 %v87, 4294901760
  %1830 = vmatpush1.msra.mxu0 %v1829
  %1831 = vmatprep.subr.mxu0 0.0
  %v1832 = vand.u32 %v88, 4294901760
  %1833 = vmatpush1.msra.mxu0 %v1832
  %1834 = vmatprep.subr.mxu0 0.0
  %v1835 = vand.u32 %v89, 4294901760
  %1836 = vmatpush1.msra.mxu0 %v1835
  %1837 = vmatprep.subr.mxu0 0.0
  %v1838 = vand.u32 %v90, 4294901760
  %1839 = vmatpush1.msra.mxu0 %v1838
  %1840 = vmatprep.subr.mxu0 0.0
  %v1841 = vand.u32 %v91, 4294901760
  %1842 = vmatpush1.msra.mxu0 %v1841
  %1843 = vmatprep.subr.mxu0 0.0
  %v1844 = vand.u32 %v92, 4294901760
  %1845 = vmatpush1.msra.mxu0 %v1844
  %1846 = vmatprep.subr.mxu0 0.0
  %v1847 = vand.u32 %v93, 4294901760
  %1848 = vmatpush1.msra.mxu0 %v1847
  %1849 = vmatprep.subr.mxu0 0.0
  %v1850 = vand.u32 %v94, 4294901760
  %1851 = vmatpush1.msra.mxu0 %v1850
  %1852 = vmatprep.subr.mxu0 0.0
  %v1853 = vand.u32 %v95, 4294901760
  %1854 = vmatpush1.msra.mxu0 %v1853
  %1855 = vmatprep.subr.mxu0 0.0
  %v1856 = vand.u32 %v96, 4294901760
  %1857 = vmatpush1.msra.mxu0 %v1856
  %v1858 = vand.u32 %v29, 4294901760
  %1859 = vmatprep.mubr.f32.mxu0 %v1858
  %v1860 = vand.u32 %v28, 4294901760
  %1861 = vmatmul.mubr.f32.gmra.mrb[0].mxu0 %v1860
  %v1862 = vpop.f32.mrb[0].mxu0
  %v1863 = vadd.f32 %v1759, %v1862
  %v1864 = vpop.f32.mrb[0].mxu0
  %1865 = vdwg.mxu0
  %1866 = vmatprep.subr.mxu0 0.0
  %v1867 = vand.u32 %v97, 4294901760
  %1868 = vmatpush1.msra.mxu0 %v1867
  %1869 = vmatprep.subr.mxu0 0.0
  %v1870 = vand.u32 %v98, 4294901760
  %1871 = vmatpush1.msra.mxu0 %v1870
  %1872 = vmatprep.subr.mxu0 0.0
  %v1873 = vand.u32 %v99, 4294901760
  %1874 = vmatpush1.msra.mxu0 %v1873
  %1875 = vmatprep.subr.mxu0 0.0
  %v1876 = vand.u32 %v100, 4294901760
  %1877 = vmatpush1.msra.mxu0 %v1876
  %1878 = vmatprep.subr.mxu0 0.0
  %v1879 = vand.u32 %v101, 4294901760
  %1880 = vmatpush1.msra.mxu0 %v1879
  %1881 = vmatprep.subr.mxu0 0.0
  %v1882 = vand.u32 %v102, 4294901760
  %1883 = vmatpush1.msra.mxu0 %v1882
  %1884 = vmatprep.subr.mxu0 0.0
  %v1885 = vand.u32 %v103, 4294901760
  %1886 = vmatpush1.msra.mxu0 %v1885
  %1887 = vmatprep.subr.mxu0 0.0
  %v1888 = vand.u32 %v104, 4294901760
  %1889 = vmatpush1.msra.mxu0 %v1888
  %1890 = vmatprep.subr.mxu0 0.0
  %v1891 = vand.u32 %v105, 4294901760
  %1892 = vmatpush1.msra.mxu0 %v1891
  %1893 = vmatprep.subr.mxu0 0.0
  %v1894 = vand.u32 %v106, 4294901760
  %1895 = vmatpush1.msra.mxu0 %v1894
  %1896 = vmatprep.subr.mxu0 0.0
  %v1897 = vand.u32 %v107, 4294901760
  %1898 = vmatpush1.msra.mxu0 %v1897
  %1899 = vmatprep.subr.mxu0 0.0
  %v1900 = vand.u32 %v108, 4294901760
  %1901 = vmatpush1.msra.mxu0 %v1900
  %1902 = vmatprep.subr.mxu0 0.0
  %v1903 = vand.u32 %v109, 4294901760
  %1904 = vmatpush1.msra.mxu0 %v1903
  %1905 = vmatprep.subr.mxu0 0.0
  %v1906 = vand.u32 %v110, 4294901760
  %1907 = vmatpush1.msra.mxu0 %v1906
  %1908 = vmatprep.subr.mxu0 0.0
  %v1909 = vand.u32 %v111, 4294901760
  %1910 = vmatpush1.msra.mxu0 %v1909
  %1911 = vmatprep.subr.mxu0 0.0
  %v1912 = vand.u32 %v112, 4294901760
  %1913 = vmatpush1.msra.mxu0 %v1912
  %1914 = vmatprep.subr.mxu0 0.0
  %v1915 = vand.u32 %v113, 4294901760
  %1916 = vmatpush1.msra.mxu0 %v1915
  %1917 = vmatprep.subr.mxu0 0.0
  %v1918 = vand.u32 %v114, 4294901760
  %1919 = vmatpush1.msra.mxu0 %v1918
  %1920 = vmatprep.subr.mxu0 0.0
  %v1921 = vand.u32 %v115, 4294901760
  %1922 = vmatpush1.msra.mxu0 %v1921
  %1923 = vmatprep.subr.mxu0 0.0
  %v1924 = vand.u32 %v116, 4294901760
  %1925 = vmatpush1.msra.mxu0 %v1924
  %1926 = vmatprep.subr.mxu0 0.0
  %v1927 = vand.u32 %v117, 4294901760
  %1928 = vmatpush1.msra.mxu0 %v1927
  %1929 = vmatprep.subr.mxu0 0.0
  %v1930 = vand.u32 %v118, 4294901760
  %1931 = vmatpush1.msra.mxu0 %v1930
  %1932 = vmatprep.subr.mxu0 0.0
  %v1933 = vand.u32 %v119, 4294901760
  %1934 = vmatpush1.msra.mxu0 %v1933
  %1935 = vmatprep.subr.mxu0 0.0
  %v1936 = vand.u32 %v120, 4294901760
  %1937 = vmatpush1.msra.mxu0 %v1936
  %1938 = vmatprep.subr.mxu0 0.0
  %v1939 = vand.u32 %v121, 4294901760
  %1940 = vmatpush1.msra.mxu0 %v1939
  %1941 = vmatprep.subr.mxu0 0.0
  %v1942 = vand.u32 %v122, 4294901760
  %1943 = vmatpush1.msra.mxu0 %v1942
  %1944 = vmatprep.subr.mxu0 0.0
  %v1945 = vand.u32 %v123, 4294901760
  %1946 = vmatpush1.msra.mxu0 %v1945
  %1947 = vmatprep.subr.mxu0 0.0
  %v1948 = vand.u32 %v124, 4294901760
  %1949 = vmatpush1.msra.mxu0 %v1948
  %1950 = vmatprep.subr.mxu0 0.0
  %v1951 = vand.u32 %v125, 4294901760
  %1952 = vmatpush1.msra.mxu0 %v1951
  %1953 = vmatprep.subr.mxu0 0.0
  %v1954 = vand.u32 %v126, 4294901760
  %1955 = vmatpush1.msra.mxu0 %v1954
  %1956 = vmatprep.subr.mxu0 0.0
  %v1957 = vand.u32 %v127, 4294901760
  %1958 = vmatpush1.msra.mxu0 %v1957
  %1959 = vmatprep.subr.mxu0 0.0
  %v1960 = vand.u32 %v128, 4294901760
  %1961 = vmatpush1.msra.mxu0 %v1960
  %v1962 = vand.u32 %v31, 4294901760
  %v1963 = vsub.f32 %v31, %v1962
  %v1964 = vand.u32 %v1963, 4294901760
  %v1965 = vsub.f32 %v1963, %v1964
  %v1966 = vand.u32 %v1965, 4294901760
  %1967 = vmatprep.mubr.f32.mxu0 %v1966
  %v1968 = vand.u32 %v30, 4294901760
  %v1969 = vsub.f32 %v30, %v1968
  %v1970 = vand.u32 %v1969, 4294901760
  %v1971 = vsub.f32 %v1969, %v1970
  %v1972 = vand.u32 %v1971, 4294901760
  %1973 = vmatmul.mubr.f32.gmra.mrb[0].mxu0 %v1972
  %v1974 = vpop.f32.mrb[0].mxu0
  %v1975 = vadd.f32 %v1863, %v1974
  %v1976 = vpop.f32.mrb[0].mxu0
  %1977 = vdwg.mxu0
  %1978 = vmatprep.subr.mxu0 0.0
  %v1979 = vand.u32 %v97, 4294901760
  %v1980 = vsub.f32 %v97, %v1979
  %v1981 = vand.u32 %v1980, 4294901760
  %v1982 = vsub.f32 %v1980, %v1981
  %v1983 = vand.u32 %v1982, 4294901760
  %1984 = vmatpush1.msra.mxu0 %v1983
  %1985 = vmatprep.subr.mxu0 0.0
  %v1986 = vand.u32 %v98, 4294901760
  %v1987 = vsub.f32 %v98, %v1986
  %v1988 = vand.u32 %v1987, 4294901760
  %v1989 = vsub.f32 %v1987, %v1988
  %v1990 = vand.u32 %v1989, 4294901760
  %1991 = vmatpush1.msra.mxu0 %v1990
  %1992 = vmatprep.subr.mxu0 0.0
  %v1993 = vand.u32 %v99, 4294901760
  %v1994 = vsub.f32 %v99, %v1993
  %v1995 = vand.u32 %v1994, 4294901760
  %v1996 = vsub.f32 %v1994, %v1995
  %v1997 = vand.u32 %v1996, 4294901760
  %1998 = vmatpush1.msra.mxu0 %v1997
  %1999 = vmatprep.subr.mxu0 0.0
  %v2000 = vand.u32 %v100, 4294901760
  %v2001 = vsub.f32 %v100, %v2000
  %v2002 = vand.u32 %v2001, 4294901760
  %v2003 = vsub.f32 %v2001, %v2002
  %v2004 = vand.u32 %v2003, 4294901760
  %2005 = vmatpush1.msra.mxu0 %v2004
  %2006 = vmatprep.subr.mxu0 0.0
  %v2007 = vand.u32 %v101, 4294901760
  %v2008 = vsub.f32 %v101, %v2007
  %v2009 = vand.u32 %v2008, 4294901760
  %v2010 = vsub.f32 %v2008, %v2009
  %v2011 = vand.u32 %v2010, 4294901760
  %2012 = vmatpush1.msra.mxu0 %v2011
  %2013 = vmatprep.subr.mxu0 0.0
  %v2014 = vand.u32 %v102, 4294901760
  %v2015 = vsub.f32 %v102, %v2014
  %v2016 = vand.u32 %v2015, 4294901760
  %v2017 = vsub.f32 %v2015, %v2016
  %v2018 = vand.u32 %v2017, 4294901760
  %2019 = vmatpush1.msra.mxu0 %v2018
  %2020 = vmatprep.subr.mxu0 0.0
  %v2021 = vand.u32 %v103, 4294901760
  %v2022 = vsub.f32 %v103, %v2021
  %v2023 = vand.u32 %v2022, 4294901760
  %v2024 = vsub.f32 %v2022, %v2023
  %v2025 = vand.u32 %v2024, 4294901760
  %2026 = vmatpush1.msra.mxu0 %v2025
  %2027 = vmatprep.subr.mxu0 0.0
  %v2028 = vand.u32 %v104, 4294901760
  %v2029 = vsub.f32 %v104, %v2028
  %v2030 = vand.u32 %v2029, 4294901760
  %v2031 = vsub.f32 %v2029, %v2030
  %v2032 = vand.u32 %v2031, 4294901760
  %2033 = vmatpush1.msra.mxu0 %v2032
  %2034 = vmatprep.subr.mxu0 0.0
  %v2035 = vand.u32 %v105, 4294901760
  %v2036 = vsub.f32 %v105, %v2035
  %v2037 = vand.u32 %v2036, 4294901760
  %v2038 = vsub.f32 %v2036, %v2037
  %v2039 = vand.u32 %v2038, 4294901760
  %2040 = vmatpush1.msra.mxu0 %v2039
  %2041 = vmatprep.subr.mxu0 0.0
  %v2042 = vand.u32 %v106, 4294901760
  %v2043 = vsub.f32 %v106, %v2042
  %v2044 = vand.u32 %v2043, 4294901760
  %v2045 = vsub.f32 %v2043, %v2044
  %v2046 = vand.u32 %v2045, 4294901760
  %2047 = vmatpush1.msra.mxu0 %v2046
  %2048 = vmatprep.subr.mxu0 0.0
  %v2049 = vand.u32 %v107, 4294901760
  %v2050 = vsub.f32 %v107, %v2049
  %v2051 = vand.u32 %v2050, 4294901760
  %v2052 = vsub.f32 %v2050, %v2051
  %v2053 = vand.u32 %v2052, 4294901760
  %2054 = vmatpush1.msra.mxu0 %v2053
  %2055 = vmatprep.subr.mxu0 0.0
  %v2056 = vand.u32 %v108, 4294901760
  %v2057 = vsub.f32 %v108, %v2056
  %v2058 = vand.u32 %v2057, 4294901760
  %v2059 = vsub.f32 %v2057, %v2058
  %v2060 = vand.u32 %v2059, 4294901760
  %2061 = vmatpush1.msra.mxu0 %v2060
  %2062 = vmatprep.subr.mxu0 0.0
  %v2063 = vand.u32 %v109, 4294901760
  %v2064 = vsub.f32 %v109, %v2063
  %v2065 = vand.u32 %v2064, 4294901760
  %v2066 = vsub.f32 %v2064, %v2065
  %v2067 = vand.u32 %v2066, 4294901760
  %2068 = vmatpush1.msra.mxu0 %v2067
  %2069 = vmatprep.subr.mxu0 0.0
  %v2070 = vand.u32 %v110, 4294901760
  %v2071 = vsub.f32 %v110, %v2070
  %v2072 = vand.u32 %v2071, 4294901760
  %v2073 = vsub.f32 %v2071, %v2072
  %v2074 = vand.u32 %v2073, 4294901760
  %2075 = vmatpush1.msra.mxu0 %v2074
  %2076 = vmatprep.subr.mxu0 0.0
  %v2077 = vand.u32 %v111, 4294901760
  %v2078 = vsub.f32 %v111, %v2077
  %v2079 = vand.u32 %v2078, 4294901760
  %v2080 = vsub.f32 %v2078, %v2079
  %v2081 = vand.u32 %v2080, 4294901760
  %2082 = vmatpush1.msra.mxu0 %v2081
  %2083 = vmatprep.subr.mxu0 0.0
  %v2084 = vand.u32 %v112, 4294901760
  %v2085 = vsub.f32 %v112, %v2084
  %v2086 = vand.u32 %v2085, 4294901760
  %v2087 = vsub.f32 %v2085, %v2086
  %v2088 = vand.u32 %v2087, 4294901760
  %2089 = vmatpush1.msra.mxu0 %v2088
  %2090 = vmatprep.subr.mxu0 0.0
  %v2091 = vand.u32 %v113, 4294901760
  %v2092 = vsub.f32 %v113, %v2091
  %v2093 = vand.u32 %v2092, 4294901760
  %v2094 = vsub.f32 %v2092, %v2093
  %v2095 = vand.u32 %v2094, 4294901760
  %2096 = vmatpush1.msra.mxu0 %v2095
  %2097 = vmatprep.subr.mxu0 0.0
  %v2098 = vand.u32 %v114, 4294901760
  %v2099 = vsub.f32 %v114, %v2098
  %v2100 = vand.u32 %v2099, 4294901760
  %v2101 = vsub.f32 %v2099, %v2100
  %v2102 = vand.u32 %v2101, 4294901760
  %2103 = vmatpush1.msra.mxu0 %v2102
  %2104 = vmatprep.subr.mxu0 0.0
  %v2105 = vand.u32 %v115, 4294901760
  %v2106 = vsub.f32 %v115, %v2105
  %v2107 = vand.u32 %v2106, 4294901760
  %v2108 = vsub.f32 %v2106, %v2107
  %v2109 = vand.u32 %v2108, 4294901760
  %2110 = vmatpush1.msra.mxu0 %v2109
  %2111 = vmatprep.subr.mxu0 0.0
  %v2112 = vand.u32 %v116, 4294901760
  %v2113 = vsub.f32 %v116, %v2112
  %v2114 = vand.u32 %v2113, 4294901760
  %v2115 = vsub.f32 %v2113, %v2114
  %v2116 = vand.u32 %v2115, 4294901760
  %2117 = vmatpush1.msra.mxu0 %v2116
  %2118 = vmatprep.subr.mxu0 0.0
  %v2119 = vand.u32 %v117, 4294901760
  %v2120 = vsub.f32 %v117, %v2119
  %v2121 = vand.u32 %v2120, 4294901760
  %v2122 = vsub.f32 %v2120, %v2121
  %v2123 = vand.u32 %v2122, 4294901760
  %2124 = vmatpush1.msra.mxu0 %v2123
  %2125 = vmatprep.subr.mxu0 0.0
  %v2126 = vand.u32 %v118, 4294901760
  %v2127 = vsub.f32 %v118, %v2126
  %v2128 = vand.u32 %v2127, 4294901760
  %v2129 = vsub.f32 %v2127, %v2128
  %v2130 = vand.u32 %v2129, 4294901760
  %2131 = vmatpush1.msra.mxu0 %v2130
  %2132 = vmatprep.subr.mxu0 0.0
  %v2133 = vand.u32 %v119, 4294901760
  %v2134 = vsub.f32 %v119, %v2133
  %v2135 = vand.u32 %v2134, 4294901760
  %v2136 = vsub.f32 %v2134, %v2135
  %v2137 = vand.u32 %v2136, 4294901760
  %2138 = vmatpush1.msra.mxu0 %v2137
  %2139 = vmatprep.subr.mxu0 0.0
  %v2140 = vand.u32 %v120, 4294901760
  %v2141 = vsub.f32 %v120, %v2140
  %v2142 = vand.u32 %v2141, 4294901760
  %v2143 = vsub.f32 %v2141, %v2142
  %v2144 = vand.u32 %v2143, 4294901760
  %2145 = vmatpush1.msra.mxu0 %v2144
  %2146 = vmatprep.subr.mxu0 0.0
  %v2147 = vand.u32 %v121, 4294901760
  %v2148 = vsub.f32 %v121, %v2147
  %v2149 = vand.u32 %v2148, 4294901760
  %v2150 = vsub.f32 %v2148, %v2149
  %v2151 = vand.u32 %v2150, 4294901760
  %2152 = vmatpush1.msra.mxu0 %v2151
  %2153 = vmatprep.subr.mxu0 0.0
  %v2154 = vand.u32 %v122, 4294901760
  %v2155 = vsub.f32 %v122, %v2154
  %v2156 = vand.u32 %v2155, 4294901760
  %v2157 = vsub.f32 %v2155, %v2156
  %v2158 = vand.u32 %v2157, 4294901760
  %2159 = vmatpush1.msra.mxu0 %v2158
  %2160 = vmatprep.subr.mxu0 0.0
  %v2161 = vand.u32 %v123, 4294901760
  %v2162 = vsub.f32 %v123, %v2161
  %v2163 = vand.u32 %v2162, 4294901760
  %v2164 = vsub.f32 %v2162, %v2163
  %v2165 = vand.u32 %v2164, 4294901760
  %2166 = vmatpush1.msra.mxu0 %v2165
  %2167 = vmatprep.subr.mxu0 0.0
  %v2168 = vand.u32 %v124, 4294901760
  %v2169 = vsub.f32 %v124, %v2168
  %v2170 = vand.u32 %v2169, 4294901760
  %v2171 = vsub.f32 %v2169, %v2170
  %v2172 = vand.u32 %v2171, 4294901760
  %2173 = vmatpush1.msra.mxu0 %v2172
  %2174 = vmatprep.subr.mxu0 0.0
  %v2175 = vand.u32 %v125, 4294901760
  %v2176 = vsub.f32 %v125, %v2175
  %v2177 = vand.u32 %v2176, 4294901760
  %v2178 = vsub.f32 %v2176, %v2177
  %v2179 = vand.u32 %v2178, 4294901760
  %2180 = vmatpush1.msra.mxu0 %v2179
  %2181 = vmatprep.subr.mxu0 0.0
  %v2182 = vand.u32 %v126, 4294901760
  %v2183 = vsub.f32 %v126, %v2182
  %v2184 = vand.u32 %v2183, 4294901760
  %v2185 = vsub.f32 %v2183, %v2184
  %v2186 = vand.u32 %v2185, 4294901760
  %2187 = vmatpush1.msra.mxu0 %v2186
  %2188 = vmatprep.subr.mxu0 0.0
  %v2189 = vand.u32 %v127, 4294901760
  %v2190 = vsub.f32 %v127, %v2189
  %v2191 = vand.u32 %v2190, 4294901760
  %v2192 = vsub.f32 %v2190, %v2191
  %v2193 = vand.u32 %v2192, 4294901760
  %2194 = vmatpush1.msra.mxu0 %v2193
  %2195 = vmatprep.subr.mxu0 0.0
  %v2196 = vand.u32 %v128, 4294901760
  %v2197 = vsub.f32 %v128, %v2196
  %v2198 = vand.u32 %v2197, 4294901760
  %v2199 = vsub.f32 %v2197, %v2198
  %v2200 = vand.u32 %v2199, 4294901760
  %2201 = vmatpush1.msra.mxu0 %v2200
  %v2202 = vand.u32 %v31, 4294901760
  %2203 = vmatprep.mubr.f32.mxu0 %v2202
  %v2204 = vand.u32 %v30, 4294901760
  %2205 = vmatmul.mubr.f32.gmra.mrb[0].mxu0 %v2204
  %v2206 = vpop.f32.mrb[0].mxu0
  %v2207 = vadd.f32 %v1975, %v2206
  %v2208 = vpop.f32.mrb[0].mxu0
  %2209 = vdwg.mxu0
  %2210 = vmatprep.subr.mxu0 0.0
  %v2211 = vand.u32 %v97, 4294901760
  %v2212 = vsub.f32 %v97, %v2211
  %2213 = vmatpush1.msra.mxu0 %v2212
  %2214 = vmatprep.subr.mxu0 0.0
  %v2215 = vand.u32 %v98, 4294901760
  %v2216 = vsub.f32 %v98, %v2215
  %2217 = vmatpush1.msra.mxu0 %v2216
  %2218 = vmatprep.subr.mxu0 0.0
  %v2219 = vand.u32 %v99, 4294901760
  %v2220 = vsub.f32 %v99, %v2219
  %2221 = vmatpush1.msra.mxu0 %v2220
  %2222 = vmatprep.subr.mxu0 0.0
  %v2223 = vand.u32 %v100, 4294901760
  %v2224 = vsub.f32 %v100, %v2223
  %2225 = vmatpush1.msra.mxu0 %v2224
  %2226 = vmatprep.subr.mxu0 0.0
  %v2227 = vand.u32 %v101, 4294901760
  %v2228 = vsub.f32 %v101, %v2227
  %2229 = vmatpush1.msra.mxu0 %v2228
  %2230 = vmatprep.subr.mxu0 0.0
  %v2231 = vand.u32 %v102, 4294901760
  %v2232 = vsub.f32 %v102, %v2231
  %2233 = vmatpush1.msra.mxu0 %v2232
  %2234 = vmatprep.subr.mxu0 0.0
  %v2235 = vand.u32 %v103, 4294901760
  %v2236 = vsub.f32 %v103, %v2235
  %2237 = vmatpush1.msra.mxu0 %v2236
  %2238 = vmatprep.subr.mxu0 0.0
  %v2239 = vand.u32 %v104, 4294901760
  %v2240 = vsub.f32 %v104, %v2239
  %2241 = vmatpush1.msra.mxu0 %v2240
  %2242 = vmatprep.subr.mxu0 0.0
  %v2243 = vand.u32 %v105, 4294901760
  %v2244 = vsub.f32 %v105, %v2243
  %2245 = vmatpush1.msra.mxu0 %v2244
  %2246 = vmatprep.subr.mxu0 0.0
  %v2247 = vand.u32 %v106, 4294901760
  %v2248 = vsub.f32 %v106, %v2247
  %2249 = vmatpush1.msra.mxu0 %v2248
  %2250 = vmatprep.subr.mxu0 0.0
  %v2251 = vand.u32 %v107, 4294901760
  %v2252 = vsub.f32 %v107, %v2251
  %2253 = vmatpush1.msra.mxu0 %v2252
  %2254 = vmatprep.subr.mxu0 0.0
  %v2255 = vand.u32 %v108, 4294901760
  %v2256 = vsub.f32 %v108, %v2255
  %2257 = vmatpush1.msra.mxu0 %v2256
  %2258 = vmatprep.subr.mxu0 0.0
  %v2259 = vand.u32 %v109, 4294901760
  %v2260 = vsub.f32 %v109, %v2259
  %2261 = vmatpush1.msra.mxu0 %v2260
  %2262 = vmatprep.subr.mxu0 0.0
  %v2263 = vand.u32 %v110, 4294901760
  %v2264 = vsub.f32 %v110, %v2263
  %2265 = vmatpush1.msra.mxu0 %v2264
  %2266 = vmatprep.subr.mxu0 0.0
  %v2267 = vand.u32 %v111, 4294901760
  %v2268 = vsub.f32 %v111, %v2267
  %2269 = vmatpush1.msra.mxu0 %v2268
  %2270 = vmatprep.subr.mxu0 0.0
  %v2271 = vand.u32 %v112, 4294901760
  %v2272 = vsub.f32 %v112, %v2271
  %2273 = vmatpush1.msra.mxu0 %v2272
  %2274 = vmatprep.subr.mxu0 0.0
  %v2275 = vand.u32 %v113, 4294901760
  %v2276 = vsub.f32 %v113, %v2275
  %2277 = vmatpush1.msra.mxu0 %v2276
  %2278 = vmatprep.subr.mxu0 0.0
  %v2279 = vand.u32 %v114, 4294901760
  %v2280 = vsub.f32 %v114, %v2279
  %2281 = vmatpush1.msra.mxu0 %v2280
  %2282 = vmatprep.subr.mxu0 0.0
  %v2283 = vand.u32 %v115, 4294901760
  %v2284 = vsub.f32 %v115, %v2283
  %2285 = vmatpush1.msra.mxu0 %v2284
  %2286 = vmatprep.subr.mxu0 0.0
  %v2287 = vand.u32 %v116, 4294901760
  %v2288 = vsub.f32 %v116, %v2287
  %2289 = vmatpush1.msra.mxu0 %v2288
  %2290 = vmatprep.subr.mxu0 0.0
  %v2291 = vand.u32 %v117, 4294901760
  %v2292 = vsub.f32 %v117, %v2291
  %2293 = vmatpush1.msra.mxu0 %v2292
  %2294 = vmatprep.subr.mxu0 0.0
  %v2295 = vand.u32 %v118, 4294901760
  %v2296 = vsub.f32 %v118, %v2295
  %2297 = vmatpush1.msra.mxu0 %v2296
  %2298 = vmatprep.subr.mxu0 0.0
  %v2299 = vand.u32 %v119, 4294901760
  %v2300 = vsub.f32 %v119, %v2299
  %2301 = vmatpush1.msra.mxu0 %v2300
  %2302 = vmatprep.subr.mxu0 0.0
  %v2303 = vand.u32 %v120, 4294901760
  %v2304 = vsub.f32 %v120, %v2303
  %2305 = vmatpush1.msra.mxu0 %v2304
  %2306 = vmatprep.subr.mxu0 0.0
  %v2307 = vand.u32 %v121, 4294901760
  %v2308 = vsub.f32 %v121, %v2307
  %2309 = vmatpush1.msra.mxu0 %v2308
  %2310 = vmatprep.subr.mxu0 0.0
  %v2311 = vand.u32 %v122, 4294901760
  %v2312 = vsub.f32 %v122, %v2311
  %2313 = vmatpush1.msra.mxu0 %v2312
  %2314 = vmatprep.subr.mxu0 0.0
  %v2315 = vand.u32 %v123, 4294901760
  %v2316 = vsub.f32 %v123, %v2315
  %2317 = vmatpush1.msra.mxu0 %v2316
  %2318 = vmatprep.subr.mxu0 0.0
  %v2319 = vand.u32 %v124, 4294901760
  %v2320 = vsub.f32 %v124, %v2319
  %2321 = vmatpush1.msra.mxu0 %v2320
  %2322 = vmatprep.subr.mxu0 0.0
  %v2323 = vand.u32 %v125, 4294901760
  %v2324 = vsub.f32 %v125, %v2323
  %2325 = vmatpush1.msra.mxu0 %v2324
  %2326 = vmatprep.subr.mxu0 0.0
  %v2327 = vand.u32 %v126, 4294901760
  %v2328 = vsub.f32 %v126, %v2327
  %2329 = vmatpush1.msra.mxu0 %v2328
  %2330 = vmatprep.subr.mxu0 0.0
  %v2331 = vand.u32 %v127, 4294901760
  %v2332 = vsub.f32 %v127, %v2331
  %2333 = vmatpush1.msra.mxu0 %v2332
  %2334 = vmatprep.subr.mxu0 0.0
  %v2335 = vand.u32 %v128, 4294901760
  %v2336 = vsub.f32 %v128, %v2335
  %2337 = vmatpush1.msra.mxu0 %v2336
  %v2338 = vand.u32 %v31, 4294901760
  %v2339 = vsub.f32 %v31, %v2338
  %2340 = vmatprep.mubr.f32.mxu0 %v2339
  %v2341 = vand.u32 %v30, 4294901760
  %v2342 = vsub.f32 %v30, %v2341
  %2343 = vmatmul.mubr.f32.gmra.mrb[0].mxu0 %v2342
  %v2344 = vpop.f32.mrb[0].mxu0
  %v2345 = vadd.f32 %v2207, %v2344
  %v2346 = vpop.f32.mrb[0].mxu0
  %2347 = vdwg.mxu0
  %2348 = vmatprep.subr.mxu0 0.0
  %v2349 = vand.u32 %v97, 4294901760
  %2350 = vmatpush1.msra.mxu0 %v2349
  %2351 = vmatprep.subr.mxu0 0.0
  %v2352 = vand.u32 %v98, 4294901760
  %2353 = vmatpush1.msra.mxu0 %v2352
  %2354 = vmatprep.subr.mxu0 0.0
  %v2355 = vand.u32 %v99, 4294901760
  %2356 = vmatpush1.msra.mxu0 %v2355
  %2357 = vmatprep.subr.mxu0 0.0
  %v2358 = vand.u32 %v100, 4294901760
  %2359 = vmatpush1.msra.mxu0 %v2358
  %2360 = vmatprep.subr.mxu0 0.0
  %v2361 = vand.u32 %v101, 4294901760
  %2362 = vmatpush1.msra.mxu0 %v2361
  %2363 = vmatprep.subr.mxu0 0.0
  %v2364 = vand.u32 %v102, 4294901760
  %2365 = vmatpush1.msra.mxu0 %v2364
  %2366 = vmatprep.subr.mxu0 0.0
  %v2367 = vand.u32 %v103, 4294901760
  %2368 = vmatpush1.msra.mxu0 %v2367
  %2369 = vmatprep.subr.mxu0 0.0
  %v2370 = vand.u32 %v104, 4294901760
  %2371 = vmatpush1.msra.mxu0 %v2370
  %2372 = vmatprep.subr.mxu0 0.0
  %v2373 = vand.u32 %v105, 4294901760
  %2374 = vmatpush1.msra.mxu0 %v2373
  %2375 = vmatprep.subr.mxu0 0.0
  %v2376 = vand.u32 %v106, 4294901760
  %2377 = vmatpush1.msra.mxu0 %v2376
  %2378 = vmatprep.subr.mxu0 0.0
  %v2379 = vand.u32 %v107, 4294901760
  %2380 = vmatpush1.msra.mxu0 %v2379
  %2381 = vmatprep.subr.mxu0 0.0
  %v2382 = vand.u32 %v108, 4294901760
  %2383 = vmatpush1.msra.mxu0 %v2382
  %2384 = vmatprep.subr.mxu0 0.0
  %v2385 = vand.u32 %v109, 4294901760
  %2386 = vmatpush1.msra.mxu0 %v2385
  %2387 = vmatprep.subr.mxu0 0.0
  %v2388 = vand.u32 %v110, 4294901760
  %2389 = vmatpush1.msra.mxu0 %v2388
  %2390 = vmatprep.subr.mxu0 0.0
  %v2391 = vand.u32 %v111, 4294901760
  %2392 = vmatpush1.msra.mxu0 %v2391
  %2393 = vmatprep.subr.mxu0 0.0
  %v2394 = vand.u32 %v112, 4294901760
  %2395 = vmatpush1.msra.mxu0 %v2394
  %2396 = vmatprep.subr.mxu0 0.0
  %v2397 = vand.u32 %v113, 4294901760
  %2398 = vmatpush1.msra.mxu0 %v2397
  %2399 = vmatprep.subr.mxu0 0.0
  %v2400 = vand.u32 %v114, 4294901760
  %2401 = vmatpush1.msra.mxu0 %v2400
  %2402 = vmatprep.subr.mxu0 0.0
  %v2403 = vand.u32 %v115, 4294901760
  %2404 = vmatpush1.msra.mxu0 %v2403
  %2405 = vmatprep.subr.mxu0 0.0
  %v2406 = vand.u32 %v116, 4294901760
  %2407 = vmatpush1.msra.mxu0 %v2406
  %2408 = vmatprep.subr.mxu0 0.0
  %v2409 = vand.u32 %v117, 4294901760
  %2410 = vmatpush1.msra.mxu0 %v2409
  %2411 = vmatprep.subr.mxu0 0.0
  %v2412 = vand.u32 %v118, 4294901760
  %2413 = vmatpush1.msra.mxu0 %v2412
  %2414 = vmatprep.subr.mxu0 0.0
  %v2415 = vand.u32 %v119, 4294901760
  %2416 = vmatpush1.msra.mxu0 %v2415
  %2417 = vmatprep.subr.mxu0 0.0
  %v2418 = vand.u32 %v120, 4294901760
  %2419 = vmatpush1.msra.mxu0 %v2418
  %2420 = vmatprep.subr.mxu0 0.0
  %v2421 = vand.u32 %v121, 4294901760
  %2422 = vmatpush1.msra.mxu0 %v2421
  %2423 = vmatprep.subr.mxu0 0.0
  %v2424 = vand.u32 %v122, 4294901760
  %2425 = vmatpush1.msra.mxu0 %v2424
  %2426 = vmatprep.subr.mxu0 0.0
  %v2427 = vand.u32 %v123, 4294901760
  %2428 = vmatpush1.msra.mxu0 %v2427
  %2429 = vmatprep.subr.mxu0 0.0
  %v2430 = vand.u32 %v124, 4294901760
  %2431 = vmatpush1.msra.mxu0 %v2430
  %2432 = vmatprep.subr.mxu0 0.0
  %v2433 = vand.u32 %v125, 4294901760
  %2434 = vmatpush1.msra.mxu0 %v2433
  %2435 = vmatprep.subr.mxu0 0.0
  %v2436 = vand.u32 %v126, 4294901760
  %2437 = vmatpush1.msra.mxu0 %v2436
  %2438 = vmatprep.subr.mxu0 0.0
  %v2439 = vand.u32 %v127, 4294901760
  %2440 = vmatpush1.msra.mxu0 %v2439
  %2441 = vmatprep.subr.mxu0 0.0
  %v2442 = vand.u32 %v128, 4294901760
  %2443 = vmatpush1.msra.mxu0 %v2442
  %v2444 = vand.u32 %v31, 4294901760
  %v2445 = vsub.f32 %v31, %v2444
  %v2446 = vand.u32 %v2445, 4294901760
  %2447 = vmatprep.mubr.f32.mxu0 %v2446
  %v2448 = vand.u32 %v30, 4294901760
  %v2449 = vsub.f32 %v30, %v2448
  %v2450 = vand.u32 %v2449, 4294901760
  %2451 = vmatmul.mubr.f32.gmra.mrb[0].mxu0 %v2450
  %v2452 = vpop.f32.mrb[0].mxu0
  %v2453 = vadd.f32 %v2345, %v2452
  %v2454 = vpop.f32.mrb[0].mxu0
  %2455 = vdwg.mxu0
  %2456 = vmatprep.subr.mxu0 0.0
  %v2457 = vand.u32 %v97, 4294901760
  %v2458 = vsub.f32 %v97, %v2457
  %v2459 = vand.u32 %v2458, 4294901760
  %2460 = vmatpush1.msra.mxu0 %v2459
  %2461 = vmatprep.subr.mxu0 0.0
  %v2462 = vand.u32 %v98, 4294901760
  %v2463 = vsub.f32 %v98, %v2462
  %v2464 = vand.u32 %v2463, 4294901760
  %2465 = vmatpush1.msra.mxu0 %v2464
  %2466 = vmatprep.subr.mxu0 0.0
  %v2467 = vand.u32 %v99, 4294901760
  %v2468 = vsub.f32 %v99, %v2467
  %v2469 = vand.u32 %v2468, 4294901760
  %2470 = vmatpush1.msra.mxu0 %v2469
  %2471 = vmatprep.subr.mxu0 0.0
  %v2472 = vand.u32 %v100, 4294901760
  %v2473 = vsub.f32 %v100, %v2472
  %v2474 = vand.u32 %v2473, 4294901760
  %2475 = vmatpush1.msra.mxu0 %v2474
  %2476 = vmatprep.subr.mxu0 0.0
  %v2477 = vand.u32 %v101, 4294901760
  %v2478 = vsub.f32 %v101, %v2477
  %v2479 = vand.u32 %v2478, 4294901760
  %2480 = vmatpush1.msra.mxu0 %v2479
  %2481 = vmatprep.subr.mxu0 0.0
  %v2482 = vand.u32 %v102, 4294901760
  %v2483 = vsub.f32 %v102, %v2482
  %v2484 = vand.u32 %v2483, 4294901760
  %2485 = vmatpush1.msra.mxu0 %v2484
  %2486 = vmatprep.subr.mxu0 0.0
  %v2487 = vand.u32 %v103, 4294901760
  %v2488 = vsub.f32 %v103, %v2487
  %v2489 = vand.u32 %v2488, 4294901760
  %2490 = vmatpush1.msra.mxu0 %v2489
  %2491 = vmatprep.subr.mxu0 0.0
  %v2492 = vand.u32 %v104, 4294901760
  %v2493 = vsub.f32 %v104, %v2492
  %v2494 = vand.u32 %v2493, 4294901760
  %2495 = vmatpush1.msra.mxu0 %v2494
  %2496 = vmatprep.subr.mxu0 0.0
  %v2497 = vand.u32 %v105, 4294901760
  %v2498 = vsub.f32 %v105, %v2497
  %v2499 = vand.u32 %v2498, 4294901760
  %2500 = vmatpush1.msra.mxu0 %v2499
  %2501 = vmatprep.subr.mxu0 0.0
  %v2502 = vand.u32 %v106, 4294901760
  %v2503 = vsub.f32 %v106, %v2502
  %v2504 = vand.u32 %v2503, 4294901760
  %2505 = vmatpush1.msra.mxu0 %v2504
  %2506 = vmatprep.subr.mxu0 0.0
  %v2507 = vand.u32 %v107, 4294901760
  %v2508 = vsub.f32 %v107, %v2507
  %v2509 = vand.u32 %v2508, 4294901760
  %2510 = vmatpush1.msra.mxu0 %v2509
  %2511 = vmatprep.subr.mxu0 0.0
  %v2512 = vand.u32 %v108, 4294901760
  %v2513 = vsub.f32 %v108, %v2512
  %v2514 = vand.u32 %v2513, 4294901760
  %2515 = vmatpush1.msra.mxu0 %v2514
  %2516 = vmatprep.subr.mxu0 0.0
  %v2517 = vand.u32 %v109, 4294901760
  %v2518 = vsub.f32 %v109, %v2517
  %v2519 = vand.u32 %v2518, 4294901760
  %2520 = vmatpush1.msra.mxu0 %v2519
  %2521 = vmatprep.subr.mxu0 0.0
  %v2522 = vand.u32 %v110, 4294901760
  %v2523 = vsub.f32 %v110, %v2522
  %v2524 = vand.u32 %v2523, 4294901760
  %2525 = vmatpush1.msra.mxu0 %v2524
  %2526 = vmatprep.subr.mxu0 0.0
  %v2527 = vand.u32 %v111, 4294901760
  %v2528 = vsub.f32 %v111, %v2527
  %v2529 = vand.u32 %v2528, 4294901760
  %2530 = vmatpush1.msra.mxu0 %v2529
  %2531 = vmatprep.subr.mxu0 0.0
  %v2532 = vand.u32 %v112, 4294901760
  %v2533 = vsub.f32 %v112, %v2532
  %v2534 = vand.u32 %v2533, 4294901760
  %2535 = vmatpush1.msra.mxu0 %v2534
  %2536 = vmatprep.subr.mxu0 0.0
  %v2537 = vand.u32 %v113, 4294901760
  %v2538 = vsub.f32 %v113, %v2537
  %v2539 = vand.u32 %v2538, 4294901760
  %2540 = vmatpush1.msra.mxu0 %v2539
  %2541 = vmatprep.subr.mxu0 0.0
  %v2542 = vand.u32 %v114, 4294901760
  %v2543 = vsub.f32 %v114, %v2542
  %v2544 = vand.u32 %v2543, 4294901760
  %2545 = vmatpush1.msra.mxu0 %v2544
  %2546 = vmatprep.subr.mxu0 0.0
  %v2547 = vand.u32 %v115, 4294901760
  %v2548 = vsub.f32 %v115, %v2547
  %v2549 = vand.u32 %v2548, 4294901760
  %2550 = vmatpush1.msra.mxu0 %v2549
  %2551 = vmatprep.subr.mxu0 0.0
  %v2552 = vand.u32 %v116, 4294901760
  %v2553 = vsub.f32 %v116, %v2552
  %v2554 = vand.u32 %v2553, 4294901760
  %2555 = vmatpush1.msra.mxu0 %v2554
  %2556 = vmatprep.subr.mxu0 0.0
  %v2557 = vand.u32 %v117, 4294901760
  %v2558 = vsub.f32 %v117, %v2557
  %v2559 = vand.u32 %v2558, 4294901760
  %2560 = vmatpush1.msra.mxu0 %v2559
  %2561 = vmatprep.subr.mxu0 0.0
  %v2562 = vand.u32 %v118, 4294901760
  %v2563 = vsub.f32 %v118, %v2562
  %v2564 = vand.u32 %v2563, 4294901760
  %2565 = vmatpush1.msra.mxu0 %v2564
  %2566 = vmatprep.subr.mxu0 0.0
  %v2567 = vand.u32 %v119, 4294901760
  %v2568 = vsub.f32 %v119, %v2567
  %v2569 = vand.u32 %v2568, 4294901760
  %2570 = vmatpush1.msra.mxu0 %v2569
  %2571 = vmatprep.subr.mxu0 0.0
  %v2572 = vand.u32 %v120, 4294901760
  %v2573 = vsub.f32 %v120, %v2572
  %v2574 = vand.u32 %v2573, 4294901760
  %2575 = vmatpush1.msra.mxu0 %v2574
  %2576 = vmatprep.subr.mxu0 0.0
  %v2577 = vand.u32 %v121, 4294901760
  %v2578 = vsub.f32 %v121, %v2577
  %v2579 = vand.u32 %v2578, 4294901760
  %2580 = vmatpush1.msra.mxu0 %v2579
  %2581 = vmatprep.subr.mxu0 0.0
  %v2582 = vand.u32 %v122, 4294901760
  %v2583 = vsub.f32 %v122, %v2582
  %v2584 = vand.u32 %v2583, 4294901760
  %2585 = vmatpush1.msra.mxu0 %v2584
  %2586 = vmatprep.subr.mxu0 0.0
  %v2587 = vand.u32 %v123, 4294901760
  %v2588 = vsub.f32 %v123, %v2587
  %v2589 = vand.u32 %v2588, 4294901760
  %2590 = vmatpush1.msra.mxu0 %v2589
  %2591 = vmatprep.subr.mxu0 0.0
  %v2592 = vand.u32 %v124, 4294901760
  %v2593 = vsub.f32 %v124, %v2592
  %v2594 = vand.u32 %v2593, 4294901760
  %2595 = vmatpush1.msra.mxu0 %v2594
  %2596 = vmatprep.subr.mxu0 0.0
  %v2597 = vand.u32 %v125, 4294901760
  %v2598 = vsub.f32 %v125, %v2597
  %v2599 = vand.u32 %v2598, 4294901760
  %2600 = vmatpush1.msra.mxu0 %v2599
  %2601 = vmatprep.subr.mxu0 0.0
  %v2602 = vand.u32 %v126, 4294901760
  %v2603 = vsub.f32 %v126, %v2602
  %v2604 = vand.u32 %v2603, 4294901760
  %2605 = vmatpush1.msra.mxu0 %v2604
  %2606 = vmatprep.subr.mxu0 0.0
  %v2607 = vand.u32 %v127, 4294901760
  %v2608 = vsub.f32 %v127, %v2607
  %v2609 = vand.u32 %v2608, 4294901760
  %2610 = vmatpush1.msra.mxu0 %v2609
  %2611 = vmatprep.subr.mxu0 0.0
  %v2612 = vand.u32 %v128, 4294901760
  %v2613 = vsub.f32 %v128, %v2612
  %v2614 = vand.u32 %v2613, 4294901760
  %2615 = vmatpush1.msra.mxu0 %v2614
  %v2616 = vand.u32 %v31, 4294901760
  %2617 = vmatprep.mubr.f32.mxu0 %v2616
  %v2618 = vand.u32 %v30, 4294901760
  %2619 = vmatmul.mubr.f32.gmra.mrb[0].mxu0 %v2618
  %v2620 = vpop.f32.mrb[0].mxu0
  %v2621 = vadd.f32 %v2453, %v2620
  %v2622 = vpop.f32.mrb[0].mxu0
  %2623 = vdwg.mxu0
  %2624 = vmatprep.subr.mxu0 0.0
  %v2625 = vand.u32 %v97, 4294901760
  %2626 = vmatpush1.msra.mxu0 %v2625
  %2627 = vmatprep.subr.mxu0 0.0
  %v2628 = vand.u32 %v98, 4294901760
  %2629 = vmatpush1.msra.mxu0 %v2628
  %2630 = vmatprep.subr.mxu0 0.0
  %v2631 = vand.u32 %v99, 4294901760
  %2632 = vmatpush1.msra.mxu0 %v2631
  %2633 = vmatprep.subr.mxu0 0.0
  %v2634 = vand.u32 %v100, 4294901760
  %2635 = vmatpush1.msra.mxu0 %v2634
  %2636 = vmatprep.subr.mxu0 0.0
  %v2637 = vand.u32 %v101, 4294901760
  %2638 = vmatpush1.msra.mxu0 %v2637
  %2639 = vmatprep.subr.mxu0 0.0
  %v2640 = vand.u32 %v102, 4294901760
  %2641 = vmatpush1.msra.mxu0 %v2640
  %2642 = vmatprep.subr.mxu0 0.0
  %v2643 = vand.u32 %v103, 4294901760
  %2644 = vmatpush1.msra.mxu0 %v2643
  %2645 = vmatprep.subr.mxu0 0.0
  %v2646 = vand.u32 %v104, 4294901760
  %2647 = vmatpush1.msra.mxu0 %v2646
  %2648 = vmatprep.subr.mxu0 0.0
  %v2649 = vand.u32 %v105, 4294901760
  %2650 = vmatpush1.msra.mxu0 %v2649
  %2651 = vmatprep.subr.mxu0 0.0
  %v2652 = vand.u32 %v106, 4294901760
  %2653 = vmatpush1.msra.mxu0 %v2652
  %2654 = vmatprep.subr.mxu0 0.0
  %v2655 = vand.u32 %v107, 4294901760
  %2656 = vmatpush1.msra.mxu0 %v2655
  %2657 = vmatprep.subr.mxu0 0.0
  %v2658 = vand.u32 %v108, 4294901760
  %2659 = vmatpush1.msra.mxu0 %v2658
  %2660 = vmatprep.subr.mxu0 0.0
  %v2661 = vand.u32 %v109, 4294901760
  %2662 = vmatpush1.msra.mxu0 %v2661
  %2663 = vmatprep.subr.mxu0 0.0
  %v2664 = vand.u32 %v110, 4294901760
  %2665 = vmatpush1.msra.mxu0 %v2664
  %2666 = vmatprep.subr.mxu0 0.0
  %v2667 = vand.u32 %v111, 4294901760
  %2668 = vmatpush1.msra.mxu0 %v2667
  %2669 = vmatprep.subr.mxu0 0.0
  %v2670 = vand.u32 %v112, 4294901760
  %2671 = vmatpush1.msra.mxu0 %v2670
  %2672 = vmatprep.subr.mxu0 0.0
  %v2673 = vand.u32 %v113, 4294901760
  %2674 = vmatpush1.msra.mxu0 %v2673
  %2675 = vmatprep.subr.mxu0 0.0
  %v2676 = vand.u32 %v114, 4294901760
  %2677 = vmatpush1.msra.mxu0 %v2676
  %2678 = vmatprep.subr.mxu0 0.0
  %v2679 = vand.u32 %v115, 4294901760
  %2680 = vmatpush1.msra.mxu0 %v2679
  %2681 = vmatprep.subr.mxu0 0.0
  %v2682 = vand.u32 %v116, 4294901760
  %2683 = vmatpush1.msra.mxu0 %v2682
  %2684 = vmatprep.subr.mxu0 0.0
  %v2685 = vand.u32 %v117, 4294901760
  %2686 = vmatpush1.msra.mxu0 %v2685
  %2687 = vmatprep.subr.mxu0 0.0
  %v2688 = vand.u32 %v118, 4294901760
  %2689 = vmatpush1.msra.mxu0 %v2688
  %2690 = vmatprep.subr.mxu0 0.0
  %v2691 = vand.u32 %v119, 4294901760
  %2692 = vmatpush1.msra.mxu0 %v2691
  %2693 = vmatprep.subr.mxu0 0.0
  %v2694 = vand.u32 %v120, 4294901760
  %2695 = vmatpush1.msra.mxu0 %v2694
  %2696 = vmatprep.subr.mxu0 0.0
  %v2697 = vand.u32 %v121, 4294901760
  %2698 = vmatpush1.msra.mxu0 %v2697
  %2699 = vmatprep.subr.mxu0 0.0
  %v2700 = vand.u32 %v122, 4294901760
  %2701 = vmatpush1.msra.mxu0 %v2700
  %2702 = vmatprep.subr.mxu0 0.0
  %v2703 = vand.u32 %v123, 4294901760
  %2704 = vmatpush1.msra.mxu0 %v2703
  %2705 = vmatprep.subr.mxu0 0.0
  %v2706 = vand.u32 %v124, 4294901760
  %2707 = vmatpush1.msra.mxu0 %v2706
  %2708 = vmatprep.subr.mxu0 0.0
  %v2709 = vand.u32 %v125, 4294901760
  %2710 = vmatpush1.msra.mxu0 %v2709
  %2711 = vmatprep.subr.mxu0 0.0
  %v2712 = vand.u32 %v126, 4294901760
  %2713 = vmatpush1.msra.mxu0 %v2712
  %2714 = vmatprep.subr.mxu0 0.0
  %v2715 = vand.u32 %v127, 4294901760
  %2716 = vmatpush1.msra.mxu0 %v2715
  %2717 = vmatprep.subr.mxu0 0.0
  %v2718 = vand.u32 %v128, 4294901760
  %2719 = vmatpush1.msra.mxu0 %v2718
  %v2720 = vand.u32 %v31, 4294901760
  %2721 = vmatprep.mubr.f32.mxu0 %v2720
  %v2722 = vand.u32 %v30, 4294901760
  %2723 = vmatmul.mubr.f32.gmra.mrb[0].mxu0 %v2722
  %v2724 = vpop.f32.mrb[0].mxu0
  %v2725 = vadd.f32 %v2621, %v2724
  %v2726 = vpop.f32.mrb[0].mxu0
  %2727 = vdwg.mxu0
  %2728 = vmatprep.subr.mxu0 0.0
  %v2729 = vand.u32 %v129, 4294901760
  %2730 = vmatpush1.msra.mxu0 %v2729
  %2731 = vmatprep.subr.mxu0 0.0
  %v2732 = vand.u32 %v130, 4294901760
  %2733 = vmatpush1.msra.mxu0 %v2732
  %2734 = vmatprep.subr.mxu0 0.0
  %2735 = vmatpush1.msra.mxu0 0.0
  %2736 = vmatprep.subr.mxu0 0.0
  %2737 = vmatpush1.msra.mxu0 0.0
  %2738 = vmatprep.subr.mxu0 0.0
  %2739 = vmatpush1.msra.mxu0 0.0
  %2740 = vmatprep.subr.mxu0 0.0
  %2741 = vmatpush1.msra.mxu0 0.0
  %2742 = vmatprep.subr.mxu0 0.0
  %2743 = vmatpush1.msra.mxu0 0.0
  %2744 = vmatprep.subr.mxu0 0.0
  %2745 = vmatpush1.msra.mxu0 0.0
  %2746 = vmatprep.subr.mxu0 0.0
  %2747 = vmatpush1.msra.mxu0 0.0
  %2748 = vmatprep.subr.mxu0 0.0
  %2749 = vmatpush1.msra.mxu0 0.0
  %2750 = vmatprep.subr.mxu0 0.0
  %2751 = vmatpush1.msra.mxu0 0.0
  %2752 = vmatprep.subr.mxu0 0.0
  %2753 = vmatpush1.msra.mxu0 0.0
  %2754 = vmatprep.subr.mxu0 0.0
  %2755 = vmatpush1.msra.mxu0 0.0
  %2756 = vmatprep.subr.mxu0 0.0
  %2757 = vmatpush1.msra.mxu0 0.0
  %2758 = vmatprep.subr.mxu0 0.0
  %2759 = vmatpush1.msra.mxu0 0.0
  %2760 = vmatprep.subr.mxu0 0.0
  %2761 = vmatpush1.msra.mxu0 0.0
  %2762 = vmatprep.subr.mxu0 0.0
  %2763 = vmatpush1.msra.mxu0 0.0
  %2764 = vmatprep.subr.mxu0 0.0
  %2765 = vmatpush1.msra.mxu0 0.0
  %2766 = vmatprep.subr.mxu0 0.0
  %2767 = vmatpush1.msra.mxu0 0.0
  %2768 = vmatprep.subr.mxu0 0.0
  %2769 = vmatpush1.msra.mxu0 0.0
  %2770 = vmatprep.subr.mxu0 0.0
  %2771 = vmatpush1.msra.mxu0 0.0
  %2772 = vmatprep.subr.mxu0 0.0
  %2773 = vmatpush1.msra.mxu0 0.0
  %2774 = vmatprep.subr.mxu0 0.0
  %2775 = vmatpush1.msra.mxu0 0.0
  %2776 = vmatprep.subr.mxu0 0.0
  %2777 = vmatpush1.msra.mxu0 0.0
  %2778 = vmatprep.subr.mxu0 0.0
  %2779 = vmatpush1.msra.mxu0 0.0
  %2780 = vmatprep.subr.mxu0 0.0
  %2781 = vmatpush1.msra.mxu0 0.0
  %2782 = vmatprep.subr.mxu0 0.0
  %2783 = vmatpush1.msra.mxu0 0.0
  %2784 = vmatprep.subr.mxu0 0.0
  %2785 = vmatpush1.msra.mxu0 0.0
  %2786 = vmatprep.subr.mxu0 0.0
  %2787 = vmatpush1.msra.mxu0 0.0
  %2788 = vmatprep.subr.mxu0 0.0
  %2789 = vmatpush1.msra.mxu0 0.0
  %2790 = vmatprep.subr.mxu0 0.0
  %2791 = vmatpush1.msra.mxu0 0.0
  %2792 = vmatprep.subr.mxu0 0.0
  %2793 = vmatpush1.msra.mxu0 0.0
  %2794 = vmatprep.mubr.f32.mxu0 0.0
  %v2795 = vand.u32 %v140, 4294901760
  %v2796 = vsub.f32 %v140, %v2795
  %v2797 = vand.u32 %v2796, 4294901760
  %v2798 = vsub.f32 %v2796, %v2797
  %v2799 = vand.u32 %v2798, 4294901760
  %2800 = vmatmul.mubr.f32.gmra.mrb[0].mxu0 %v2799
  %v2801 = vpop.f32.mrb[0].mxu0
  %v2802 = vadd.f32 %v2725, %v2801
  %v2803 = vpop.f32.mrb[0].mxu0
  %2804 = vdwg.mxu0
  %2805 = vmatprep.subr.mxu0 0.0
  %v2806 = vand.u32 %v129, 4294901760
  %v2807 = vsub.f32 %v129, %v2806
  %v2808 = vand.u32 %v2807, 4294901760
  %v2809 = vsub.f32 %v2807, %v2808
  %v2810 = vand.u32 %v2809, 4294901760
  %2811 = vmatpush1.msra.mxu0 %v2810
  %2812 = vmatprep.subr.mxu0 0.0
  %v2813 = vand.u32 %v130, 4294901760
  %v2814 = vsub.f32 %v130, %v2813
  %v2815 = vand.u32 %v2814, 4294901760
  %v2816 = vsub.f32 %v2814, %v2815
  %v2817 = vand.u32 %v2816, 4294901760
  %2818 = vmatpush1.msra.mxu0 %v2817
  %2819 = vmatprep.subr.mxu0 0.0
  %2820 = vmatpush1.msra.mxu0 0.0
  %2821 = vmatprep.subr.mxu0 0.0
  %2822 = vmatpush1.msra.mxu0 0.0
  %2823 = vmatprep.subr.mxu0 0.0
  %2824 = vmatpush1.msra.mxu0 0.0
  %2825 = vmatprep.subr.mxu0 0.0
  %2826 = vmatpush1.msra.mxu0 0.0
  %2827 = vmatprep.subr.mxu0 0.0
  %2828 = vmatpush1.msra.mxu0 0.0
  %2829 = vmatprep.subr.mxu0 0.0
  %2830 = vmatpush1.msra.mxu0 0.0
  %2831 = vmatprep.subr.mxu0 0.0
  %2832 = vmatpush1.msra.mxu0 0.0
  %2833 = vmatprep.subr.mxu0 0.0
  %2834 = vmatpush1.msra.mxu0 0.0
  %2835 = vmatprep.subr.mxu0 0.0
  %2836 = vmatpush1.msra.mxu0 0.0
  %2837 = vmatprep.subr.mxu0 0.0
  %2838 = vmatpush1.msra.mxu0 0.0
  %2839 = vmatprep.subr.mxu0 0.0
  %2840 = vmatpush1.msra.mxu0 0.0
  %2841 = vmatprep.subr.mxu0 0.0
  %2842 = vmatpush1.msra.mxu0 0.0
  %2843 = vmatprep.subr.mxu0 0.0
  %2844 = vmatpush1.msra.mxu0 0.0
  %2845 = vmatprep.subr.mxu0 0.0
  %2846 = vmatpush1.msra.mxu0 0.0
  %2847 = vmatprep.subr.mxu0 0.0
  %2848 = vmatpush1.msra.mxu0 0.0
  %2849 = vmatprep.subr.mxu0 0.0
  %2850 = vmatpush1.msra.mxu0 0.0
  %2851 = vmatprep.subr.mxu0 0.0
  %2852 = vmatpush1.msra.mxu0 0.0
  %2853 = vmatprep.subr.mxu0 0.0
  %2854 = vmatpush1.msra.mxu0 0.0
  %2855 = vmatprep.subr.mxu0 0.0
  %2856 = vmatpush1.msra.mxu0 0.0
  %2857 = vmatprep.subr.mxu0 0.0
  %2858 = vmatpush1.msra.mxu0 0.0
  %2859 = vmatprep.subr.mxu0 0.0
  %2860 = vmatpush1.msra.mxu0 0.0
  %2861 = vmatprep.subr.mxu0 0.0
  %2862 = vmatpush1.msra.mxu0 0.0
  %2863 = vmatprep.subr.mxu0 0.0
  %2864 = vmatpush1.msra.mxu0 0.0
  %2865 = vmatprep.subr.mxu0 0.0
  %2866 = vmatpush1.msra.mxu0 0.0
  %2867 = vmatprep.subr.mxu0 0.0
  %2868 = vmatpush1.msra.mxu0 0.0
  %2869 = vmatprep.subr.mxu0 0.0
  %2870 = vmatpush1.msra.mxu0 0.0
  %2871 = vmatprep.subr.mxu0 0.0
  %2872 = vmatpush1.msra.mxu0 0.0
  %2873 = vmatprep.subr.mxu0 0.0
  %2874 = vmatpush1.msra.mxu0 0.0
  %2875 = vmatprep.subr.mxu0 0.0
  %2876 = vmatpush1.msra.mxu0 0.0
  %2877 = vmatprep.subr.mxu0 0.0
  %2878 = vmatpush1.msra.mxu0 0.0
  %2879 = vmatprep.mubr.f32.mxu0 0.0
  %v2880 = vand.u32 %v140, 4294901760
  %2881 = vmatmul.mubr.f32.gmra.mrb[0].mxu0 %v2880
  %v2882 = vpop.f32.mrb[0].mxu0
  %v2883 = vadd.f32 %v2802, %v2882
  %v2884 = vpop.f32.mrb[0].mxu0
  %2885 = vdwg.mxu0
  %2886 = vmatprep.subr.mxu0 0.0
  %v2887 = vand.u32 %v129, 4294901760
  %v2888 = vsub.f32 %v129, %v2887
  %2889 = vmatpush1.msra.mxu0 %v2888
  %2890 = vmatprep.subr.mxu0 0.0
  %v2891 = vand.u32 %v130, 4294901760
  %v2892 = vsub.f32 %v130, %v2891
  %2893 = vmatpush1.msra.mxu0 %v2892
  %2894 = vmatprep.subr.mxu0 0.0
  %2895 = vmatpush1.msra.mxu0 0.0
  %2896 = vmatprep.subr.mxu0 0.0
  %2897 = vmatpush1.msra.mxu0 0.0
  %2898 = vmatprep.subr.mxu0 0.0
  %2899 = vmatpush1.msra.mxu0 0.0
  %2900 = vmatprep.subr.mxu0 0.0
  %2901 = vmatpush1.msra.mxu0 0.0
  %2902 = vmatprep.subr.mxu0 0.0
  %2903 = vmatpush1.msra.mxu0 0.0
  %2904 = vmatprep.subr.mxu0 0.0
  %2905 = vmatpush1.msra.mxu0 0.0
  %2906 = vmatprep.subr.mxu0 0.0
  %2907 = vmatpush1.msra.mxu0 0.0
  %2908 = vmatprep.subr.mxu0 0.0
  %2909 = vmatpush1.msra.mxu0 0.0
  %2910 = vmatprep.subr.mxu0 0.0
  %2911 = vmatpush1.msra.mxu0 0.0
  %2912 = vmatprep.subr.mxu0 0.0
  %2913 = vmatpush1.msra.mxu0 0.0
  %2914 = vmatprep.subr.mxu0 0.0
  %2915 = vmatpush1.msra.mxu0 0.0
  %2916 = vmatprep.subr.mxu0 0.0
  %2917 = vmatpush1.msra.mxu0 0.0
  %2918 = vmatprep.subr.mxu0 0.0
  %2919 = vmatpush1.msra.mxu0 0.0
  %2920 = vmatprep.subr.mxu0 0.0
  %2921 = vmatpush1.msra.mxu0 0.0
  %2922 = vmatprep.subr.mxu0 0.0
  %2923 = vmatpush1.msra.mxu0 0.0
  %2924 = vmatprep.subr.mxu0 0.0
  %2925 = vmatpush1.msra.mxu0 0.0
  %2926 = vmatprep.subr.mxu0 0.0
  %2927 = vmatpush1.msra.mxu0 0.0
  %2928 = vmatprep.subr.mxu0 0.0
  %2929 = vmatpush1.msra.mxu0 0.0
  %2930 = vmatprep.subr.mxu0 0.0
  %2931 = vmatpush1.msra.mxu0 0.0
  %2932 = vmatprep.subr.mxu0 0.0
  %2933 = vmatpush1.msra.mxu0 0.0
  %2934 = vmatprep.subr.mxu0 0.0
  %2935 = vmatpush1.msra.mxu0 0.0
  %2936 = vmatprep.subr.mxu0 0.0
  %2937 = vmatpush1.msra.mxu0 0.0
  %2938 = vmatprep.subr.mxu0 0.0
  %2939 = vmatpush1.msra.mxu0 0.0
  %2940 = vmatprep.subr.mxu0 0.0
  %2941 = vmatpush1.msra.mxu0 0.0
  %2942 = vmatprep.subr.mxu0 0.0
  %2943 = vmatpush1.msra.mxu0 0.0
  %2944 = vmatprep.subr.mxu0 0.0
  %2945 = vmatpush1.msra.mxu0 0.0
  %2946 = vmatprep.subr.mxu0 0.0
  %2947 = vmatpush1.msra.mxu0 0.0
  %2948 = vmatprep.subr.mxu0 0.0
  %2949 = vmatpush1.msra.mxu0 0.0
  %2950 = vmatprep.subr.mxu0 0.0
  %2951 = vmatpush1.msra.mxu0 0.0
  %2952 = vmatprep.subr.mxu0 0.0
  %2953 = vmatpush1.msra.mxu0 0.0
  %2954 = vmatprep.mubr.f32.mxu0 0.0
  %v2955 = vand.u32 %v140, 4294901760
  %v2956 = vsub.f32 %v140, %v2955
  %2957 = vmatmul.mubr.f32.gmra.mrb[0].mxu0 %v2956
  %v2958 = vpop.f32.mrb[0].mxu0
  %v2959 = vadd.f32 %v2883, %v2958
  %v2960 = vpop.f32.mrb[0].mxu0
  %2961 = vdwg.mxu0
  %2962 = vmatprep.subr.mxu0 0.0
  %v2963 = vand.u32 %v129, 4294901760
  %2964 = vmatpush1.msra.mxu0 %v2963
  %2965 = vmatprep.subr.mxu0 0.0
  %v2966 = vand.u32 %v130, 4294901760
  %2967 = vmatpush1.msra.mxu0 %v2966
  %2968 = vmatprep.subr.mxu0 0.0
  %2969 = vmatpush1.msra.mxu0 0.0
  %2970 = vmatprep.subr.mxu0 0.0
  %2971 = vmatpush1.msra.mxu0 0.0
  %2972 = vmatprep.subr.mxu0 0.0
  %2973 = vmatpush1.msra.mxu0 0.0
  %2974 = vmatprep.subr.mxu0 0.0
  %2975 = vmatpush1.msra.mxu0 0.0
  %2976 = vmatprep.subr.mxu0 0.0
  %2977 = vmatpush1.msra.mxu0 0.0
  %2978 = vmatprep.subr.mxu0 0.0
  %2979 = vmatpush1.msra.mxu0 0.0
  %2980 = vmatprep.subr.mxu0 0.0
  %2981 = vmatpush1.msra.mxu0 0.0
  %2982 = vmatprep.subr.mxu0 0.0
  %2983 = vmatpush1.msra.mxu0 0.0
  %2984 = vmatprep.subr.mxu0 0.0
  %2985 = vmatpush1.msra.mxu0 0.0
  %2986 = vmatprep.subr.mxu0 0.0
  %2987 = vmatpush1.msra.mxu0 0.0
  %2988 = vmatprep.subr.mxu0 0.0
  %2989 = vmatpush1.msra.mxu0 0.0
  %2990 = vmatprep.subr.mxu0 0.0
  %2991 = vmatpush1.msra.mxu0 0.0
  %2992 = vmatprep.subr.mxu0 0.0
  %2993 = vmatpush1.msra.mxu0 0.0
  %2994 = vmatprep.subr.mxu0 0.0
  %2995 = vmatpush1.msra.mxu0 0.0
  %2996 = vmatprep.subr.mxu0 0.0
  %2997 = vmatpush1.msra.mxu0 0.0
  %2998 = vmatprep.subr.mxu0 0.0
  %2999 = vmatpush1.msra.mxu0 0.0
  %3000 = vmatprep.subr.mxu0 0.0
  %3001 = vmatpush1.msra.mxu0 0.0
  %3002 = vmatprep.subr.mxu0 0.0
  %3003 = vmatpush1.msra.mxu0 0.0
  %3004 = vmatprep.subr.mxu0 0.0
  %3005 = vmatpush1.msra.mxu0 0.0
  %3006 = vmatprep.subr.mxu0 0.0
  %3007 = vmatpush1.msra.mxu0 0.0
  %3008 = vmatprep.subr.mxu0 0.0
  %3009 = vmatpush1.msra.mxu0 0.0
  %3010 = vmatprep.subr.mxu0 0.0
  %3011 = vmatpush1.msra.mxu0 0.0
  %3012 = vmatprep.subr.mxu0 0.0
  %3013 = vmatpush1.msra.mxu0 0.0
  %3014 = vmatprep.subr.mxu0 0.0
  %3015 = vmatpush1.msra.mxu0 0.0
  %3016 = vmatprep.subr.mxu0 0.0
  %3017 = vmatpush1.msra.mxu0 0.0
  %3018 = vmatprep.subr.mxu0 0.0
  %3019 = vmatpush1.msra.mxu0 0.0
  %3020 = vmatprep.subr.mxu0 0.0
  %3021 = vmatpush1.msra.mxu0 0.0
  %3022 = vmatprep.subr.mxu0 0.0
  %3023 = vmatpush1.msra.mxu0 0.0
  %3024 = vmatprep.subr.mxu0 0.0
  %3025 = vmatpush1.msra.mxu0 0.0
  %3026 = vmatprep.subr.mxu0 0.0
  %3027 = vmatpush1.msra.mxu0 0.0
  %3028 = vmatprep.mubr.f32.mxu0 0.0
  %v3029 = vand.u32 %v140, 4294901760
  %v3030 = vsub.f32 %v140, %v3029
  %v3031 = vand.u32 %v3030, 4294901760
  %3032 = vmatmul.mubr.f32.gmra.mrb[0].mxu0 %v3031
  %v3033 = vpop.f32.mrb[0].mxu0
  %v3034 = vadd.f32 %v2959, %v3033
  %v3035 = vpop.f32.mrb[0].mxu0
  %3036 = vdwg.mxu0
  %3037 = vmatprep.subr.mxu0 0.0
  %v3038 = vand.u32 %v129, 4294901760
  %v3039 = vsub.f32 %v129, %v3038
  %v3040 = vand.u32 %v3039, 4294901760
  %3041 = vmatpush1.msra.mxu0 %v3040
  %3042 = vmatprep.subr.mxu0 0.0
  %v3043 = vand.u32 %v130, 4294901760
  %v3044 = vsub.f32 %v130, %v3043
  %v3045 = vand.u32 %v3044, 4294901760
  %3046 = vmatpush1.msra.mxu0 %v3045
  %3047 = vmatprep.subr.mxu0 0.0
  %3048 = vmatpush1.msra.mxu0 0.0
  %3049 = vmatprep.subr.mxu0 0.0
  %3050 = vmatpush1.msra.mxu0 0.0
  %3051 = vmatprep.subr.mxu0 0.0
  %3052 = vmatpush1.msra.mxu0 0.0
  %3053 = vmatprep.subr.mxu0 0.0
  %3054 = vmatpush1.msra.mxu0 0.0
  %3055 = vmatprep.subr.mxu0 0.0
  %3056 = vmatpush1.msra.mxu0 0.0
  %3057 = vmatprep.subr.mxu0 0.0
  %3058 = vmatpush1.msra.mxu0 0.0
  %3059 = vmatprep.subr.mxu0 0.0
  %3060 = vmatpush1.msra.mxu0 0.0
  %3061 = vmatprep.subr.mxu0 0.0
  %3062 = vmatpush1.msra.mxu0 0.0
  %3063 = vmatprep.subr.mxu0 0.0
  %3064 = vmatpush1.msra.mxu0 0.0
  %3065 = vmatprep.subr.mxu0 0.0
  %3066 = vmatpush1.msra.mxu0 0.0
  %3067 = vmatprep.subr.mxu0 0.0
  %3068 = vmatpush1.msra.mxu0 0.0
  %3069 = vmatprep.subr.mxu0 0.0
  %3070 = vmatpush1.msra.mxu0 0.0
  %3071 = vmatprep.subr.mxu0 0.0
  %3072 = vmatpush1.msra.mxu0 0.0
  %3073 = vmatprep.subr.mxu0 0.0
  %3074 = vmatpush1.msra.mxu0 0.0
  %3075 = vmatprep.subr.mxu0 0.0
  %3076 = vmatpush1.msra.mxu0 0.0
  %3077 = vmatprep.subr.mxu0 0.0
  %3078 = vmatpush1.msra.mxu0 0.0
  %3079 = vmatprep.subr.mxu0 0.0
  %3080 = vmatpush1.msra.mxu0 0.0
  %3081 = vmatprep.subr.mxu0 0.0
  %3082 = vmatpush1.msra.mxu0 0.0
  %3083 = vmatprep.subr.mxu0 0.0
  %3084 = vmatpush1.msra.mxu0 0.0
  %3085 = vmatprep.subr.mxu0 0.0
  %3086 = vmatpush1.msra.mxu0 0.0
  %3087 = vmatprep.subr.mxu0 0.0
  %3088 = vmatpush1.msra.mxu0 0.0
  %3089 = vmatprep.subr.mxu0 0.0
  %3090 = vmatpush1.msra.mxu0 0.0
  %3091 = vmatprep.subr.mxu0 0.0
  %3092 = vmatpush1.msra.mxu0 0.0
  %3093 = vmatprep.subr.mxu0 0.0
  %3094 = vmatpush1.msra.mxu0 0.0
  %3095 = vmatprep.subr.mxu0 0.0
  %3096 = vmatpush1.msra.mxu0 0.0
  %3097 = vmatprep.subr.mxu0 0.0
  %3098 = vmatpush1.msra.mxu0 0.0
  %3099 = vmatprep.subr.mxu0 0.0
  %3100 = vmatpush1.msra.mxu0 0.0
  %3101 = vmatprep.subr.mxu0 0.0
  %3102 = vmatpush1.msra.mxu0 0.0
  %3103 = vmatprep.subr.mxu0 0.0
  %3104 = vmatpush1.msra.mxu0 0.0
  %3105 = vmatprep.subr.mxu0 0.0
  %3106 = vmatpush1.msra.mxu0 0.0
  %3107 = vmatprep.mubr.f32.mxu0 0.0
  %v3108 = vand.u32 %v140, 4294901760
  %3109 = vmatmul.mubr.f32.gmra.mrb[0].mxu0 %v3108
  %v3110 = vpop.f32.mrb[0].mxu0
  %v3111 = vadd.f32 %v3034, %v3110
  %v3112 = vpop.f32.mrb[0].mxu0
  %3113 = vdwg.mxu0
  %3114 = vmatprep.subr.mxu0 0.0
  %v3115 = vand.u32 %v129, 4294901760
  %3116 = vmatpush1.msra.mxu0 %v3115
  %3117 = vmatprep.subr.mxu0 0.0
  %v3118 = vand.u32 %v130, 4294901760
  %3119 = vmatpush1.msra.mxu0 %v3118
  %3120 = vmatprep.subr.mxu0 0.0
  %3121 = vmatpush1.msra.mxu0 0.0
  %3122 = vmatprep.subr.mxu0 0.0
  %3123 = vmatpush1.msra.mxu0 0.0
  %3124 = vmatprep.subr.mxu0 0.0
  %3125 = vmatpush1.msra.mxu0 0.0
  %3126 = vmatprep.subr.mxu0 0.0
  %3127 = vmatpush1.msra.mxu0 0.0
  %3128 = vmatprep.subr.mxu0 0.0
  %3129 = vmatpush1.msra.mxu0 0.0
  %3130 = vmatprep.subr.mxu0 0.0
  %3131 = vmatpush1.msra.mxu0 0.0
  %3132 = vmatprep.subr.mxu0 0.0
  %3133 = vmatpush1.msra.mxu0 0.0
  %3134 = vmatprep.subr.mxu0 0.0
  %3135 = vmatpush1.msra.mxu0 0.0
  %3136 = vmatprep.subr.mxu0 0.0
  %3137 = vmatpush1.msra.mxu0 0.0
  %3138 = vmatprep.subr.mxu0 0.0
  %3139 = vmatpush1.msra.mxu0 0.0
  %3140 = vmatprep.subr.mxu0 0.0
  %3141 = vmatpush1.msra.mxu0 0.0
  %3142 = vmatprep.subr.mxu0 0.0
  %3143 = vmatpush1.msra.mxu0 0.0
  %3144 = vmatprep.subr.mxu0 0.0
  %3145 = vmatpush1.msra.mxu0 0.0
  %3146 = vmatprep.subr.mxu0 0.0
  %3147 = vmatpush1.msra.mxu0 0.0
  %3148 = vmatprep.subr.mxu0 0.0
  %3149 = vmatpush1.msra.mxu0 0.0
  %3150 = vmatprep.subr.mxu0 0.0
  %3151 = vmatpush1.msra.mxu0 0.0
  %3152 = vmatprep.subr.mxu0 0.0
  %3153 = vmatpush1.msra.mxu0 0.0
  %3154 = vmatprep.subr.mxu0 0.0
  %3155 = vmatpush1.msra.mxu0 0.0
  %3156 = vmatprep.subr.mxu0 0.0
  %3157 = vmatpush1.msra.mxu0 0.0
  %3158 = vmatprep.subr.mxu0 0.0
  %3159 = vmatpush1.msra.mxu0 0.0
  %3160 = vmatprep.subr.mxu0 0.0
  %3161 = vmatpush1.msra.mxu0 0.0
  %3162 = vmatprep.subr.mxu0 0.0
  %3163 = vmatpush1.msra.mxu0 0.0
  %3164 = vmatprep.subr.mxu0 0.0
  %3165 = vmatpush1.msra.mxu0 0.0
  %3166 = vmatprep.subr.mxu0 0.0
  %3167 = vmatpush1.msra.mxu0 0.0
  %3168 = vmatprep.subr.mxu0 0.0
  %3169 = vmatpush1.msra.mxu0 0.0
  %3170 = vmatprep.subr.mxu0 0.0
  %3171 = vmatpush1.msra.mxu0 0.0
  %3172 = vmatprep.subr.mxu0 0.0
  %3173 = vmatpush1.msra.mxu0 0.0
  %3174 = vmatprep.subr.mxu0 0.0
  %3175 = vmatpush1.msra.mxu0 0.0
  %3176 = vmatprep.subr.mxu0 0.0
  %3177 = vmatpush1.msra.mxu0 0.0
  %3178 = vmatprep.subr.mxu0 0.0
  %3179 = vmatpush1.msra.mxu0 0.0
  %3180 = vmatprep.mubr.f32.mxu0 0.0
  %v3181 = vand.u32 %v140, 4294901760
  %3182 = vmatmul.mubr.f32.gmra.mrb[0].mxu0 %v3181
  %v3183 = vpop.f32.mrb[0].mxu0
  %v3184 = vadd.f32 %v3111, %v3183
  %v3185 = vpop.f32.mrb[0].mxu0
  %3186 = vdwg.mxu0
  %v3187 = vmax.f32 %v3184, 0.0
  %v3188 = vld [vmem:[%s3] sm:$0xff]
  %v3189 = vld [vmem:[%s3 + $0x8] sm:$0xff]
  %v3190 = vld [vmem:[%s3 + $0x10] sm:$0xff]
  %v3191 = vld [vmem:[%s3 + $0x18] sm:$0xff]
  %v3192 = vld [vmem:[%s3 + $0x20] sm:$0xff]
  %v3193 = vld [vmem:[%s3 + $0x28] sm:$0xff]
  %v3194 = vld [vmem:[%s3 + $0x30] sm:$0xff]
  %v3195 = vld [vmem:[%s3 + $0x38] sm:$0xff]
  %v3196 = vld [vmem:[%s3 + $0x40] sm:$0xff]
  %v3197 = vld [vmem:[%s3 + $0x48] sm:$0xff]
  %v3198 = vld [vmem:[%s3 + $0x50] sm:$0xff]
  %v3199 = vld [vmem:[%s3 + $0x58] sm:$0xff]
  %v3200 = vld [vmem:[%s3 + $0x60] sm:$0xff]
  %v3201 = vld [vmem:[%s3 + $0x68] sm:$0xff]
  %v3202 = vld [vmem:[%s3 + $0x70] sm:$0xff]
  %v3203 = vld [vmem:[%s3 + $0x78] sm:$0xff]
  %v3204 = vld [vmem:[%s4] sm:$0x1]
  %v3206 = vlaneseq
  %v3207 = vshrl.u32 %v3206, 7
  %v3208 = vsub.s32 0, %v3207
  %v3209 = vrot.slane %v3204, %v3208
  %3211 = vmatprep.subr.mxu0 0.0
  %v3212 = vand.u32 %v3188, 4294901760
  %3213 = vmatpush1.msra.mxu0 %v3212
  %3214 = vmatprep.subr.mxu0 0.0
  %v3215 = vand.u32 %v3189, 4294901760
  %3216 = vmatpush1.msra.mxu0 %v3215
  %3217 = vmatprep.subr.mxu0 0.0
  %v3218 = vand.u32 %v3190, 4294901760
  %3219 = vmatpush1.msra.mxu0 %v3218
  %3220 = vmatprep.subr.mxu0 0.0
  %v3221 = vand.u32 %v3191, 4294901760
  %3222 = vmatpush1.msra.mxu0 %v3221
  %3223 = vmatprep.subr.mxu0 0.0
  %v3224 = vand.u32 %v3192, 4294901760
  %3225 = vmatpush1.msra.mxu0 %v3224
  %3226 = vmatprep.subr.mxu0 0.0
  %v3227 = vand.u32 %v3193, 4294901760
  %3228 = vmatpush1.msra.mxu0 %v3227
  %3229 = vmatprep.subr.mxu0 0.0
  %v3230 = vand.u32 %v3194, 4294901760
  %3231 = vmatpush1.msra.mxu0 %v3230
  %3232 = vmatprep.subr.mxu0 0.0
  %v3233 = vand.u32 %v3195, 4294901760
  %3234 = vmatpush1.msra.mxu0 %v3233
  %3235 = vmatprep.subr.mxu0 0.0
  %v3236 = vand.u32 %v3196, 4294901760
  %3237 = vmatpush1.msra.mxu0 %v3236
  %3238 = vmatprep.subr.mxu0 0.0
  %v3239 = vand.u32 %v3197, 4294901760
  %3240 = vmatpush1.msra.mxu0 %v3239
  %3241 = vmatprep.subr.mxu0 0.0
  %v3242 = vand.u32 %v3198, 4294901760
  %3243 = vmatpush1.msra.mxu0 %v3242
  %3244 = vmatprep.subr.mxu0 0.0
  %v3245 = vand.u32 %v3199, 4294901760
  %3246 = vmatpush1.msra.mxu0 %v3245
  %3247 = vmatprep.subr.mxu0 0.0
  %v3248 = vand.u32 %v3200, 4294901760
  %3249 = vmatpush1.msra.mxu0 %v3248
  %3250 = vmatprep.subr.mxu0 0.0
  %v3251 = vand.u32 %v3201, 4294901760
  %3252 = vmatpush1.msra.mxu0 %v3251
  %3253 = vmatprep.subr.mxu0 0.0
  %v3254 = vand.u32 %v3202, 4294901760
  %3255 = vmatpush1.msra.mxu0 %v3254
  %3256 = vmatprep.subr.mxu0 0.0
  %v3257 = vand.u32 %v3203, 4294901760
  %3258 = vmatpush1.msra.mxu0 %v3257
  %3259 = vmatprep.subr.mxu0 0.0
  %3260 = vmatpush1.msra.mxu0 0.0
  %3261 = vmatprep.subr.mxu0 0.0
  %3262 = vmatpush1.msra.mxu0 0.0
  %3263 = vmatprep.subr.mxu0 0.0
  %3264 = vmatpush1.msra.mxu0 0.0
  %3265 = vmatprep.subr.mxu0 0.0
  %3266 = vmatpush1.msra.mxu0 0.0
  %3267 = vmatprep.subr.mxu0 0.0
  %3268 = vmatpush1.msra.mxu0 0.0
  %3269 = vmatprep.subr.mxu0 0.0
  %3270 = vmatpush1.msra.mxu0 0.0
  %3271 = vmatprep.subr.mxu0 0.0
  %3272 = vmatpush1.msra.mxu0 0.0
  %3273 = vmatprep.subr.mxu0 0.0
  %3274 = vmatpush1.msra.mxu0 0.0
  %3275 = vmatprep.subr.mxu0 0.0
  %3276 = vmatpush1.msra.mxu0 0.0
  %3277 = vmatprep.subr.mxu0 0.0
  %3278 = vmatpush1.msra.mxu0 0.0
  %3279 = vmatprep.subr.mxu0 0.0
  %3280 = vmatpush1.msra.mxu0 0.0
  %3281 = vmatprep.subr.mxu0 0.0
  %3282 = vmatpush1.msra.mxu0 0.0
  %3283 = vmatprep.subr.mxu0 0.0
  %3284 = vmatpush1.msra.mxu0 0.0
  %3285 = vmatprep.subr.mxu0 0.0
  %3286 = vmatpush1.msra.mxu0 0.0
  %3287 = vmatprep.subr.mxu0 0.0
  %3288 = vmatpush1.msra.mxu0 0.0
  %3289 = vmatprep.subr.mxu0 0.0
  %3290 = vmatpush1.msra.mxu0 0.0
  %3291 = vmatprep.mubr.f32.mxu0 0.0
  %v3292 = vand.u32 %v3187, 4294901760
  %v3293 = vsub.f32 %v3187, %v3292
  %v3294 = vand.u32 %v3293, 4294901760
  %v3295 = vsub.f32 %v3293, %v3294
  %v3296 = vand.u32 %v3295, 4294901760
  %3297 = vmatmul.mubr.f32.gmra.mrb[0].mxu0 %v3296
  %v3298 = vpop.f32.mrb[0].mxu0
  %v3299 = vadd.f32 %v3209, %v3298
  %v3300 = vpop.f32.mrb[0].mxu0
  %3301 = vdwg.mxu0
  %3302 = vmatprep.subr.mxu0 0.0
  %v3303 = vand.u32 %v3188, 4294901760
  %v3304 = vsub.f32 %v3188, %v3303
  %v3305 = vand.u32 %v3304, 4294901760
  %v3306 = vsub.f32 %v3304, %v3305
  %v3307 = vand.u32 %v3306, 4294901760
  %3308 = vmatpush1.msra.mxu0 %v3307
  %3309 = vmatprep.subr.mxu0 0.0
  %v3310 = vand.u32 %v3189, 4294901760
  %v3311 = vsub.f32 %v3189, %v3310
  %v3312 = vand.u32 %v3311, 4294901760
  %v3313 = vsub.f32 %v3311, %v3312
  %v3314 = vand.u32 %v3313, 4294901760
  %3315 = vmatpush1.msra.mxu0 %v3314
  %3316 = vmatprep.subr.mxu0 0.0
  %v3317 = vand.u32 %v3190, 4294901760
  %v3318 = vsub.f32 %v3190, %v3317
  %v3319 = vand.u32 %v3318, 4294901760
  %v3320 = vsub.f32 %v3318, %v3319
  %v3321 = vand.u32 %v3320, 4294901760
  %3322 = vmatpush1.msra.mxu0 %v3321
  %3323 = vmatprep.subr.mxu0 0.0
  %v3324 = vand.u32 %v3191, 4294901760
  %v3325 = vsub.f32 %v3191, %v3324
  %v3326 = vand.u32 %v3325, 4294901760
  %v3327 = vsub.f32 %v3325, %v3326
  %v3328 = vand.u32 %v3327, 4294901760
  %3329 = vmatpush1.msra.mxu0 %v3328
  %3330 = vmatprep.subr.mxu0 0.0
  %v3331 = vand.u32 %v3192, 4294901760
  %v3332 = vsub.f32 %v3192, %v3331
  %v3333 = vand.u32 %v3332, 4294901760
  %v3334 = vsub.f32 %v3332, %v3333
  %v3335 = vand.u32 %v3334, 4294901760
  %3336 = vmatpush1.msra.mxu0 %v3335
  %3337 = vmatprep.subr.mxu0 0.0
  %v3338 = vand.u32 %v3193, 4294901760
  %v3339 = vsub.f32 %v3193, %v3338
  %v3340 = vand.u32 %v3339, 4294901760
  %v3341 = vsub.f32 %v3339, %v3340
  %v3342 = vand.u32 %v3341, 4294901760
  %3343 = vmatpush1.msra.mxu0 %v3342
  %3344 = vmatprep.subr.mxu0 0.0
  %v3345 = vand.u32 %v3194, 4294901760
  %v3346 = vsub.f32 %v3194, %v3345
  %v3347 = vand.u32 %v3346, 4294901760
  %v3348 = vsub.f32 %v3346, %v3347
  %v3349 = vand.u32 %v3348, 4294901760
  %3350 = vmatpush1.msra.mxu0 %v3349
  %3351 = vmatprep.subr.mxu0 0.0
  %v3352 = vand.u32 %v3195, 4294901760
  %v3353 = vsub.f32 %v3195, %v3352
  %v3354 = vand.u32 %v3353, 4294901760
  %v3355 = vsub.f32 %v3353, %v3354
  %v3356 = vand.u32 %v3355, 4294901760
  %3357 = vmatpush1.msra.mxu0 %v3356
  %3358 = vmatprep.subr.mxu0 0.0
  %v3359 = vand.u32 %v3196, 4294901760
  %v3360 = vsub.f32 %v3196, %v3359
  %v3361 = vand.u32 %v3360, 4294901760
  %v3362 = vsub.f32 %v3360, %v3361
  %v3363 = vand.u32 %v3362, 4294901760
  %3364 = vmatpush1.msra.mxu0 %v3363
  %3365 = vmatprep.subr.mxu0 0.0
  %v3366 = vand.u32 %v3197, 4294901760
  %v3367 = vsub.f32 %v3197, %v3366
  %v3368 = vand.u32 %v3367, 4294901760
  %v3369 = vsub.f32 %v3367, %v3368
  %v3370 = vand.u32 %v3369, 4294901760
  %3371 = vmatpush1.msra.mxu0 %v3370
  %3372 = vmatprep.subr.mxu0 0.0
  %v3373 = vand.u32 %v3198, 4294901760
  %v3374 = vsub.f32 %v3198, %v3373
  %v3375 = vand.u32 %v3374, 4294901760
  %v3376 = vsub.f32 %v3374, %v3375
  %v3377 = vand.u32 %v3376, 4294901760
  %3378 = vmatpush1.msra.mxu0 %v3377
  %3379 = vmatprep.subr.mxu0 0.0
  %v3380 = vand.u32 %v3199, 4294901760
  %v3381 = vsub.f32 %v3199, %v3380
  %v3382 = vand.u32 %v3381, 4294901760
  %v3383 = vsub.f32 %v3381, %v3382
  %v3384 = vand.u32 %v3383, 4294901760
  %3385 = vmatpush1.msra.mxu0 %v3384
  %3386 = vmatprep.subr.mxu0 0.0
  %v3387 = vand.u32 %v3200, 4294901760
  %v3388 = vsub.f32 %v3200, %v3387
  %v3389 = vand.u32 %v3388, 4294901760
  %v3390 = vsub.f32 %v3388, %v3389
  %v3391 = vand.u32 %v3390, 4294901760
  %3392 = vmatpush1.msra.mxu0 %v3391
  %3393 = vmatprep.subr.mxu0 0.0
  %v3394 = vand.u32 %v3201, 4294901760
  %v3395 = vsub.f32 %v3201, %v3394
  %v3396 = vand.u32 %v3395, 4294901760
  %v3397 = vsub.f32 %v3395, %v3396
  %v3398 = vand.u32 %v3397, 4294901760
  %3399 = vmatpush1.msra.mxu0 %v3398
  %3400 = vmatprep.subr.mxu0 0.0
  %v3401 = vand.u32 %v3202, 4294901760
  %v3402 = vsub.f32 %v3202, %v3401
  %v3403 = vand.u32 %v3402, 4294901760
  %v3404 = vsub.f32 %v3402, %v3403
  %v3405 = vand.u32 %v3404, 4294901760
  %3406 = vmatpush1.msra.mxu0 %v3405
  %3407 = vmatprep.subr.mxu0 0.0
  %v3408 = vand.u32 %v3203, 4294901760
  %v3409 = vsub.f32 %v3203, %v3408
  %v3410 = vand.u32 %v3409, 4294901760
  %v3411 = vsub.f32 %v3409, %v3410
  %v3412 = vand.u32 %v3411, 4294901760
  %3413 = vmatpush1.msra.mxu0 %v3412
  %3414 = vmatprep.subr.mxu0 0.0
  %3415 = vmatpush1.msra.mxu0 0.0
  %3416 = vmatprep.subr.mxu0 0.0
  %3417 = vmatpush1.msra.mxu0 0.0
  %3418 = vmatprep.subr.mxu0 0.0
  %3419 = vmatpush1.msra.mxu0 0.0
  %3420 = vmatprep.subr.mxu0 0.0
  %3421 = vmatpush1.msra.mxu0 0.0
  %3422 = vmatprep.subr.mxu0 0.0
  %3423 = vmatpush1.msra.mxu0 0.0
  %3424 = vmatprep.subr.mxu0 0.0
  %3425 = vmatpush1.msra.mxu0 0.0
  %3426 = vmatprep.subr.mxu0 0.0
  %3427 = vmatpush1.msra.mxu0 0.0
  %3428 = vmatprep.subr.mxu0 0.0
  %3429 = vmatpush1.msra.mxu0 0.0
  %3430 = vmatprep.subr.mxu0 0.0
  %3431 = vmatpush1.msra.mxu0 0.0
  %3432 = vmatprep.subr.mxu0 0.0
  %3433 = vmatpush1.msra.mxu0 0.0
  %3434 = vmatprep.subr.mxu0 0.0
  %3435 = vmatpush1.msra.mxu0 0.0
  %3436 = vmatprep.subr.mxu0 0.0
  %3437 = vmatpush1.msra.mxu0 0.0
  %3438 = vmatprep.subr.mxu0 0.0
  %3439 = vmatpush1.msra.mxu0 0.0
  %3440 = vmatprep.subr.mxu0 0.0
  %3441 = vmatpush1.msra.mxu0 0.0
  %3442 = vmatprep.subr.mxu0 0.0
  %3443 = vmatpush1.msra.mxu0 0.0
  %3444 = vmatprep.subr.mxu0 0.0
  %3445 = vmatpush1.msra.mxu0 0.0
  %3446 = vmatprep.mubr.f32.mxu0 0.0
  %v3447 = vand.u32 %v3187, 4294901760
  %3448 = vmatmul.mubr.f32.gmra.mrb[0].mxu0 %v3447
  %v3449 = vpop.f32.mrb[0].mxu0
  %v3450 = vadd.f32 %v3299, %v3449
  %v3451 = vpop.f32.mrb[0].mxu0
  %3452 = vdwg.mxu0
  %3453 = vmatprep.subr.mxu0 0.0
  %v3454 = vand.u32 %v3188, 4294901760
  %v3455 = vsub.f32 %v3188, %v3454
  %3456 = vmatpush1.msra.mxu0 %v3455
  %3457 = vmatprep.subr.mxu0 0.0
  %v3458 = vand.u32 %v3189, 4294901760
  %v3459 = vsub.f32 %v3189, %v3458
  %3460 = vmatpush1.msra.mxu0 %v3459
  %3461 = vmatprep.subr.mxu0 0.0
  %v3462 = vand.u32 %v3190, 4294901760
  %v3463 = vsub.f32 %v3190, %v3462
  %3464 = vmatpush1.msra.mxu0 %v3463
  %3465 = vmatprep.subr.mxu0 0.0
  %v3466 = vand.u32 %v3191, 4294901760
  %v3467 = vsub.f32 %v3191, %v3466
  %3468 = vmatpush1.msra.mxu0 %v3467
  %3469 = vmatprep.subr.mxu0 0.0
  %v3470 = vand.u32 %v3192, 4294901760
  %v3471 = vsub.f32 %v3192, %v3470
  %3472 = vmatpush1.msra.mxu0 %v3471
  %3473 = vmatprep.subr.mxu0 0.0
  %v3474 = vand.u32 %v3193, 4294901760
  %v3475 = vsub.f32 %v3193, %v3474
  %3476 = vmatpush1.msra.mxu0 %v3475
  %3477 = vmatprep.subr.mxu0 0.0
  %v3478 = vand.u32 %v3194, 4294901760
  %v3479 = vsub.f32 %v3194, %v3478
  %3480 = vmatpush1.msra.mxu0 %v3479
  %3481 = vmatprep.subr.mxu0 0.0
  %v3482 = vand.u32 %v3195, 4294901760
  %v3483 = vsub.f32 %v3195, %v3482
  %3484 = vmatpush1.msra.mxu0 %v3483
  %3485 = vmatprep.subr.mxu0 0.0
  %v3486 = vand.u32 %v3196, 4294901760
  %v3487 = vsub.f32 %v3196, %v3486
  %3488 = vmatpush1.msra.mxu0 %v3487
  %3489 = vmatprep.subr.mxu0 0.0
  %v3490 = vand.u32 %v3197, 4294901760
  %v3491 = vsub.f32 %v3197, %v3490
  %3492 = vmatpush1.msra.mxu0 %v3491
  %3493 = vmatprep.subr.mxu0 0.0
  %v3494 = vand.u32 %v3198, 4294901760
  %v3495 = vsub.f32 %v3198, %v3494
  %3496 = vmatpush1.msra.mxu0 %v3495
  %3497 = vmatprep.subr.mxu0 0.0
  %v3498 = vand.u32 %v3199, 4294901760
  %v3499 = vsub.f32 %v3199, %v3498
  %3500 = vmatpush1.msra.mxu0 %v3499
  %3501 = vmatprep.subr.mxu0 0.0
  %v3502 = vand.u32 %v3200, 4294901760
  %v3503 = vsub.f32 %v3200, %v3502
  %3504 = vmatpush1.msra.mxu0 %v3503
  %3505 = vmatprep.subr.mxu0 0.0
  %v3506 = vand.u32 %v3201, 4294901760
  %v3507 = vsub.f32 %v3201, %v3506
  %3508 = vmatpush1.msra.mxu0 %v3507
  %3509 = vmatprep.subr.mxu0 0.0
  %v3510 = vand.u32 %v3202, 4294901760
  %v3511 = vsub.f32 %v3202, %v3510
  %3512 = vmatpush1.msra.mxu0 %v3511
  %3513 = vmatprep.subr.mxu0 0.0
  %v3514 = vand.u32 %v3203, 4294901760
  %v3515 = vsub.f32 %v3203, %v3514
  %3516 = vmatpush1.msra.mxu0 %v3515
  %3517 = vmatprep.subr.mxu0 0.0
  %3518 = vmatpush1.msra.mxu0 0.0
  %3519 = vmatprep.subr.mxu0 0.0
  %3520 = vmatpush1.msra.mxu0 0.0
  %3521 = vmatprep.subr.mxu0 0.0
  %3522 = vmatpush1.msra.mxu0 0.0
  %3523 = vmatprep.subr.mxu0 0.0
  %3524 = vmatpush1.msra.mxu0 0.0
  %3525 = vmatprep.subr.mxu0 0.0
  %3526 = vmatpush1.msra.mxu0 0.0
  %3527 = vmatprep.subr.mxu0 0.0
  %3528 = vmatpush1.msra.mxu0 0.0
  %3529 = vmatprep.subr.mxu0 0.0
  %3530 = vmatpush1.msra.mxu0 0.0
  %3531 = vmatprep.subr.mxu0 0.0
  %3532 = vmatpush1.msra.mxu0 0.0
  %3533 = vmatprep.subr.mxu0 0.0
  %3534 = vmatpush1.msra.mxu0 0.0
  %3535 = vmatprep.subr.mxu0 0.0
  %3536 = vmatpush1.msra.mxu0 0.0
  %3537 = vmatprep.subr.mxu0 0.0
  %3538 = vmatpush1.msra.mxu0 0.0
  %3539 = vmatprep.subr.mxu0 0.0
  %3540 = vmatpush1.msra.mxu0 0.0
  %3541 = vmatprep.subr.mxu0 0.0
  %3542 = vmatpush1.msra.mxu0 0.0
  %3543 = vmatprep.subr.mxu0 0.0
  %3544 = vmatpush1.msra.mxu0 0.0
  %3545 = vmatprep.subr.mxu0 0.0
  %3546 = vmatpush1.msra.mxu0 0.0
  %3547 = vmatprep.subr.mxu0 0.0
  %3548 = vmatpush1.msra.mxu0 0.0
  %3549 = vmatprep.mubr.f32.mxu0 0.0
  %v3550 = vand.u32 %v3187, 4294901760
  %v3551 = vsub.f32 %v3187, %v3550
  %3552 = vmatmul.mubr.f32.gmra.mrb[0].mxu0 %v3551
  %v3553 = vpop.f32.mrb[0].mxu0
  %v3554 = vadd.f32 %v3450, %v3553
  %v3555 = vpop.f32.mrb[0].mxu0
  %3556 = vdwg.mxu0
  %3557 = vmatprep.subr.mxu0 0.0
  %v3558 = vand.u32 %v3188, 4294901760
  %3559 = vmatpush1.msra.mxu0 %v3558
  %3560 = vmatprep.subr.mxu0 0.0
  %v3561 = vand.u32 %v3189, 4294901760
  %3562 = vmatpush1.msra.mxu0 %v3561
  %3563 = vmatprep.subr.mxu0 0.0
  %v3564 = vand.u32 %v3190, 4294901760
  %3565 = vmatpush1.msra.mxu0 %v3564
  %3566 = vmatprep.subr.mxu0 0.0
  %v3567 = vand.u32 %v3191, 4294901760
  %3568 = vmatpush1.msra.mxu0 %v3567
  %3569 = vmatprep.subr.mxu0 0.0
  %v3570 = vand.u32 %v3192, 4294901760
  %3571 = vmatpush1.msra.mxu0 %v3570
  %3572 = vmatprep.subr.mxu0 0.0
  %v3573 = vand.u32 %v3193, 4294901760
  %3574 = vmatpush1.msra.mxu0 %v3573
  %3575 = vmatprep.subr.mxu0 0.0
  %v3576 = vand.u32 %v3194, 4294901760
  %3577 = vmatpush1.msra.mxu0 %v3576
  %3578 = vmatprep.subr.mxu0 0.0
  %v3579 = vand.u32 %v3195, 4294901760
  %3580 = vmatpush1.msra.mxu0 %v3579
  %3581 = vmatprep.subr.mxu0 0.0
  %v3582 = vand.u32 %v3196, 4294901760
  %3583 = vmatpush1.msra.mxu0 %v3582
  %3584 = vmatprep.subr.mxu0 0.0
  %v3585 = vand.u32 %v3197, 4294901760
  %3586 = vmatpush1.msra.mxu0 %v3585
  %3587 = vmatprep.subr.mxu0 0.0
  %v3588 = vand.u32 %v3198, 4294901760
  %3589 = vmatpush1.msra.mxu0 %v3588
  %3590 = vmatprep.subr.mxu0 0.0
  %v3591 = vand.u32 %v3199, 4294901760
  %3592 = vmatpush1.msra.mxu0 %v3591
  %3593 = vmatprep.subr.mxu0 0.0
  %v3594 = vand.u32 %v3200, 4294901760
  %3595 = vmatpush1.msra.mxu0 %v3594
  %3596 = vmatprep.subr.mxu0 0.0
  %v3597 = vand.u32 %v3201, 4294901760
  %3598 = vmatpush1.msra.mxu0 %v3597
  %3599 = vmatprep.subr.mxu0 0.0
  %v3600 = vand.u32 %v3202, 4294901760
  %3601 = vmatpush1.msra.mxu0 %v3600
  %3602 = vmatprep.subr.mxu0 0.0
  %v3603 = vand.u32 %v3203, 4294901760
  %3604 = vmatpush1.msra.mxu0 %v3603
  %3605 = vmatprep.subr.mxu0 0.0
  %3606 = vmatpush1.msra.mxu0 0.0
  %3607 = vmatprep.subr.mxu0 0.0
  %3608 = vmatpush1.msra.mxu0 0.0
  %3609 = vmatprep.subr.mxu0 0.0
  %3610 = vmatpush1.msra.mxu0 0.0
  %3611 = vmatprep.subr.mxu0 0.0
  %3612 = vmatpush1.msra.mxu0 0.0
  %3613 = vmatprep.subr.mxu0 0.0
  %3614 = vmatpush1.msra.mxu0 0.0
  %3615 = vmatprep.subr.mxu0 0.0
  %3616 = vmatpush1.msra.mxu0 0.0
  %3617 = vmatprep.subr.mxu0 0.0
  %3618 = vmatpush1.msra.mxu0 0.0
  %3619 = vmatprep.subr.mxu0 0.0
  %3620 = vmatpush1.msra.mxu0 0.0
  %3621 = vmatprep.subr.mxu0 0.0
  %3622 = vmatpush1.msra.mxu0 0.0
  %3623 = vmatprep.subr.mxu0 0.0
  %3624 = vmatpush1.msra.mxu0 0.0
  %3625 = vmatprep.subr.mxu0 0.0
  %3626 = vmatpush1.msra.mxu0 0.0
  %3627 = vmatprep.subr.mxu0 0.0
  %3628 = vmatpush1.msra.mxu0 0.0
  %3629 = vmatprep.subr.mxu0 0.0
  %3630 = vmatpush1.msra.mxu0 0.0
  %3631 = vmatprep.subr.mxu0 0.0
  %3632 = vmatpush1.msra.mxu0 0.0
  %3633 = vmatprep.subr.mxu0 0.0
  %3634 = vmatpush1.msra.mxu0 0.0
  %3635 = vmatprep.subr.mxu0 0.0
  %3636 = vmatpush1.msra.mxu0 0.0
  %3637 = vmatprep.mubr.f32.mxu0 0.0
  %v3638 = vand.u32 %v3187, 4294901760
  %v3639 = vsub.f32 %v3187, %v3638
  %v3640 = vand.u32 %v3639, 4294901760
  %3641 = vmatmul.mubr.f32.gmra.mrb[0].mxu0 %v3640
  %v3642 = vpop.f32.mrb[0].mxu0
  %v3643 = vadd.f32 %v3554, %v3642
  %v3644 = vpop.f32.mrb[0].mxu0
  %3645 = vdwg.mxu0
  %3646 = vmatprep.subr.mxu0 0.0
  %v3647 = vand.u32 %v3188, 4294901760
  %v3648 = vsub.f32 %v3188, %v3647
  %v3649 = vand.u32 %v3648, 4294901760
  %3650 = vmatpush1.msra.mxu0 %v3649
  %3651 = vmatprep.subr.mxu0 0.0
  %v3652 = vand.u32 %v3189, 4294901760
  %v3653 = vsub.f32 %v3189, %v3652
  %v3654 = vand.u32 %v3653, 4294901760
  %3655 = vmatpush1.msra.mxu0 %v3654
  %3656 = vmatprep.subr.mxu0 0.0
  %v3657 = vand.u32 %v3190, 4294901760
  %v3658 = vsub.f32 %v3190, %v3657
  %v3659 = vand.u32 %v3658, 4294901760
  %3660 = vmatpush1.msra.mxu0 %v3659
  %3661 = vmatprep.subr.mxu0 0.0
  %v3662 = vand.u32 %v3191, 4294901760
  %v3663 = vsub.f32 %v3191, %v3662
  %v3664 = vand.u32 %v3663, 4294901760
  %3665 = vmatpush1.msra.mxu0 %v3664
  %3666 = vmatprep.subr.mxu0 0.0
  %v3667 = vand.u32 %v3192, 4294901760
  %v3668 = vsub.f32 %v3192, %v3667
  %v3669 = vand.u32 %v3668, 4294901760
  %3670 = vmatpush1.msra.mxu0 %v3669
  %3671 = vmatprep.subr.mxu0 0.0
  %v3672 = vand.u32 %v3193, 4294901760
  %v3673 = vsub.f32 %v3193, %v3672
  %v3674 = vand.u32 %v3673, 4294901760
  %3675 = vmatpush1.msra.mxu0 %v3674
  %3676 = vmatprep.subr.mxu0 0.0
  %v3677 = vand.u32 %v3194, 4294901760
  %v3678 = vsub.f32 %v3194, %v3677
  %v3679 = vand.u32 %v3678, 4294901760
  %3680 = vmatpush1.msra.mxu0 %v3679
  %3681 = vmatprep.subr.mxu0 0.0
  %v3682 = vand.u32 %v3195, 4294901760
  %v3683 = vsub.f32 %v3195, %v3682
  %v3684 = vand.u32 %v3683, 4294901760
  %3685 = vmatpush1.msra.mxu0 %v3684
  %3686 = vmatprep.subr.mxu0 0.0
  %v3687 = vand.u32 %v3196, 4294901760
  %v3688 = vsub.f32 %v3196, %v3687
  %v3689 = vand.u32 %v3688, 4294901760
  %3690 = vmatpush1.msra.mxu0 %v3689
  %3691 = vmatprep.subr.mxu0 0.0
  %v3692 = vand.u32 %v3197, 4294901760
  %v3693 = vsub.f32 %v3197, %v3692
  %v3694 = vand.u32 %v3693, 4294901760
  %3695 = vmatpush1.msra.mxu0 %v3694
  %3696 = vmatprep.subr.mxu0 0.0
  %v3697 = vand.u32 %v3198, 4294901760
  %v3698 = vsub.f32 %v3198, %v3697
  %v3699 = vand.u32 %v3698, 4294901760
  %3700 = vmatpush1.msra.mxu0 %v3699
  %3701 = vmatprep.subr.mxu0 0.0
  %v3702 = vand.u32 %v3199, 4294901760
  %v3703 = vsub.f32 %v3199, %v3702
  %v3704 = vand.u32 %v3703, 4294901760
  %3705 = vmatpush1.msra.mxu0 %v3704
  %3706 = vmatprep.subr.mxu0 0.0
  %v3707 = vand.u32 %v3200, 4294901760
  %v3708 = vsub.f32 %v3200, %v3707
  %v3709 = vand.u32 %v3708, 4294901760
  %3710 = vmatpush1.msra.mxu0 %v3709
  %3711 = vmatprep.subr.mxu0 0.0
  %v3712 = vand.u32 %v3201, 4294901760
  %v3713 = vsub.f32 %v3201, %v3712
  %v3714 = vand.u32 %v3713, 4294901760
  %3715 = vmatpush1.msra.mxu0 %v3714
  %3716 = vmatprep.subr.mxu0 0.0
  %v3717 = vand.u32 %v3202, 4294901760
  %v3718 = vsub.f32 %v3202, %v3717
  %v3719 = vand.u32 %v3718, 4294901760
  %3720 = vmatpush1.msra.mxu0 %v3719
  %3721 = vmatprep.subr.mxu0 0.0
  %v3722 = vand.u32 %v3203, 4294901760
  %v3723 = vsub.f32 %v3203, %v3722
  %v3724 = vand.u32 %v3723, 4294901760
  %3725 = vmatpush1.msra.mxu0 %v3724
  %3726 = vmatprep.subr.mxu0 0.0
  %3727 = vmatpush1.msra.mxu0 0.0
  %3728 = vmatprep.subr.mxu0 0.0
  %3729 = vmatpush1.msra.mxu0 0.0
  %3730 = vmatprep.subr.mxu0 0.0
  %3731 = vmatpush1.msra.mxu0 0.0
  %3732 = vmatprep.subr.mxu0 0.0
  %3733 = vmatpush1.msra.mxu0 0.0
  %3734 = vmatprep.subr.mxu0 0.0
  %3735 = vmatpush1.msra.mxu0 0.0
  %3736 = vmatprep.subr.mxu0 0.0
  %3737 = vmatpush1.msra.mxu0 0.0
  %3738 = vmatprep.subr.mxu0 0.0
  %3739 = vmatpush1.msra.mxu0 0.0
  %3740 = vmatprep.subr.mxu0 0.0
  %3741 = vmatpush1.msra.mxu0 0.0
  %3742 = vmatprep.subr.mxu0 0.0
  %3743 = vmatpush1.msra.mxu0 0.0
  %3744 = vmatprep.subr.mxu0 0.0
  %3745 = vmatpush1.msra.mxu0 0.0
  %3746 = vmatprep.subr.mxu0 0.0
  %3747 = vmatpush1.msra.mxu0 0.0
  %3748 = vmatprep.subr.mxu0 0.0
  %3749 = vmatpush1.msra.mxu0 0.0
  %3750 = vmatprep.subr.mxu0 0.0
  %3751 = vmatpush1.msra.mxu0 0.0
  %3752 = vmatprep.subr.mxu0 0.0
  %3753 = vmatpush1.msra.mxu0 0.0
  %3754 = vmatprep.subr.mxu0 0.0
  %3755 = vmatpush1.msra.mxu0 0.0
  %3756 = vmatprep.subr.mxu0 0.0
  %3757 = vmatpush1.msra.mxu0 0.0
  %3758 = vmatprep.mubr.f32.mxu0 0.0
  %v3759 = vand.u32 %v3187, 4294901760
  %3760 = vmatmul.mubr.f32.gmra.mrb[0].mxu0 %v3759
  %v3761 = vpop.f32.mrb[0].mxu0
  %v3762 = vadd.f32 %v3643, %v3761
  %v3763 = vpop.f32.mrb[0].mxu0
  %3764 = vdwg.mxu0
  %3765 = vmatprep.subr.mxu0 0.0
  %v3766 = vand.u32 %v3188, 4294901760
  %3767 = vmatpush1.msra.mxu0 %v3766
  %3768 = vmatprep.subr.mxu0 0.0
  %v3769 = vand.u32 %v3189, 4294901760
  %3770 = vmatpush1.msra.mxu0 %v3769
  %3771 = vmatprep.subr.mxu0 0.0
  %v3772 = vand.u32 %v3190, 4294901760
  %3773 = vmatpush1.msra.mxu0 %v3772
  %3774 = vmatprep.subr.mxu0 0.0
  %v3775 = vand.u32 %v3191, 4294901760
  %3776 = vmatpush1.msra.mxu0 %v3775
  %3777 = vmatprep.subr.mxu0 0.0
  %v3778 = vand.u32 %v3192, 4294901760
  %3779 = vmatpush1.msra.mxu0 %v3778
  %3780 = vmatprep.subr.mxu0 0.0
  %v3781 = vand.u32 %v3193, 4294901760
  %3782 = vmatpush1.msra.mxu0 %v3781
  %3783 = vmatprep.subr.mxu0 0.0
  %v3784 = vand.u32 %v3194, 4294901760
  %3785 = vmatpush1.msra.mxu0 %v3784
  %3786 = vmatprep.subr.mxu0 0.0
  %v3787 = vand.u32 %v3195, 4294901760
  %3788 = vmatpush1.msra.mxu0 %v3787
  %3789 = vmatprep.subr.mxu0 0.0
  %v3790 = vand.u32 %v3196, 4294901760
  %3791 = vmatpush1.msra.mxu0 %v3790
  %3792 = vmatprep.subr.mxu0 0.0
  %v3793 = vand.u32 %v3197, 4294901760
  %3794 = vmatpush1.msra.mxu0 %v3793
  %3795 = vmatprep.subr.mxu0 0.0
  %v3796 = vand.u32 %v3198, 4294901760
  %3797 = vmatpush1.msra.mxu0 %v3796
  %3798 = vmatprep.subr.mxu0 0.0
  %v3799 = vand.u32 %v3199, 4294901760
  %3800 = vmatpush1.msra.mxu0 %v3799
  %3801 = vmatprep.subr.mxu0 0.0
  %v3802 = vand.u32 %v3200, 4294901760
  %3803 = vmatpush1.msra.mxu0 %v3802
  %3804 = vmatprep.subr.mxu0 0.0
  %v3805 = vand.u32 %v3201, 4294901760
  %3806 = vmatpush1.msra.mxu0 %v3805
  %3807 = vmatprep.subr.mxu0 0.0
  %v3808 = vand.u32 %v3202, 4294901760
  %3809 = vmatpush1.msra.mxu0 %v3808
  %3810 = vmatprep.subr.mxu0 0.0
  %v3811 = vand.u32 %v3203, 4294901760
  %3812 = vmatpush1.msra.mxu0 %v3811
  %3813 = vmatprep.subr.mxu0 0.0
  %3814 = vmatpush1.msra.mxu0 0.0
  %3815 = vmatprep.subr.mxu0 0.0
  %3816 = vmatpush1.msra.mxu0 0.0
  %3817 = vmatprep.subr.mxu0 0.0
  %3818 = vmatpush1.msra.mxu0 0.0
  %3819 = vmatprep.subr.mxu0 0.0
  %3820 = vmatpush1.msra.mxu0 0.0
  %3821 = vmatprep.subr.mxu0 0.0
  %3822 = vmatpush1.msra.mxu0 0.0
  %3823 = vmatprep.subr.mxu0 0.0
  %3824 = vmatpush1.msra.mxu0 0.0
  %3825 = vmatprep.subr.mxu0 0.0
  %3826 = vmatpush1.msra.mxu0 0.0
  %3827 = vmatprep.subr.mxu0 0.0
  %3828 = vmatpush1.msra.mxu0 0.0
  %3829 = vmatprep.subr.mxu0 0.0
  %3830 = vmatpush1.msra.mxu0 0.0
  %3831 = vmatprep.subr.mxu0 0.0
  %3832 = vmatpush1.msra.mxu0 0.0
  %3833 = vmatprep.subr.mxu0 0.0
  %3834 = vmatpush1.msra.mxu0 0.0
  %3835 = vmatprep.subr.mxu0 0.0
  %3836 = vmatpush1.msra.mxu0 0.0
  %3837 = vmatprep.subr.mxu0 0.0
  %3838 = vmatpush1.msra.mxu0 0.0
  %3839 = vmatprep.subr.mxu0 0.0
  %3840 = vmatpush1.msra.mxu0 0.0
  %3841 = vmatprep.subr.mxu0 0.0
  %3842 = vmatpush1.msra.mxu0 0.0
  %3843 = vmatprep.subr.mxu0 0.0
  %3844 = vmatpush1.msra.mxu0 0.0
  %3845 = vmatprep.mubr.f32.mxu0 0.0
  %v3846 = vand.u32 %v3187, 4294901760
  %3847 = vmatmul.mubr.f32.gmra.mrb[0].mxu0 %v3846
  %v3848 = vpop.f32.mrb[0].mxu0
  %v3849 = vadd.f32 %v3762, %v3848
  %v3850 = vpop.f32.mrb[0].mxu0
  %3851 = vdwg.mxu0
  %v3852 = vmax.f32 %v3849, 0.0
  %v3853 = vld [vmem:[%s5] sm:$0xff]
  %v3854 = vld [vmem:[%s5 + $0x8] sm:$0xff]
  %v3855 = vld [vmem:[%s5 + $0x10] sm:$0xff]
  %v3856 = vld [vmem:[%s5 + $0x18] sm:$0xff]
  %v3857 = vld [vmem:[%s5 + $0x20] sm:$0xff]
  %v3858 = vld [vmem:[%s5 + $0x28] sm:$0xff]
  %v3859 = vld [vmem:[%s5 + $0x30] sm:$0xff]
  %v3860 = vld [vmem:[%s5 + $0x38] sm:$0xff]
  %v3861 = vld [vmem:[%s5 + $0x40] sm:$0xff]
  %v3862 = vld [vmem:[%s5 + $0x48] sm:$0xff]
  %v3863 = vld [vmem:[%s5 + $0x50] sm:$0xff]
  %v3864 = vld [vmem:[%s5 + $0x58] sm:$0xff]
  %v3865 = vld [vmem:[%s5 + $0x60] sm:$0xff]
  %v3866 = vld [vmem:[%s5 + $0x68] sm:$0xff]
  %v3867 = vld [vmem:[%s5 + $0x70] sm:$0xff]
  %v3868 = vld [vmem:[%s5 + $0x78] sm:$0xff]
  %v3869 = vld [vmem:[%s5 + $0x80] sm:$0xff]
  %v3870 = vld [vmem:[%s5 + $0x88] sm:$0xff]
  %v3871 = vld [vmem:[%s5 + $0x90] sm:$0xff]
  %v3872 = vld [vmem:[%s5 + $0x98] sm:$0xff]
  %v3873 = vld [vmem:[%s5 + $0xa0] sm:$0xff]
  %v3874 = vld [vmem:[%s5 + $0xa8] sm:$0xff]
  %v3875 = vld [vmem:[%s5 + $0xb0] sm:$0xff]
  %v3876 = vld [vmem:[%s5 + $0xb8] sm:$0xff]
  %v3877 = vld [vmem:[%s5 + $0xc0] sm:$0xff]
  %v3878 = vld [vmem:[%s5 + $0xc8] sm:$0xff]
  %v3879 = vld [vmem:[%s5 + $0xd0] sm:$0xff]
  %v3880 = vld [vmem:[%s5 + $0xd8] sm:$0xff]
  %v3881 = vld [vmem:[%s5 + $0xe0] sm:$0xff]
  %v3882 = vld [vmem:[%s5 + $0xe8] sm:$0xff]
  %v3883 = vld [vmem:[%s5 + $0xf0] sm:$0xff]
  %v3884 = vld [vmem:[%s5 + $0xf8] sm:$0xff]
  %v3885 = vld [vmem:[%s5 + $0x100] sm:$0xff]
  %v3886 = vld [vmem:[%s5 + $0x108] sm:$0xff]
  %v3887 = vld [vmem:[%s5 + $0x110] sm:$0xff]
  %v3888 = vld [vmem:[%s5 + $0x118] sm:$0xff]
  %v3889 = vld [vmem:[%s5 + $0x120] sm:$0xff]
  %v3890 = vld [vmem:[%s5 + $0x128] sm:$0xff]
  %v3891 = vld [vmem:[%s5 + $0x130] sm:$0xff]
  %v3892 = vld [vmem:[%s5 + $0x138] sm:$0xff]
  %v3893 = vld [vmem:[%s5 + $0x140] sm:$0xff]
  %v3894 = vld [vmem:[%s5 + $0x148] sm:$0xff]
  %v3895 = vld [vmem:[%s5 + $0x150] sm:$0xff]
  %v3896 = vld [vmem:[%s5 + $0x158] sm:$0xff]
  %v3897 = vld [vmem:[%s5 + $0x160] sm:$0xff]
  %v3898 = vld [vmem:[%s5 + $0x168] sm:$0xff]
  %v3899 = vld [vmem:[%s5 + $0x170] sm:$0xff]
  %v3900 = vld [vmem:[%s5 + $0x178] sm:$0xff]
  %v3901 = vld [vmem:[%s5 + $0x180] sm:$0xff]
  %v3902 = vld [vmem:[%s5 + $0x188] sm:$0xff]
  %v3903 = vld [vmem:[%s5 + $0x190] sm:$0xff]
  %v3904 = vld [vmem:[%s5 + $0x198] sm:$0xff]
  %v3905 = vld [vmem:[%s5 + $0x1a0] sm:$0xff]
  %v3906 = vld [vmem:[%s5 + $0x1a8] sm:$0xff]
  %v3907 = vld [vmem:[%s5 + $0x1b0] sm:$0xff]
  %v3908 = vld [vmem:[%s5 + $0x1b8] sm:$0xff]
  %v3909 = vld [vmem:[%s5 + $0x1c0] sm:$0xff]
  %v3910 = vld [vmem:[%s5 + $0x1c8] sm:$0xff]
  %v3911 = vld [vmem:[%s5 + $0x1d0] sm:$0xff]
  %v3912 = vld [vmem:[%s5 + $0x1d8] sm:$0xff]
  %v3913 = vld [vmem:[%s5 + $0x1e0] sm:$0xff]
  %v3914 = vld [vmem:[%s5 + $0x1e8] sm:$0xff]
  %v3915 = vld [vmem:[%s5 + $0x1f0] sm:$0xff]
  %v3916 = vld [vmem:[%s5 + $0x1f8] sm:$0xff]
  %v3917 = vld [vmem:[%s5 + $0x200] sm:$0xff]
  %v3918 = vld [vmem:[%s5 + $0x208] sm:$0xff]
  %v3919 = vld [vmem:[%s5 + $0x210] sm:$0xff]
  %v3920 = vld [vmem:[%s5 + $0x218] sm:$0xff]
  %v3921 = vld [vmem:[%s5 + $0x220] sm:$0xff]
  %v3922 = vld [vmem:[%s5 + $0x228] sm:$0xff]
  %v3923 = vld [vmem:[%s5 + $0x230] sm:$0xff]
  %v3924 = vld [vmem:[%s5 + $0x238] sm:$0xff]
  %v3925 = vld [vmem:[%s5 + $0x240] sm:$0xff]
  %v3926 = vld [vmem:[%s5 + $0x248] sm:$0xff]
  %v3927 = vld [vmem:[%s5 + $0x250] sm:$0xff]
  %v3928 = vld [vmem:[%s5 + $0x258] sm:$0xff]
  %v3929 = vld [vmem:[%s5 + $0x260] sm:$0xff]
  %v3930 = vld [vmem:[%s5 + $0x268] sm:$0xff]
  %v3931 = vld [vmem:[%s5 + $0x270] sm:$0xff]
  %v3932 = vld [vmem:[%s5 + $0x278] sm:$0xff]
  %v3933 = vld [vmem:[%s5 + $0x280] sm:$0xff]
  %v3934 = vld [vmem:[%s5 + $0x288] sm:$0xff]
  %v3935 = vld [vmem:[%s5 + $0x290] sm:$0xff]
  %v3936 = vld [vmem:[%s5 + $0x298] sm:$0xff]
  %v3937 = vld [vmem:[%s5 + $0x2a0] sm:$0xff]
  %v3938 = vld [vmem:[%s5 + $0x2a8] sm:$0xff]
  %v3939 = vld [vmem:[%s5 + $0x2b0] sm:$0xff]
  %v3940 = vld [vmem:[%s5 + $0x2b8] sm:$0xff]
  %v3941 = vld [vmem:[%s5 + $0x2c0] sm:$0xff]
  %v3942 = vld [vmem:[%s5 + $0x2c8] sm:$0xff]
  %v3943 = vld [vmem:[%s5 + $0x2d0] sm:$0xff]
  %v3944 = vld [vmem:[%s5 + $0x2d8] sm:$0xff]
  %v3945 = vld [vmem:[%s5 + $0x2e0] sm:$0xff]
  %v3946 = vld [vmem:[%s5 + $0x2e8] sm:$0xff]
  %v3947 = vld [vmem:[%s5 + $0x2f0] sm:$0xff]
  %v3948 = vld [vmem:[%s5 + $0x2f8] sm:$0xff]
  %v3949 = vld [vmem:[%s5 + $0x300] sm:$0xff]
  %v3950 = vld [vmem:[%s5 + $0x308] sm:$0xff]
  %v3951 = vld [vmem:[%s5 + $0x310] sm:$0xff]
  %v3952 = vld [vmem:[%s5 + $0x318] sm:$0xff]
  %v3953 = vld [vmem:[%s5 + $0x320] sm:$0xff]
  %v3954 = vld [vmem:[%s5 + $0x328] sm:$0xff]
  %v3955 = vld [vmem:[%s5 + $0x330] sm:$0xff]
  %v3956 = vld [vmem:[%s5 + $0x338] sm:$0xff]
  %v3957 = vld [vmem:[%s5 + $0x340] sm:$0xff]
  %v3958 = vld [vmem:[%s5 + $0x348] sm:$0xff]
  %v3959 = vld [vmem:[%s5 + $0x350] sm:$0xff]
  %v3960 = vld [vmem:[%s5 + $0x358] sm:$0xff]
  %v3961 = vld [vmem:[%s5 + $0x360] sm:$0xff]
  %v3962 = vld [vmem:[%s5 + $0x368] sm:$0xff]
  %v3963 = vld [vmem:[%s5 + $0x370] sm:$0xff]
  %v3964 = vld [vmem:[%s5 + $0x378] sm:$0xff]
  %v3965 = vld [vmem:[%s6] sm:$0x7f]
  %v3967 = vlaneseq
  %v3968 = vshrl.u32 %v3967, 7
  %v3969 = vsub.s32 0, %v3968
  %v3970 = vrot.slane %v3965, %v3969
  %v3971 = vlaneseq
  %v3972 = vshrl.u32 %v3971, 7
  %v3973 = vsub.s32 1, %v3972
  %v3974 = vrot.slane %v3965, %v3973
  %v3975 = vlaneseq
  %v3976 = vshrl.u32 %v3975, 7
  %v3977 = vsub.s32 2, %v3976
  %v3978 = vrot.slane %v3965, %v3977
  %v3979 = vlaneseq
  %v3980 = vshrl.u32 %v3979, 7
  %v3981 = vsub.s32 3, %v3980
  %v3982 = vrot.slane %v3965, %v3981
  %v3983 = vlaneseq
  %v3984 = vshrl.u32 %v3983, 7
  %v3985 = vsub.s32 4, %v3984
  %v3986 = vrot.slane %v3965, %v3985
  %v3987 = vlaneseq
  %v3988 = vshrl.u32 %v3987, 7
  %v3989 = vsub.s32 5, %v3988
  %v3990 = vrot.slane %v3965, %v3989
  %v3991 = vlaneseq
  %v3992 = vshrl.u32 %v3991, 7
  %v3993 = vsub.s32 6, %v3992
  %v3994 = vrot.slane %v3965, %v3993
  %v4002 = vand.u32 %v3854, 4294901760
  %4003 = vmatprep.subr.mxu0 %v4002
  %v4004 = vand.u32 %v3853, 4294901760
  %4005 = vmatpush1.msra.mxu0 %v4004
  %v4006 = vand.u32 %v3861, 4294901760
  %4007 = vmatprep.subr.mxu0 %v4006
  %v4008 = vand.u32 %v3860, 4294901760
  %4009 = vmatpush1.msra.mxu0 %v4008
  %v4010 = vand.u32 %v3868, 4294901760
  %4011 = vmatprep.subr.mxu0 %v4010
  %v4012 = vand.u32 %v3867, 4294901760
  %4013 = vmatpush1.msra.mxu0 %v4012
  %v4014 = vand.u32 %v3875, 4294901760
  %4015 = vmatprep.subr.mxu0 %v4014
  %v4016 = vand.u32 %v3874, 4294901760
  %4017 = vmatpush1.msra.mxu0 %v4016
  %v4018 = vand.u32 %v3882, 4294901760
  %4019 = vmatprep.subr.mxu0 %v4018
  %v4020 = vand.u32 %v3881, 4294901760
  %4021 = vmatpush1.msra.mxu0 %v4020
  %v4022 = vand.u32 %v3889, 4294901760
  %4023 = vmatprep.subr.mxu0 %v4022
  %v4024 = vand.u32 %v3888, 4294901760
  %4025 = vmatpush1.msra.mxu0 %v4024
  %v4026 = vand.u32 %v3896, 4294901760
  %4027 = vmatprep.subr.mxu0 %v4026
  %v4028 = vand.u32 %v3895, 4294901760
  %4029 = vmatpush1.msra.mxu0 %v4028
  %v4030 = vand.u32 %v3903, 4294901760
  %4031 = vmatprep.subr.mxu0 %v4030
  %v4032 = vand.u32 %v3902, 4294901760
  %4033 = vmatpush1.msra.mxu0 %v4032
  %v4034 = vand.u32 %v3910, 4294901760
  %4035 = vmatprep.subr.mxu0 %v4034
  %v4036 = vand.u32 %v3909, 4294901760
  %4037 = vmatpush1.msra.mxu0 %v4036
  %v4038 = vand.u32 %v3917, 4294901760
  %4039 = vmatprep.subr.mxu0 %v4038
  %v4040 = vand.u32 %v3916, 4294901760
  %4041 = vmatpush1.msra.mxu0 %v4040
  %v4042 = vand.u32 %v3924, 4294901760
  %4043 = vmatprep.subr.mxu0 %v4042
  %v4044 = vand.u32 %v3923, 4294901760
  %4045 = vmatpush1.msra.mxu0 %v4044
  %v4046 = vand.u32 %v3931, 4294901760
  %4047 = vmatprep.subr.mxu0 %v4046
  %v4048 = vand.u32 %v3930, 4294901760
  %4049 = vmatpush1.msra.mxu0 %v4048
  %v4050 = vand.u32 %v3938, 4294901760
  %4051 = vmatprep.subr.mxu0 %v4050
  %v4052 = vand.u32 %v3937, 4294901760
  %4053 = vmatpush1.msra.mxu0 %v4052
  %v4054 = vand.u32 %v3945, 4294901760
  %4055 = vmatprep.subr.mxu0 %v4054
  %v4056 = vand.u32 %v3944, 4294901760
  %4057 = vmatpush1.msra.mxu0 %v4056
  %v4058 = vand.u32 %v3952, 4294901760
  %4059 = vmatprep.subr.mxu0 %v4058
  %v4060 = vand.u32 %v3951, 4294901760
  %4061 = vmatpush1.msra.mxu0 %v4060
  %v4062 = vand.u32 %v3959, 4294901760
  %4063 = vmatprep.subr.mxu0 %v4062
  %v4064 = vand.u32 %v3958, 4294901760
  %4065 = vmatpush1.msra.mxu0 %v4064
  %4066 = vmatprep.subr.mxu0 0.0
  %4067 = vmatpush1.msra.mxu0 0.0
  %4068 = vmatprep.subr.mxu0 0.0
  %4069 = vmatpush1.msra.mxu0 0.0
  %4070 = vmatprep.subr.mxu0 0.0
  %4071 = vmatpush1.msra.mxu0 0.0
  %4072 = vmatprep.subr.mxu0 0.0
  %4073 = vmatpush1.msra.mxu0 0.0
  %4074 = vmatprep.subr.mxu0 0.0
  %4075 = vmatpush1.msra.mxu0 0.0
  %4076 = vmatprep.subr.mxu0 0.0
  %4077 = vmatpush1.msra.mxu0 0.0
  %4078 = vmatprep.subr.mxu0 0.0
  %4079 = vmatpush1.msra.mxu0 0.0
  %4080 = vmatprep.subr.mxu0 0.0
  %4081 = vmatpush1.msra.mxu0 0.0
  %4082 = vmatprep.subr.mxu0 0.0
  %4083 = vmatpush1.msra.mxu0 0.0
  %4084 = vmatprep.subr.mxu0 0.0
  %4085 = vmatpush1.msra.mxu0 0.0
  %4086 = vmatprep.subr.mxu0 0.0
  %4087 = vmatpush1.msra.mxu0 0.0
  %4088 = vmatprep.subr.mxu0 0.0
  %4089 = vmatpush1.msra.mxu0 0.0
  %4090 = vmatprep.subr.mxu0 0.0
  %4091 = vmatpush1.msra.mxu0 0.0
  %4092 = vmatprep.subr.mxu0 0.0
  %4093 = vmatpush1.msra.mxu0 0.0
  %4094 = vmatprep.subr.mxu0 0.0
  %4095 = vmatpush1.msra.mxu0 0.0
  %4096 = vmatprep.subr.mxu0 0.0
  %4097 = vmatpush1.msra.mxu0 0.0
  %4098 = vmatprep.mubr.f32.mxu0 0.0
  %v4099 = vand.u32 %v3852, 4294901760
  %v4100 = vsub.f32 %v3852, %v4099
  %v4101 = vand.u32 %v4100, 4294901760
  %v4102 = vsub.f32 %v4100, %v4101
  %v4103 = vand.u32 %v4102, 4294901760
  %4104 = vmatmul.mubr.f32.gmra.mrb[0].mxu0 %v4103
  %v4105 = vpop.f32.mrb[0].mxu0
  %v4106 = vadd.f32 %v3970, %v4105
  %v4107 = vpop.f32.mrb[0].mxu0
  %v4108 = vadd.f32 %v3974, %v4107
  %4109 = vdwg.mxu0
  %v4110 = vand.u32 %v3854, 4294901760
  %v4111 = vsub.f32 %v3854, %v4110
  %v4112 = vand.u32 %v4111, 4294901760
  %v4113 = vsub.f32 %v4111, %v4112
  %v4114 = vand.u32 %v4113, 4294901760
  %4115 = vmatprep.subr.mxu0 %v4114
  %v4116 = vand.u32 %v3853, 4294901760
  %v4117 = vsub.f32 %v3853, %v4116
  %v4118 = vand.u32 %v4117, 4294901760
  %v4119 = vsub.f32 %v4117, %v4118
  %v4120 = vand.u32 %v4119, 4294901760
  %4121 = vmatpush1.msra.mxu0 %v4120
  %v4122 = vand.u32 %v3861, 4294901760
  %v4123 = vsub.f32 %v3861, %v4122
  %v4124 = vand.u32 %v4123, 4294901760
  %v4125 = vsub.f32 %v4123, %v4124
  %v4126 = vand.u32 %v4125, 4294901760
  %4127 = vmatprep.subr.mxu0 %v4126
  %v4128 = vand.u32 %v3860, 4294901760
  %v4129 = vsub.f32 %v3860, %v4128
  %v4130 = vand.u32 %v4129, 4294901760
  %v4131 = vsub.f32 %v4129, %v4130
  %v4132 = vand.u32 %v4131, 4294901760
  %4133 = vmatpush1.msra.mxu0 %v4132
  %v4134 = vand.u32 %v3868, 4294901760
  %v4135 = vsub.f32 %v3868, %v4134
  %v4136 = vand.u32 %v4135, 4294901760
  %v4137 = vsub.f32 %v4135, %v4136
  %v4138 = vand.u32 %v4137, 4294901760
  %4139 = vmatprep.subr.mxu0 %v4138
  %v4140 = vand.u32 %v3867, 4294901760
  %v4141 = vsub.f32 %v3867, %v4140
  %v4142 = vand.u32 %v4141, 4294901760
  %v4143 = vsub.f32 %v4141, %v4142
  %v4144 = vand.u32 %v4143, 4294901760
  %4145 = vmatpush1.msra.mxu0 %v4144
  %v4146 = vand.u32 %v3875, 4294901760
  %v4147 = vsub.f32 %v3875, %v4146
  %v4148 = vand.u32 %v4147, 4294901760
  %v4149 = vsub.f32 %v4147, %v4148
  %v4150 = vand.u32 %v4149, 4294901760
  %4151 = vmatprep.subr.mxu0 %v4150
  %v4152 = vand.u32 %v3874, 4294901760
  %v4153 = vsub.f32 %v3874, %v4152
  %v4154 = vand.u32 %v4153, 4294901760
  %v4155 = vsub.f32 %v4153, %v4154
  %v4156 = vand.u32 %v4155, 4294901760
  %4157 = vmatpush1.msra.mxu0 %v4156
  %v4158 = vand.u32 %v3882, 4294901760
  %v4159 = vsub.f32 %v3882, %v4158
  %v4160 = vand.u32 %v4159, 4294901760
  %v4161 = vsub.f32 %v4159, %v4160
  %v4162 = vand.u32 %v4161, 4294901760
  %4163 = vmatprep.subr.mxu0 %v4162
  %v4164 = vand.u32 %v3881, 4294901760
  %v4165 = vsub.f32 %v3881, %v4164
  %v4166 = vand.u32 %v4165, 4294901760
  %v4167 = vsub.f32 %v4165, %v4166
  %v4168 = vand.u32 %v4167, 4294901760
  %4169 = vmatpush1.msra.mxu0 %v4168
  %v4170 = vand.u32 %v3889, 4294901760
  %v4171 = vsub.f32 %v3889, %v4170
  %v4172 = vand.u32 %v4171, 4294901760
  %v4173 = vsub.f32 %v4171, %v4172
  %v4174 = vand.u32 %v4173, 4294901760
  %4175 = vmatprep.subr.mxu0 %v4174
  %v4176 = vand.u32 %v3888, 4294901760
  %v4177 = vsub.f32 %v3888, %v4176
  %v4178 = vand.u32 %v4177, 4294901760
  %v4179 = vsub.f32 %v4177, %v4178
  %v4180 = vand.u32 %v4179, 4294901760
  %4181 = vmatpush1.msra.mxu0 %v4180
  %v4182 = vand.u32 %v3896, 4294901760
  %v4183 = vsub.f32 %v3896, %v4182
  %v4184 = vand.u32 %v4183, 4294901760
  %v4185 = vsub.f32 %v4183, %v4184
  %v4186 = vand.u32 %v4185, 4294901760
  %4187 = vmatprep.subr.mxu0 %v4186
  %v4188 = vand.u32 %v3895, 4294901760
  %v4189 = vsub.f32 %v3895, %v4188
  %v4190 = vand.u32 %v4189, 4294901760
  %v4191 = vsub.f32 %v4189, %v4190
  %v4192 = vand.u32 %v4191, 4294901760
  %4193 = vmatpush1.msra.mxu0 %v4192
  %v4194 = vand.u32 %v3903, 4294901760
  %v4195 = vsub.f32 %v3903, %v4194
  %v4196 = vand.u32 %v4195, 4294901760
  %v4197 = vsub.f32 %v4195, %v4196
  %v4198 = vand.u32 %v4197, 4294901760
  %4199 = vmatprep.subr.mxu0 %v4198
  %v4200 = vand.u32 %v3902, 4294901760
  %v4201 = vsub.f32 %v3902, %v4200
  %v4202 = vand.u32 %v4201, 4294901760
  %v4203 = vsub.f32 %v4201, %v4202
  %v4204 = vand.u32 %v4203, 4294901760
  %4205 = vmatpush1.msra.mxu0 %v4204
  %v4206 = vand.u32 %v3910, 4294901760
  %v4207 = vsub.f32 %v3910, %v4206
  %v4208 = vand.u32 %v4207, 4294901760
  %v4209 = vsub.f32 %v4207, %v4208
  %v4210 = vand.u32 %v4209, 4294901760
  %4211 = vmatprep.subr.mxu0 %v4210
  %v4212 = vand.u32 %v3909, 4294901760
  %v4213 = vsub.f32 %v3909, %v4212
  %v4214 = vand.u32 %v4213, 4294901760
  %v4215 = vsub.f32 %v4213, %v4214
  %v4216 = vand.u32 %v4215, 4294901760
  %4217 = vmatpush1.msra.mxu0 %v4216
  %v4218 = vand.u32 %v3917, 4294901760
  %v4219 = vsub.f32 %v3917, %v4218
  %v4220 = vand.u32 %v4219, 4294901760
  %v4221 = vsub.f32 %v4219, %v4220
  %v4222 = vand.u32 %v4221, 4294901760
  %4223 = vmatprep.subr.mxu0 %v4222
  %v4224 = vand.u32 %v3916, 4294901760
  %v4225 = vsub.f32 %v3916, %v4224
  %v4226 = vand.u32 %v4225, 4294901760
  %v4227 = vsub.f32 %v4225, %v4226
  %v4228 = vand.u32 %v4227, 4294901760
  %4229 = vmatpush1.msra.mxu0 %v4228
  %v4230 = vand.u32 %v3924, 4294901760
  %v4231 = vsub.f32 %v3924, %v4230
  %v4232 = vand.u32 %v4231, 4294901760
  %v4233 = vsub.f32 %v4231, %v4232
  %v4234 = vand.u32 %v4233, 4294901760
  %4235 = vmatprep.subr.mxu0 %v4234
  %v4236 = vand.u32 %v3923, 4294901760
  %v4237 = vsub.f32 %v3923, %v4236
  %v4238 = vand.u32 %v4237, 4294901760
  %v4239 = vsub.f32 %v4237, %v4238
  %v4240 = vand.u32 %v4239, 4294901760
  %4241 = vmatpush1.msra.mxu0 %v4240
  %v4242 = vand.u32 %v3931, 4294901760
  %v4243 = vsub.f32 %v3931, %v4242
  %v4244 = vand.u32 %v4243, 4294901760
  %v4245 = vsub.f32 %v4243, %v4244
  %v4246 = vand.u32 %v4245, 4294901760
  %4247 = vmatprep.subr.mxu0 %v4246
  %v4248 = vand.u32 %v3930, 4294901760
  %v4249 = vsub.f32 %v3930, %v4248
  %v4250 = vand.u32 %v4249, 4294901760
  %v4251 = vsub.f32 %v4249, %v4250
  %v4252 = vand.u32 %v4251, 4294901760
  %4253 = vmatpush1.msra.mxu0 %v4252
  %v4254 = vand.u32 %v3938, 4294901760
  %v4255 = vsub.f32 %v3938, %v4254
  %v4256 = vand.u32 %v4255, 4294901760
  %v4257 = vsub.f32 %v4255, %v4256
  %v4258 = vand.u32 %v4257, 4294901760
  %4259 = vmatprep.subr.mxu0 %v4258
  %v4260 = vand.u32 %v3937, 4294901760
  %v4261 = vsub.f32 %v3937, %v4260
  %v4262 = vand.u32 %v4261, 4294901760
  %v4263 = vsub.f32 %v4261, %v4262
  %v4264 = vand.u32 %v4263, 4294901760
  %4265 = vmatpush1.msra.mxu0 %v4264
  %v4266 = vand.u32 %v3945, 4294901760
  %v4267 = vsub.f32 %v3945, %v4266
  %v4268 = vand.u32 %v4267, 4294901760
  %v4269 = vsub.f32 %v4267, %v4268
  %v4270 = vand.u32 %v4269, 4294901760
  %4271 = vmatprep.subr.mxu0 %v4270
  %v4272 = vand.u32 %v3944, 4294901760
  %v4273 = vsub.f32 %v3944, %v4272
  %v4274 = vand.u32 %v4273, 4294901760
  %v4275 = vsub.f32 %v4273, %v4274
  %v4276 = vand.u32 %v4275, 4294901760
  %4277 = vmatpush1.msra.mxu0 %v4276
  %v4278 = vand.u32 %v3952, 4294901760
  %v4279 = vsub.f32 %v3952, %v4278
  %v4280 = vand.u32 %v4279, 4294901760
  %v4281 = vsub.f32 %v4279, %v4280
  %v4282 = vand.u32 %v4281, 4294901760
  %4283 = vmatprep.subr.mxu0 %v4282
  %v4284 = vand.u32 %v3951, 4294901760
  %v4285 = vsub.f32 %v3951, %v4284
  %v4286 = vand.u32 %v4285, 4294901760
  %v4287 = vsub.f32 %v4285, %v4286
  %v4288 = vand.u32 %v4287, 4294901760
  %4289 = vmatpush1.msra.mxu0 %v4288
  %v4290 = vand.u32 %v3959, 4294901760
  %v4291 = vsub.f32 %v3959, %v4290
  %v4292 = vand.u32 %v4291, 4294901760
  %v4293 = vsub.f32 %v4291, %v4292
  %v4294 = vand.u32 %v4293, 4294901760
  %4295 = vmatprep.subr.mxu0 %v4294
  %v4296 = vand.u32 %v3958, 4294901760
  %v4297 = vsub.f32 %v3958, %v4296
  %v4298 = vand.u32 %v4297, 4294901760
  %v4299 = vsub.f32 %v4297, %v4298
  %v4300 = vand.u32 %v4299, 4294901760
  %4301 = vmatpush1.msra.mxu0 %v4300
  %4302 = vmatprep.subr.mxu0 0.0
  %4303 = vmatpush1.msra.mxu0 0.0
  %4304 = vmatprep.subr.mxu0 0.0
  %4305 = vmatpush1.msra.mxu0 0.0
  %4306 = vmatprep.subr.mxu0 0.0
  %4307 = vmatpush1.msra.mxu0 0.0
  %4308 = vmatprep.subr.mxu0 0.0
  %4309 = vmatpush1.msra.mxu0 0.0
  %4310 = vmatprep.subr.mxu0 0.0
  %4311 = vmatpush1.msra.mxu0 0.0
  %4312 = vmatprep.subr.mxu0 0.0
  %4313 = vmatpush1.msra.mxu0 0.0
  %4314 = vmatprep.subr.mxu0 0.0
  %4315 = vmatpush1.msra.mxu0 0.0
  %4316 = vmatprep.subr.mxu0 0.0
  %4317 = vmatpush1.msra.mxu0 0.0
  %4318 = vmatprep.subr.mxu0 0.0
  %4319 = vmatpush1.msra.mxu0 0.0
  %4320 = vmatprep.subr.mxu0 0.0
  %4321 = vmatpush1.msra.mxu0 0.0
  %4322 = vmatprep.subr.mxu0 0.0
  %4323 = vmatpush1.msra.mxu0 0.0
  %4324 = vmatprep.subr.mxu0 0.0
  %4325 = vmatpush1.msra.mxu0 0.0
  %4326 = vmatprep.subr.mxu0 0.0
  %4327 = vmatpush1.msra.mxu0 0.0
  %4328 = vmatprep.subr.mxu0 0.0
  %4329 = vmatpush1.msra.mxu0 0.0
  %4330 = vmatprep.subr.mxu0 0.0
  %4331 = vmatpush1.msra.mxu0 0.0
  %4332 = vmatprep.subr.mxu0 0.0
  %4333 = vmatpush1.msra.mxu0 0.0
  %4334 = vmatprep.mubr.f32.mxu0 0.0
  %v4335 = vand.u32 %v3852, 4294901760
  %4336 = vmatmul.mubr.f32.gmra.mrb[0].mxu0 %v4335
  %v4337 = vpop.f32.mrb[0].mxu0
  %v4338 = vadd.f32 %v4106, %v4337
  %v4339 = vpop.f32.mrb[0].mxu0
  %v4340 = vadd.f32 %v4108, %v4339
  %4341 = vdwg.mxu0
  %v4342 = vand.u32 %v3854, 4294901760
  %v4343 = vsub.f32 %v3854, %v4342
  %4344 = vmatprep.subr.mxu0 %v4343
  %v4345 = vand.u32 %v3853, 4294901760
  %v4346 = vsub.f32 %v3853, %v4345
  %4347 = vmatpush1.msra.mxu0 %v4346
  %v4348 = vand.u32 %v3861, 4294901760
  %v4349 = vsub.f32 %v3861, %v4348
  %4350 = vmatprep.subr.mxu0 %v4349
  %v4351 = vand.u32 %v3860, 4294901760
  %v4352 = vsub.f32 %v3860, %v4351
  %4353 = vmatpush1.msra.mxu0 %v4352
  %v4354 = vand.u32 %v3868, 4294901760
  %v4355 = vsub.f32 %v3868, %v4354
  %4356 = vmatprep.subr.mxu0 %v4355
  %v4357 = vand.u32 %v3867, 4294901760
  %v4358 = vsub.f32 %v3867, %v4357
  %4359 = vmatpush1.msra.mxu0 %v4358
  %v4360 = vand.u32 %v3875, 4294901760
  %v4361 = vsub.f32 %v3875, %v4360
  %4362 = vmatprep.subr.mxu0 %v4361
  %v4363 = vand.u32 %v3874, 4294901760
  %v4364 = vsub.f32 %v3874, %v4363
  %4365 = vmatpush1.msra.mxu0 %v4364
  %v4366 = vand.u32 %v3882, 4294901760
  %v4367 = vsub.f32 %v3882, %v4366
  %4368 = vmatprep.subr.mxu0 %v4367
  %v4369 = vand.u32 %v3881, 4294901760
  %v4370 = vsub.f32 %v3881, %v4369
  %4371 = vmatpush1.msra.mxu0 %v4370
  %v4372 = vand.u32 %v3889, 4294901760
  %v4373 = vsub.f32 %v3889, %v4372
  %4374 = vmatprep.subr.mxu0 %v4373
  %v4375 = vand.u32 %v3888, 4294901760
  %v4376 = vsub.f32 %v3888, %v4375
  %4377 = vmatpush1.msra.mxu0 %v4376
  %v4378 = vand.u32 %v3896, 4294901760
  %v4379 = vsub.f32 %v3896, %v4378
  %4380 = vmatprep.subr.mxu0 %v4379
  %v4381 = vand.u32 %v3895, 4294901760
  %v4382 = vsub.f32 %v3895, %v4381
  %4383 = vmatpush1.msra.mxu0 %v4382
  %v4384 = vand.u32 %v3903, 4294901760
  %v4385 = vsub.f32 %v3903, %v4384
  %4386 = vmatprep.subr.mxu0 %v4385
  %v4387 = vand.u32 %v3902, 4294901760
  %v4388 = vsub.f32 %v3902, %v4387
  %4389 = vmatpush1.msra.mxu0 %v4388
  %v4390 = vand.u32 %v3910, 4294901760
  %v4391 = vsub.f32 %v3910, %v4390
  %4392 = vmatprep.subr.mxu0 %v4391
  %v4393 = vand.u32 %v3909, 4294901760
  %v4394 = vsub.f32 %v3909, %v4393
  %4395 = vmatpush1.msra.mxu0 %v4394
  %v4396 = vand.u32 %v3917, 4294901760
  %v4397 = vsub.f32 %v3917, %v4396
  %4398 = vmatprep.subr.mxu0 %v4397
  %v4399 = vand.u32 %v3916, 4294901760
  %v4400 = vsub.f32 %v3916, %v4399
  %4401 = vmatpush1.msra.mxu0 %v4400
  %v4402 = vand.u32 %v3924, 4294901760
  %v4403 = vsub.f32 %v3924, %v4402
  %4404 = vmatprep.subr.mxu0 %v4403
  %v4405 = vand.u32 %v3923, 4294901760
  %v4406 = vsub.f32 %v3923, %v4405
  %4407 = vmatpush1.msra.mxu0 %v4406
  %v4408 = vand.u32 %v3931, 4294901760
  %v4409 = vsub.f32 %v3931, %v4408
  %4410 = vmatprep.subr.mxu0 %v4409
  %v4411 = vand.u32 %v3930, 4294901760
  %v4412 = vsub.f32 %v3930, %v4411
  %4413 = vmatpush1.msra.mxu0 %v4412
  %v4414 = vand.u32 %v3938, 4294901760
  %v4415 = vsub.f32 %v3938, %v4414
  %4416 = vmatprep.subr.mxu0 %v4415
  %v4417 = vand.u32 %v3937, 4294901760
  %v4418 = vsub.f32 %v3937, %v4417
  %4419 = vmatpush1.msra.mxu0 %v4418
  %v4420 = vand.u32 %v3945, 4294901760
  %v4421 = vsub.f32 %v3945, %v4420
  %4422 = vmatprep.subr.mxu0 %v4421
  %v4423 = vand.u32 %v3944, 4294901760
  %v4424 = vsub.f32 %v3944, %v4423
  %4425 = vmatpush1.msra.mxu0 %v4424
  %v4426 = vand.u32 %v3952, 4294901760
  %v4427 = vsub.f32 %v3952, %v4426
  %4428 = vmatprep.subr.mxu0 %v4427
  %v4429 = vand.u32 %v3951, 4294901760
  %v4430 = vsub.f32 %v3951, %v4429
  %4431 = vmatpush1.msra.mxu0 %v4430
  %v4432 = vand.u32 %v3959, 4294901760
  %v4433 = vsub.f32 %v3959, %v4432
  %4434 = vmatprep.subr.mxu0 %v4433
  %v4435 = vand.u32 %v3958, 4294901760
  %v4436 = vsub.f32 %v3958, %v4435
  %4437 = vmatpush1.msra.mxu0 %v4436
  %4438 = vmatprep.subr.mxu0 0.0
  %4439 = vmatpush1.msra.mxu0 0.0
  %4440 = vmatprep.subr.mxu0 0.0
  %4441 = vmatpush1.msra.mxu0 0.0
  %4442 = vmatprep.subr.mxu0 0.0
  %4443 = vmatpush1.msra.mxu0 0.0
  %4444 = vmatprep.subr.mxu0 0.0
  %4445 = vmatpush1.msra.mxu0 0.0
  %4446 = vmatprep.subr.mxu0 0.0
  %4447 = vmatpush1.msra.mxu0 0.0
  %4448 = vmatprep.subr.mxu0 0.0
  %4449 = vmatpush1.msra.mxu0 0.0
  %4450 = vmatprep.subr.mxu0 0.0
  %4451 = vmatpush1.msra.mxu0 0.0
  %4452 = vmatprep.subr.mxu0 0.0
  %4453 = vmatpush1.msra.mxu0 0.0
  %4454 = vmatprep.subr.mxu0 0.0
  %4455 = vmatpush1.msra.mxu0 0.0
  %4456 = vmatprep.subr.mxu0 0.0
  %4457 = vmatpush1.msra.mxu0 0.0
  %4458 = vmatprep.subr.mxu0 0.0
  %4459 = vmatpush1.msra.mxu0 0.0
  %4460 = vmatprep.subr.mxu0 0.0
  %4461 = vmatpush1.msra.mxu0 0.0
  %4462 = vmatprep.subr.mxu0 0.0
  %4463 = vmatpush1.msra.mxu0 0.0
  %4464 = vmatprep.subr.mxu0 0.0
  %4465 = vmatpush1.msra.mxu0 0.0
  %4466 = vmatprep.subr.mxu0 0.0
  %4467 = vmatpush1.msra.mxu0 0.0
  %4468 = vmatprep.subr.mxu0 0.0
  %4469 = vmatpush1.msra.mxu0 0.0
  %4470 = vmatprep.mubr.f32.mxu0 0.0
  %v4471 = vand.u32 %v3852, 4294901760
  %v4472 = vsub.f32 %v3852, %v4471
  %4473 = vmatmul.mubr.f32.gmra.mrb[0].mxu0 %v4472
  %v4474 = vpop.f32.mrb[0].mxu0
  %v4475 = vadd.f32 %v4338, %v4474
  %v4476 = vpop.f32.mrb[0].mxu0
  %v4477 = vadd.f32 %v4340, %v4476
  %4478 = vdwg.mxu0
  %v4479 = vand.u32 %v3854, 4294901760
  %4480 = vmatprep.subr.mxu0 %v4479
  %v4481 = vand.u32 %v3853, 4294901760
  %4482 = vmatpush1.msra.mxu0 %v4481
  %v4483 = vand.u32 %v3861, 4294901760
  %4484 = vmatprep.subr.mxu0 %v4483
  %v4485 = vand.u32 %v3860, 4294901760
  %4486 = vmatpush1.msra.mxu0 %v4485
  %v4487 = vand.u32 %v3868, 4294901760
  %4488 = vmatprep.subr.mxu0 %v4487
  %v4489 = vand.u32 %v3867, 4294901760
  %4490 = vmatpush1.msra.mxu0 %v4489
  %v4491 = vand.u32 %v3875, 4294901760
  %4492 = vmatprep.subr.mxu0 %v4491
  %v4493 = vand.u32 %v3874, 4294901760
  %4494 = vmatpush1.msra.mxu0 %v4493
  %v4495 = vand.u32 %v3882, 4294901760
  %4496 = vmatprep.subr.mxu0 %v4495
  %v4497 = vand.u32 %v3881, 4294901760
  %4498 = vmatpush1.msra.mxu0 %v4497
  %v4499 = vand.u32 %v3889, 4294901760
  %4500 = vmatprep.subr.mxu0 %v4499
  %v4501 = vand.u32 %v3888, 4294901760
  %4502 = vmatpush1.msra.mxu0 %v4501
  %v4503 = vand.u32 %v3896, 4294901760
  %4504 = vmatprep.subr.mxu0 %v4503
  %v4505 = vand.u32 %v3895, 4294901760
  %4506 = vmatpush1.msra.mxu0 %v4505
  %v4507 = vand.u32 %v3903, 4294901760
  %4508 = vmatprep.subr.mxu0 %v4507
  %v4509 = vand.u32 %v3902, 4294901760
  %4510 = vmatpush1.msra.mxu0 %v4509
  %v4511 = vand.u32 %v3910, 4294901760
  %4512 = vmatprep.subr.mxu0 %v4511
  %v4513 = vand.u32 %v3909, 4294901760
  %4514 = vmatpush1.msra.mxu0 %v4513
  %v4515 = vand.u32 %v3917, 4294901760
  %4516 = vmatprep.subr.mxu0 %v4515
  %v4517 = vand.u32 %v3916, 4294901760
  %4518 = vmatpush1.msra.mxu0 %v4517
  %v4519 = vand.u32 %v3924, 4294901760
  %4520 = vmatprep.subr.mxu0 %v4519
  %v4521 = vand.u32 %v3923, 4294901760
  %4522 = vmatpush1.msra.mxu0 %v4521
  %v4523 = vand.u32 %v3931, 4294901760
  %4524 = vmatprep.subr.mxu0 %v4523
  %v4525 = vand.u32 %v3930, 4294901760
  %4526 = vmatpush1.msra.mxu0 %v4525
  %v4527 = vand.u32 %v3938, 4294901760
  %4528 = vmatprep.subr.mxu0 %v4527
  %v4529 = vand.u32 %v3937, 4294901760
  %4530 = vmatpush1.msra.mxu0 %v4529
  %v4531 = vand.u32 %v3945, 4294901760
  %4532 = vmatprep.subr.mxu0 %v4531
  %v4533 = vand.u32 %v3944, 4294901760
  %4534 = vmatpush1.msra.mxu0 %v4533
  %v4535 = vand.u32 %v3952, 4294901760
  %4536 = vmatprep.subr.mxu0 %v4535
  %v4537 = vand.u32 %v3951, 4294901760
  %4538 = vmatpush1.msra.mxu0 %v4537
  %v4539 = vand.u32 %v3959, 4294901760
  %4540 = vmatprep.subr.mxu0 %v4539
  %v4541 = vand.u32 %v3958, 4294901760
  %4542 = vmatpush1.msra.mxu0 %v4541
  %4543 = vmatprep.subr.mxu0 0.0
  %4544 = vmatpush1.msra.mxu0 0.0
  %4545 = vmatprep.subr.mxu0 0.0
  %4546 = vmatpush1.msra.mxu0 0.0
  %4547 = vmatprep.subr.mxu0 0.0
  %4548 = vmatpush1.msra.mxu0 0.0
  %4549 = vmatprep.subr.mxu0 0.0
  %4550 = vmatpush1.msra.mxu0 0.0
  %4551 = vmatprep.subr.mxu0 0.0
  %4552 = vmatpush1.msra.mxu0 0.0
  %4553 = vmatprep.subr.mxu0 0.0
  %4554 = vmatpush1.msra.mxu0 0.0
  %4555 = vmatprep.subr.mxu0 0.0
  %4556 = vmatpush1.msra.mxu0 0.0
  %4557 = vmatprep.subr.mxu0 0.0
  %4558 = vmatpush1.msra.mxu0 0.0
  %4559 = vmatprep.subr.mxu0 0.0
  %4560 = vmatpush1.msra.mxu0 0.0
  %4561 = vmatprep.subr.mxu0 0.0
  %4562 = vmatpush1.msra.mxu0 0.0
  %4563 = vmatprep.subr.mxu0 0.0
  %4564 = vmatpush1.msra.mxu0 0.0
  %4565 = vmatprep.subr.mxu0 0.0
  %4566 = vmatpush1.msra.mxu0 0.0
  %4567 = vmatprep.subr.mxu0 0.0
  %4568 = vmatpush1.msra.mxu0 0.0
  %4569 = vmatprep.subr.mxu0 0.0
  %4570 = vmatpush1.msra.mxu0 0.0
  %4571 = vmatprep.subr.mxu0 0.0
  %4572 = vmatpush1.msra.mxu0 0.0
  %4573 = vmatprep.subr.mxu0 0.0
  %4574 = vmatpush1.msra.mxu0 0.0
  %4575 = vmatprep.mubr.f32.mxu0 0.0
  %v4576 = vand.u32 %v3852, 4294901760
  %v4577 = vsub.f32 %v3852, %v4576
  %v4578 = vand.u32 %v4577, 4294901760
  %4579 = vmatmul.mubr.f32.gmra.mrb[0].mxu0 %v4578
  %v4580 = vpop.f32.mrb[0].mxu0
  %v4581 = vadd.f32 %v4475, %v4580
  %v4582 = vpop.f32.mrb[0].mxu0
  %v4583 = vadd.f32 %v4477, %v4582
  %4584 = vdwg.mxu0
  %v4585 = vand.u32 %v3854, 4294901760
  %v4586 = vsub.f32 %v3854, %v4585
  %v4587 = vand.u32 %v4586, 4294901760
  %4588 = vmatprep.subr.mxu0 %v4587
  %v4589 = vand.u32 %v3853, 4294901760
  %v4590 = vsub.f32 %v3853, %v4589
  %v4591 = vand.u32 %v4590, 4294901760
  %4592 = vmatpush1.msra.mxu0 %v4591
  %v4593 = vand.u32 %v3861, 4294901760
  %v4594 = vsub.f32 %v3861, %v4593
  %v4595 = vand.u32 %v4594, 4294901760
  %4596 = vmatprep.subr.mxu0 %v4595
  %v4597 = vand.u32 %v3860, 4294901760
  %v4598 = vsub.f32 %v3860, %v4597
  %v4599 = vand.u32 %v4598, 4294901760
  %4600 = vmatpush1.msra.mxu0 %v4599
  %v4601 = vand.u32 %v3868, 4294901760
  %v4602 = vsub.f32 %v3868, %v4601
  %v4603 = vand.u32 %v4602, 4294901760
  %4604 = vmatprep.subr.mxu0 %v4603
  %v4605 = vand.u32 %v3867, 4294901760
  %v4606 = vsub.f32 %v3867, %v4605
  %v4607 = vand.u32 %v4606, 4294901760
  %4608 = vmatpush1.msra.mxu0 %v4607
  %v4609 = vand.u32 %v3875, 4294901760
  %v4610 = vsub.f32 %v3875, %v4609
  %v4611 = vand.u32 %v4610, 4294901760
  %4612 = vmatprep.subr.mxu0 %v4611
  %v4613 = vand.u32 %v3874, 4294901760
  %v4614 = vsub.f32 %v3874, %v4613
  %v4615 = vand.u32 %v4614, 4294901760
  %4616 = vmatpush1.msra.mxu0 %v4615
  %v4617 = vand.u32 %v3882, 4294901760
  %v4618 = vsub.f32 %v3882, %v4617
  %v4619 = vand.u32 %v4618, 4294901760
  %4620 = vmatprep.subr.mxu0 %v4619
  %v4621 = vand.u32 %v3881, 4294901760
  %v4622 = vsub.f32 %v3881, %v4621
  %v4623 = vand.u32 %v4622, 4294901760
  %4624 = vmatpush1.msra.mxu0 %v4623
  %v4625 = vand.u32 %v3889, 4294901760
  %v4626 = vsub.f32 %v3889, %v4625
  %v4627 = vand.u32 %v4626, 4294901760
  %4628 = vmatprep.subr.mxu0 %v4627
  %v4629 = vand.u32 %v3888, 4294901760
  %v4630 = vsub.f32 %v3888, %v4629
  %v4631 = vand.u32 %v4630, 4294901760
  %4632 = vmatpush1.msra.mxu0 %v4631
  %v4633 = vand.u32 %v3896, 4294901760
  %v4634 = vsub.f32 %v3896, %v4633
  %v4635 = vand.u32 %v4634, 4294901760
  %4636 = vmatprep.subr.mxu0 %v4635
  %v4637 = vand.u32 %v3895, 4294901760
  %v4638 = vsub.f32 %v3895, %v4637
  %v4639 = vand.u32 %v4638, 4294901760
  %4640 = vmatpush1.msra.mxu0 %v4639
  %v4641 = vand.u32 %v3903, 4294901760
  %v4642 = vsub.f32 %v3903, %v4641
  %v4643 = vand.u32 %v4642, 4294901760
  %4644 = vmatprep.subr.mxu0 %v4643
  %v4645 = vand.u32 %v3902, 4294901760
  %v4646 = vsub.f32 %v3902, %v4645
  %v4647 = vand.u32 %v4646, 4294901760
  %4648 = vmatpush1.msra.mxu0 %v4647
  %v4649 = vand.u32 %v3910, 4294901760
  %v4650 = vsub.f32 %v3910, %v4649
  %v4651 = vand.u32 %v4650, 4294901760
  %4652 = vmatprep.subr.mxu0 %v4651
  %v4653 = vand.u32 %v3909, 4294901760
  %v4654 = vsub.f32 %v3909, %v4653
  %v4655 = vand.u32 %v4654, 4294901760
  %4656 = vmatpush1.msra.mxu0 %v4655
  %v4657 = vand.u32 %v3917, 4294901760
  %v4658 = vsub.f32 %v3917, %v4657
  %v4659 = vand.u32 %v4658, 4294901760
  %4660 = vmatprep.subr.mxu0 %v4659
  %v4661 = vand.u32 %v3916, 4294901760
  %v4662 = vsub.f32 %v3916, %v4661
  %v4663 = vand.u32 %v4662, 4294901760
  %4664 = vmatpush1.msra.mxu0 %v4663
  %v4665 = vand.u32 %v3924, 4294901760
  %v4666 = vsub.f32 %v3924, %v4665
  %v4667 = vand.u32 %v4666, 4294901760
  %4668 = vmatprep.subr.mxu0 %v4667
  %v4669 = vand.u32 %v3923, 4294901760
  %v4670 = vsub.f32 %v3923, %v4669
  %v4671 = vand.u32 %v4670, 4294901760
  %4672 = vmatpush1.msra.mxu0 %v4671
  %v4673 = vand.u32 %v3931, 4294901760
  %v4674 = vsub.f32 %v3931, %v4673
  %v4675 = vand.u32 %v4674, 4294901760
  %4676 = vmatprep.subr.mxu0 %v4675
  %v4677 = vand.u32 %v3930, 4294901760
  %v4678 = vsub.f32 %v3930, %v4677
  %v4679 = vand.u32 %v4678, 4294901760
  %4680 = vmatpush1.msra.mxu0 %v4679
  %v4681 = vand.u32 %v3938, 4294901760
  %v4682 = vsub.f32 %v3938, %v4681
  %v4683 = vand.u32 %v4682, 4294901760
  %4684 = vmatprep.subr.mxu0 %v4683
  %v4685 = vand.u32 %v3937, 4294901760
  %v4686 = vsub.f32 %v3937, %v4685
  %v4687 = vand.u32 %v4686, 4294901760
  %4688 = vmatpush1.msra.mxu0 %v4687
  %v4689 = vand.u32 %v3945, 4294901760
  %v4690 = vsub.f32 %v3945, %v4689
  %v4691 = vand.u32 %v4690, 4294901760
  %4692 = vmatprep.subr.mxu0 %v4691
  %v4693 = vand.u32 %v3944, 4294901760
  %v4694 = vsub.f32 %v3944, %v4693
  %v4695 = vand.u32 %v4694, 4294901760
  %4696 = vmatpush1.msra.mxu0 %v4695
  %v4697 = vand.u32 %v3952, 4294901760
  %v4698 = vsub.f32 %v3952, %v4697
  %v4699 = vand.u32 %v4698, 4294901760
  %4700 = vmatprep.subr.mxu0 %v4699
  %v4701 = vand.u32 %v3951, 4294901760
  %v4702 = vsub.f32 %v3951, %v4701
  %v4703 = vand.u32 %v4702, 4294901760
  %4704 = vmatpush1.msra.mxu0 %v4703
  %v4705 = vand.u32 %v3959, 4294901760
  %v4706 = vsub.f32 %v3959, %v4705
  %v4707 = vand.u32 %v4706, 4294901760
  %4708 = vmatprep.subr.mxu0 %v4707
  %v4709 = vand.u32 %v3958, 4294901760
  %v4710 = vsub.f32 %v3958, %v4709
  %v4711 = vand.u32 %v4710, 4294901760
  %4712 = vmatpush1.msra.mxu0 %v4711
  %4713 = vmatprep.subr.mxu0 0.0
  %4714 = vmatpush1.msra.mxu0 0.0
  %4715 = vmatprep.subr.mxu0 0.0
  %4716 = vmatpush1.msra.mxu0 0.0
  %4717 = vmatprep.subr.mxu0 0.0
  %4718 = vmatpush1.msra.mxu0 0.0
  %4719 = vmatprep.subr.mxu0 0.0
  %4720 = vmatpush1.msra.mxu0 0.0
  %4721 = vmatprep.subr.mxu0 0.0
  %4722 = vmatpush1.msra.mxu0 0.0
  %4723 = vmatprep.subr.mxu0 0.0
  %4724 = vmatpush1.msra.mxu0 0.0
  %4725 = vmatprep.subr.mxu0 0.0
  %4726 = vmatpush1.msra.mxu0 0.0
  %4727 = vmatprep.subr.mxu0 0.0
  %4728 = vmatpush1.msra.mxu0 0.0
  %4729 = vmatprep.subr.mxu0 0.0
  %4730 = vmatpush1.msra.mxu0 0.0
  %4731 = vmatprep.subr.mxu0 0.0
  %4732 = vmatpush1.msra.mxu0 0.0
  %4733 = vmatprep.subr.mxu0 0.0
  %4734 = vmatpush1.msra.mxu0 0.0
  %4735 = vmatprep.subr.mxu0 0.0
  %4736 = vmatpush1.msra.mxu0 0.0
  %4737 = vmatprep.subr.mxu0 0.0
  %4738 = vmatpush1.msra.mxu0 0.0
  %4739 = vmatprep.subr.mxu0 0.0
  %4740 = vmatpush1.msra.mxu0 0.0
  %4741 = vmatprep.subr.mxu0 0.0
  %4742 = vmatpush1.msra.mxu0 0.0
  %4743 = vmatprep.subr.mxu0 0.0
  %4744 = vmatpush1.msra.mxu0 0.0
  %4745 = vmatprep.mubr.f32.mxu0 0.0
  %v4746 = vand.u32 %v3852, 4294901760
  %4747 = vmatmul.mubr.f32.gmra.mrb[0].mxu0 %v4746
  %v4748 = vpop.f32.mrb[0].mxu0
  %v4749 = vadd.f32 %v4581, %v4748
  %v4750 = vpop.f32.mrb[0].mxu0
  %v4751 = vadd.f32 %v4583, %v4750
  %4752 = vdwg.mxu0
  %v4753 = vand.u32 %v3854, 4294901760
  %4754 = vmatprep.subr.mxu0 %v4753
  %v4755 = vand.u32 %v3853, 4294901760
  %4756 = vmatpush1.msra.mxu0 %v4755
  %v4757 = vand.u32 %v3861, 4294901760
  %4758 = vmatprep.subr.mxu0 %v4757
  %v4759 = vand.u32 %v3860, 4294901760
  %4760 = vmatpush1.msra.mxu0 %v4759
  %v4761 = vand.u32 %v3868, 4294901760
  %4762 = vmatprep.subr.mxu0 %v4761
  %v4763 = vand.u32 %v3867, 4294901760
  %4764 = vmatpush1.msra.mxu0 %v4763
  %v4765 = vand.u32 %v3875, 4294901760
  %4766 = vmatprep.subr.mxu0 %v4765
  %v4767 = vand.u32 %v3874, 4294901760
  %4768 = vmatpush1.msra.mxu0 %v4767
  %v4769 = vand.u32 %v3882, 4294901760
  %4770 = vmatprep.subr.mxu0 %v4769
  %v4771 = vand.u32 %v3881, 4294901760
  %4772 = vmatpush1.msra.mxu0 %v4771
  %v4773 = vand.u32 %v3889, 4294901760
  %4774 = vmatprep.subr.mxu0 %v4773
  %v4775 = vand.u32 %v3888, 4294901760
  %4776 = vmatpush1.msra.mxu0 %v4775
  %v4777 = vand.u32 %v3896, 4294901760
  %4778 = vmatprep.subr.mxu0 %v4777
  %v4779 = vand.u32 %v3895, 4294901760
  %4780 = vmatpush1.msra.mxu0 %v4779
  %v4781 = vand.u32 %v3903, 4294901760
  %4782 = vmatprep.subr.mxu0 %v4781
  %v4783 = vand.u32 %v3902, 4294901760
  %4784 = vmatpush1.msra.mxu0 %v4783
  %v4785 = vand.u32 %v3910, 4294901760
  %4786 = vmatprep.subr.mxu0 %v4785
  %v4787 = vand.u32 %v3909, 4294901760
  %4788 = vmatpush1.msra.mxu0 %v4787
  %v4789 = vand.u32 %v3917, 4294901760
  %4790 = vmatprep.subr.mxu0 %v4789
  %v4791 = vand.u32 %v3916, 4294901760
  %4792 = vmatpush1.msra.mxu0 %v4791
  %v4793 = vand.u32 %v3924, 4294901760
  %4794 = vmatprep.subr.mxu0 %v4793
  %v4795 = vand.u32 %v3923, 4294901760
  %4796 = vmatpush1.msra.mxu0 %v4795
  %v4797 = vand.u32 %v3931, 4294901760
  %4798 = vmatprep.subr.mxu0 %v4797
  %v4799 = vand.u32 %v3930, 4294901760
  %4800 = vmatpush1.msra.mxu0 %v4799
  %v4801 = vand.u32 %v3938, 4294901760
  %4802 = vmatprep.subr.mxu0 %v4801
  %v4803 = vand.u32 %v3937, 4294901760
  %4804 = vmatpush1.msra.mxu0 %v4803
  %v4805 = vand.u32 %v3945, 4294901760
  %4806 = vmatprep.subr.mxu0 %v4805
  %v4807 = vand.u32 %v3944, 4294901760
  %4808 = vmatpush1.msra.mxu0 %v4807
  %v4809 = vand.u32 %v3952, 4294901760
  %4810 = vmatprep.subr.mxu0 %v4809
  %v4811 = vand.u32 %v3951, 4294901760
  %4812 = vmatpush1.msra.mxu0 %v4811
  %v4813 = vand.u32 %v3959, 4294901760
  %4814 = vmatprep.subr.mxu0 %v4813
  %v4815 = vand.u32 %v3958, 4294901760
  %4816 = vmatpush1.msra.mxu0 %v4815
  %4817 = vmatprep.subr.mxu0 0.0
  %4818 = vmatpush1.msra.mxu0 0.0
  %4819 = vmatprep.subr.mxu0 0.0
  %4820 = vmatpush1.msra.mxu0 0.0
  %4821 = vmatprep.subr.mxu0 0.0
  %4822 = vmatpush1.msra.mxu0 0.0
  %4823 = vmatprep.subr.mxu0 0.0
  %4824 = vmatpush1.msra.mxu0 0.0
  %4825 = vmatprep.subr.mxu0 0.0
  %4826 = vmatpush1.msra.mxu0 0.0
  %4827 = vmatprep.subr.mxu0 0.0
  %4828 = vmatpush1.msra.mxu0 0.0
  %4829 = vmatprep.subr.mxu0 0.0
  %4830 = vmatpush1.msra.mxu0 0.0
  %4831 = vmatprep.subr.mxu0 0.0
  %4832 = vmatpush1.msra.mxu0 0.0
  %4833 = vmatprep.subr.mxu0 0.0
  %4834 = vmatpush1.msra.mxu0 0.0
  %4835 = vmatprep.subr.mxu0 0.0
  %4836 = vmatpush1.msra.mxu0 0.0
  %4837 = vmatprep.subr.mxu0 0.0
  %4838 = vmatpush1.msra.mxu0 0.0
  %4839 = vmatprep.subr.mxu0 0.0
  %4840 = vmatpush1.msra.mxu0 0.0
  %4841 = vmatprep.subr.mxu0 0.0
  %4842 = vmatpush1.msra.mxu0 0.0
  %4843 = vmatprep.subr.mxu0 0.0
  %4844 = vmatpush1.msra.mxu0 0.0
  %4845 = vmatprep.subr.mxu0 0.0
  %4846 = vmatpush1.msra.mxu0 0.0
  %4847 = vmatprep.subr.mxu0 0.0
  %4848 = vmatpush1.msra.mxu0 0.0
  %4849 = vmatprep.mubr.f32.mxu0 0.0
  %v4850 = vand.u32 %v3852, 4294901760
  %4851 = vmatmul.mubr.f32.gmra.mrb[0].mxu0 %v4850
  %v4852 = vpop.f32.mrb[0].mxu0
  %v4853 = vadd.f32 %v4749, %v4852
  %v4854 = vpop.f32.mrb[0].mxu0
  %v4855 = vadd.f32 %v4751, %v4854
  %4856 = vdwg.mxu0
  %v4857 = vand.u32 %v3856, 4294901760
  %4858 = vmatprep.subr.mxu0 %v4857
  %v4859 = vand.u32 %v3855, 4294901760
  %4860 = vmatpush1.msra.mxu0 %v4859
  %v4861 = vand.u32 %v3863, 4294901760
  %4862 = vmatprep.subr.mxu0 %v4861
  %v4863 = vand.u32 %v3862, 4294901760
  %4864 = vmatpush1.msra.mxu0 %v4863
  %v4865 = vand.u32 %v3870, 4294901760
  %4866 = vmatprep.subr.mxu0 %v4865
  %v4867 = vand.u32 %v3869, 4294901760
  %4868 = vmatpush1.msra.mxu0 %v4867
  %v4869 = vand.u32 %v3877, 4294901760
  %4870 = vmatprep.subr.mxu0 %v4869
  %v4871 = vand.u32 %v3876, 4294901760
  %4872 = vmatpush1.msra.mxu0 %v4871
  %v4873 = vand.u32 %v3884, 4294901760
  %4874 = vmatprep.subr.mxu0 %v4873
  %v4875 = vand.u32 %v3883, 4294901760
  %4876 = vmatpush1.msra.mxu0 %v4875
  %v4877 = vand.u32 %v3891, 4294901760
  %4878 = vmatprep.subr.mxu0 %v4877
  %v4879 = vand.u32 %v3890, 4294901760
  %4880 = vmatpush1.msra.mxu0 %v4879
  %v4881 = vand.u32 %v3898, 4294901760
  %4882 = vmatprep.subr.mxu0 %v4881
  %v4883 = vand.u32 %v3897, 4294901760
  %4884 = vmatpush1.msra.mxu0 %v4883
  %v4885 = vand.u32 %v3905, 4294901760
  %4886 = vmatprep.subr.mxu0 %v4885
  %v4887 = vand.u32 %v3904, 4294901760
  %4888 = vmatpush1.msra.mxu0 %v4887
  %v4889 = vand.u32 %v3912, 4294901760
  %4890 = vmatprep.subr.mxu0 %v4889
  %v4891 = vand.u32 %v3911, 4294901760
  %4892 = vmatpush1.msra.mxu0 %v4891
  %v4893 = vand.u32 %v3919, 4294901760
  %4894 = vmatprep.subr.mxu0 %v4893
  %v4895 = vand.u32 %v3918, 4294901760
  %4896 = vmatpush1.msra.mxu0 %v4895
  %v4897 = vand.u32 %v3926, 4294901760
  %4898 = vmatprep.subr.mxu0 %v4897
  %v4899 = vand.u32 %v3925, 4294901760
  %4900 = vmatpush1.msra.mxu0 %v4899
  %v4901 = vand.u32 %v3933, 4294901760
  %4902 = vmatprep.subr.mxu0 %v4901
  %v4903 = vand.u32 %v3932, 4294901760
  %4904 = vmatpush1.msra.mxu0 %v4903
  %v4905 = vand.u32 %v3940, 4294901760
  %4906 = vmatprep.subr.mxu0 %v4905
  %v4907 = vand.u32 %v3939, 4294901760
  %4908 = vmatpush1.msra.mxu0 %v4907
  %v4909 = vand.u32 %v3947, 4294901760
  %4910 = vmatprep.subr.mxu0 %v4909
  %v4911 = vand.u32 %v3946, 4294901760
  %4912 = vmatpush1.msra.mxu0 %v4911
  %v4913 = vand.u32 %v3954, 4294901760
  %4914 = vmatprep.subr.mxu0 %v4913
  %v4915 = vand.u32 %v3953, 4294901760
  %4916 = vmatpush1.msra.mxu0 %v4915
  %v4917 = vand.u32 %v3961, 4294901760
  %4918 = vmatprep.subr.mxu0 %v4917
  %v4919 = vand.u32 %v3960, 4294901760
  %4920 = vmatpush1.msra.mxu0 %v4919
  %4921 = vmatprep.subr.mxu0 0.0
  %4922 = vmatpush1.msra.mxu0 0.0
  %4923 = vmatprep.subr.mxu0 0.0
  %4924 = vmatpush1.msra.mxu0 0.0
  %4925 = vmatprep.subr.mxu0 0.0
  %4926 = vmatpush1.msra.mxu0 0.0
  %4927 = vmatprep.subr.mxu0 0.0
  %4928 = vmatpush1.msra.mxu0 0.0
  %4929 = vmatprep.subr.mxu0 0.0
  %4930 = vmatpush1.msra.mxu0 0.0
  %4931 = vmatprep.subr.mxu0 0.0
  %4932 = vmatpush1.msra.mxu0 0.0
  %4933 = vmatprep.subr.mxu0 0.0
  %4934 = vmatpush1.msra.mxu0 0.0
  %4935 = vmatprep.subr.mxu0 0.0
  %4936 = vmatpush1.msra.mxu0 0.0
  %4937 = vmatprep.subr.mxu0 0.0
  %4938 = vmatpush1.msra.mxu0 0.0
  %4939 = vmatprep.subr.mxu0 0.0
  %4940 = vmatpush1.msra.mxu0 0.0
  %4941 = vmatprep.subr.mxu0 0.0
  %4942 = vmatpush1.msra.mxu0 0.0
  %4943 = vmatprep.subr.mxu0 0.0
  %4944 = vmatpush1.msra.mxu0 0.0
  %4945 = vmatprep.subr.mxu0 0.0
  %4946 = vmatpush1.msra.mxu0 0.0
  %4947 = vmatprep.subr.mxu0 0.0
  %4948 = vmatpush1.msra.mxu0 0.0
  %4949 = vmatprep.subr.mxu0 0.0
  %4950 = vmatpush1.msra.mxu0 0.0
  %4951 = vmatprep.subr.mxu0 0.0
  %4952 = vmatpush1.msra.mxu0 0.0
  %4953 = vmatprep.mubr.f32.mxu0 0.0
  %v4954 = vand.u32 %v3852, 4294901760
  %v4955 = vsub.f32 %v3852, %v4954
  %v4956 = vand.u32 %v4955, 4294901760
  %v4957 = vsub.f32 %v4955, %v4956
  %v4958 = vand.u32 %v4957, 4294901760
  %4959 = vmatmul.mubr.f32.gmra.mrb[0].mxu0 %v4958
  %v4960 = vpop.f32.mrb[0].mxu0
  %v4961 = vadd.f32 %v3978, %v4960
  %v4962 = vpop.f32.mrb[0].mxu0
  %v4963 = vadd.f32 %v3982, %v4962
  %4964 = vdwg.mxu0
  %v4965 = vand.u32 %v3856, 4294901760
  %v4966 = vsub.f32 %v3856, %v4965
  %v4967 = vand.u32 %v4966, 4294901760
  %v4968 = vsub.f32 %v4966, %v4967
  %v4969 = vand.u32 %v4968, 4294901760
  %4970 = vmatprep.subr.mxu0 %v4969
  %v4971 = vand.u32 %v3855, 4294901760
  %v4972 = vsub.f32 %v3855, %v4971
  %v4973 = vand.u32 %v4972, 4294901760
  %v4974 = vsub.f32 %v4972, %v4973
  %v4975 = vand.u32 %v4974, 4294901760
  %4976 = vmatpush1.msra.mxu0 %v4975
  %v4977 = vand.u32 %v3863, 4294901760
  %v4978 = vsub.f32 %v3863, %v4977
  %v4979 = vand.u32 %v4978, 4294901760
  %v4980 = vsub.f32 %v4978, %v4979
  %v4981 = vand.u32 %v4980, 4294901760
  %4982 = vmatprep.subr.mxu0 %v4981
  %v4983 = vand.u32 %v3862, 4294901760
  %v4984 = vsub.f32 %v3862, %v4983
  %v4985 = vand.u32 %v4984, 4294901760
  %v4986 = vsub.f32 %v4984, %v4985
  %v4987 = vand.u32 %v4986, 4294901760
  %4988 = vmatpush1.msra.mxu0 %v4987
  %v4989 = vand.u32 %v3870, 4294901760
  %v4990 = vsub.f32 %v3870, %v4989
  %v4991 = vand.u32 %v4990, 4294901760
  %v4992 = vsub.f32 %v4990, %v4991
  %v4993 = vand.u32 %v4992, 4294901760
  %4994 = vmatprep.subr.mxu0 %v4993
  %v4995 = vand.u32 %v3869, 4294901760
  %v4996 = vsub.f32 %v3869, %v4995
  %v4997 = vand.u32 %v4996, 4294901760
  %v4998 = vsub.f32 %v4996, %v4997
  %v4999 = vand.u32 %v4998, 4294901760
  %5000 = vmatpush1.msra.mxu0 %v4999
  %v5001 = vand.u32 %v3877, 4294901760
  %v5002 = vsub.f32 %v3877, %v5001
  %v5003 = vand.u32 %v5002, 4294901760
  %v5004 = vsub.f32 %v5002, %v5003
  %v5005 = vand.u32 %v5004, 4294901760
  %5006 = vmatprep.subr.mxu0 %v5005
  %v5007 = vand.u32 %v3876, 4294901760
  %v5008 = vsub.f32 %v3876, %v5007
  %v5009 = vand.u32 %v5008, 4294901760
  %v5010 = vsub.f32 %v5008, %v5009
  %v5011 = vand.u32 %v5010, 4294901760
  %5012 = vmatpush1.msra.mxu0 %v5011
  %v5013 = vand.u32 %v3884, 4294901760
  %v5014 = vsub.f32 %v3884, %v5013
  %v5015 = vand.u32 %v5014, 4294901760
  %v5016 = vsub.f32 %v5014, %v5015
  %v5017 = vand.u32 %v5016, 4294901760
  %5018 = vmatprep.subr.mxu0 %v5017
  %v5019 = vand.u32 %v3883, 4294901760
  %v5020 = vsub.f32 %v3883, %v5019
  %v5021 = vand.u32 %v5020, 4294901760
  %v5022 = vsub.f32 %v5020, %v5021
  %v5023 = vand.u32 %v5022, 4294901760
  %5024 = vmatpush1.msra.mxu0 %v5023
  %v5025 = vand.u32 %v3891, 4294901760
  %v5026 = vsub.f32 %v3891, %v5025
  %v5027 = vand.u32 %v5026, 4294901760
  %v5028 = vsub.f32 %v5026, %v5027
  %v5029 = vand.u32 %v5028, 4294901760
  %5030 = vmatprep.subr.mxu0 %v5029
  %v5031 = vand.u32 %v3890, 4294901760
  %v5032 = vsub.f32 %v3890, %v5031
  %v5033 = vand.u32 %v5032, 4294901760
  %v5034 = vsub.f32 %v5032, %v5033
  %v5035 = vand.u32 %v5034, 4294901760
  %5036 = vmatpush1.msra.mxu0 %v5035
  %v5037 = vand.u32 %v3898, 4294901760
  %v5038 = vsub.f32 %v3898, %v5037
  %v5039 = vand.u32 %v5038, 4294901760
  %v5040 = vsub.f32 %v5038, %v5039
  %v5041 = vand.u32 %v5040, 4294901760
  %5042 = vmatprep.subr.mxu0 %v5041
  %v5043 = vand.u32 %v3897, 4294901760
  %v5044 = vsub.f32 %v3897, %v5043
  %v5045 = vand.u32 %v5044, 4294901760
  %v5046 = vsub.f32 %v5044, %v5045
  %v5047 = vand.u32 %v5046, 4294901760
  %5048 = vmatpush1.msra.mxu0 %v5047
  %v5049 = vand.u32 %v3905, 4294901760
  %v5050 = vsub.f32 %v3905, %v5049
  %v5051 = vand.u32 %v5050, 4294901760
  %v5052 = vsub.f32 %v5050, %v5051
  %v5053 = vand.u32 %v5052, 4294901760
  %5054 = vmatprep.subr.mxu0 %v5053
  %v5055 = vand.u32 %v3904, 4294901760
  %v5056 = vsub.f32 %v3904, %v5055
  %v5057 = vand.u32 %v5056, 4294901760
  %v5058 = vsub.f32 %v5056, %v5057
  %v5059 = vand.u32 %v5058, 4294901760
  %5060 = vmatpush1.msra.mxu0 %v5059
  %v5061 = vand.u32 %v3912, 4294901760
  %v5062 = vsub.f32 %v3912, %v5061
  %v5063 = vand.u32 %v5062, 4294901760
  %v5064 = vsub.f32 %v5062, %v5063
  %v5065 = vand.u32 %v5064, 4294901760
  %5066 = vmatprep.subr.mxu0 %v5065
  %v5067 = vand.u32 %v3911, 4294901760
  %v5068 = vsub.f32 %v3911, %v5067
  %v5069 = vand.u32 %v5068, 4294901760
  %v5070 = vsub.f32 %v5068, %v5069
  %v5071 = vand.u32 %v5070, 4294901760
  %5072 = vmatpush1.msra.mxu0 %v5071
  %v5073 = vand.u32 %v3919, 4294901760
  %v5074 = vsub.f32 %v3919, %v5073
  %v5075 = vand.u32 %v5074, 4294901760
  %v5076 = vsub.f32 %v5074, %v5075
  %v5077 = vand.u32 %v5076, 4294901760
  %5078 = vmatprep.subr.mxu0 %v5077
  %v5079 = vand.u32 %v3918, 4294901760
  %v5080 = vsub.f32 %v3918, %v5079
  %v5081 = vand.u32 %v5080, 4294901760
  %v5082 = vsub.f32 %v5080, %v5081
  %v5083 = vand.u32 %v5082, 4294901760
  %5084 = vmatpush1.msra.mxu0 %v5083
  %v5085 = vand.u32 %v3926, 4294901760
  %v5086 = vsub.f32 %v3926, %v5085
  %v5087 = vand.u32 %v5086, 4294901760
  %v5088 = vsub.f32 %v5086, %v5087
  %v5089 = vand.u32 %v5088, 4294901760
  %5090 = vmatprep.subr.mxu0 %v5089
  %v5091 = vand.u32 %v3925, 4294901760
  %v5092 = vsub.f32 %v3925, %v5091
  %v5093 = vand.u32 %v5092, 4294901760
  %v5094 = vsub.f32 %v5092, %v5093
  %v5095 = vand.u32 %v5094, 4294901760
  %5096 = vmatpush1.msra.mxu0 %v5095
  %v5097 = vand.u32 %v3933, 4294901760
  %v5098 = vsub.f32 %v3933, %v5097
  %v5099 = vand.u32 %v5098, 4294901760
  %v5100 = vsub.f32 %v5098, %v5099
  %v5101 = vand.u32 %v5100, 4294901760
  %5102 = vmatprep.subr.mxu0 %v5101
  %v5103 = vand.u32 %v3932, 4294901760
  %v5104 = vsub.f32 %v3932, %v5103
  %v5105 = vand.u32 %v5104, 4294901760
  %v5106 = vsub.f32 %v5104, %v5105
  %v5107 = vand.u32 %v5106, 4294901760
  %5108 = vmatpush1.msra.mxu0 %v5107
  %v5109 = vand.u32 %v3940, 4294901760
  %v5110 = vsub.f32 %v3940, %v5109
  %v5111 = vand.u32 %v5110, 4294901760
  %v5112 = vsub.f32 %v5110, %v5111
  %v5113 = vand.u32 %v5112, 4294901760
  %5114 = vmatprep.subr.mxu0 %v5113
  %v5115 = vand.u32 %v3939, 4294901760
  %v5116 = vsub.f32 %v3939, %v5115
  %v5117 = vand.u32 %v5116, 4294901760
  %v5118 = vsub.f32 %v5116, %v5117
  %v5119 = vand.u32 %v5118, 4294901760
  %5120 = vmatpush1.msra.mxu0 %v5119
  %v5121 = vand.u32 %v3947, 4294901760
  %v5122 = vsub.f32 %v3947, %v5121
  %v5123 = vand.u32 %v5122, 4294901760
  %v5124 = vsub.f32 %v5122, %v5123
  %v5125 = vand.u32 %v5124, 4294901760
  %5126 = vmatprep.subr.mxu0 %v5125
  %v5127 = vand.u32 %v3946, 4294901760
  %v5128 = vsub.f32 %v3946, %v5127
  %v5129 = vand.u32 %v5128, 4294901760
  %v5130 = vsub.f32 %v5128, %v5129
  %v5131 = vand.u32 %v5130, 4294901760
  %5132 = vmatpush1.msra.mxu0 %v5131
  %v5133 = vand.u32 %v3954, 4294901760
  %v5134 = vsub.f32 %v3954, %v5133
  %v5135 = vand.u32 %v5134, 4294901760
  %v5136 = vsub.f32 %v5134, %v5135
  %v5137 = vand.u32 %v5136, 4294901760
  %5138 = vmatprep.subr.mxu0 %v5137
  %v5139 = vand.u32 %v3953, 4294901760
  %v5140 = vsub.f32 %v3953, %v5139
  %v5141 = vand.u32 %v5140, 4294901760
  %v5142 = vsub.f32 %v5140, %v5141
  %v5143 = vand.u32 %v5142, 4294901760
  %5144 = vmatpush1.msra.mxu0 %v5143
  %v5145 = vand.u32 %v3961, 4294901760
  %v5146 = vsub.f32 %v3961, %v5145
  %v5147 = vand.u32 %v5146, 4294901760
  %v5148 = vsub.f32 %v5146, %v5147
  %v5149 = vand.u32 %v5148, 4294901760
  %5150 = vmatprep.subr.mxu0 %v5149
  %v5151 = vand.u32 %v3960, 4294901760
  %v5152 = vsub.f32 %v3960, %v5151
  %v5153 = vand.u32 %v5152, 4294901760
  %v5154 = vsub.f32 %v5152, %v5153
  %v5155 = vand.u32 %v5154, 4294901760
  %5156 = vmatpush1.msra.mxu0 %v5155
  %5157 = vmatprep.subr.mxu0 0.0
  %5158 = vmatpush1.msra.mxu0 0.0
  %5159 = vmatprep.subr.mxu0 0.0
  %5160 = vmatpush1.msra.mxu0 0.0
  %5161 = vmatprep.subr.mxu0 0.0
  %5162 = vmatpush1.msra.mxu0 0.0
  %5163 = vmatprep.subr.mxu0 0.0
  %5164 = vmatpush1.msra.mxu0 0.0
  %5165 = vmatprep.subr.mxu0 0.0
  %5166 = vmatpush1.msra.mxu0 0.0
  %5167 = vmatprep.subr.mxu0 0.0
  %5168 = vmatpush1.msra.mxu0 0.0
  %5169 = vmatprep.subr.mxu0 0.0
  %5170 = vmatpush1.msra.mxu0 0.0
  %5171 = vmatprep.subr.mxu0 0.0
  %5172 = vmatpush1.msra.mxu0 0.0
  %5173 = vmatprep.subr.mxu0 0.0
  %5174 = vmatpush1.msra.mxu0 0.0
  %5175 = vmatprep.subr.mxu0 0.0
  %5176 = vmatpush1.msra.mxu0 0.0
  %5177 = vmatprep.subr.mxu0 0.0
  %5178 = vmatpush1.msra.mxu0 0.0
  %5179 = vmatprep.subr.mxu0 0.0
  %5180 = vmatpush1.msra.mxu0 0.0
  %5181 = vmatprep.subr.mxu0 0.0
  %5182 = vmatpush1.msra.mxu0 0.0
  %5183 = vmatprep.subr.mxu0 0.0
  %5184 = vmatpush1.msra.mxu0 0.0
  %5185 = vmatprep.subr.mxu0 0.0
  %5186 = vmatpush1.msra.mxu0 0.0
  %5187 = vmatprep.subr.mxu0 0.0
  %5188 = vmatpush1.msra.mxu0 0.0
  %5189 = vmatprep.mubr.f32.mxu0 0.0
  %v5190 = vand.u32 %v3852, 4294901760
  %5191 = vmatmul.mubr.f32.gmra.mrb[0].mxu0 %v5190
  %v5192 = vpop.f32.mrb[0].mxu0
  %v5193 = vadd.f32 %v4961, %v5192
  %v5194 = vpop.f32.mrb[0].mxu0
  %v5195 = vadd.f32 %v4963, %v5194
  %5196 = vdwg.mxu0
  %v5197 = vand.u32 %v3856, 4294901760
  %v5198 = vsub.f32 %v3856, %v5197
  %5199 = vmatprep.subr.mxu0 %v5198
  %v5200 = vand.u32 %v3855, 4294901760
  %v5201 = vsub.f32 %v3855, %v5200
  %5202 = vmatpush1.msra.mxu0 %v5201
  %v5203 = vand.u32 %v3863, 4294901760
  %v5204 = vsub.f32 %v3863, %v5203
  %5205 = vmatprep.subr.mxu0 %v5204
  %v5206 = vand.u32 %v3862, 4294901760
  %v5207 = vsub.f32 %v3862, %v5206
  %5208 = vmatpush1.msra.mxu0 %v5207
  %v5209 = vand.u32 %v3870, 4294901760
  %v5210 = vsub.f32 %v3870, %v5209
  %5211 = vmatprep.subr.mxu0 %v5210
  %v5212 = vand.u32 %v3869, 4294901760
  %v5213 = vsub.f32 %v3869, %v5212
  %5214 = vmatpush1.msra.mxu0 %v5213
  %v5215 = vand.u32 %v3877, 4294901760
  %v5216 = vsub.f32 %v3877, %v5215
  %5217 = vmatprep.subr.mxu0 %v5216
  %v5218 = vand.u32 %v3876, 4294901760
  %v5219 = vsub.f32 %v3876, %v5218
  %5220 = vmatpush1.msra.mxu0 %v5219
  %v5221 = vand.u32 %v3884, 4294901760
  %v5222 = vsub.f32 %v3884, %v5221
  %5223 = vmatprep.subr.mxu0 %v5222
  %v5224 = vand.u32 %v3883, 4294901760
  %v5225 = vsub.f32 %v3883, %v5224
  %5226 = vmatpush1.msra.mxu0 %v5225
  %v5227 = vand.u32 %v3891, 4294901760
  %v5228 = vsub.f32 %v3891, %v5227
  %5229 = vmatprep.subr.mxu0 %v5228
  %v5230 = vand.u32 %v3890, 4294901760
  %v5231 = vsub.f32 %v3890, %v5230
  %5232 = vmatpush1.msra.mxu0 %v5231
  %v5233 = vand.u32 %v3898, 4294901760
  %v5234 = vsub.f32 %v3898, %v5233
  %5235 = vmatprep.subr.mxu0 %v5234
  %v5236 = vand.u32 %v3897, 4294901760
  %v5237 = vsub.f32 %v3897, %v5236
  %5238 = vmatpush1.msra.mxu0 %v5237
  %v5239 = vand.u32 %v3905, 4294901760
  %v5240 = vsub.f32 %v3905, %v5239
  %5241 = vmatprep.subr.mxu0 %v5240
  %v5242 = vand.u32 %v3904, 4294901760
  %v5243 = vsub.f32 %v3904, %v5242
  %5244 = vmatpush1.msra.mxu0 %v5243
  %v5245 = vand.u32 %v3912, 4294901760
  %v5246 = vsub.f32 %v3912, %v5245
  %5247 = vmatprep.subr.mxu0 %v5246
  %v5248 = vand.u32 %v3911, 4294901760
  %v5249 = vsub.f32 %v3911, %v5248
  %5250 = vmatpush1.msra.mxu0 %v5249
  %v5251 = vand.u32 %v3919, 4294901760
  %v5252 = vsub.f32 %v3919, %v5251
  %5253 = vmatprep.subr.mxu0 %v5252
  %v5254 = vand.u32 %v3918, 4294901760
  %v5255 = vsub.f32 %v3918, %v5254
  %5256 = vmatpush1.msra.mxu0 %v5255
  %v5257 = vand.u32 %v3926, 4294901760
  %v5258 = vsub.f32 %v3926, %v5257
  %5259 = vmatprep.subr.mxu0 %v5258
  %v5260 = vand.u32 %v3925, 4294901760
  %v5261 = vsub.f32 %v3925, %v5260
  %5262 = vmatpush1.msra.mxu0 %v5261
  %v5263 = vand.u32 %v3933, 4294901760
  %v5264 = vsub.f32 %v3933, %v5263
  %5265 = vmatprep.subr.mxu0 %v5264
  %v5266 = vand.u32 %v3932, 4294901760
  %v5267 = vsub.f32 %v3932, %v5266
  %5268 = vmatpush1.msra.mxu0 %v5267
  %v5269 = vand.u32 %v3940, 4294901760
  %v5270 = vsub.f32 %v3940, %v5269
  %5271 = vmatprep.subr.mxu0 %v5270
  %v5272 = vand.u32 %v3939, 4294901760
  %v5273 = vsub.f32 %v3939, %v5272
  %5274 = vmatpush1.msra.mxu0 %v5273
  %v5275 = vand.u32 %v3947, 4294901760
  %v5276 = vsub.f32 %v3947, %v5275
  %5277 = vmatprep.subr.mxu0 %v5276
  %v5278 = vand.u32 %v3946, 4294901760
  %v5279 = vsub.f32 %v3946, %v5278
  %5280 = vmatpush1.msra.mxu0 %v5279
  %v5281 = vand.u32 %v3954, 4294901760
  %v5282 = vsub.f32 %v3954, %v5281
  %5283 = vmatprep.subr.mxu0 %v5282
  %v5284 = vand.u32 %v3953, 4294901760
  %v5285 = vsub.f32 %v3953, %v5284
  %5286 = vmatpush1.msra.mxu0 %v5285
  %v5287 = vand.u32 %v3961, 4294901760
  %v5288 = vsub.f32 %v3961, %v5287
  %5289 = vmatprep.subr.mxu0 %v5288
  %v5290 = vand.u32 %v3960, 4294901760
  %v5291 = vsub.f32 %v3960, %v5290
  %5292 = vmatpush1.msra.mxu0 %v5291
  %5293 = vmatprep.subr.mxu0 0.0
  %5294 = vmatpush1.msra.mxu0 0.0
  %5295 = vmatprep.subr.mxu0 0.0
  %5296 = vmatpush1.msra.mxu0 0.0
  %5297 = vmatprep.subr.mxu0 0.0
  %5298 = vmatpush1.msra.mxu0 0.0
  %5299 = vmatprep.subr.mxu0 0.0
  %5300 = vmatpush1.msra.mxu0 0.0
  %5301 = vmatprep.subr.mxu0 0.0
  %5302 = vmatpush1.msra.mxu0 0.0
  %5303 = vmatprep.subr.mxu0 0.0
  %5304 = vmatpush1.msra.mxu0 0.0
  %5305 = vmatprep.subr.mxu0 0.0
  %5306 = vmatpush1.msra.mxu0 0.0
  %5307 = vmatprep.subr.mxu0 0.0
  %5308 = vmatpush1.msra.mxu0 0.0
  %5309 = vmatprep.subr.mxu0 0.0
  %5310 = vmatpush1.msra.mxu0 0.0
  %5311 = vmatprep.subr.mxu0 0.0
  %5312 = vmatpush1.msra.mxu0 0.0
  %5313 = vmatprep.subr.mxu0 0.0
  %5314 = vmatpush1.msra.mxu0 0.0
  %5315 = vmatprep.subr.mxu0 0.0
  %5316 = vmatpush1.msra.mxu0 0.0
  %5317 = vmatprep.subr.mxu0 0.0
  %5318 = vmatpush1.msra.mxu0 0.0
  %5319 = vmatprep.subr.mxu0 0.0
  %5320 = vmatpush1.msra.mxu0 0.0
  %5321 = vmatprep.subr.mxu0 0.0
  %5322 = vmatpush1.msra.mxu0 0.0
  %5323 = vmatprep.subr.mxu0 0.0
  %5324 = vmatpush1.msra.mxu0 0.0
  %5325 = vmatprep.mubr.f32.mxu0 0.0
  %v5326 = vand.u32 %v3852, 4294901760
  %v5327 = vsub.f32 %v3852, %v5326
  %5328 = vmatmul.mubr.f32.gmra.mrb[0].mxu0 %v5327
  %v5329 = vpop.f32.mrb[0].mxu0
  %v5330 = vadd.f32 %v5193, %v5329
  %v5331 = vpop.f32.mrb[0].mxu0
  %v5332 = vadd.f32 %v5195, %v5331
  %5333 = vdwg.mxu0
  %v5334 = vand.u32 %v3856, 4294901760
  %5335 = vmatprep.subr.mxu0 %v5334
  %v5336 = vand.u32 %v3855, 4294901760
  %5337 = vmatpush1.msra.mxu0 %v5336
  %v5338 = vand.u32 %v3863, 4294901760
  %5339 = vmatprep.subr.mxu0 %v5338
  %v5340 = vand.u32 %v3862, 4294901760
  %5341 = vmatpush1.msra.mxu0 %v5340
  %v5342 = vand.u32 %v3870, 4294901760
  %5343 = vmatprep.subr.mxu0 %v5342
  %v5344 = vand.u32 %v3869, 4294901760
  %5345 = vmatpush1.msra.mxu0 %v5344
  %v5346 = vand.u32 %v3877, 4294901760
  %5347 = vmatprep.subr.mxu0 %v5346
  %v5348 = vand.u32 %v3876, 4294901760
  %5349 = vmatpush1.msra.mxu0 %v5348
  %v5350 = vand.u32 %v3884, 4294901760
  %5351 = vmatprep.subr.mxu0 %v5350
  %v5352 = vand.u32 %v3883, 4294901760
  %5353 = vmatpush1.msra.mxu0 %v5352
  %v5354 = vand.u32 %v3891, 4294901760
  %5355 = vmatprep.subr.mxu0 %v5354
  %v5356 = vand.u32 %v3890, 4294901760
  %5357 = vmatpush1.msra.mxu0 %v5356
  %v5358 = vand.u32 %v3898, 4294901760
  %5359 = vmatprep.subr.mxu0 %v5358
  %v5360 = vand.u32 %v3897, 4294901760
  %5361 = vmatpush1.msra.mxu0 %v5360
  %v5362 = vand.u32 %v3905, 4294901760
  %5363 = vmatprep.subr.mxu0 %v5362
  %v5364 = vand.u32 %v3904, 4294901760
  %5365 = vmatpush1.msra.mxu0 %v5364
  %v5366 = vand.u32 %v3912, 4294901760
  %5367 = vmatprep.subr.mxu0 %v5366
  %v5368 = vand.u32 %v3911, 4294901760
  %5369 = vmatpush1.msra.mxu0 %v5368
  %v5370 = vand.u32 %v3919, 4294901760
  %5371 = vmatprep.subr.mxu0 %v5370
  %v5372 = vand.u32 %v3918, 4294901760
  %5373 = vmatpush1.msra.mxu0 %v5372
  %v5374 = vand.u32 %v3926, 4294901760
  %5375 = vmatprep.subr.mxu0 %v5374
  %v5376 = vand.u32 %v3925, 4294901760
  %5377 = vmatpush1.msra.mxu0 %v5376
  %v5378 = vand.u32 %v3933, 4294901760
  %5379 = vmatprep.subr.mxu0 %v5378
  %v5380 = vand.u32 %v3932, 4294901760
  %5381 = vmatpush1.msra.mxu0 %v5380
  %v5382 = vand.u32 %v3940, 4294901760
  %5383 = vmatprep.subr.mxu0 %v5382
  %v5384 = vand.u32 %v3939, 4294901760
  %5385 = vmatpush1.msra.mxu0 %v5384
  %v5386 = vand.u32 %v3947, 4294901760
  %5387 = vmatprep.subr.mxu0 %v5386
  %v5388 = vand.u32 %v3946, 4294901760
  %5389 = vmatpush1.msra.mxu0 %v5388
  %v5390 = vand.u32 %v3954, 4294901760
  %5391 = vmatprep.subr.mxu0 %v5390
  %v5392 = vand.u32 %v3953, 4294901760
  %5393 = vmatpush1.msra.mxu0 %v5392
  %v5394 = vand.u32 %v3961, 4294901760
  %5395 = vmatprep.subr.mxu0 %v5394
  %v5396 = vand.u32 %v3960, 4294901760
  %5397 = vmatpush1.msra.mxu0 %v5396
  %5398 = vmatprep.subr.mxu0 0.0
  %5399 = vmatpush1.msra.mxu0 0.0
  %5400 = vmatprep.subr.mxu0 0.0
  %5401 = vmatpush1.msra.mxu0 0.0
  %5402 = vmatprep.subr.mxu0 0.0
  %5403 = vmatpush1.msra.mxu0 0.0
  %5404 = vmatprep.subr.mxu0 0.0
  %5405 = vmatpush1.msra.mxu0 0.0
  %5406 = vmatprep.subr.mxu0 0.0
  %5407 = vmatpush1.msra.mxu0 0.0
  %5408 = vmatprep.subr.mxu0 0.0
  %5409 = vmatpush1.msra.mxu0 0.0
  %5410 = vmatprep.subr.mxu0 0.0
  %5411 = vmatpush1.msra.mxu0 0.0
  %5412 = vmatprep.subr.mxu0 0.0
  %5413 = vmatpush1.msra.mxu0 0.0
  %5414 = vmatprep.subr.mxu0 0.0
  %5415 = vmatpush1.msra.mxu0 0.0
  %5416 = vmatprep.subr.mxu0 0.0
  %5417 = vmatpush1.msra.mxu0 0.0
  %5418 = vmatprep.subr.mxu0 0.0
  %5419 = vmatpush1.msra.mxu0 0.0
  %5420 = vmatprep.subr.mxu0 0.0
  %5421 = vmatpush1.msra.mxu0 0.0
  %5422 = vmatprep.subr.mxu0 0.0
  %5423 = vmatpush1.msra.mxu0 0.0
  %5424 = vmatprep.subr.mxu0 0.0
  %5425 = vmatpush1.msra.mxu0 0.0
  %5426 = vmatprep.subr.mxu0 0.0
  %5427 = vmatpush1.msra.mxu0 0.0
  %5428 = vmatprep.subr.mxu0 0.0
  %5429 = vmatpush1.msra.mxu0 0.0
  %5430 = vmatprep.mubr.f32.mxu0 0.0
  %v5431 = vand.u32 %v3852, 4294901760
  %v5432 = vsub.f32 %v3852, %v5431
  %v5433 = vand.u32 %v5432, 4294901760
  %5434 = vmatmul.mubr.f32.gmra.mrb[0].mxu0 %v5433
  %v5435 = vpop.f32.mrb[0].mxu0
  %v5436 = vadd.f32 %v5330, %v5435
  %v5437 = vpop.f32.mrb[0].mxu0
  %v5438 = vadd.f32 %v5332, %v5437
  %5439 = vdwg.mxu0
  %v5440 = vand.u32 %v3856, 4294901760
  %v5441 = vsub.f32 %v3856, %v5440
  %v5442 = vand.u32 %v5441, 4294901760
  %5443 = vmatprep.subr.mxu0 %v5442
  %v5444 = vand.u32 %v3855, 4294901760
  %v5445 = vsub.f32 %v3855, %v5444
  %v5446 = vand.u32 %v5445, 4294901760
  %5447 = vmatpush1.msra.mxu0 %v5446
  %v5448 = vand.u32 %v3863, 4294901760
  %v5449 = vsub.f32 %v3863, %v5448
  %v5450 = vand.u32 %v5449, 4294901760
  %5451 = vmatprep.subr.mxu0 %v5450
  %v5452 = vand.u32 %v3862, 4294901760
  %v5453 = vsub.f32 %v3862, %v5452
  %v5454 = vand.u32 %v5453, 4294901760
  %5455 = vmatpush1.msra.mxu0 %v5454
  %v5456 = vand.u32 %v3870, 4294901760
  %v5457 = vsub.f32 %v3870, %v5456
  %v5458 = vand.u32 %v5457, 4294901760
  %5459 = vmatprep.subr.mxu0 %v5458
  %v5460 = vand.u32 %v3869, 4294901760
  %v5461 = vsub.f32 %v3869, %v5460
  %v5462 = vand.u32 %v5461, 4294901760
  %5463 = vmatpush1.msra.mxu0 %v5462
  %v5464 = vand.u32 %v3877, 4294901760
  %v5465 = vsub.f32 %v3877, %v5464
  %v5466 = vand.u32 %v5465, 4294901760
  %5467 = vmatprep.subr.mxu0 %v5466
  %v5468 = vand.u32 %v3876, 4294901760
  %v5469 = vsub.f32 %v3876, %v5468
  %v5470 = vand.u32 %v5469, 4294901760
  %5471 = vmatpush1.msra.mxu0 %v5470
  %v5472 = vand.u32 %v3884, 4294901760
  %v5473 = vsub.f32 %v3884, %v5472
  %v5474 = vand.u32 %v5473, 4294901760
  %5475 = vmatprep.subr.mxu0 %v5474
  %v5476 = vand.u32 %v3883, 4294901760
  %v5477 = vsub.f32 %v3883, %v5476
  %v5478 = vand.u32 %v5477, 4294901760
  %5479 = vmatpush1.msra.mxu0 %v5478
  %v5480 = vand.u32 %v3891, 4294901760
  %v5481 = vsub.f32 %v3891, %v5480
  %v5482 = vand.u32 %v5481, 4294901760
  %5483 = vmatprep.subr.mxu0 %v5482
  %v5484 = vand.u32 %v3890, 4294901760
  %v5485 = vsub.f32 %v3890, %v5484
  %v5486 = vand.u32 %v5485, 4294901760
  %5487 = vmatpush1.msra.mxu0 %v5486
  %v5488 = vand.u32 %v3898, 4294901760
  %v5489 = vsub.f32 %v3898, %v5488
  %v5490 = vand.u32 %v5489, 4294901760
  %5491 = vmatprep.subr.mxu0 %v5490
  %v5492 = vand.u32 %v3897, 4294901760
  %v5493 = vsub.f32 %v3897, %v5492
  %v5494 = vand.u32 %v5493, 4294901760
  %5495 = vmatpush1.msra.mxu0 %v5494
  %v5496 = vand.u32 %v3905, 4294901760
  %v5497 = vsub.f32 %v3905, %v5496
  %v5498 = vand.u32 %v5497, 4294901760
  %5499 = vmatprep.subr.mxu0 %v5498
  %v5500 = vand.u32 %v3904, 4294901760
  %v5501 = vsub.f32 %v3904, %v5500
  %v5502 = vand.u32 %v5501, 4294901760
  %5503 = vmatpush1.msra.mxu0 %v5502
  %v5504 = vand.u32 %v3912, 4294901760
  %v5505 = vsub.f32 %v3912, %v5504
  %v5506 = vand.u32 %v5505, 4294901760
  %5507 = vmatprep.subr.mxu0 %v5506
  %v5508 = vand.u32 %v3911, 4294901760
  %v5509 = vsub.f32 %v3911, %v5508
  %v5510 = vand.u32 %v5509, 4294901760
  %5511 = vmatpush1.msra.mxu0 %v5510
  %v5512 = vand.u32 %v3919, 4294901760
  %v5513 = vsub.f32 %v3919, %v5512
  %v5514 = vand.u32 %v5513, 4294901760
  %5515 = vmatprep.subr.mxu0 %v5514
  %v5516 = vand.u32 %v3918, 4294901760
  %v5517 = vsub.f32 %v3918, %v5516
  %v5518 = vand.u32 %v5517, 4294901760
  %5519 = vmatpush1.msra.mxu0 %v5518
  %v5520 = vand.u32 %v3926, 4294901760
  %v5521 = vsub.f32 %v3926, %v5520
  %v5522 = vand.u32 %v5521, 4294901760
  %5523 = vmatprep.subr.mxu0 %v5522
  %v5524 = vand.u32 %v3925, 4294901760
  %v5525 = vsub.f32 %v3925, %v5524
  %v5526 = vand.u32 %v5525, 4294901760
  %5527 = vmatpush1.msra.mxu0 %v5526
  %v5528 = vand.u32 %v3933, 4294901760
  %v5529 = vsub.f32 %v3933, %v5528
  %v5530 = vand.u32 %v5529, 4294901760
  %5531 = vmatprep.subr.mxu0 %v5530
  %v5532 = vand.u32 %v3932, 4294901760
  %v5533 = vsub.f32 %v3932, %v5532
  %v5534 = vand.u32 %v5533, 4294901760
  %5535 = vmatpush1.msra.mxu0 %v5534
  %v5536 = vand.u32 %v3940, 4294901760
  %v5537 = vsub.f32 %v3940, %v5536
  %v5538 = vand.u32 %v5537, 4294901760
  %5539 = vmatprep.subr.mxu0 %v5538
  %v5540 = vand.u32 %v3939, 4294901760
  %v5541 = vsub.f32 %v3939, %v5540
  %v5542 = vand.u32 %v5541, 4294901760
  %5543 = vmatpush1.msra.mxu0 %v5542
  %v5544 = vand.u32 %v3947, 4294901760
  %v5545 = vsub.f32 %v3947, %v5544
  %v5546 = vand.u32 %v5545, 4294901760
  %5547 = vmatprep.subr.mxu0 %v5546
  %v5548 = vand.u32 %v3946, 4294901760
  %v5549 = vsub.f32 %v3946, %v5548
  %v5550 = vand.u32 %v5549, 4294901760
  %5551 = vmatpush1.msra.mxu0 %v5550
  %v5552 = vand.u32 %v3954, 4294901760
  %v5553 = vsub.f32 %v3954, %v5552
  %v5554 = vand.u32 %v5553, 4294901760
  %5555 = vmatprep.subr.mxu0 %v5554
  %v5556 = vand.u32 %v3953, 4294901760
  %v5557 = vsub.f32 %v3953, %v5556
  %v5558 = vand.u32 %v5557, 4294901760
  %5559 = vmatpush1.msra.mxu0 %v5558
  %v5560 = vand.u32 %v3961, 4294901760
  %v5561 = vsub.f32 %v3961, %v5560
  %v5562 = vand.u32 %v5561, 4294901760
  %5563 = vmatprep.subr.mxu0 %v5562
  %v5564 = vand.u32 %v3960, 4294901760
  %v5565 = vsub.f32 %v3960, %v5564
  %v5566 = vand.u32 %v5565, 4294901760
  %5567 = vmatpush1.msra.mxu0 %v5566
  %5568 = vmatprep.subr.mxu0 0.0
  %5569 = vmatpush1.msra.mxu0 0.0
  %5570 = vmatprep.subr.mxu0 0.0
  %5571 = vmatpush1.msra.mxu0 0.0
  %5572 = vmatprep.subr.mxu0 0.0
  %5573 = vmatpush1.msra.mxu0 0.0
  %5574 = vmatprep.subr.mxu0 0.0
  %5575 = vmatpush1.msra.mxu0 0.0
  %5576 = vmatprep.subr.mxu0 0.0
  %5577 = vmatpush1.msra.mxu0 0.0
  %5578 = vmatprep.subr.mxu0 0.0
  %5579 = vmatpush1.msra.mxu0 0.0
  %5580 = vmatprep.subr.mxu0 0.0
  %5581 = vmatpush1.msra.mxu0 0.0
  %5582 = vmatprep.subr.mxu0 0.0
  %5583 = vmatpush1.msra.mxu0 0.0
  %5584 = vmatprep.subr.mxu0 0.0
  %5585 = vmatpush1.msra.mxu0 0.0
  %5586 = vmatprep.subr.mxu0 0.0
  %5587 = vmatpush1.msra.mxu0 0.0
  %5588 = vmatprep.subr.mxu0 0.0
  %5589 = vmatpush1.msra.mxu0 0.0
  %5590 = vmatprep.subr.mxu0 0.0
  %5591 = vmatpush1.msra.mxu0 0.0
  %5592 = vmatprep.subr.mxu0 0.0
  %5593 = vmatpush1.msra.mxu0 0.0
  %5594 = vmatprep.subr.mxu0 0.0
  %5595 = vmatpush1.msra.mxu0 0.0
  %5596 = vmatprep.subr.mxu0 0.0
  %5597 = vmatpush1.msra.mxu0 0.0
  %5598 = vmatprep.subr.mxu0 0.0
  %5599 = vmatpush1.msra.mxu0 0.0
  %5600 = vmatprep.mubr.f32.mxu0 0.0
  %v5601 = vand.u32 %v3852, 4294901760
  %5602 = vmatmul.mubr.f32.gmra.mrb[0].mxu0 %v5601
  %v5603 = vpop.f32.mrb[0].mxu0
  %v5604 = vadd.f32 %v5436, %v5603
  %v5605 = vpop.f32.mrb[0].mxu0
  %v5606 = vadd.f32 %v5438, %v5605
  %5607 = vdwg.mxu0
  %v5608 = vand.u32 %v3856, 4294901760
  %5609 = vmatprep.subr.mxu0 %v5608
  %v5610 = vand.u32 %v3855, 4294901760
  %5611 = vmatpush1.msra.mxu0 %v5610
  %v5612 = vand.u32 %v3863, 4294901760
  %5613 = vmatprep.subr.mxu0 %v5612
  %v5614 = vand.u32 %v3862, 4294901760
  %5615 = vmatpush1.msra.mxu0 %v5614
  %v5616 = vand.u32 %v3870, 4294901760
  %5617 = vmatprep.subr.mxu0 %v5616
  %v5618 = vand.u32 %v3869, 4294901760
  %5619 = vmatpush1.msra.mxu0 %v5618
  %v5620 = vand.u32 %v3877, 4294901760
  %5621 = vmatprep.subr.mxu0 %v5620
  %v5622 = vand.u32 %v3876, 4294901760
  %5623 = vmatpush1.msra.mxu0 %v5622
  %v5624 = vand.u32 %v3884, 4294901760
  %5625 = vmatprep.subr.mxu0 %v5624
  %v5626 = vand.u32 %v3883, 4294901760
  %5627 = vmatpush1.msra.mxu0 %v5626
  %v5628 = vand.u32 %v3891, 4294901760
  %5629 = vmatprep.subr.mxu0 %v5628
  %v5630 = vand.u32 %v3890, 4294901760
  %5631 = vmatpush1.msra.mxu0 %v5630
  %v5632 = vand.u32 %v3898, 4294901760
  %5633 = vmatprep.subr.mxu0 %v5632
  %v5634 = vand.u32 %v3897, 4294901760
  %5635 = vmatpush1.msra.mxu0 %v5634
  %v5636 = vand.u32 %v3905, 4294901760
  %5637 = vmatprep.subr.mxu0 %v5636
  %v5638 = vand.u32 %v3904, 4294901760
  %5639 = vmatpush1.msra.mxu0 %v5638
  %v5640 = vand.u32 %v3912, 4294901760
  %5641 = vmatprep.subr.mxu0 %v5640
  %v5642 = vand.u32 %v3911, 4294901760
  %5643 = vmatpush1.msra.mxu0 %v5642
  %v5644 = vand.u32 %v3919, 4294901760
  %5645 = vmatprep.subr.mxu0 %v5644
  %v5646 = vand.u32 %v3918, 4294901760
  %5647 = vmatpush1.msra.mxu0 %v5646
  %v5648 = vand.u32 %v3926, 4294901760
  %5649 = vmatprep.subr.mxu0 %v5648
  %v5650 = vand.u32 %v3925, 4294901760
  %5651 = vmatpush1.msra.mxu0 %v5650
  %v5652 = vand.u32 %v3933, 4294901760
  %5653 = vmatprep.subr.mxu0 %v5652
  %v5654 = vand.u32 %v3932, 4294901760
  %5655 = vmatpush1.msra.mxu0 %v5654
  %v5656 = vand.u32 %v3940, 4294901760
  %5657 = vmatprep.subr.mxu0 %v5656
  %v5658 = vand.u32 %v3939, 4294901760
  %5659 = vmatpush1.msra.mxu0 %v5658
  %v5660 = vand.u32 %v3947, 4294901760
  %5661 = vmatprep.subr.mxu0 %v5660
  %v5662 = vand.u32 %v3946, 4294901760
  %5663 = vmatpush1.msra.mxu0 %v5662
  %v5664 = vand.u32 %v3954, 4294901760
  %5665 = vmatprep.subr.mxu0 %v5664
  %v5666 = vand.u32 %v3953, 4294901760
  %5667 = vmatpush1.msra.mxu0 %v5666
  %v5668 = vand.u32 %v3961, 4294901760
  %5669 = vmatprep.subr.mxu0 %v5668
  %v5670 = vand.u32 %v3960, 4294901760
  %5671 = vmatpush1.msra.mxu0 %v5670
  %5672 = vmatprep.subr.mxu0 0.0
  %5673 = vmatpush1.msra.mxu0 0.0
  %5674 = vmatprep.subr.mxu0 0.0
  %5675 = vmatpush1.msra.mxu0 0.0
  %5676 = vmatprep.subr.mxu0 0.0
  %5677 = vmatpush1.msra.mxu0 0.0
  %5678 = vmatprep.subr.mxu0 0.0
  %5679 = vmatpush1.msra.mxu0 0.0
  %5680 = vmatprep.subr.mxu0 0.0
  %5681 = vmatpush1.msra.mxu0 0.0
  %5682 = vmatprep.subr.mxu0 0.0
  %5683 = vmatpush1.msra.mxu0 0.0
  %5684 = vmatprep.subr.mxu0 0.0
  %5685 = vmatpush1.msra.mxu0 0.0
  %5686 = vmatprep.subr.mxu0 0.0
  %5687 = vmatpush1.msra.mxu0 0.0
  %5688 = vmatprep.subr.mxu0 0.0
  %5689 = vmatpush1.msra.mxu0 0.0
  %5690 = vmatprep.subr.mxu0 0.0
  %5691 = vmatpush1.msra.mxu0 0.0
  %5692 = vmatprep.subr.mxu0 0.0
  %5693 = vmatpush1.msra.mxu0 0.0
  %5694 = vmatprep.subr.mxu0 0.0
  %5695 = vmatpush1.msra.mxu0 0.0
  %5696 = vmatprep.subr.mxu0 0.0
  %5697 = vmatpush1.msra.mxu0 0.0
  %5698 = vmatprep.subr.mxu0 0.0
  %5699 = vmatpush1.msra.mxu0 0.0
  %5700 = vmatprep.subr.mxu0 0.0
  %5701 = vmatpush1.msra.mxu0 0.0
  %5702 = vmatprep.subr.mxu0 0.0
  %5703 = vmatpush1.msra.mxu0 0.0
  %5704 = vmatprep.mubr.f32.mxu0 0.0
  %v5705 = vand.u32 %v3852, 4294901760
  %5706 = vmatmul.mubr.f32.gmra.mrb[0].mxu0 %v5705
  %v5707 = vpop.f32.mrb[0].mxu0
  %v5708 = vadd.f32 %v5604, %v5707
  %v5709 = vpop.f32.mrb[0].mxu0
  %v5710 = vadd.f32 %v5606, %v5709
  %5711 = vdwg.mxu0
  %v5712 = vand.u32 %v3858, 4294901760
  %5713 = vmatprep.subr.mxu0 %v5712
  %v5714 = vand.u32 %v3857, 4294901760
  %5715 = vmatpush1.msra.mxu0 %v5714
  %v5716 = vand.u32 %v3865, 4294901760
  %5717 = vmatprep.subr.mxu0 %v5716
  %v5718 = vand.u32 %v3864, 4294901760
  %5719 = vmatpush1.msra.mxu0 %v5718
  %v5720 = vand.u32 %v3872, 4294901760
  %5721 = vmatprep.subr.mxu0 %v5720
  %v5722 = vand.u32 %v3871, 4294901760
  %5723 = vmatpush1.msra.mxu0 %v5722
  %v5724 = vand.u32 %v3879, 4294901760
  %5725 = vmatprep.subr.mxu0 %v5724
  %v5726 = vand.u32 %v3878, 4294901760
  %5727 = vmatpush1.msra.mxu0 %v5726
  %v5728 = vand.u32 %v3886, 4294901760
  %5729 = vmatprep.subr.mxu0 %v5728
  %v5730 = vand.u32 %v3885, 4294901760
  %5731 = vmatpush1.msra.mxu0 %v5730
  %v5732 = vand.u32 %v3893, 4294901760
  %5733 = vmatprep.subr.mxu0 %v5732
  %v5734 = vand.u32 %v3892, 4294901760
  %5735 = vmatpush1.msra.mxu0 %v5734
  %v5736 = vand.u32 %v3900, 4294901760
  %5737 = vmatprep.subr.mxu0 %v5736
  %v5738 = vand.u32 %v3899, 4294901760
  %5739 = vmatpush1.msra.mxu0 %v5738
  %v5740 = vand.u32 %v3907, 4294901760
  %5741 = vmatprep.subr.mxu0 %v5740
  %v5742 = vand.u32 %v3906, 4294901760
  %5743 = vmatpush1.msra.mxu0 %v5742
  %v5744 = vand.u32 %v3914, 4294901760
  %5745 = vmatprep.subr.mxu0 %v5744
  %v5746 = vand.u32 %v3913, 4294901760
  %5747 = vmatpush1.msra.mxu0 %v5746
  %v5748 = vand.u32 %v3921, 4294901760
  %5749 = vmatprep.subr.mxu0 %v5748
  %v5750 = vand.u32 %v3920, 4294901760
  %5751 = vmatpush1.msra.mxu0 %v5750
  %v5752 = vand.u32 %v3928, 4294901760
  %5753 = vmatprep.subr.mxu0 %v5752
  %v5754 = vand.u32 %v3927, 4294901760
  %5755 = vmatpush1.msra.mxu0 %v5754
  %v5756 = vand.u32 %v3935, 4294901760
  %5757 = vmatprep.subr.mxu0 %v5756
  %v5758 = vand.u32 %v3934, 4294901760
  %5759 = vmatpush1.msra.mxu0 %v5758
  %v5760 = vand.u32 %v3942, 4294901760
  %5761 = vmatprep.subr.mxu0 %v5760
  %v5762 = vand.u32 %v3941, 4294901760
  %5763 = vmatpush1.msra.mxu0 %v5762
  %v5764 = vand.u32 %v3949, 4294901760
  %5765 = vmatprep.subr.mxu0 %v5764
  %v5766 = vand.u32 %v3948, 4294901760
  %5767 = vmatpush1.msra.mxu0 %v5766
  %v5768 = vand.u32 %v3956, 4294901760
  %5769 = vmatprep.subr.mxu0 %v5768
  %v5770 = vand.u32 %v3955, 4294901760
  %5771 = vmatpush1.msra.mxu0 %v5770
  %v5772 = vand.u32 %v3963, 4294901760
  %5773 = vmatprep.subr.mxu0 %v5772
  %v5774 = vand.u32 %v3962, 4294901760
  %5775 = vmatpush1.msra.mxu0 %v5774
  %5776 = vmatprep.subr.mxu0 0.0
  %5777 = vmatpush1.msra.mxu0 0.0
  %5778 = vmatprep.subr.mxu0 0.0
  %5779 = vmatpush1.msra.mxu0 0.0
  %5780 = vmatprep.subr.mxu0 0.0
  %5781 = vmatpush1.msra.mxu0 0.0
  %5782 = vmatprep.subr.mxu0 0.0
  %5783 = vmatpush1.msra.mxu0 0.0
  %5784 = vmatprep.subr.mxu0 0.0
  %5785 = vmatpush1.msra.mxu0 0.0
  %5786 = vmatprep.subr.mxu0 0.0
  %5787 = vmatpush1.msra.mxu0 0.0
  %5788 = vmatprep.subr.mxu0 0.0
  %5789 = vmatpush1.msra.mxu0 0.0
  %5790 = vmatprep.subr.mxu0 0.0
  %5791 = vmatpush1.msra.mxu0 0.0
  %5792 = vmatprep.subr.mxu0 0.0
  %5793 = vmatpush1.msra.mxu0 0.0
  %5794 = vmatprep.subr.mxu0 0.0
  %5795 = vmatpush1.msra.mxu0 0.0
  %5796 = vmatprep.subr.mxu0 0.0
  %5797 = vmatpush1.msra.mxu0 0.0
  %5798 = vmatprep.subr.mxu0 0.0
  %5799 = vmatpush1.msra.mxu0 0.0
  %5800 = vmatprep.subr.mxu0 0.0
  %5801 = vmatpush1.msra.mxu0 0.0
  %5802 = vmatprep.subr.mxu0 0.0
  %5803 = vmatpush1.msra.mxu0 0.0
  %5804 = vmatprep.subr.mxu0 0.0
  %5805 = vmatpush1.msra.mxu0 0.0
  %5806 = vmatprep.subr.mxu0 0.0
  %5807 = vmatpush1.msra.mxu0 0.0
  %5808 = vmatprep.mubr.f32.mxu0 0.0
  %v5809 = vand.u32 %v3852, 4294901760
  %v5810 = vsub.f32 %v3852, %v5809
  %v5811 = vand.u32 %v5810, 4294901760
  %v5812 = vsub.f32 %v5810, %v5811
  %v5813 = vand.u32 %v5812, 4294901760
  %5814 = vmatmul.mubr.f32.gmra.mrb[0].mxu0 %v5813
  %v5815 = vpop.f32.mrb[0].mxu0
  %v5816 = vadd.f32 %v3986, %v5815
  %v5817 = vpop.f32.mrb[0].mxu0
  %v5818 = vadd.f32 %v3990, %v5817
  %5819 = vdwg.mxu0
  %v5820 = vand.u32 %v3858, 4294901760
  %v5821 = vsub.f32 %v3858, %v5820
  %v5822 = vand.u32 %v5821, 4294901760
  %v5823 = vsub.f32 %v5821, %v5822
  %v5824 = vand.u32 %v5823, 4294901760
  %5825 = vmatprep.subr.mxu0 %v5824
  %v5826 = vand.u32 %v3857, 4294901760
  %v5827 = vsub.f32 %v3857, %v5826
  %v5828 = vand.u32 %v5827, 4294901760
  %v5829 = vsub.f32 %v5827, %v5828
  %v5830 = vand.u32 %v5829, 4294901760
  %5831 = vmatpush1.msra.mxu0 %v5830
  %v5832 = vand.u32 %v3865, 4294901760
  %v5833 = vsub.f32 %v3865, %v5832
  %v5834 = vand.u32 %v5833, 4294901760
  %v5835 = vsub.f32 %v5833, %v5834
  %v5836 = vand.u32 %v5835, 4294901760
  %5837 = vmatprep.subr.mxu0 %v5836
  %v5838 = vand.u32 %v3864, 4294901760
  %v5839 = vsub.f32 %v3864, %v5838
  %v5840 = vand.u32 %v5839, 4294901760
  %v5841 = vsub.f32 %v5839, %v5840
  %v5842 = vand.u32 %v5841, 4294901760
  %5843 = vmatpush1.msra.mxu0 %v5842
  %v5844 = vand.u32 %v3872, 4294901760
  %v5845 = vsub.f32 %v3872, %v5844
  %v5846 = vand.u32 %v5845, 4294901760
  %v5847 = vsub.f32 %v5845, %v5846
  %v5848 = vand.u32 %v5847, 4294901760
  %5849 = vmatprep.subr.mxu0 %v5848
  %v5850 = vand.u32 %v3871, 4294901760
  %v5851 = vsub.f32 %v3871, %v5850
  %v5852 = vand.u32 %v5851, 4294901760
  %v5853 = vsub.f32 %v5851, %v5852
  %v5854 = vand.u32 %v5853, 4294901760
  %5855 = vmatpush1.msra.mxu0 %v5854
  %v5856 = vand.u32 %v3879, 4294901760
  %v5857 = vsub.f32 %v3879, %v5856
  %v5858 = vand.u32 %v5857, 4294901760
  %v5859 = vsub.f32 %v5857, %v5858
  %v5860 = vand.u32 %v5859, 4294901760
  %5861 = vmatprep.subr.mxu0 %v5860
  %v5862 = vand.u32 %v3878, 4294901760
  %v5863 = vsub.f32 %v3878, %v5862
  %v5864 = vand.u32 %v5863, 4294901760
  %v5865 = vsub.f32 %v5863, %v5864
  %v5866 = vand.u32 %v5865, 4294901760
  %5867 = vmatpush1.msra.mxu0 %v5866
  %v5868 = vand.u32 %v3886, 4294901760
  %v5869 = vsub.f32 %v3886, %v5868
  %v5870 = vand.u32 %v5869, 4294901760
  %v5871 = vsub.f32 %v5869, %v5870
  %v5872 = vand.u32 %v5871, 4294901760
  %5873 = vmatprep.subr.mxu0 %v5872
  %v5874 = vand.u32 %v3885, 4294901760
  %v5875 = vsub.f32 %v3885, %v5874
  %v5876 = vand.u32 %v5875, 4294901760
  %v5877 = vsub.f32 %v5875, %v5876
  %v5878 = vand.u32 %v5877, 4294901760
  %5879 = vmatpush1.msra.mxu0 %v5878
  %v5880 = vand.u32 %v3893, 4294901760
  %v5881 = vsub.f32 %v3893, %v5880
  %v5882 = vand.u32 %v5881, 4294901760
  %v5883 = vsub.f32 %v5881, %v5882
  %v5884 = vand.u32 %v5883, 4294901760
  %5885 = vmatprep.subr.mxu0 %v5884
  %v5886 = vand.u32 %v3892, 4294901760
  %v5887 = vsub.f32 %v3892, %v5886
  %v5888 = vand.u32 %v5887, 4294901760
  %v5889 = vsub.f32 %v5887, %v5888
  %v5890 = vand.u32 %v5889, 4294901760
  %5891 = vmatpush1.msra.mxu0 %v5890
  %v5892 = vand.u32 %v3900, 4294901760
  %v5893 = vsub.f32 %v3900, %v5892
  %v5894 = vand.u32 %v5893, 4294901760
  %v5895 = vsub.f32 %v5893, %v5894
  %v5896 = vand.u32 %v5895, 4294901760
  %5897 = vmatprep.subr.mxu0 %v5896
  %v5898 = vand.u32 %v3899, 4294901760
  %v5899 = vsub.f32 %v3899, %v5898
  %v5900 = vand.u32 %v5899, 4294901760
  %v5901 = vsub.f32 %v5899, %v5900
  %v5902 = vand.u32 %v5901, 4294901760
  %5903 = vmatpush1.msra.mxu0 %v5902
  %v5904 = vand.u32 %v3907, 4294901760
  %v5905 = vsub.f32 %v3907, %v5904
  %v5906 = vand.u32 %v5905, 4294901760
  %v5907 = vsub.f32 %v5905, %v5906
  %v5908 = vand.u32 %v5907, 4294901760
  %5909 = vmatprep.subr.mxu0 %v5908
  %v5910 = vand.u32 %v3906, 4294901760
  %v5911 = vsub.f32 %v3906, %v5910
  %v5912 = vand.u32 %v5911, 4294901760
  %v5913 = vsub.f32 %v5911, %v5912
  %v5914 = vand.u32 %v5913, 4294901760
  %5915 = vmatpush1.msra.mxu0 %v5914
  %v5916 = vand.u32 %v3914, 4294901760
  %v5917 = vsub.f32 %v3914, %v5916
  %v5918 = vand.u32 %v5917, 4294901760
  %v5919 = vsub.f32 %v5917, %v5918
  %v5920 = vand.u32 %v5919, 4294901760
  %5921 = vmatprep.subr.mxu0 %v5920
  %v5922 = vand.u32 %v3913, 4294901760
  %v5923 = vsub.f32 %v3913, %v5922
  %v5924 = vand.u32 %v5923, 4294901760
  %v5925 = vsub.f32 %v5923, %v5924
  %v5926 = vand.u32 %v5925, 4294901760
  %5927 = vmatpush1.msra.mxu0 %v5926
  %v5928 = vand.u32 %v3921, 4294901760
  %v5929 = vsub.f32 %v3921, %v5928
  %v5930 = vand.u32 %v5929, 4294901760
  %v5931 = vsub.f32 %v5929, %v5930
  %v5932 = vand.u32 %v5931, 4294901760
  %5933 = vmatprep.subr.mxu0 %v5932
  %v5934 = vand.u32 %v3920, 4294901760
  %v5935 = vsub.f32 %v3920, %v5934
  %v5936 = vand.u32 %v5935, 4294901760
  %v5937 = vsub.f32 %v5935, %v5936
  %v5938 = vand.u32 %v5937, 4294901760
  %5939 = vmatpush1.msra.mxu0 %v5938
  %v5940 = vand.u32 %v3928, 4294901760
  %v5941 = vsub.f32 %v3928, %v5940
  %v5942 = vand.u32 %v5941, 4294901760
  %v5943 = vsub.f32 %v5941, %v5942
  %v5944 = vand.u32 %v5943, 4294901760
  %5945 = vmatprep.subr.mxu0 %v5944
  %v5946 = vand.u32 %v3927, 4294901760
  %v5947 = vsub.f32 %v3927, %v5946
  %v5948 = vand.u32 %v5947, 4294901760
  %v5949 = vsub.f32 %v5947, %v5948
  %v5950 = vand.u32 %v5949, 4294901760
  %5951 = vmatpush1.msra.mxu0 %v5950
  %v5952 = vand.u32 %v3935, 4294901760
  %v5953 = vsub.f32 %v3935, %v5952
  %v5954 = vand.u32 %v5953, 4294901760
  %v5955 = vsub.f32 %v5953, %v5954
  %v5956 = vand.u32 %v5955, 4294901760
  %5957 = vmatprep.subr.mxu0 %v5956
  %v5958 = vand.u32 %v3934, 4294901760
  %v5959 = vsub.f32 %v3934, %v5958
  %v5960 = vand.u32 %v5959, 4294901760
  %v5961 = vsub.f32 %v5959, %v5960
  %v5962 = vand.u32 %v5961, 4294901760
  %5963 = vmatpush1.msra.mxu0 %v5962
  %v5964 = vand.u32 %v3942, 4294901760
  %v5965 = vsub.f32 %v3942, %v5964
  %v5966 = vand.u32 %v5965, 4294901760
  %v5967 = vsub.f32 %v5965, %v5966
  %v5968 = vand.u32 %v5967, 4294901760
  %5969 = vmatprep.subr.mxu0 %v5968
  %v5970 = vand.u32 %v3941, 4294901760
  %v5971 = vsub.f32 %v3941, %v5970
  %v5972 = vand.u32 %v5971, 4294901760
  %v5973 = vsub.f32 %v5971, %v5972
  %v5974 = vand.u32 %v5973, 4294901760
  %5975 = vmatpush1.msra.mxu0 %v5974
  %v5976 = vand.u32 %v3949, 4294901760
  %v5977 = vsub.f32 %v3949, %v5976
  %v5978 = vand.u32 %v5977, 4294901760
  %v5979 = vsub.f32 %v5977, %v5978
  %v5980 = vand.u32 %v5979, 4294901760
  %5981 = vmatprep.subr.mxu0 %v5980
  %v5982 = vand.u32 %v3948, 4294901760
  %v5983 = vsub.f32 %v3948, %v5982
  %v5984 = vand.u32 %v5983, 4294901760
  %v5985 = vsub.f32 %v5983, %v5984
  %v5986 = vand.u32 %v5985, 4294901760
  %5987 = vmatpush1.msra.mxu0 %v5986
  %v5988 = vand.u32 %v3956, 4294901760
  %v5989 = vsub.f32 %v3956, %v5988
  %v5990 = vand.u32 %v5989, 4294901760
  %v5991 = vsub.f32 %v5989, %v5990
  %v5992 = vand.u32 %v5991, 4294901760
  %5993 = vmatprep.subr.mxu0 %v5992
  %v5994 = vand.u32 %v3955, 4294901760
  %v5995 = vsub.f32 %v3955, %v5994
  %v5996 = vand.u32 %v5995, 4294901760
  %v5997 = vsub.f32 %v5995, %v5996
  %v5998 = vand.u32 %v5997, 4294901760
  %5999 = vmatpush1.msra.mxu0 %v5998
  %v6000 = vand.u32 %v3963, 4294901760
  %v6001 = vsub.f32 %v3963, %v6000
  %v6002 = vand.u32 %v6001, 4294901760
  %v6003 = vsub.f32 %v6001, %v6002
  %v6004 = vand.u32 %v6003, 4294901760
  %6005 = vmatprep.subr.mxu0 %v6004
  %v6006 = vand.u32 %v3962, 4294901760
  %v6007 = vsub.f32 %v3962, %v6006
  %v6008 = vand.u32 %v6007, 4294901760
  %v6009 = vsub.f32 %v6007, %v6008
  %v6010 = vand.u32 %v6009, 4294901760
  %6011 = vmatpush1.msra.mxu0 %v6010
  %6012 = vmatprep.subr.mxu0 0.0
  %6013 = vmatpush1.msra.mxu0 0.0
  %6014 = vmatprep.subr.mxu0 0.0
  %6015 = vmatpush1.msra.mxu0 0.0
  %6016 = vmatprep.subr.mxu0 0.0
  %6017 = vmatpush1.msra.mxu0 0.0
  %6018 = vmatprep.subr.mxu0 0.0
  %6019 = vmatpush1.msra.mxu0 0.0
  %6020 = vmatprep.subr.mxu0 0.0
  %6021 = vmatpush1.msra.mxu0 0.0
  %6022 = vmatprep.subr.mxu0 0.0
  %6023 = vmatpush1.msra.mxu0 0.0
  %6024 = vmatprep.subr.mxu0 0.0
  %6025 = vmatpush1.msra.mxu0 0.0
  %6026 = vmatprep.subr.mxu0 0.0
  %6027 = vmatpush1.msra.mxu0 0.0
  %6028 = vmatprep.subr.mxu0 0.0
  %6029 = vmatpush1.msra.mxu0 0.0
  %6030 = vmatprep.subr.mxu0 0.0
  %6031 = vmatpush1.msra.mxu0 0.0
  %6032 = vmatprep.subr.mxu0 0.0
  %6033 = vmatpush1.msra.mxu0 0.0
  %6034 = vmatprep.subr.mxu0 0.0
  %6035 = vmatpush1.msra.mxu0 0.0
  %6036 = vmatprep.subr.mxu0 0.0
  %6037 = vmatpush1.msra.mxu0 0.0
  %6038 = vmatprep.subr.mxu0 0.0
  %6039 = vmatpush1.msra.mxu0 0.0
  %6040 = vmatprep.subr.mxu0 0.0
  %6041 = vmatpush1.msra.mxu0 0.0
  %6042 = vmatprep.subr.mxu0 0.0
  %6043 = vmatpush1.msra.mxu0 0.0
  %6044 = vmatprep.mubr.f32.mxu0 0.0
  %v6045 = vand.u32 %v3852, 4294901760
  %6046 = vmatmul.mubr.f32.gmra.mrb[0].mxu0 %v6045
  %v6047 = vpop.f32.mrb[0].mxu0
  %v6048 = vadd.f32 %v5816, %v6047
  %v6049 = vpop.f32.mrb[0].mxu0
  %v6050 = vadd.f32 %v5818, %v6049
  %6051 = vdwg.mxu0
  %v6052 = vand.u32 %v3858, 4294901760
  %v6053 = vsub.f32 %v3858, %v6052
  %6054 = vmatprep.subr.mxu0 %v6053
  %v6055 = vand.u32 %v3857, 4294901760
  %v6056 = vsub.f32 %v3857, %v6055
  %6057 = vmatpush1.msra.mxu0 %v6056
  %v6058 = vand.u32 %v3865, 4294901760
  %v6059 = vsub.f32 %v3865, %v6058
  %6060 = vmatprep.subr.mxu0 %v6059
  %v6061 = vand.u32 %v3864, 4294901760
  %v6062 = vsub.f32 %v3864, %v6061
  %6063 = vmatpush1.msra.mxu0 %v6062
  %v6064 = vand.u32 %v3872, 4294901760
  %v6065 = vsub.f32 %v3872, %v6064
  %6066 = vmatprep.subr.mxu0 %v6065
  %v6067 = vand.u32 %v3871, 4294901760
  %v6068 = vsub.f32 %v3871, %v6067
  %6069 = vmatpush1.msra.mxu0 %v6068
  %v6070 = vand.u32 %v3879, 4294901760
  %v6071 = vsub.f32 %v3879, %v6070
  %6072 = vmatprep.subr.mxu0 %v6071
  %v6073 = vand.u32 %v3878, 4294901760
  %v6074 = vsub.f32 %v3878, %v6073
  %6075 = vmatpush1.msra.mxu0 %v6074
  %v6076 = vand.u32 %v3886, 4294901760
  %v6077 = vsub.f32 %v3886, %v6076
  %6078 = vmatprep.subr.mxu0 %v6077
  %v6079 = vand.u32 %v3885, 4294901760
  %v6080 = vsub.f32 %v3885, %v6079
  %6081 = vmatpush1.msra.mxu0 %v6080
  %v6082 = vand.u32 %v3893, 4294901760
  %v6083 = vsub.f32 %v3893, %v6082
  %6084 = vmatprep.subr.mxu0 %v6083
  %v6085 = vand.u32 %v3892, 4294901760
  %v6086 = vsub.f32 %v3892, %v6085
  %6087 = vmatpush1.msra.mxu0 %v6086
  %v6088 = vand.u32 %v3900, 4294901760
  %v6089 = vsub.f32 %v3900, %v6088
  %6090 = vmatprep.subr.mxu0 %v6089
  %v6091 = vand.u32 %v3899, 4294901760
  %v6092 = vsub.f32 %v3899, %v6091
  %6093 = vmatpush1.msra.mxu0 %v6092
  %v6094 = vand.u32 %v3907, 4294901760
  %v6095 = vsub.f32 %v3907, %v6094
  %6096 = vmatprep.subr.mxu0 %v6095
  %v6097 = vand.u32 %v3906, 4294901760
  %v6098 = vsub.f32 %v3906, %v6097
  %6099 = vmatpush1.msra.mxu0 %v6098
  %v6100 = vand.u32 %v3914, 4294901760
  %v6101 = vsub.f32 %v3914, %v6100
  %6102 = vmatprep.subr.mxu0 %v6101
  %v6103 = vand.u32 %v3913, 4294901760
  %v6104 = vsub.f32 %v3913, %v6103
  %6105 = vmatpush1.msra.mxu0 %v6104
  %v6106 = vand.u32 %v3921, 4294901760
  %v6107 = vsub.f32 %v3921, %v6106
  %6108 = vmatprep.subr.mxu0 %v6107
  %v6109 = vand.u32 %v3920, 4294901760
  %v6110 = vsub.f32 %v3920, %v6109
  %6111 = vmatpush1.msra.mxu0 %v6110
  %v6112 = vand.u32 %v3928, 4294901760
  %v6113 = vsub.f32 %v3928, %v6112
  %6114 = vmatprep.subr.mxu0 %v6113
  %v6115 = vand.u32 %v3927, 4294901760
  %v6116 = vsub.f32 %v3927, %v6115
  %6117 = vmatpush1.msra.mxu0 %v6116
  %v6118 = vand.u32 %v3935, 4294901760
  %v6119 = vsub.f32 %v3935, %v6118
  %6120 = vmatprep.subr.mxu0 %v6119
  %v6121 = vand.u32 %v3934, 4294901760
  %v6122 = vsub.f32 %v3934, %v6121
  %6123 = vmatpush1.msra.mxu0 %v6122
  %v6124 = vand.u32 %v3942, 4294901760
  %v6125 = vsub.f32 %v3942, %v6124
  %6126 = vmatprep.subr.mxu0 %v6125
  %v6127 = vand.u32 %v3941, 4294901760
  %v6128 = vsub.f32 %v3941, %v6127
  %6129 = vmatpush1.msra.mxu0 %v6128
  %v6130 = vand.u32 %v3949, 4294901760
  %v6131 = vsub.f32 %v3949, %v6130
  %6132 = vmatprep.subr.mxu0 %v6131
  %v6133 = vand.u32 %v3948, 4294901760
  %v6134 = vsub.f32 %v3948, %v6133
  %6135 = vmatpush1.msra.mxu0 %v6134
  %v6136 = vand.u32 %v3956, 4294901760
  %v6137 = vsub.f32 %v3956, %v6136
  %6138 = vmatprep.subr.mxu0 %v6137
  %v6139 = vand.u32 %v3955, 4294901760
  %v6140 = vsub.f32 %v3955, %v6139
  %6141 = vmatpush1.msra.mxu0 %v6140
  %v6142 = vand.u32 %v3963, 4294901760
  %v6143 = vsub.f32 %v3963, %v6142
  %6144 = vmatprep.subr.mxu0 %v6143
  %v6145 = vand.u32 %v3962, 4294901760
  %v6146 = vsub.f32 %v3962, %v6145
  %6147 = vmatpush1.msra.mxu0 %v6146
  %6148 = vmatprep.subr.mxu0 0.0
  %6149 = vmatpush1.msra.mxu0 0.0
  %6150 = vmatprep.subr.mxu0 0.0
  %6151 = vmatpush1.msra.mxu0 0.0
  %6152 = vmatprep.subr.mxu0 0.0
  %6153 = vmatpush1.msra.mxu0 0.0
  %6154 = vmatprep.subr.mxu0 0.0
  %6155 = vmatpush1.msra.mxu0 0.0
  %6156 = vmatprep.subr.mxu0 0.0
  %6157 = vmatpush1.msra.mxu0 0.0
  %6158 = vmatprep.subr.mxu0 0.0
  %6159 = vmatpush1.msra.mxu0 0.0
  %6160 = vmatprep.subr.mxu0 0.0
  %6161 = vmatpush1.msra.mxu0 0.0
  %6162 = vmatprep.subr.mxu0 0.0
  %6163 = vmatpush1.msra.mxu0 0.0
  %6164 = vmatprep.subr.mxu0 0.0
  %6165 = vmatpush1.msra.mxu0 0.0
  %6166 = vmatprep.subr.mxu0 0.0
  %6167 = vmatpush1.msra.mxu0 0.0
  %6168 = vmatprep.subr.mxu0 0.0
  %6169 = vmatpush1.msra.mxu0 0.0
  %6170 = vmatprep.subr.mxu0 0.0
  %6171 = vmatpush1.msra.mxu0 0.0
  %6172 = vmatprep.subr.mxu0 0.0
  %6173 = vmatpush1.msra.mxu0 0.0
  %6174 = vmatprep.subr.mxu0 0.0
  %6175 = vmatpush1.msra.mxu0 0.0
  %6176 = vmatprep.subr.mxu0 0.0
  %6177 = vmatpush1.msra.mxu0 0.0
  %6178 = vmatprep.subr.mxu0 0.0
  %6179 = vmatpush1.msra.mxu0 0.0
  %6180 = vmatprep.mubr.f32.mxu0 0.0
  %v6181 = vand.u32 %v3852, 4294901760
  %v6182 = vsub.f32 %v3852, %v6181
  %6183 = vmatmul.mubr.f32.gmra.mrb[0].mxu0 %v6182
  %v6184 = vpop.f32.mrb[0].mxu0
  %v6185 = vadd.f32 %v6048, %v6184
  %v6186 = vpop.f32.mrb[0].mxu0
  %v6187 = vadd.f32 %v6050, %v6186
  %6188 = vdwg.mxu0
  %v6189 = vand.u32 %v3858, 4294901760
  %6190 = vmatprep.subr.mxu0 %v6189
  %v6191 = vand.u32 %v3857, 4294901760
  %6192 = vmatpush1.msra.mxu0 %v6191
  %v6193 = vand.u32 %v3865, 4294901760
  %6194 = vmatprep.subr.mxu0 %v6193
  %v6195 = vand.u32 %v3864, 4294901760
  %6196 = vmatpush1.msra.mxu0 %v6195
  %v6197 = vand.u32 %v3872, 4294901760
  %6198 = vmatprep.subr.mxu0 %v6197
  %v6199 = vand.u32 %v3871, 4294901760
  %6200 = vmatpush1.msra.mxu0 %v6199
  %v6201 = vand.u32 %v3879, 4294901760
  %6202 = vmatprep.subr.mxu0 %v6201
  %v6203 = vand.u32 %v3878, 4294901760
  %6204 = vmatpush1.msra.mxu0 %v6203
  %v6205 = vand.u32 %v3886, 4294901760
  %6206 = vmatprep.subr.mxu0 %v6205
  %v6207 = vand.u32 %v3885, 4294901760
  %6208 = vmatpush1.msra.mxu0 %v6207
  %v6209 = vand.u32 %v3893, 4294901760
  %6210 = vmatprep.subr.mxu0 %v6209
  %v6211 = vand.u32 %v3892, 4294901760
  %6212 = vmatpush1.msra.mxu0 %v6211
  %v6213 = vand.u32 %v3900, 4294901760
  %6214 = vmatprep.subr.mxu0 %v6213
  %v6215 = vand.u32 %v3899, 4294901760
  %6216 = vmatpush1.msra.mxu0 %v6215
  %v6217 = vand.u32 %v3907, 4294901760
  %6218 = vmatprep.subr.mxu0 %v6217
  %v6219 = vand.u32 %v3906, 4294901760
  %6220 = vmatpush1.msra.mxu0 %v6219
  %v6221 = vand.u32 %v3914, 4294901760
  %6222 = vmatprep.subr.mxu0 %v6221
  %v6223 = vand.u32 %v3913, 4294901760
  %6224 = vmatpush1.msra.mxu0 %v6223
  %v6225 = vand.u32 %v3921, 4294901760
  %6226 = vmatprep.subr.mxu0 %v6225
  %v6227 = vand.u32 %v3920, 4294901760
  %6228 = vmatpush1.msra.mxu0 %v6227
  %v6229 = vand.u32 %v3928, 4294901760
  %6230 = vmatprep.subr.mxu0 %v6229
  %v6231 = vand.u32 %v3927, 4294901760
  %6232 = vmatpush1.msra.mxu0 %v6231
  %v6233 = vand.u32 %v3935, 4294901760
  %6234 = vmatprep.subr.mxu0 %v6233
  %v6235 = vand.u32 %v3934, 4294901760
  %6236 = vmatpush1.msra.mxu0 %v6235
  %v6237 = vand.u32 %v3942, 4294901760
  %6238 = vmatprep.subr.mxu0 %v6237
  %v6239 = vand.u32 %v3941, 4294901760
  %6240 = vmatpush1.msra.mxu0 %v6239
  %v6241 = vand.u32 %v3949, 4294901760
  %6242 = vmatprep.subr.mxu0 %v6241
  %v6243 = vand.u32 %v3948, 4294901760
  %6244 = vmatpush1.msra.mxu0 %v6243
  %v6245 = vand.u32 %v3956, 4294901760
  %6246 = vmatprep.subr.mxu0 %v6245
  %v6247 = vand.u32 %v3955, 4294901760
  %6248 = vmatpush1.msra.mxu0 %v6247
  %v6249 = vand.u32 %v3963, 4294901760
  %6250 = vmatprep.subr.mxu0 %v6249
  %v6251 = vand.u32 %v3962, 4294901760
  %6252 = vmatpush1.msra.mxu0 %v6251
  %6253 = vmatprep.subr.mxu0 0.0
  %6254 = vmatpush1.msra.mxu0 0.0
  %6255 = vmatprep.subr.mxu0 0.0
  %6256 = vmatpush1.msra.mxu0 0.0
  %6257 = vmatprep.subr.mxu0 0.0
  %6258 = vmatpush1.msra.mxu0 0.0
  %6259 = vmatprep.subr.mxu0 0.0
  %6260 = vmatpush1.msra.mxu0 0.0
  %6261 = vmatprep.subr.mxu0 0.0
  %6262 = vmatpush1.msra.mxu0 0.0
  %6263 = vmatprep.subr.mxu0 0.0
  %6264 = vmatpush1.msra.mxu0 0.0
  %6265 = vmatprep.subr.mxu0 0.0
  %6266 = vmatpush1.msra.mxu0 0.0
  %6267 = vmatprep.subr.mxu0 0.0
  %6268 = vmatpush1.msra.mxu0 0.0
  %6269 = vmatprep.subr.mxu0 0.0
  %6270 = vmatpush1.msra.mxu0 0.0
  %6271 = vmatprep.subr.mxu0 0.0
  %6272 = vmatpush1.msra.mxu0 0.0
  %6273 = vmatprep.subr.mxu0 0.0
  %6274 = vmatpush1.msra.mxu0 0.0
  %6275 = vmatprep.subr.mxu0 0.0
  %6276 = vmatpush1.msra.mxu0 0.0
  %6277 = vmatprep.subr.mxu0 0.0
  %6278 = vmatpush1.msra.mxu0 0.0
  %6279 = vmatprep.subr.mxu0 0.0
  %6280 = vmatpush1.msra.mxu0 0.0
  %6281 = vmatprep.subr.mxu0 0.0
  %6282 = vmatpush1.msra.mxu0 0.0
  %6283 = vmatprep.subr.mxu0 0.0
  %6284 = vmatpush1.msra.mxu0 0.0
  %6285 = vmatprep.mubr.f32.mxu0 0.0
  %v6286 = vand.u32 %v3852, 4294901760
  %v6287 = vsub.f32 %v3852, %v6286
  %v6288 = vand.u32 %v6287, 4294901760
  %6289 = vmatmul.mubr.f32.gmra.mrb[0].mxu0 %v6288
  %v6290 = vpop.f32.mrb[0].mxu0
  %v6291 = vadd.f32 %v6185, %v6290
  %v6292 = vpop.f32.mrb[0].mxu0
  %v6293 = vadd.f32 %v6187, %v6292
  %6294 = vdwg.mxu0
  %v6295 = vand.u32 %v3858, 4294901760
  %v6296 = vsub.f32 %v3858, %v6295
  %v6297 = vand.u32 %v6296, 4294901760
  %6298 = vmatprep.subr.mxu0 %v6297
  %v6299 = vand.u32 %v3857, 4294901760
  %v6300 = vsub.f32 %v3857, %v6299
  %v6301 = vand.u32 %v6300, 4294901760
  %6302 = vmatpush1.msra.mxu0 %v6301
  %v6303 = vand.u32 %v3865, 4294901760
  %v6304 = vsub.f32 %v3865, %v6303
  %v6305 = vand.u32 %v6304, 4294901760
  %6306 = vmatprep.subr.mxu0 %v6305
  %v6307 = vand.u32 %v3864, 4294901760
  %v6308 = vsub.f32 %v3864, %v6307
  %v6309 = vand.u32 %v6308, 4294901760
  %6310 = vmatpush1.msra.mxu0 %v6309
  %v6311 = vand.u32 %v3872, 4294901760
  %v6312 = vsub.f32 %v3872, %v6311
  %v6313 = vand.u32 %v6312, 4294901760
  %6314 = vmatprep.subr.mxu0 %v6313
  %v6315 = vand.u32 %v3871, 4294901760
  %v6316 = vsub.f32 %v3871, %v6315
  %v6317 = vand.u32 %v6316, 4294901760
  %6318 = vmatpush1.msra.mxu0 %v6317
  %v6319 = vand.u32 %v3879, 4294901760
  %v6320 = vsub.f32 %v3879, %v6319
  %v6321 = vand.u32 %v6320, 4294901760
  %6322 = vmatprep.subr.mxu0 %v6321
  %v6323 = vand.u32 %v3878, 4294901760
  %v6324 = vsub.f32 %v3878, %v6323
  %v6325 = vand.u32 %v6324, 4294901760
  %6326 = vmatpush1.msra.mxu0 %v6325
  %v6327 = vand.u32 %v3886, 4294901760
  %v6328 = vsub.f32 %v3886, %v6327
  %v6329 = vand.u32 %v6328, 4294901760
  %6330 = vmatprep.subr.mxu0 %v6329
  %v6331 = vand.u32 %v3885, 4294901760
  %v6332 = vsub.f32 %v3885, %v6331
  %v6333 = vand.u32 %v6332, 4294901760
  %6334 = vmatpush1.msra.mxu0 %v6333
  %v6335 = vand.u32 %v3893, 4294901760
  %v6336 = vsub.f32 %v3893, %v6335
  %v6337 = vand.u32 %v6336, 4294901760
  %6338 = vmatprep.subr.mxu0 %v6337
  %v6339 = vand.u32 %v3892, 4294901760
  %v6340 = vsub.f32 %v3892, %v6339
  %v6341 = vand.u32 %v6340, 4294901760
  %6342 = vmatpush1.msra.mxu0 %v6341
  %v6343 = vand.u32 %v3900, 4294901760
  %v6344 = vsub.f32 %v3900, %v6343
  %v6345 = vand.u32 %v6344, 4294901760
  %6346 = vmatprep.subr.mxu0 %v6345
  %v6347 = vand.u32 %v3899, 4294901760
  %v6348 = vsub.f32 %v3899, %v6347
  %v6349 = vand.u32 %v6348, 4294901760
  %6350 = vmatpush1.msra.mxu0 %v6349
  %v6351 = vand.u32 %v3907, 4294901760
  %v6352 = vsub.f32 %v3907, %v6351
  %v6353 = vand.u32 %v6352, 4294901760
  %6354 = vmatprep.subr.mxu0 %v6353
  %v6355 = vand.u32 %v3906, 4294901760
  %v6356 = vsub.f32 %v3906, %v6355
  %v6357 = vand.u32 %v6356, 4294901760
  %6358 = vmatpush1.msra.mxu0 %v6357
  %v6359 = vand.u32 %v3914, 4294901760
  %v6360 = vsub.f32 %v3914, %v6359
  %v6361 = vand.u32 %v6360, 4294901760
  %6362 = vmatprep.subr.mxu0 %v6361
  %v6363 = vand.u32 %v3913, 4294901760
  %v6364 = vsub.f32 %v3913, %v6363
  %v6365 = vand.u32 %v6364, 4294901760
  %6366 = vmatpush1.msra.mxu0 %v6365
  %v6367 = vand.u32 %v3921, 4294901760
  %v6368 = vsub.f32 %v3921, %v6367
  %v6369 = vand.u32 %v6368, 4294901760
  %6370 = vmatprep.subr.mxu0 %v6369
  %v6371 = vand.u32 %v3920, 4294901760
  %v6372 = vsub.f32 %v3920, %v6371
  %v6373 = vand.u32 %v6372, 4294901760
  %6374 = vmatpush1.msra.mxu0 %v6373
  %v6375 = vand.u32 %v3928, 4294901760
  %v6376 = vsub.f32 %v3928, %v6375
  %v6377 = vand.u32 %v6376, 4294901760
  %6378 = vmatprep.subr.mxu0 %v6377
  %v6379 = vand.u32 %v3927, 4294901760
  %v6380 = vsub.f32 %v3927, %v6379
  %v6381 = vand.u32 %v6380, 4294901760
  %6382 = vmatpush1.msra.mxu0 %v6381
  %v6383 = vand.u32 %v3935, 4294901760
  %v6384 = vsub.f32 %v3935, %v6383
  %v6385 = vand.u32 %v6384, 4294901760
  %6386 = vmatprep.subr.mxu0 %v6385
  %v6387 = vand.u32 %v3934, 4294901760
  %v6388 = vsub.f32 %v3934, %v6387
  %v6389 = vand.u32 %v6388, 4294901760
  %6390 = vmatpush1.msra.mxu0 %v6389
  %v6391 = vand.u32 %v3942, 4294901760
  %v6392 = vsub.f32 %v3942, %v6391
  %v6393 = vand.u32 %v6392, 4294901760
  %6394 = vmatprep.subr.mxu0 %v6393
  %v6395 = vand.u32 %v3941, 4294901760
  %v6396 = vsub.f32 %v3941, %v6395
  %v6397 = vand.u32 %v6396, 4294901760
  %6398 = vmatpush1.msra.mxu0 %v6397
  %v6399 = vand.u32 %v3949, 4294901760
  %v6400 = vsub.f32 %v3949, %v6399
  %v6401 = vand.u32 %v6400, 4294901760
  %6402 = vmatprep.subr.mxu0 %v6401
  %v6403 = vand.u32 %v3948, 4294901760
  %v6404 = vsub.f32 %v3948, %v6403
  %v6405 = vand.u32 %v6404, 4294901760
  %6406 = vmatpush1.msra.mxu0 %v6405
  %v6407 = vand.u32 %v3956, 4294901760
  %v6408 = vsub.f32 %v3956, %v6407
  %v6409 = vand.u32 %v6408, 4294901760
  %6410 = vmatprep.subr.mxu0 %v6409
  %v6411 = vand.u32 %v3955, 4294901760
  %v6412 = vsub.f32 %v3955, %v6411
  %v6413 = vand.u32 %v6412, 4294901760
  %6414 = vmatpush1.msra.mxu0 %v6413
  %v6415 = vand.u32 %v3963, 4294901760
  %v6416 = vsub.f32 %v3963, %v6415
  %v6417 = vand.u32 %v6416, 4294901760
  %6418 = vmatprep.subr.mxu0 %v6417
  %v6419 = vand.u32 %v3962, 4294901760
  %v6420 = vsub.f32 %v3962, %v6419
  %v6421 = vand.u32 %v6420, 4294901760
  %6422 = vmatpush1.msra.mxu0 %v6421
  %6423 = vmatprep.subr.mxu0 0.0
  %6424 = vmatpush1.msra.mxu0 0.0
  %6425 = vmatprep.subr.mxu0 0.0
  %6426 = vmatpush1.msra.mxu0 0.0
  %6427 = vmatprep.subr.mxu0 0.0
  %6428 = vmatpush1.msra.mxu0 0.0
  %6429 = vmatprep.subr.mxu0 0.0
  %6430 = vmatpush1.msra.mxu0 0.0
  %6431 = vmatprep.subr.mxu0 0.0
  %6432 = vmatpush1.msra.mxu0 0.0
  %6433 = vmatprep.subr.mxu0 0.0
  %6434 = vmatpush1.msra.mxu0 0.0
  %6435 = vmatprep.subr.mxu0 0.0
  %6436 = vmatpush1.msra.mxu0 0.0
  %6437 = vmatprep.subr.mxu0 0.0
  %6438 = vmatpush1.msra.mxu0 0.0
  %6439 = vmatprep.subr.mxu0 0.0
  %6440 = vmatpush1.msra.mxu0 0.0
  %6441 = vmatprep.subr.mxu0 0.0
  %6442 = vmatpush1.msra.mxu0 0.0
  %6443 = vmatprep.subr.mxu0 0.0
  %6444 = vmatpush1.msra.mxu0 0.0
  %6445 = vmatprep.subr.mxu0 0.0
  %6446 = vmatpush1.msra.mxu0 0.0
  %6447 = vmatprep.subr.mxu0 0.0
  %6448 = vmatpush1.msra.mxu0 0.0
  %6449 = vmatprep.subr.mxu0 0.0
  %6450 = vmatpush1.msra.mxu0 0.0
  %6451 = vmatprep.subr.mxu0 0.0
  %6452 = vmatpush1.msra.mxu0 0.0
  %6453 = vmatprep.subr.mxu0 0.0
  %6454 = vmatpush1.msra.mxu0 0.0
  %6455 = vmatprep.mubr.f32.mxu0 0.0
  %v6456 = vand.u32 %v3852, 4294901760
  %6457 = vmatmul.mubr.f32.gmra.mrb[0].mxu0 %v6456
  %v6458 = vpop.f32.mrb[0].mxu0
  %v6459 = vadd.f32 %v6291, %v6458
  %v6460 = vpop.f32.mrb[0].mxu0
  %v6461 = vadd.f32 %v6293, %v6460
  %6462 = vdwg.mxu0
  %v6463 = vand.u32 %v3858, 4294901760
  %6464 = vmatprep.subr.mxu0 %v6463
  %v6465 = vand.u32 %v3857, 4294901760
  %6466 = vmatpush1.msra.mxu0 %v6465
  %v6467 = vand.u32 %v3865, 4294901760
  %6468 = vmatprep.subr.mxu0 %v6467
  %v6469 = vand.u32 %v3864, 4294901760
  %6470 = vmatpush1.msra.mxu0 %v6469
  %v6471 = vand.u32 %v3872, 4294901760
  %6472 = vmatprep.subr.mxu0 %v6471
  %v6473 = vand.u32 %v3871, 4294901760
  %6474 = vmatpush1.msra.mxu0 %v6473
  %v6475 = vand.u32 %v3879, 4294901760
  %6476 = vmatprep.subr.mxu0 %v6475
  %v6477 = vand.u32 %v3878, 4294901760
  %6478 = vmatpush1.msra.mxu0 %v6477
  %v6479 = vand.u32 %v3886, 4294901760
  %6480 = vmatprep.subr.mxu0 %v6479
  %v6481 = vand.u32 %v3885, 4294901760
  %6482 = vmatpush1.msra.mxu0 %v6481
  %v6483 = vand.u32 %v3893, 4294901760
  %6484 = vmatprep.subr.mxu0 %v6483
  %v6485 = vand.u32 %v3892, 4294901760
  %6486 = vmatpush1.msra.mxu0 %v6485
  %v6487 = vand.u32 %v3900, 4294901760
  %6488 = vmatprep.subr.mxu0 %v6487
  %v6489 = vand.u32 %v3899, 4294901760
  %6490 = vmatpush1.msra.mxu0 %v6489
  %v6491 = vand.u32 %v3907, 4294901760
  %6492 = vmatprep.subr.mxu0 %v6491
  %v6493 = vand.u32 %v3906, 4294901760
  %6494 = vmatpush1.msra.mxu0 %v6493
  %v6495 = vand.u32 %v3914, 4294901760
  %6496 = vmatprep.subr.mxu0 %v6495
  %v6497 = vand.u32 %v3913, 4294901760
  %6498 = vmatpush1.msra.mxu0 %v6497
  %v6499 = vand.u32 %v3921, 4294901760
  %6500 = vmatprep.subr.mxu0 %v6499
  %v6501 = vand.u32 %v3920, 4294901760
  %6502 = vmatpush1.msra.mxu0 %v6501
  %v6503 = vand.u32 %v3928, 4294901760
  %6504 = vmatprep.subr.mxu0 %v6503
  %v6505 = vand.u32 %v3927, 4294901760
  %6506 = vmatpush1.msra.mxu0 %v6505
  %v6507 = vand.u32 %v3935, 4294901760
  %6508 = vmatprep.subr.mxu0 %v6507
  %v6509 = vand.u32 %v3934, 4294901760
  %6510 = vmatpush1.msra.mxu0 %v6509
  %v6511 = vand.u32 %v3942, 4294901760
  %6512 = vmatprep.subr.mxu0 %v6511
  %v6513 = vand.u32 %v3941, 4294901760
  %6514 = vmatpush1.msra.mxu0 %v6513
  %v6515 = vand.u32 %v3949, 4294901760
  %6516 = vmatprep.subr.mxu0 %v6515
  %v6517 = vand.u32 %v3948, 4294901760
  %6518 = vmatpush1.msra.mxu0 %v6517
  %v6519 = vand.u32 %v3956, 4294901760
  %6520 = vmatprep.subr.mxu0 %v6519
  %v6521 = vand.u32 %v3955, 4294901760
  %6522 = vmatpush1.msra.mxu0 %v6521
  %v6523 = vand.u32 %v3963, 4294901760
  %6524 = vmatprep.subr.mxu0 %v6523
  %v6525 = vand.u32 %v3962, 4294901760
  %6526 = vmatpush1.msra.mxu0 %v6525
  %6527 = vmatprep.subr.mxu0 0.0
  %6528 = vmatpush1.msra.mxu0 0.0
  %6529 = vmatprep.subr.mxu0 0.0
  %6530 = vmatpush1.msra.mxu0 0.0
  %6531 = vmatprep.subr.mxu0 0.0
  %6532 = vmatpush1.msra.mxu0 0.0
  %6533 = vmatprep.subr.mxu0 0.0
  %6534 = vmatpush1.msra.mxu0 0.0
  %6535 = vmatprep.subr.mxu0 0.0
  %6536 = vmatpush1.msra.mxu0 0.0
  %6537 = vmatprep.subr.mxu0 0.0
  %6538 = vmatpush1.msra.mxu0 0.0
  %6539 = vmatprep.subr.mxu0 0.0
  %6540 = vmatpush1.msra.mxu0 0.0
  %6541 = vmatprep.subr.mxu0 0.0
  %6542 = vmatpush1.msra.mxu0 0.0
  %6543 = vmatprep.subr.mxu0 0.0
  %6544 = vmatpush1.msra.mxu0 0.0
  %6545 = vmatprep.subr.mxu0 0.0
  %6546 = vmatpush1.msra.mxu0 0.0
  %6547 = vmatprep.subr.mxu0 0.0
  %6548 = vmatpush1.msra.mxu0 0.0
  %6549 = vmatprep.subr.mxu0 0.0
  %6550 = vmatpush1.msra.mxu0 0.0
  %6551 = vmatprep.subr.mxu0 0.0
  %6552 = vmatpush1.msra.mxu0 0.0
  %6553 = vmatprep.subr.mxu0 0.0
  %6554 = vmatpush1.msra.mxu0 0.0
  %6555 = vmatprep.subr.mxu0 0.0
  %6556 = vmatpush1.msra.mxu0 0.0
  %6557 = vmatprep.subr.mxu0 0.0
  %6558 = vmatpush1.msra.mxu0 0.0
  %6559 = vmatprep.mubr.f32.mxu0 0.0
  %v6560 = vand.u32 %v3852, 4294901760
  %6561 = vmatmul.mubr.f32.gmra.mrb[0].mxu0 %v6560
  %v6562 = vpop.f32.mrb[0].mxu0
  %v6563 = vadd.f32 %v6459, %v6562
  %v6564 = vpop.f32.mrb[0].mxu0
  %v6565 = vadd.f32 %v6461, %v6564
  %6566 = vdwg.mxu0
  %6567 = vmatprep.subr.mxu0 0.0
  %v6568 = vand.u32 %v3859, 4294901760
  %6569 = vmatpush1.msra.mxu0 %v6568
  %6570 = vmatprep.subr.mxu0 0.0
  %v6571 = vand.u32 %v3866, 4294901760
  %6572 = vmatpush1.msra.mxu0 %v6571
  %6573 = vmatprep.subr.mxu0 0.0
  %v6574 = vand.u32 %v3873, 4294901760
  %6575 = vmatpush1.msra.mxu0 %v6574
  %6576 = vmatprep.subr.mxu0 0.0
  %v6577 = vand.u32 %v3880, 4294901760
  %6578 = vmatpush1.msra.mxu0 %v6577
  %6579 = vmatprep.subr.mxu0 0.0
  %v6580 = vand.u32 %v3887, 4294901760
  %6581 = vmatpush1.msra.mxu0 %v6580
  %6582 = vmatprep.subr.mxu0 0.0
  %v6583 = vand.u32 %v3894, 4294901760
  %6584 = vmatpush1.msra.mxu0 %v6583
  %6585 = vmatprep.subr.mxu0 0.0
  %v6586 = vand.u32 %v3901, 4294901760
  %6587 = vmatpush1.msra.mxu0 %v6586
  %6588 = vmatprep.subr.mxu0 0.0
  %v6589 = vand.u32 %v3908, 4294901760
  %6590 = vmatpush1.msra.mxu0 %v6589
  %6591 = vmatprep.subr.mxu0 0.0
  %v6592 = vand.u32 %v3915, 4294901760
  %6593 = vmatpush1.msra.mxu0 %v6592
  %6594 = vmatprep.subr.mxu0 0.0
  %v6595 = vand.u32 %v3922, 4294901760
  %6596 = vmatpush1.msra.mxu0 %v6595
  %6597 = vmatprep.subr.mxu0 0.0
  %v6598 = vand.u32 %v3929, 4294901760
  %6599 = vmatpush1.msra.mxu0 %v6598
  %6600 = vmatprep.subr.mxu0 0.0
  %v6601 = vand.u32 %v3936, 4294901760
  %6602 = vmatpush1.msra.mxu0 %v6601
  %6603 = vmatprep.subr.mxu0 0.0
  %v6604 = vand.u32 %v3943, 4294901760
  %6605 = vmatpush1.msra.mxu0 %v6604
  %6606 = vmatprep.subr.mxu0 0.0
  %v6607 = vand.u32 %v3950, 4294901760
  %6608 = vmatpush1.msra.mxu0 %v6607
  %6609 = vmatprep.subr.mxu0 0.0
  %v6610 = vand.u32 %v3957, 4294901760
  %6611 = vmatpush1.msra.mxu0 %v6610
  %6612 = vmatprep.subr.mxu0 0.0
  %v6613 = vand.u32 %v3964, 4294901760
  %6614 = vmatpush1.msra.mxu0 %v6613
  %6615 = vmatprep.subr.mxu0 0.0
  %6616 = vmatpush1.msra.mxu0 0.0
  %6617 = vmatprep.subr.mxu0 0.0
  %6618 = vmatpush1.msra.mxu0 0.0
  %6619 = vmatprep.subr.mxu0 0.0
  %6620 = vmatpush1.msra.mxu0 0.0
  %6621 = vmatprep.subr.mxu0 0.0
  %6622 = vmatpush1.msra.mxu0 0.0
  %6623 = vmatprep.subr.mxu0 0.0
  %6624 = vmatpush1.msra.mxu0 0.0
  %6625 = vmatprep.subr.mxu0 0.0
  %6626 = vmatpush1.msra.mxu0 0.0
  %6627 = vmatprep.subr.mxu0 0.0
  %6628 = vmatpush1.msra.mxu0 0.0
  %6629 = vmatprep.subr.mxu0 0.0
  %6630 = vmatpush1.msra.mxu0 0.0
  %6631 = vmatprep.subr.mxu0 0.0
  %6632 = vmatpush1.msra.mxu0 0.0
  %6633 = vmatprep.subr.mxu0 0.0
  %6634 = vmatpush1.msra.mxu0 0.0
  %6635 = vmatprep.subr.mxu0 0.0
  %6636 = vmatpush1.msra.mxu0 0.0
  %6637 = vmatprep.subr.mxu0 0.0
  %6638 = vmatpush1.msra.mxu0 0.0
  %6639 = vmatprep.subr.mxu0 0.0
  %6640 = vmatpush1.msra.mxu0 0.0
  %6641 = vmatprep.subr.mxu0 0.0
  %6642 = vmatpush1.msra.mxu0 0.0
  %6643 = vmatprep.subr.mxu0 0.0
  %6644 = vmatpush1.msra.mxu0 0.0
  %6645 = vmatprep.subr.mxu0 0.0
  %6646 = vmatpush1.msra.mxu0 0.0
  %6647 = vmatprep.mubr.f32.mxu0 0.0
  %v6648 = vand.u32 %v3852, 4294901760
  %v6649 = vsub.f32 %v3852, %v6648
  %v6650 = vand.u32 %v6649, 4294901760
  %v6651 = vsub.f32 %v6649, %v6650
  %v6652 = vand.u32 %v6651, 4294901760
  %6653 = vmatmul.mubr.f32.gmra.mrb[0].mxu0 %v6652
  %v6654 = vpop.f32.mrb[0].mxu0
  %v6655 = vadd.f32 %v3994, %v6654
  %v6656 = vpop.f32.mrb[0].mxu0
  %6657 = vdwg.mxu0
  %6658 = vmatprep.subr.mxu0 0.0
  %v6659 = vand.u32 %v3859, 4294901760
  %v6660 = vsub.f32 %v3859, %v6659
  %v6661 = vand.u32 %v6660, 4294901760
  %v6662 = vsub.f32 %v6660, %v6661
  %v6663 = vand.u32 %v6662, 4294901760
  %6664 = vmatpush1.msra.mxu0 %v6663
  %6665 = vmatprep.subr.mxu0 0.0
  %v6666 = vand.u32 %v3866, 4294901760
  %v6667 = vsub.f32 %v3866, %v6666
  %v6668 = vand.u32 %v6667, 4294901760
  %v6669 = vsub.f32 %v6667, %v6668
  %v6670 = vand.u32 %v6669, 4294901760
  %6671 = vmatpush1.msra.mxu0 %v6670
  %6672 = vmatprep.subr.mxu0 0.0
  %v6673 = vand.u32 %v3873, 4294901760
  %v6674 = vsub.f32 %v3873, %v6673
  %v6675 = vand.u32 %v6674, 4294901760
  %v6676 = vsub.f32 %v6674, %v6675
  %v6677 = vand.u32 %v6676, 4294901760
  %6678 = vmatpush1.msra.mxu0 %v6677
  %6679 = vmatprep.subr.mxu0 0.0
  %v6680 = vand.u32 %v3880, 4294901760
  %v6681 = vsub.f32 %v3880, %v6680
  %v6682 = vand.u32 %v6681, 4294901760
  %v6683 = vsub.f32 %v6681, %v6682
  %v6684 = vand.u32 %v6683, 4294901760
  %6685 = vmatpush1.msra.mxu0 %v6684
  %6686 = vmatprep.subr.mxu0 0.0
  %v6687 = vand.u32 %v3887, 4294901760
  %v6688 = vsub.f32 %v3887, %v6687
  %v6689 = vand.u32 %v6688, 4294901760
  %v6690 = vsub.f32 %v6688, %v6689
  %v6691 = vand.u32 %v6690, 4294901760
  %6692 = vmatpush1.msra.mxu0 %v6691
  %6693 = vmatprep.subr.mxu0 0.0
  %v6694 = vand.u32 %v3894, 4294901760
  %v6695 = vsub.f32 %v3894, %v6694
  %v6696 = vand.u32 %v6695, 4294901760
  %v6697 = vsub.f32 %v6695, %v6696
  %v6698 = vand.u32 %v6697, 4294901760
  %6699 = vmatpush1.msra.mxu0 %v6698
  %6700 = vmatprep.subr.mxu0 0.0
  %v6701 = vand.u32 %v3901, 4294901760
  %v6702 = vsub.f32 %v3901, %v6701
  %v6703 = vand.u32 %v6702, 4294901760
  %v6704 = vsub.f32 %v6702, %v6703
  %v6705 = vand.u32 %v6704, 4294901760
  %6706 = vmatpush1.msra.mxu0 %v6705
  %6707 = vmatprep.subr.mxu0 0.0
  %v6708 = vand.u32 %v3908, 4294901760
  %v6709 = vsub.f32 %v3908, %v6708
  %v6710 = vand.u32 %v6709, 4294901760
  %v6711 = vsub.f32 %v6709, %v6710
  %v6712 = vand.u32 %v6711, 4294901760
  %6713 = vmatpush1.msra.mxu0 %v6712
  %6714 = vmatprep.subr.mxu0 0.0
  %v6715 = vand.u32 %v3915, 4294901760
  %v6716 = vsub.f32 %v3915, %v6715
  %v6717 = vand.u32 %v6716, 4294901760
  %v6718 = vsub.f32 %v6716, %v6717
  %v6719 = vand.u32 %v6718, 4294901760
  %6720 = vmatpush1.msra.mxu0 %v6719
  %6721 = vmatprep.subr.mxu0 0.0
  %v6722 = vand.u32 %v3922, 4294901760
  %v6723 = vsub.f32 %v3922, %v6722
  %v6724 = vand.u32 %v6723, 4294901760
  %v6725 = vsub.f32 %v6723, %v6724
  %v6726 = vand.u32 %v6725, 4294901760
  %6727 = vmatpush1.msra.mxu0 %v6726
  %6728 = vmatprep.subr.mxu0 0.0
  %v6729 = vand.u32 %v3929, 4294901760
  %v6730 = vsub.f32 %v3929, %v6729
  %v6731 = vand.u32 %v6730, 4294901760
  %v6732 = vsub.f32 %v6730, %v6731
  %v6733 = vand.u32 %v6732, 4294901760
  %6734 = vmatpush1.msra.mxu0 %v6733
  %6735 = vmatprep.subr.mxu0 0.0
  %v6736 = vand.u32 %v3936, 4294901760
  %v6737 = vsub.f32 %v3936, %v6736
  %v6738 = vand.u32 %v6737, 4294901760
  %v6739 = vsub.f32 %v6737, %v6738
  %v6740 = vand.u32 %v6739, 4294901760
  %6741 = vmatpush1.msra.mxu0 %v6740
  %6742 = vmatprep.subr.mxu0 0.0
  %v6743 = vand.u32 %v3943, 4294901760
  %v6744 = vsub.f32 %v3943, %v6743
  %v6745 = vand.u32 %v6744, 4294901760
  %v6746 = vsub.f32 %v6744, %v6745
  %v6747 = vand.u32 %v6746, 4294901760
  %6748 = vmatpush1.msra.mxu0 %v6747
  %6749 = vmatprep.subr.mxu0 0.0
  %v6750 = vand.u32 %v3950, 4294901760
  %v6751 = vsub.f32 %v3950, %v6750
  %v6752 = vand.u32 %v6751, 4294901760
  %v6753 = vsub.f32 %v6751, %v6752
  %v6754 = vand.u32 %v6753, 4294901760
  %6755 = vmatpush1.msra.mxu0 %v6754
  %6756 = vmatprep.subr.mxu0 0.0
  %v6757 = vand.u32 %v3957, 4294901760
  %v6758 = vsub.f32 %v3957, %v6757
  %v6759 = vand.u32 %v6758, 4294901760
  %v6760 = vsub.f32 %v6758, %v6759
  %v6761 = vand.u32 %v6760, 4294901760
  %6762 = vmatpush1.msra.mxu0 %v6761
  %6763 = vmatprep.subr.mxu0 0.0
  %v6764 = vand.u32 %v3964, 4294901760
  %v6765 = vsub.f32 %v3964, %v6764
  %v6766 = vand.u32 %v6765, 4294901760
  %v6767 = vsub.f32 %v6765, %v6766
  %v6768 = vand.u32 %v6767, 4294901760
  %6769 = vmatpush1.msra.mxu0 %v6768
  %6770 = vmatprep.subr.mxu0 0.0
  %6771 = vmatpush1.msra.mxu0 0.0
  %6772 = vmatprep.subr.mxu0 0.0
  %6773 = vmatpush1.msra.mxu0 0.0
  %6774 = vmatprep.subr.mxu0 0.0
  %6775 = vmatpush1.msra.mxu0 0.0
  %6776 = vmatprep.subr.mxu0 0.0
  %6777 = vmatpush1.msra.mxu0 0.0
  %6778 = vmatprep.subr.mxu0 0.0
  %6779 = vmatpush1.msra.mxu0 0.0
  %6780 = vmatprep.subr.mxu0 0.0
  %6781 = vmatpush1.msra.mxu0 0.0
  %6782 = vmatprep.subr.mxu0 0.0
  %6783 = vmatpush1.msra.mxu0 0.0
  %6784 = vmatprep.subr.mxu0 0.0
  %6785 = vmatpush1.msra.mxu0 0.0
  %6786 = vmatprep.subr.mxu0 0.0
  %6787 = vmatpush1.msra.mxu0 0.0
  %6788 = vmatprep.subr.mxu0 0.0
  %6789 = vmatpush1.msra.mxu0 0.0
  %6790 = vmatprep.subr.mxu0 0.0
  %6791 = vmatpush1.msra.mxu0 0.0
  %6792 = vmatprep.subr.mxu0 0.0
  %6793 = vmatpush1.msra.mxu0 0.0
  %6794 = vmatprep.subr.mxu0 0.0
  %6795 = vmatpush1.msra.mxu0 0.0
  %6796 = vmatprep.subr.mxu0 0.0
  %6797 = vmatpush1.msra.mxu0 0.0
  %6798 = vmatprep.subr.mxu0 0.0
  %6799 = vmatpush1.msra.mxu0 0.0
  %6800 = vmatprep.subr.mxu0 0.0
  %6801 = vmatpush1.msra.mxu0 0.0
  %6802 = vmatprep.mubr.f32.mxu0 0.0
  %v6803 = vand.u32 %v3852, 4294901760
  %6804 = vmatmul.mubr.f32.gmra.mrb[0].mxu0 %v6803
  %v6805 = vpop.f32.mrb[0].mxu0
  %v6806 = vadd.f32 %v6655, %v6805
  %v6807 = vpop.f32.mrb[0].mxu0
  %6808 = vdwg.mxu0
  %6809 = vmatprep.subr.mxu0 0.0
  %v6810 = vand.u32 %v3859, 4294901760
  %v6811 = vsub.f32 %v3859, %v6810
  %6812 = vmatpush1.msra.mxu0 %v6811
  %6813 = vmatprep.subr.mxu0 0.0
  %v6814 = vand.u32 %v3866, 4294901760
  %v6815 = vsub.f32 %v3866, %v6814
  %6816 = vmatpush1.msra.mxu0 %v6815
  %6817 = vmatprep.subr.mxu0 0.0
  %v6818 = vand.u32 %v3873, 4294901760
  %v6819 = vsub.f32 %v3873, %v6818
  %6820 = vmatpush1.msra.mxu0 %v6819
  %6821 = vmatprep.subr.mxu0 0.0
  %v6822 = vand.u32 %v3880, 4294901760
  %v6823 = vsub.f32 %v3880, %v6822
  %6824 = vmatpush1.msra.mxu0 %v6823
  %6825 = vmatprep.subr.mxu0 0.0
  %v6826 = vand.u32 %v3887, 4294901760
  %v6827 = vsub.f32 %v3887, %v6826
  %6828 = vmatpush1.msra.mxu0 %v6827
  %6829 = vmatprep.subr.mxu0 0.0
  %v6830 = vand.u32 %v3894, 4294901760
  %v6831 = vsub.f32 %v3894, %v6830
  %6832 = vmatpush1.msra.mxu0 %v6831
  %6833 = vmatprep.subr.mxu0 0.0
  %v6834 = vand.u32 %v3901, 4294901760
  %v6835 = vsub.f32 %v3901, %v6834
  %6836 = vmatpush1.msra.mxu0 %v6835
  %6837 = vmatprep.subr.mxu0 0.0
  %v6838 = vand.u32 %v3908, 4294901760
  %v6839 = vsub.f32 %v3908, %v6838
  %6840 = vmatpush1.msra.mxu0 %v6839
  %6841 = vmatprep.subr.mxu0 0.0
  %v6842 = vand.u32 %v3915, 4294901760
  %v6843 = vsub.f32 %v3915, %v6842
  %6844 = vmatpush1.msra.mxu0 %v6843
  %6845 = vmatprep.subr.mxu0 0.0
  %v6846 = vand.u32 %v3922, 4294901760
  %v6847 = vsub.f32 %v3922, %v6846
  %6848 = vmatpush1.msra.mxu0 %v6847
  %6849 = vmatprep.subr.mxu0 0.0
  %v6850 = vand.u32 %v3929, 4294901760
  %v6851 = vsub.f32 %v3929, %v6850
  %6852 = vmatpush1.msra.mxu0 %v6851
  %6853 = vmatprep.subr.mxu0 0.0
  %v6854 = vand.u32 %v3936, 4294901760
  %v6855 = vsub.f32 %v3936, %v6854
  %6856 = vmatpush1.msra.mxu0 %v6855
  %6857 = vmatprep.subr.mxu0 0.0
  %v6858 = vand.u32 %v3943, 4294901760
  %v6859 = vsub.f32 %v3943, %v6858
  %6860 = vmatpush1.msra.mxu0 %v6859
  %6861 = vmatprep.subr.mxu0 0.0
  %v6862 = vand.u32 %v3950, 4294901760
  %v6863 = vsub.f32 %v3950, %v6862
  %6864 = vmatpush1.msra.mxu0 %v6863
  %6865 = vmatprep.subr.mxu0 0.0
  %v6866 = vand.u32 %v3957, 4294901760
  %v6867 = vsub.f32 %v3957, %v6866
  %6868 = vmatpush1.msra.mxu0 %v6867
  %6869 = vmatprep.subr.mxu0 0.0
  %v6870 = vand.u32 %v3964, 4294901760
  %v6871 = vsub.f32 %v3964, %v6870
  %6872 = vmatpush1.msra.mxu0 %v6871
  %6873 = vmatprep.subr.mxu0 0.0
  %6874 = vmatpush1.msra.mxu0 0.0
  %6875 = vmatprep.subr.mxu0 0.0
  %6876 = vmatpush1.msra.mxu0 0.0
  %6877 = vmatprep.subr.mxu0 0.0
  %6878 = vmatpush1.msra.mxu0 0.0
  %6879 = vmatprep.subr.mxu0 0.0
  %6880 = vmatpush1.msra.mxu0 0.0
  %6881 = vmatprep.subr.mxu0 0.0
  %6882 = vmatpush1.msra.mxu0 0.0
  %6883 = vmatprep.subr.mxu0 0.0
  %6884 = vmatpush1.msra.mxu0 0.0
  %6885 = vmatprep.subr.mxu0 0.0
  %6886 = vmatpush1.msra.mxu0 0.0
  %6887 = vmatprep.subr.mxu0 0.0
  %6888 = vmatpush1.msra.mxu0 0.0
  %6889 = vmatprep.subr.mxu0 0.0
  %6890 = vmatpush1.msra.mxu0 0.0
  %6891 = vmatprep.subr.mxu0 0.0
  %6892 = vmatpush1.msra.mxu0 0.0
  %6893 = vmatprep.subr.mxu0 0.0
  %6894 = vmatpush1.msra.mxu0 0.0
  %6895 = vmatprep.subr.mxu0 0.0
  %6896 = vmatpush1.msra.mxu0 0.0
  %6897 = vmatprep.subr.mxu0 0.0
  %6898 = vmatpush1.msra.mxu0 0.0
  %6899 = vmatprep.subr.mxu0 0.0
  %6900 = vmatpush1.msra.mxu0 0.0
  %6901 = vmatprep.subr.mxu0 0.0
  %6902 = vmatpush1.msra.mxu0 0.0
  %6903 = vmatprep.subr.mxu0 0.0
  %6904 = vmatpush1.msra.mxu0 0.0
  %6905 = vmatprep.mubr.f32.mxu0 0.0
  %v6906 = vand.u32 %v3852, 4294901760
  %v6907 = vsub.f32 %v3852, %v6906
  %6908 = vmatmul.mubr.f32.gmra.mrb[0].mxu0 %v6907
  %v6909 = vpop.f32.mrb[0].mxu0
  %v6910 = vadd.f32 %v6806, %v6909
  %v6911 = vpop.f32.mrb[0].mxu0
  %6912 = vdwg.mxu0
  %6913 = vmatprep.subr.mxu0 0.0
  %v6914 = vand.u32 %v3859, 4294901760
  %6915 = vmatpush1.msra.mxu0 %v6914
  %6916 = vmatprep.subr.mxu0 0.0
  %v6917 = vand.u32 %v3866, 4294901760
  %6918 = vmatpush1.msra.mxu0 %v6917
  %6919 = vmatprep.subr.mxu0 0.0
  %v6920 = vand.u32 %v3873, 4294901760
  %6921 = vmatpush1.msra.mxu0 %v6920
  %6922 = vmatprep.subr.mxu0 0.0
  %v6923 = vand.u32 %v3880, 4294901760
  %6924 = vmatpush1.msra.mxu0 %v6923
  %6925 = vmatprep.subr.mxu0 0.0
  %v6926 = vand.u32 %v3887, 4294901760
  %6927 = vmatpush1.msra.mxu0 %v6926
  %6928 = vmatprep.subr.mxu0 0.0
  %v6929 = vand.u32 %v3894, 4294901760
  %6930 = vmatpush1.msra.mxu0 %v6929
  %6931 = vmatprep.subr.mxu0 0.0
  %v6932 = vand.u32 %v3901, 4294901760
  %6933 = vmatpush1.msra.mxu0 %v6932
  %6934 = vmatprep.subr.mxu0 0.0
  %v6935 = vand.u32 %v3908, 4294901760
  %6936 = vmatpush1.msra.mxu0 %v6935
  %6937 = vmatprep.subr.mxu0 0.0
  %v6938 = vand.u32 %v3915, 4294901760
  %6939 = vmatpush1.msra.mxu0 %v6938
  %6940 = vmatprep.subr.mxu0 0.0
  %v6941 = vand.u32 %v3922, 4294901760
  %6942 = vmatpush1.msra.mxu0 %v6941
  %6943 = vmatprep.subr.mxu0 0.0
  %v6944 = vand.u32 %v3929, 4294901760
  %6945 = vmatpush1.msra.mxu0 %v6944
  %6946 = vmatprep.subr.mxu0 0.0
  %v6947 = vand.u32 %v3936, 4294901760
  %6948 = vmatpush1.msra.mxu0 %v6947
  %6949 = vmatprep.subr.mxu0 0.0
  %v6950 = vand.u32 %v3943, 4294901760
  %6951 = vmatpush1.msra.mxu0 %v6950
  %6952 = vmatprep.subr.mxu0 0.0
  %v6953 = vand.u32 %v3950, 4294901760
  %6954 = vmatpush1.msra.mxu0 %v6953
  %6955 = vmatprep.subr.mxu0 0.0
  %v6956 = vand.u32 %v3957, 4294901760
  %6957 = vmatpush1.msra.mxu0 %v6956
  %6958 = vmatprep.subr.mxu0 0.0
  %v6959 = vand.u32 %v3964, 4294901760
  %6960 = vmatpush1.msra.mxu0 %v6959
  %6961 = vmatprep.subr.mxu0 0.0
  %6962 = vmatpush1.msra.mxu0 0.0
  %6963 = vmatprep.subr.mxu0 0.0
  %6964 = vmatpush1.msra.mxu0 0.0
  %6965 = vmatprep.subr.mxu0 0.0
  %6966 = vmatpush1.msra.mxu0 0.0
  %6967 = vmatprep.subr.mxu0 0.0
  %6968 = vmatpush1.msra.mxu0 0.0
  %6969 = vmatprep.subr.mxu0 0.0
  %6970 = vmatpush1.msra.mxu0 0.0
  %6971 = vmatprep.subr.mxu0 0.0
  %6972 = vmatpush1.msra.mxu0 0.0
  %6973 = vmatprep.subr.mxu0 0.0
  %6974 = vmatpush1.msra.mxu0 0.0
  %6975 = vmatprep.subr.mxu0 0.0
  %6976 = vmatpush1.msra.mxu0 0.0
  %6977 = vmatprep.subr.mxu0 0.0
  %6978 = vmatpush1.msra.mxu0 0.0
  %6979 = vmatprep.subr.mxu0 0.0
  %6980 = vmatpush1.msra.mxu0 0.0
  %6981 = vmatprep.subr.mxu0 0.0
  %6982 = vmatpush1.msra.mxu0 0.0
  %6983 = vmatprep.subr.mxu0 0.0
  %6984 = vmatpush1.msra.mxu0 0.0
  %6985 = vmatprep.subr.mxu0 0.0
  %6986 = vmatpush1.msra.mxu0 0.0
  %6987 = vmatprep.subr.mxu0 0.0
  %6988 = vmatpush1.msra.mxu0 0.0
  %6989 = vmatprep.subr.mxu0 0.0
  %6990 = vmatpush1.msra.mxu0 0.0
  %6991 = vmatprep.subr.mxu0 0.0
  %6992 = vmatpush1.msra.mxu0 0.0
  %6993 = vmatprep.mubr.f32.mxu0 0.0
  %v6994 = vand.u32 %v3852, 4294901760
  %v6995 = vsub.f32 %v3852, %v6994
  %v6996 = vand.u32 %v6995, 4294901760
  %6997 = vmatmul.mubr.f32.gmra.mrb[0].mxu0 %v6996
  %v6998 = vpop.f32.mrb[0].mxu0
  %v6999 = vadd.f32 %v6910, %v6998
  %v7000 = vpop.f32.mrb[0].mxu0
  %7001 = vdwg.mxu0
  %7002 = vmatprep.subr.mxu0 0.0
  %v7003 = vand.u32 %v3859, 4294901760
  %v7004 = vsub.f32 %v3859, %v7003
  %v7005 = vand.u32 %v7004, 4294901760
  %7006 = vmatpush1.msra.mxu0 %v7005
  %7007 = vmatprep.subr.mxu0 0.0
  %v7008 = vand.u32 %v3866, 4294901760
  %v7009 = vsub.f32 %v3866, %v7008
  %v7010 = vand.u32 %v7009, 4294901760
  %7011 = vmatpush1.msra.mxu0 %v7010
  %7012 = vmatprep.subr.mxu0 0.0
  %v7013 = vand.u32 %v3873, 4294901760
  %v7014 = vsub.f32 %v3873, %v7013
  %v7015 = vand.u32 %v7014, 4294901760
  %7016 = vmatpush1.msra.mxu0 %v7015
  %7017 = vmatprep.subr.mxu0 0.0
  %v7018 = vand.u32 %v3880, 4294901760
  %v7019 = vsub.f32 %v3880, %v7018
  %v7020 = vand.u32 %v7019, 4294901760
  %7021 = vmatpush1.msra.mxu0 %v7020
  %7022 = vmatprep.subr.mxu0 0.0
  %v7023 = vand.u32 %v3887, 4294901760
  %v7024 = vsub.f32 %v3887, %v7023
  %v7025 = vand.u32 %v7024, 4294901760
  %7026 = vmatpush1.msra.mxu0 %v7025
  %7027 = vmatprep.subr.mxu0 0.0
  %v7028 = vand.u32 %v3894, 4294901760
  %v7029 = vsub.f32 %v3894, %v7028
  %v7030 = vand.u32 %v7029, 4294901760
  %7031 = vmatpush1.msra.mxu0 %v7030
  %7032 = vmatprep.subr.mxu0 0.0
  %v7033 = vand.u32 %v3901, 4294901760
  %v7034 = vsub.f32 %v3901, %v7033
  %v7035 = vand.u32 %v7034, 4294901760
  %7036 = vmatpush1.msra.mxu0 %v7035
  %7037 = vmatprep.subr.mxu0 0.0
  %v7038 = vand.u32 %v3908, 4294901760
  %v7039 = vsub.f32 %v3908, %v7038
  %v7040 = vand.u32 %v7039, 4294901760
  %7041 = vmatpush1.msra.mxu0 %v7040
  %7042 = vmatprep.subr.mxu0 0.0
  %v7043 = vand.u32 %v3915, 4294901760
  %v7044 = vsub.f32 %v3915, %v7043
  %v7045 = vand.u32 %v7044, 4294901760
  %7046 = vmatpush1.msra.mxu0 %v7045
  %7047 = vmatprep.subr.mxu0 0.0
  %v7048 = vand.u32 %v3922, 4294901760
  %v7049 = vsub.f32 %v3922, %v7048
  %v7050 = vand.u32 %v7049, 4294901760
  %7051 = vmatpush1.msra.mxu0 %v7050
  %7052 = vmatprep.subr.mxu0 0.0
  %v7053 = vand.u32 %v3929, 4294901760
  %v7054 = vsub.f32 %v3929, %v7053
  %v7055 = vand.u32 %v7054, 4294901760
  %7056 = vmatpush1.msra.mxu0 %v7055
  %7057 = vmatprep.subr.mxu0 0.0
  %v7058 = vand.u32 %v3936, 4294901760
  %v7059 = vsub.f32 %v3936, %v7058
  %v7060 = vand.u32 %v7059, 4294901760
  %7061 = vmatpush1.msra.mxu0 %v7060
  %7062 = vmatprep.subr.mxu0 0.0
  %v7063 = vand.u32 %v3943, 4294901760
  %v7064 = vsub.f32 %v3943, %v7063
  %v7065 = vand.u32 %v7064, 4294901760
  %7066 = vmatpush1.msra.mxu0 %v7065
  %7067 = vmatprep.subr.mxu0 0.0
  %v7068 = vand.u32 %v3950, 4294901760
  %v7069 = vsub.f32 %v3950, %v7068
  %v7070 = vand.u32 %v7069, 4294901760
  %7071 = vmatpush1.msra.mxu0 %v7070
  %7072 = vmatprep.subr.mxu0 0.0
  %v7073 = vand.u32 %v3957, 4294901760
  %v7074 = vsub.f32 %v3957, %v7073
  %v7075 = vand.u32 %v7074, 4294901760
  %7076 = vmatpush1.msra.mxu0 %v7075
  %7077 = vmatprep.subr.mxu0 0.0
  %v7078 = vand.u32 %v3964, 4294901760
  %v7079 = vsub.f32 %v3964, %v7078
  %v7080 = vand.u32 %v7079, 4294901760
  %7081 = vmatpush1.msra.mxu0 %v7080
  %7082 = vmatprep.subr.mxu0 0.0
  %7083 = vmatpush1.msra.mxu0 0.0
  %7084 = vmatprep.subr.mxu0 0.0
  %7085 = vmatpush1.msra.mxu0 0.0
  %7086 = vmatprep.subr.mxu0 0.0
  %7087 = vmatpush1.msra.mxu0 0.0
  %7088 = vmatprep.subr.mxu0 0.0
  %7089 = vmatpush1.msra.mxu0 0.0
  %7090 = vmatprep.subr.mxu0 0.0
  %7091 = vmatpush1.msra.mxu0 0.0
  %7092 = vmatprep.subr.mxu0 0.0
  %7093 = vmatpush1.msra.mxu0 0.0
  %7094 = vmatprep.subr.mxu0 0.0
  %7095 = vmatpush1.msra.mxu0 0.0
  %7096 = vmatprep.subr.mxu0 0.0
  %7097 = vmatpush1.msra.mxu0 0.0
  %7098 = vmatprep.subr.mxu0 0.0
  %7099 = vmatpush1.msra.mxu0 0.0
  %7100 = vmatprep.subr.mxu0 0.0
  %7101 = vmatpush1.msra.mxu0 0.0
  %7102 = vmatprep.subr.mxu0 0.0
  %7103 = vmatpush1.msra.mxu0 0.0
  %7104 = vmatprep.subr.mxu0 0.0
  %7105 = vmatpush1.msra.mxu0 0.0
  %7106 = vmatprep.subr.mxu0 0.0
  %7107 = vmatpush1.msra.mxu0 0.0
  %7108 = vmatprep.subr.mxu0 0.0
  %7109 = vmatpush1.msra.mxu0 0.0
  %7110 = vmatprep.subr.mxu0 0.0
  %7111 = vmatpush1.msra.mxu0 0.0
  %7112 = vmatprep.subr.mxu0 0.0
  %7113 = vmatpush1.msra.mxu0 0.0
  %7114 = vmatprep.mubr.f32.mxu0 0.0
  %v7115 = vand.u32 %v3852, 4294901760
  %7116 = vmatmul.mubr.f32.gmra.mrb[0].mxu0 %v7115
  %v7117 = vpop.f32.mrb[0].mxu0
  %v7118 = vadd.f32 %v6999, %v7117
  %v7119 = vpop.f32.mrb[0].mxu0
  %7120 = vdwg.mxu0
  %7121 = vmatprep.subr.mxu0 0.0
  %v7122 = vand.u32 %v3859, 4294901760
  %7123 = vmatpush1.msra.mxu0 %v7122
  %7124 = vmatprep.subr.mxu0 0.0
  %v7125 = vand.u32 %v3866, 4294901760
  %7126 = vmatpush1.msra.mxu0 %v7125
  %7127 = vmatprep.subr.mxu0 0.0
  %v7128 = vand.u32 %v3873, 4294901760
  %7129 = vmatpush1.msra.mxu0 %v7128
  %7130 = vmatprep.subr.mxu0 0.0
  %v7131 = vand.u32 %v3880, 4294901760
  %7132 = vmatpush1.msra.mxu0 %v7131
  %7133 = vmatprep.subr.mxu0 0.0
  %v7134 = vand.u32 %v3887, 4294901760
  %7135 = vmatpush1.msra.mxu0 %v7134
  %7136 = vmatprep.subr.mxu0 0.0
  %v7137 = vand.u32 %v3894, 4294901760
  %7138 = vmatpush1.msra.mxu0 %v7137
  %7139 = vmatprep.subr.mxu0 0.0
  %v7140 = vand.u32 %v3901, 4294901760
  %7141 = vmatpush1.msra.mxu0 %v7140
  %7142 = vmatprep.subr.mxu0 0.0
  %v7143 = vand.u32 %v3908, 4294901760
  %7144 = vmatpush1.msra.mxu0 %v7143
  %7145 = vmatprep.subr.mxu0 0.0
  %v7146 = vand.u32 %v3915, 4294901760
  %7147 = vmatpush1.msra.mxu0 %v7146
  %7148 = vmatprep.subr.mxu0 0.0
  %v7149 = vand.u32 %v3922, 4294901760
  %7150 = vmatpush1.msra.mxu0 %v7149
  %7151 = vmatprep.subr.mxu0 0.0
  %v7152 = vand.u32 %v3929, 4294901760
  %7153 = vmatpush1.msra.mxu0 %v7152
  %7154 = vmatprep.subr.mxu0 0.0
  %v7155 = vand.u32 %v3936, 4294901760
  %7156 = vmatpush1.msra.mxu0 %v7155
  %7157 = vmatprep.subr.mxu0 0.0
  %v7158 = vand.u32 %v3943, 4294901760
  %7159 = vmatpush1.msra.mxu0 %v7158
  %7160 = vmatprep.subr.mxu0 0.0
  %v7161 = vand.u32 %v3950, 4294901760
  %7162 = vmatpush1.msra.mxu0 %v7161
  %7163 = vmatprep.subr.mxu0 0.0
  %v7164 = vand.u32 %v3957, 4294901760
  %7165 = vmatpush1.msra.mxu0 %v7164
  %7166 = vmatprep.subr.mxu0 0.0
  %v7167 = vand.u32 %v3964, 4294901760
  %7168 = vmatpush1.msra.mxu0 %v7167
  %7169 = vmatprep.subr.mxu0 0.0
  %7170 = vmatpush1.msra.mxu0 0.0
  %7171 = vmatprep.subr.mxu0 0.0
  %7172 = vmatpush1.msra.mxu0 0.0
  %7173 = vmatprep.subr.mxu0 0.0
  %7174 = vmatpush1.msra.mxu0 0.0
  %7175 = vmatprep.subr.mxu0 0.0
  %7176 = vmatpush1.msra.mxu0 0.0
  %7177 = vmatprep.subr.mxu0 0.0
  %7178 = vmatpush1.msra.mxu0 0.0
  %7179 = vmatprep.subr.mxu0 0.0
  %7180 = vmatpush1.msra.mxu0 0.0
  %7181 = vmatprep.subr.mxu0 0.0
  %7182 = vmatpush1.msra.mxu0 0.0
  %7183 = vmatprep.subr.mxu0 0.0
  %7184 = vmatpush1.msra.mxu0 0.0
  %7185 = vmatprep.subr.mxu0 0.0
  %7186 = vmatpush1.msra.mxu0 0.0
  %7187 = vmatprep.subr.mxu0 0.0
  %7188 = vmatpush1.msra.mxu0 0.0
  %7189 = vmatprep.subr.mxu0 0.0
  %7190 = vmatpush1.msra.mxu0 0.0
  %7191 = vmatprep.subr.mxu0 0.0
  %7192 = vmatpush1.msra.mxu0 0.0
  %7193 = vmatprep.subr.mxu0 0.0
  %7194 = vmatpush1.msra.mxu0 0.0
  %7195 = vmatprep.subr.mxu0 0.0
  %7196 = vmatpush1.msra.mxu0 0.0
  %7197 = vmatprep.subr.mxu0 0.0
  %7198 = vmatpush1.msra.mxu0 0.0
  %7199 = vmatprep.subr.mxu0 0.0
  %7200 = vmatpush1.msra.mxu0 0.0
  %7201 = vmatprep.mubr.f32.mxu0 0.0
  %v7202 = vand.u32 %v3852, 4294901760
  %7203 = vmatmul.mubr.f32.gmra.mrb[0].mxu0 %v7202
  %v7204 = vpop.f32.mrb[0].mxu0
  %v7205 = vadd.f32 %v7118, %v7204
  %v7206 = vpop.f32.mrb[0].mxu0
  %7207 = vdwg.mxu0
  %v7208 = vxor.u32 %v4853, 2147483648
  %v7209 = vxor.u32 %v4855, 2147483648
  %v7210 = vxor.u32 %v5708, 2147483648
  %v7211 = vxor.u32 %v5710, 2147483648
  %v7212 = vxor.u32 %v6563, 2147483648
  %v7213 = vxor.u32 %v6565, 2147483648
  %v7214 = vxor.u32 %v7205, 2147483648
  %v7215 = vmul.f32 %v7208, 1.442695
  %v7216 = vpow.pop %v7215
  %v7217 = vmul.f32 %v7209, 1.442695
  %v7218 = vpow.pop %v7217
  %v7219 = vmul.f32 %v7210, 1.442695
  %v7220 = vpow.pop %v7219
  %v7221 = vmul.f32 %v7211, 1.442695
  %v7222 = vpow.pop %v7221
  %v7223 = vmul.f32 %v7212, 1.442695
  %v7224 = vpow.pop %v7223
  %v7225 = vmul.f32 %v7213, 1.442695
  %v7226 = vpow.pop %v7225
  %v7227 = vmul.f32 %v7214, 1.442695
  %v7228 = vpow.pop %v7227
  %v7229 = vadd.f32 %v7216, 1.0
  %v7230 = vadd.f32 %v7218, 1.0
  %v7231 = vadd.f32 %v7220, 1.0
  %v7232 = vadd.f32 %v7222, 1.0
  %v7233 = vadd.f32 %v7224, 1.0
  %v7234 = vadd.f32 %v7226, 1.0
  %v7235 = vadd.f32 %v7228, 1.0
  %v7236 = vrcp.pop %v7229
  %v7237 = vmul.f32 1.0, %v7236
  %v7238 = vrcp.pop %v7230
  %v7239 = vmul.f32 1.0, %v7238
  %v7240 = vrcp.pop %v7231
  %v7241 = vmul.f32 1.0, %v7240
  %v7242 = vrcp.pop %v7232
  %v7243 = vmul.f32 1.0, %v7242
  %v7244 = vrcp.pop %v7233
  %v7245 = vmul.f32 1.0, %v7244
  %v7246 = vrcp.pop %v7234
  %v7247 = vmul.f32 1.0, %v7246
  %v7248 = vrcp.pop %v7235
  %v7249 = vmul.f32 1.0, %v7248
  %7250 = vst [vmem:[%s7] sm:$0xff] %v7237
  %7251 = vst [vmem:[%s7 + $0x8] sm:$0xff] %v7239
  %7252 = vst [vmem:[%s7 + $0x10] sm:$0xff] %v7241
  %7253 = vst [vmem:[%s7 + $0x18] sm:$0xff] %v7243
  %7254 = vst [vmem:[%s7 + $0x20] sm:$0xff] %v7245
  %7255 = vst [vmem:[%s7 + $0x28] sm:$0xff] %v7247
  %7256 = vst.msk [vmem:[%s7 + $0x30] sm:$0xff] %vm138, %v7249
  // Predicated region
  $region30: #{autoencoder_forward.1} parent=0 // pred_check
    _
  $region31: #{autoencoder_forward.1} parent=0 // pred_check_branch
    %7258 = sbr.rel (0) target = $region33
  $region32: #{autoencoder_forward.1} parent=0 // pred_region
    _
  $region33: #{autoencoder_forward.1} parent=0 // pred_fallthru
    _
  // Predicated region
  $region34: #{autoencoder_forward.1} parent=0 // pred_check
    _
  $region35: #{autoencoder_forward.1} parent=0 // pred_check_branch
    %7260 = sbr.rel (0) target = $region37
  $region36: #{autoencoder_forward.1} parent=0 // pred_region
    _
  $region37: #{autoencoder_forward.1} parent=0 // pred_fallthru
    _

</llo_original>
